<compile_context>
chip_gen: v6e
topology: v6e:2x2x1
jax: 0.10.0
libtpu: 0.0.40
codegen_flags: <defaults>
</compile_context>

<pallas_src>
import functools

import jax
import jax.numpy as jnp
from jax.experimental import pallas as pl
from jax.experimental.pallas import tpu as pltpu


def _round_up(v, m):
    return ((v + m - 1) // m) * m


def _pick_block_rows(n, block_rows):
    """Largest row tile <= block_rows; prefer >= 2 grid blocks (v7x dual-TC sharding)."""
    br = min(block_rows, _round_up(n, 8))
    if _round_up(n, br) // br < 2 and n > 8:
        br = min(br, _round_up((n + 1) // 2, 8))
    return br


# ----------------------------------------------------------------------------
# Fused multi-input MLP (+ optional LayerNorm + optional residual) Pallas kernel
# ----------------------------------------------------------------------------
def _mlp_kernel(n_inputs, n_layers, use_ln, residual_mode, eps, use_bf16, *refs):
    # in refs : x_1..x_p, (W_l, b_l) for l=0..L-1, [gamma, beta], [residual]
    # out refs: out            (residual_mode in {None, "add"})
    #           out, out_res   (residual_mode == "both")
    n_out = 2 if residual_mode == "both" else 1
    in_refs = refs[:-n_out]
    out_refs = refs[-n_out:]

    cdt = jnp.bfloat16 if use_bf16 else jnp.float32

    # Layer 0 input: lane-concatenate the row-aligned inputs in VMEM (no HBM concat);
    # a single deeper-K dot fills the 256-deep MXU on v6e/v7x.
    xs = [in_refs[i][...].astype(cdt) for i in range(n_inputs)]
    x = xs[0] if n_inputs == 1 else jnp.concatenate(xs, axis=-1)
    pos = n_inputs

    h = None
    for layer in range(n_layers):
        w = in_refs[pos][...].astype(cdt)
        b = in_refs[pos + 1][...]                       # f32 bias, broadcast over rows
        pos += 2
        inp = x if layer == 0 else h.astype(cdt)
        h = jnp.dot(inp, w, preferred_element_type=jnp.float32) + b
        if layer < n_layers - 1:                        # ReLU on all but the last linear
            h = jnp.maximum(h, 0.0)

    if use_ln:                                          # LayerNorm in f32
        gamma = in_refs[pos][...]
        beta = in_refs[pos + 1][...]
        pos += 2
        mean = jnp.mean(h, axis=-1, keepdims=True)
        var = jnp.mean(jnp.square(h - mean), axis=-1, keepdims=True)
        h = (h - mean) * jax.lax.rsqrt(var + eps) * gamma + beta

    if residual_mode is None:
        out_refs[0][...] = h.astype(out_refs[0].dtype)
    else:
        r = in_refs[pos][...].astype(jnp.float32)       # residual add in f32
        if residual_mode == "add":
            out_refs[0][...] = (h + r).astype(out_refs[0].dtype)
        else:  # "both": pre-residual and post-residual outputs
            out_refs[0][...] = h.astype(out_refs[0].dtype)
            out_refs[1][...] = (h + r).astype(out_refs[1].dtype)


def fused_mlp(xs, weights, biases, ln=None, residual=None, residual_mode=None,
              out_dtype=jnp.float32, eps=1e-5, block_rows=512, use_bf16=True,
              vmem_limit_bytes=32 * 1024 * 1024):
    """y = LN?( W_{L-1}( relu(... relu(cat(xs) @ W_0 + b_0) ...) ) ) [+ residual].

    weights[0] rows must follow the torch cat() order of `xs`.
    """
    n = xs[0].shape[0]
    n_layers = len(weights)
    assert len(biases) == n_layers
    f_out = weights[-1].shape[1]
    use_ln = ln is not None

    if residual is None:
        residual_mode = None
    elif residual_mode is None:
        residual_mode = "add"

    weights = list(weights)
    biases = list(biases)

    # Lane-dense output slab for narrow outputs (decoders): pad last-layer W/b to a multiple of
    # 128 lanes; true columns are sliced back at the end. Only legal with no LayerNorm on the
    # output. Narrow residuals are added by the caller on the sliced output (cheaper than a
    # 128-wide zero-padded residual slab).
    if (not use_ln) and (f_out % 128 != 0):
        assert residual is None, "add narrow residuals outside the kernel"
        f_out_pad = _round_up(f_out, 128)
        pad = f_out_pad - f_out
        weights[-1] = jnp.pad(weights[-1], ((0, 0), (0, pad)))
        biases[-1] = jnp.pad(biases[-1], ((0, pad),))
    else:
        f_out_pad = f_out

    # Row tiling. If the caller already padded rows to a multiple of block_rows, use it as-is
    # (no per-call pad / slice); otherwise pick a tile that keeps >= 2 grid blocks when possible.
    if n % block_rows == 0:
        br = block_rows
    else:
        br = _pick_block_rows(n, block_rows)
    n_pad = _round_up(n, br)
    if n_pad != n:
        xs = [jnp.pad(x, ((0, n_pad - n), (0, 0))) for x in xs]
        if residual is not None:
            residual = jnp.pad(residual, ((0, n_pad - n), (0, 0)))

    args = []
    in_specs = []
    for x in xs:                                        # row-tiled activation inputs
        args.append(x)
        in_specs.append(pl.BlockSpec((br, x.shape[1]), lambda i: (i, 0)))
    for w, b in zip(weights, biases):                   # block-invariant weights / biases
        args += [w, b.reshape(1, -1)]
        in_specs += [pl.BlockSpec(w.shape, lambda i: (0, 0)),
                     pl.BlockSpec((1, w.shape[1]), lambda i: (0, 0))]
    if use_ln:
        gamma, beta = ln
        args += [gamma.reshape(1, -1), beta.reshape(1, -1)]
        in_specs += [pl.BlockSpec((1, f_out_pad), lambda i: (0, 0)),
                     pl.BlockSpec((1, f_out_pad), lambda i: (0, 0))]
    if residual is not None:                            # fused (wide) residual add
        args.append(residual)
        in_specs.append(pl.BlockSpec((br, f_out_pad), lambda i: (i, 0)))

    n_out = 2 if residual_mode == "both" else 1
    if n_out == 1:
        out_shape = jax.ShapeDtypeStruct((n_pad, f_out_pad), out_dtype)
        out_specs = pl.BlockSpec((br, f_out_pad), lambda i: (i, 0))
    else:
        out_shape = (jax.ShapeDtypeStruct((n_pad, f_out_pad), out_dtype),
                     jax.ShapeDtypeStruct((n_pad, f_out_pad), out_dtype))
        out_specs = (pl.BlockSpec((br, f_out_pad), lambda i: (i, 0)),
                     pl.BlockSpec((br, f_out_pad), lambda i: (i, 0)))

    kernel = functools.partial(_mlp_kernel, len(xs), n_layers, use_ln,
                               residual_mode, eps, use_bf16)
    out = pl.pallas_call(
        kernel,
        grid=(n_pad // br,),
        in_specs=in_specs,
        out_specs=out_specs,
        out_shape=out_shape,
        compiler_params=pltpu.CompilerParams(
            dimension_semantics=("parallel",),
            vmem_limit_bytes=vmem_limit_bytes),
    )(*args)

    def trim(o):
        return o[:n, :f_out] if (n_pad != n or f_out_pad != f_out) else o

    if n_out == 1:
        return trim(out)
    return trim(out[0]), trim(out[1])


# ----------------------------------------------------------------------------
# Deterministic parameter initialization (PyTorch-style uniform bounds)
# ----------------------------------------------------------------------------
def _init_linear(key, fan_in, fan_out, w_dtype):
    k1, k2 = jax.random.split(key)
    bound = 1.0 / float(fan_in) ** 0.5
    w = jax.random.uniform(k1, (fan_in, fan_out), jnp.float32, -bound, bound).astype(w_dtype)
    b = jax.random.uniform(k2, (fan_out,), jnp.float32, -bound, bound)
    return w, b


def _init_mlp(key, in_dim, hidden_dim, n_hidden_layers, out_dim, layer_norm, w_dtype):
    sizes = [in_dim] + [hidden_dim] * n_hidden_layers + [out_dim]
    ws, bs = [], []
    for i in range(len(sizes) - 1):
        key, sub = jax.random.split(key)
        w, b = _init_linear(sub, sizes[i], sizes[i + 1], w_dtype)
        ws.append(w)
        bs.append(b)
    ln = (jnp.ones((out_dim,), jnp.float32), jnp.zeros((out_dim,), jnp.float32)) if layer_norm else None
    return {"w": ws, "b": bs, "ln": ln}


def init_params(key, nnode_in, nnode_out, nedge_in, nedge_out, latent_dim,
                n_mp_steps, nmlp_layers, mlp_hidden_dim, w_dtype=jnp.bfloat16):
    # Weights are stored in bf16 once at init (matmuls run bf16/f32-acc anyway); biases/LN in f32.
    keys = jax.random.split(key, 6 + 3 * n_mp_steps)
    params = {
        # Encoder (node_fn_b exists in the torch module but is unused when node_type=None)
        "enc_node": _init_mlp(keys[0], nnode_in, mlp_hidden_dim, nmlp_layers, latent_dim, True, w_dtype),
        "enc_node_b": _init_mlp(keys[1], nnode_in, mlp_hidden_dim, nmlp_layers, latent_dim, True, w_dtype),
        "enc_edge": _init_mlp(keys[2], nedge_in, mlp_hidden_dim, nmlp_layers, latent_dim, True, w_dtype),
        "processor": [],
        "node_dec": _init_mlp(keys[3], latent_dim, mlp_hidden_dim, nmlp_layers, nnode_out, False, w_dtype),
        "edge_dec": _init_mlp(keys[4], latent_dim, mlp_hidden_dim, nmlp_layers, nedge_out, False, w_dtype),
    }
    for s in range(n_mp_steps):
        k0, k1, k2 = keys[5 + 3 * s], keys[6 + 3 * s], keys[7 + 3 * s]
        params["processor"].append({
            "edge_fn": _init_mlp(k0, 3 * latent_dim, mlp_hidden_dim, nmlp_layers, latent_dim, True, w_dtype),
            "node_fn": _init_mlp(k1, 2 * latent_dim, mlp_hidden_dim, nmlp_layers, latent_dim, True, w_dtype),
            "edge_update_fn": _init_mlp(k2, 3 * latent_dim, mlp_hidden_dim, nmlp_layers, latent_dim, True, w_dtype),
        })
    return params


def _apply_mlp(p, xs, residual=None, residual_mode=None, out_dtype=jnp.float32,
               block_rows=512, use_bf16=True):
    # weights[0] rows follow the torch cat() order of xs (split-W == row-stacked W0).
    return fused_mlp(xs, p["w"], p["b"], ln=p["ln"],
                     residual=residual, residual_mode=residual_mode,
                     out_dtype=out_dtype, block_rows=block_rows, use_bf16=use_bf16)


# ----------------------------------------------------------------------------
# Forward pass: EncodeProcessDecodeDual (node_type=None path)
# ----------------------------------------------------------------------------
def encode_process_decode(params, x, edge_index, edge_attr, *, residual, n_time_steps,
                          block_rows=512, use_bf16=True):
    n_nodes = x.shape[0]
    n_edges = edge_attr.shape[0]
    latent_dtype = jnp.bfloat16 if use_bf16 else jnp.float32

    # ---- Residual feature extraction (unpadded inputs; added to sliced decoder outputs) ----
    if residual:
        n_eff = n_time_steps - 1
        dynamic_vars = n_eff * 4
        static_vars_size = x.shape[1] - dynamic_vars
        head_end = static_vars_size + 3 * n_eff - 1
        flow_end = static_vars_size + 4 * n_eff - 1
        node_residual = jnp.stack([x[:, head_end], x[:, flow_end]], axis=1)

        dynamic_vars_edge = n_eff * 6
        static_vars_size_edge = edge_attr.shape[1] - dynamic_vars_edge
        flow_end_edge = static_vars_size_edge + 5 * n_eff - 1
        depth_end_edge = static_vars_size_edge + 6 * n_eff - 1
        edge_residual = jnp.stack([edge_attr[:, flow_end_edge],
                                   edge_attr[:, depth_end_edge]], axis=1)
    else:
        node_residual = None
        edge_residual = None

    # ---- Pick row tiles ONCE, pad rows ONCE, keep padded shapes through all MP steps ----
    node_br = _pick_block_rows(n_nodes, block_rows)
    edge_br = _pick_block_rows(n_edges, block_rows)
    n_pad = _round_up(n_nodes, node_br)
    e_pad = _round_up(n_edges, edge_br)

    apply_n = functools.partial(_apply_mlp, block_rows=node_br, use_bf16=use_bf16)
    apply_e = functools.partial(_apply_mlp, block_rows=edge_br, use_bf16=use_bf16)

    # Sort edges by target once -> sorted scatter-add fast path in every MP step.
    perm = jnp.argsort(edge_index[1])
    inv_perm = jnp.argsort(perm)
    src_s = edge_index[0][perm]
    tgt_s = edge_index[1][perm]
    edge_attr_s = edge_attr[perm]

    pad_e = e_pad - n_edges
    # Padded edge rows: gather ids -> node 0 (harmless), scatter ids -> n_pad (out of range,
    # dropped by segment_sum), so padding never contaminates real nodes.
    src_g = jnp.pad(src_s, (0, pad_e)) if pad_e else src_s
    tgt_g = jnp.pad(tgt_s, (0, pad_e)) if pad_e else tgt_s
    tgt_scatter = jnp.pad(tgt_s, (0, pad_e), constant_values=n_pad) if pad_e else tgt_s

    x_p = jnp.pad(x, ((0, n_pad - n_nodes), (0, 0))) if n_pad != n_nodes else x
    ea_p = jnp.pad(edge_attr_s, ((0, pad_e), (0, 0))) if pad_e else edge_attr_s

    # ---- Encoder (node_type=None -> single node MLP branch); latents stored in bf16 ----
    # TODO(synk): dual-branch node_fn / node_fn_b routing (node_type + removal_indices masking)
    #             is not exercised here; this implements the node_type=None path.
    node_latent = apply_n(params["enc_node"], [x_p], out_dtype=latent_dtype)
    edge_latent = apply_e(params["enc_edge"], [ea_p], out_dtype=latent_dtype)

    # ---- Processor: message passing (PyG flow 'source_to_target', aggr='add') ----
    for step in params["processor"]:
        # message m = edge_fn(cat([x_i(target), x_j(source), e])); cat happens in VMEM (no HBM concat)
        msgs = apply_e(step["edge_fn"],
                       [node_latent[tgt_g], node_latent[src_g], edge_latent],
                       out_dtype=latent_dtype)

        # scatter-add aggregation onto target nodes (sorted segment ids, bf16 traffic)
        # TODO(synk): in-kernel segment reduction / gather via scalar-prefetched segment offsets
        #             is not implemented; this round-trips msgs/aggr through HBM in XLA.
        aggr = jax.ops.segment_sum(msgs, tgt_scatter, num_segments=n_pad,
                                   indices_are_sorted=True)

        # node update: node_fn(cat([aggr, x])); residual fused, pre-residual kept for edge update
        x_upd, x_out = apply_n(step["node_fn"], [aggr, node_latent],
                               residual=node_latent, residual_mode="both",
                               out_dtype=latent_dtype)

        # edge update: edge_update_fn(cat([x_upd[src], x_upd[tgt], e])); residual fused
        edge_latent = apply_e(step["edge_update_fn"],
                              [x_upd[src_g], x_upd[tgt_g], edge_latent],
                              residual=edge_latent, residual_mode="add",
                              out_dtype=latent_dtype)
        node_latent = x_out

    # ---- Decoders (lane-dense output slab in-kernel; rows sliced + residual added here) ----
    node_pred = apply_n(params["node_dec"], [node_latent], out_dtype=jnp.float32)[:n_nodes]
    edge_pred = apply_e(params["edge_dec"], [edge_latent], out_dtype=jnp.float32)[:n_edges]
    edge_pred = edge_pred[inv_perm]          # undo the edge sort

    if residual:
        node_pred = node_pred + node_residual
        edge_pred = edge_pred + edge_residual
    return node_pred, edge_pred


# ----------------------------------------------------------------------------
# Demo / smoke test
# ----------------------------------------------------------------------------
if __name__ == "__main__":
    NUM_NODES = 64
    NUM_EDGES = 128
    N_TIME_STEPS = 2            # n_eff = 1 -> node dynamic vars = 4, edge dynamic vars = 6
    NNODE_IN = 8                # 4 static + 4 dynamic
    NEDGE_IN = 10               # 4 static + 6 dynamic
    NNODE_OUT = 2
    NEDGE_OUT = 2
    LATENT = 128                # lane-dense latent/hidden (multiple of 128)
    HIDDEN = 128
    NMLP_LAYERS = 2
    N_MP_STEPS = 2
    RESIDUAL = True
    USE_BF16 = True

    key = jax.random.PRNGKey(0)
    kp, kx, ke, ki = jax.random.split(key, 4)

    params = init_params(kp, NNODE_IN, NNODE_OUT, NEDGE_IN, NEDGE_OUT,
                         LATENT, N_MP_STEPS, NMLP_LAYERS, HIDDEN,
                         w_dtype=jnp.bfloat16 if USE_BF16 else jnp.float32)

    x = jax.random.normal(kx, (NUM_NODES, NNODE_IN), jnp.float32)
    edge_attr = jax.random.normal(ke, (NUM_EDGES, NEDGE_IN), jnp.float32)
    edge_index = jax.random.randint(ki, (2, NUM_EDGES), 0, NUM_NODES, dtype=jnp.int32)

    fwd = jax.jit(functools.partial(encode_process_decode,
                                    residual=RESIDUAL, n_time_steps=N_TIME_STEPS,
                                    use_bf16=USE_BF16))
    node_pred, edge_pred = fwd(params, x, edge_index, edge_attr)

    jax.block_until_ready(node_pred)
    jax.block_until_ready(edge_pred)

    assert node_pred.shape == (NUM_NODES, NNODE_OUT)
    assert edge_pred.shape == (NUM_EDGES, NEDGE_OUT)
    assert bool(jnp.all(jnp.isfinite(node_pred))) and bool(jnp.all(jnp.isfinite(edge_pred)))
    print("KERNEL_OK")
</pallas_src>

<mosaic_0001>
module attributes {stable_mosaic.version = 11 : i64} {
  func.func @_mlp_kernel(%arg0: i32, %arg1: memref<32x8xf32, #tpu.memory_space<vmem>>, %arg2: memref<8x128xbf16, #tpu.memory_space<vmem>>, %arg3: memref<1x128xf32, #tpu.memory_space<vmem>>, %arg4: memref<128x128xbf16, #tpu.memory_space<vmem>>, %arg5: memref<1x128xf32, #tpu.memory_space<vmem>>, %arg6: memref<128x128xbf16, #tpu.memory_space<vmem>>, %arg7: memref<1x128xf32, #tpu.memory_space<vmem>>, %arg8: memref<1x128xf32, #tpu.memory_space<vmem>>, %arg9: memref<1x128xf32, #tpu.memory_space<vmem>>, %arg10: memref<32x128xbf16, #tpu.memory_space<vmem>>) attributes {dimension_semantics = [#tpu.dimension_semantics<parallel>], iteration_bounds = array<i64: 2>, scalar_prefetch = 0 : i64, scratch_operands = 0 : i64, tpu.core_type = #tpu.core_type<tc>, window_params = [{transform_indices = @transform_0, window_bounds = array<i64: 32, 8>}, {pipeline_mode = #tpu.pipeline_mode<synchronous>, transform_indices = @transform_1, window_bounds = array<i64: 8, 128>}, {pipeline_mode = #tpu.pipeline_mode<synchronous>, transform_indices = @transform_2, window_bounds = array<i64: 1, 128>}, {pipeline_mode = #tpu.pipeline_mode<synchronous>, transform_indices = @transform_3, window_bounds = array<i64: 128, 128>}, {pipeline_mode = #tpu.pipeline_mode<synchronous>, transform_indices = @transform_4, window_bounds = array<i64: 1, 128>}, {pipeline_mode = #tpu.pipeline_mode<synchronous>, transform_indices = @transform_5, window_bounds = array<i64: 128, 128>}, {pipeline_mode = #tpu.pipeline_mode<synchronous>, transform_indices = @transform_6, window_bounds = array<i64: 1, 128>}, {pipeline_mode = #tpu.pipeline_mode<synchronous>, transform_indices = @transform_7, window_bounds = array<i64: 1, 128>}, {pipeline_mode = #tpu.pipeline_mode<synchronous>, transform_indices = @transform_8, window_bounds = array<i64: 1, 128>}, {transform_indices = @transform_9, window_bounds = array<i64: 32, 128>}]} {
    %c0 = arith.constant 0 : index
    %c0_0 = arith.constant 0 : index
    %0 = vector.load %arg1[%c0, %c0_0] : memref<32x8xf32, #tpu.memory_space<vmem>>, vector<32x8xf32>
    %1 = arith.truncf %0 : vector<32x8xf32> to vector<32x8xbf16>
    %c0_1 = arith.constant 0 : index
    %c0_2 = arith.constant 0 : index
    %2 = vector.load %arg2[%c0_1, %c0_2] : memref<8x128xbf16, #tpu.memory_space<vmem>>, vector<8x128xbf16>
    %c0_3 = arith.constant 0 : index
    %c0_4 = arith.constant 0 : index
    %3 = vector.load %arg3[%c0_3, %c0_4] : memref<1x128xf32, #tpu.memory_space<vmem>>, vector<1x128xf32>
    %cst = arith.constant dense<0.000000e+00> : vector<32x128xf32>
    %4 = tpu.matmul %1, %2, %cst {dimension_numbers = #tpu.dot_dimension_numbers<[1], [0], [0], [1], [0, 0, 1, 1], [], []>} : vector<32x8xbf16>, vector<8x128xbf16>, vector<32x128xf32> -> vector<32x128xf32>
    %5 = vector.broadcast %3 : vector<1x128xf32> to vector<32x128xf32>
    %6 = arith.addf %4, %5 : vector<32x128xf32>
    %cst_5 = arith.constant 0.000000e+00 : f32
    %7 = vector.broadcast %cst_5 : f32 to vector<32x128xf32>
    %8 = arith.maximumf %6, %7 : vector<32x128xf32>
    %c0_6 = arith.constant 0 : index
    %c0_7 = arith.constant 0 : index
    %9 = vector.load %arg4[%c0_6, %c0_7] : memref<128x128xbf16, #tpu.memory_space<vmem>>, vector<128x128xbf16>
    %c0_8 = arith.constant 0 : index
    %c0_9 = arith.constant 0 : index
    %10 = vector.load %arg5[%c0_8, %c0_9] : memref<1x128xf32, #tpu.memory_space<vmem>>, vector<1x128xf32>
    %11 = arith.truncf %8 : vector<32x128xf32> to vector<32x128xbf16>
    %cst_10 = arith.constant dense<0.000000e+00> : vector<32x128xf32>
    %12 = tpu.matmul %11, %9, %cst_10 {dimension_numbers = #tpu.dot_dimension_numbers<[1], [0], [0], [1], [0, 0, 1, 1], [], []>} : vector<32x128xbf16>, vector<128x128xbf16>, vector<32x128xf32> -> vector<32x128xf32>
    %13 = vector.broadcast %10 : vector<1x128xf32> to vector<32x128xf32>
    %14 = arith.addf %12, %13 : vector<32x128xf32>
    %cst_11 = arith.constant 0.000000e+00 : f32
    %15 = vector.broadcast %cst_11 : f32 to vector<32x128xf32>
    %16 = arith.maximumf %14, %15 : vector<32x128xf32>
    %c0_12 = arith.constant 0 : index
    %c0_13 = arith.constant 0 : index
    %17 = vector.load %arg6[%c0_12, %c0_13] : memref<128x128xbf16, #tpu.memory_space<vmem>>, vector<128x128xbf16>
    %c0_14 = arith.constant 0 : index
    %c0_15 = arith.constant 0 : index
    %18 = vector.load %arg7[%c0_14, %c0_15] : memref<1x128xf32, #tpu.memory_space<vmem>>, vector<1x128xf32>
    %19 = arith.truncf %16 : vector<32x128xf32> to vector<32x128xbf16>
    %cst_16 = arith.constant dense<0.000000e+00> : vector<32x128xf32>
    %20 = tpu.matmul %19, %17, %cst_16 {dimension_numbers = #tpu.dot_dimension_numbers<[1], [0], [0], [1], [0, 0, 1, 1], [], []>} : vector<32x128xbf16>, vector<128x128xbf16>, vector<32x128xf32> -> vector<32x128xf32>
    %21 = vector.broadcast %18 : vector<1x128xf32> to vector<32x128xf32>
    %22 = arith.addf %20, %21 : vector<32x128xf32>
    %c0_17 = arith.constant 0 : index
    %c0_18 = arith.constant 0 : index
    %23 = vector.load %arg8[%c0_17, %c0_18] : memref<1x128xf32, #tpu.memory_space<vmem>>, vector<1x128xf32>
    %c0_19 = arith.constant 0 : index
    %c0_20 = arith.constant 0 : index
    %24 = vector.load %arg9[%c0_19, %c0_20] : memref<1x128xf32, #tpu.memory_space<vmem>>, vector<1x128xf32>
    %cst_21 = arith.constant dense<0.000000e+00> : vector<32xf32>
    %25 = vector.multi_reduction <add>, %22, %cst_21 [1] : vector<32x128xf32> to vector<32xf32>
    %26 = vector.shape_cast %25 : vector<32xf32> to vector<32x1xf32>
    %cst_22 = arith.constant 1.280000e+02 : f32
    %27 = vector.broadcast %cst_22 : f32 to vector<32x1xf32>
    %28 = arith.divf %26, %27 : vector<32x1xf32>
    %29 = vector.broadcast %28 : vector<32x1xf32> to vector<32x128xf32>
    %30 = arith.subf %22, %29 : vector<32x128xf32>
    %31 = arith.mulf %30, %30 : vector<32x128xf32>
    %cst_23 = arith.constant dense<0.000000e+00> : vector<32xf32>
    %32 = vector.multi_reduction <add>, %31, %cst_23 [1] : vector<32x128xf32> to vector<32xf32>
    %33 = vector.shape_cast %32 : vector<32xf32> to vector<32x1xf32>
    %cst_24 = arith.constant 1.280000e+02 : f32
    %34 = vector.broadcast %cst_24 : f32 to vector<32x1xf32>
    %35 = arith.divf %33, %34 : vector<32x1xf32>
    %36 = vector.broadcast %28 : vector<32x1xf32> to vector<32x128xf32>
    %37 = arith.subf %22, %36 : vector<32x128xf32>
    %cst_25 = arith.constant 9.99999974E-6 : f32
    %38 = vector.broadcast %cst_25 : f32 to vector<32x1xf32>
    %39 = arith.addf %35, %38 : vector<32x1xf32>
    %40 = math.rsqrt %39 : vector<32x1xf32>
    %41 = vector.broadcast %40 : vector<32x1xf32> to vector<32x128xf32>
    %42 = arith.mulf %37, %41 : vector<32x128xf32>
    %43 = vector.broadcast %23 : vector<1x128xf32> to vector<32x128xf32>
    %44 = arith.mulf %42, %43 : vector<32x128xf32>
    %45 = vector.broadcast %24 : vector<1x128xf32> to vector<32x128xf32>
    %46 = arith.addf %44, %45 : vector<32x128xf32>
    %47 = arith.truncf %46 : vector<32x128xf32> to vector<32x128xbf16>
    %c0_26 = arith.constant 0 : index
    %c0_27 = arith.constant 0 : index
    %48 = vector.load %arg10[%c0_26, %c0_27] : memref<32x128xbf16, #tpu.memory_space<vmem>>, vector<32x128xbf16>
    tpu.vector_store %arg10[%c0_26, %c0_27], %47 {strides = array<i32>} : memref<32x128xbf16, #tpu.memory_space<vmem>>, vector<32x128xbf16>,
    return
  }
  func.func @transform_0(%arg0: i32) -> (i32, i32) {
    %c0_i32 = arith.constant 0 : i32
    %c0_i32_0 = arith.constant 0 : i32
    return %arg0, %c0_i32 : i32, i32
  }
  func.func @transform_1(%arg0: i32) -> (i32, i32) {
    %c0_i32 = arith.constant 0 : i32
    %c0_i32_0 = arith.constant 0 : i32
    %c0_i32_1 = arith.constant 0 : i32
    return %c0_i32, %c0_i32_0 : i32, i32
  }
  func.func @transform_2(%arg0: i32) -> (i32, i32) {
    %c0_i32 = arith.constant 0 : i32
    %c0_i32_0 = arith.constant 0 : i32
    %c0_i32_1 = arith.constant 0 : i32
    return %c0_i32, %c0_i32_0 : i32, i32
  }
  func.func @transform_3(%arg0: i32) -> (i32, i32) {
    %c0_i32 = arith.constant 0 : i32
    %c0_i32_0 = arith.constant 0 : i32
    %c0_i32_1 = arith.constant 0 : i32
    return %c0_i32, %c0_i32_0 : i32, i32
  }
  func.func @transform_4(%arg0: i32) -> (i32, i32) {
    %c0_i32 = arith.constant 0 : i32
    %c0_i32_0 = arith.constant 0 : i32
    %c0_i32_1 = arith.constant 0 : i32
    return %c0_i32, %c0_i32_0 : i32, i32
  }
  func.func @transform_5(%arg0: i32) -> (i32, i32) {
    %c0_i32 = arith.constant 0 : i32
    %c0_i32_0 = arith.constant 0 : i32
    %c0_i32_1 = arith.constant 0 : i32
    return %c0_i32, %c0_i32_0 : i32, i32
  }
  func.func @transform_6(%arg0: i32) -> (i32, i32) {
    %c0_i32 = arith.constant 0 : i32
    %c0_i32_0 = arith.constant 0 : i32
    %c0_i32_1 = arith.constant 0 : i32
    return %c0_i32, %c0_i32_0 : i32, i32
  }
  func.func @transform_7(%arg0: i32) -> (i32, i32) {
    %c0_i32 = arith.constant 0 : i32
    %c0_i32_0 = arith.constant 0 : i32
    %c0_i32_1 = arith.constant 0 : i32
    return %c0_i32, %c0_i32_0 : i32, i32
  }
  func.func @transform_8(%arg0: i32) -> (i32, i32) {
    %c0_i32 = arith.constant 0 : i32
    %c0_i32_0 = arith.constant 0 : i32
    %c0_i32_1 = arith.constant 0 : i32
    return %c0_i32, %c0_i32_0 : i32, i32
  }
  func.func @transform_9(%arg0: i32) -> (i32, i32) {
    %c0_i32 = arith.constant 0 : i32
    %c0_i32_0 = arith.constant 0 : i32
    return %arg0, %c0_i32 : i32, i32
  }
}

module attributes {stable_mosaic.version = 11 : i64} {
  func.func @_mlp_kernel(%arg0: i32, %arg1: memref<64x10xf32, #tpu.memory_space<vmem>>, %arg2: memref<10x128xbf16, #tpu.memory_space<vmem>>, %arg3: memref<1x128xf32, #tpu.memory_space<vmem>>, %arg4: memref<128x128xbf16, #tpu.memory_space<vmem>>, %arg5: memref<1x128xf32, #tpu.memory_space<vmem>>, %arg6: memref<128x128xbf16, #tpu.memory_space<vmem>>, %arg7: memref<1x128xf32, #tpu.memory_space<vmem>>, %arg8: memref<1x128xf32, #tpu.memory_space<vmem>>, %arg9: memref<1x128xf32, #tpu.memory_space<vmem>>, %arg10: memref<64x128xbf16, #tpu.memory_space<vmem>>) attributes {dimension_semantics = [#tpu.dimension_semantics<parallel>], iteration_bounds = array<i64: 2>, scalar_prefetch = 0 : i64, scratch_operands = 0 : i64, tpu.core_type = #tpu.core_type<tc>, window_params = [{transform_indices = @transform_0, window_bounds = array<i64: 64, 10>}, {pipeline_mode = #tpu.pipeline_mode<synchronous>, transform_indices = @transform_1, window_bounds = array<i64: 10, 128>}, {pipeline_mode = #tpu.pipeline_mode<synchronous>, transform_indices = @transform_2, window_bounds = array<i64: 1, 128>}, {pipeline_mode = #tpu.pipeline_mode<synchronous>, transform_indices = @transform_3, window_bounds = array<i64: 128, 128>}, {pipeline_mode = #tpu.pipeline_mode<synchronous>, transform_indices = @transform_4, window_bounds = array<i64: 1, 128>}, {pipeline_mode = #tpu.pipeline_mode<synchronous>, transform_indices = @transform_5, window_bounds = array<i64: 128, 128>}, {pipeline_mode = #tpu.pipeline_mode<synchronous>, transform_indices = @transform_6, window_bounds = array<i64: 1, 128>}, {pipeline_mode = #tpu.pipeline_mode<synchronous>, transform_indices = @transform_7, window_bounds = array<i64: 1, 128>}, {pipeline_mode = #tpu.pipeline_mode<synchronous>, transform_indices = @transform_8, window_bounds = array<i64: 1, 128>}, {transform_indices = @transform_9, window_bounds = array<i64: 64, 128>}]} {
    %c0 = arith.constant 0 : index
    %c0_0 = arith.constant 0 : index
    %0 = vector.load %arg1[%c0, %c0_0] : memref<64x10xf32, #tpu.memory_space<vmem>>, vector<64x10xf32>
    %1 = arith.truncf %0 : vector<64x10xf32> to vector<64x10xbf16>
    %c0_1 = arith.constant 0 : index
    %c0_2 = arith.constant 0 : index
    %2 = vector.load %arg2[%c0_1, %c0_2] : memref<10x128xbf16, #tpu.memory_space<vmem>>, vector<10x128xbf16>
    %c0_3 = arith.constant 0 : index
    %c0_4 = arith.constant 0 : index
    %3 = vector.load %arg3[%c0_3, %c0_4] : memref<1x128xf32, #tpu.memory_space<vmem>>, vector<1x128xf32>
    %cst = arith.constant dense<0.000000e+00> : vector<64x128xf32>
    %4 = tpu.matmul %1, %2, %cst {dimension_numbers = #tpu.dot_dimension_numbers<[1], [0], [0], [1], [0, 0, 1, 1], [], []>} : vector<64x10xbf16>, vector<10x128xbf16>, vector<64x128xf32> -> vector<64x128xf32>
    %5 = vector.broadcast %3 : vector<1x128xf32> to vector<64x128xf32>
    %6 = arith.addf %4, %5 : vector<64x128xf32>
    %cst_5 = arith.constant 0.000000e+00 : f32
    %7 = vector.broadcast %cst_5 : f32 to vector<64x128xf32>
    %8 = arith.maximumf %6, %7 : vector<64x128xf32>
    %c0_6 = arith.constant 0 : index
    %c0_7 = arith.constant 0 : index
    %9 = vector.load %arg4[%c0_6, %c0_7] : memref<128x128xbf16, #tpu.memory_space<vmem>>, vector<128x128xbf16>
    %c0_8 = arith.constant 0 : index
    %c0_9 = arith.constant 0 : index
    %10 = vector.load %arg5[%c0_8, %c0_9] : memref<1x128xf32, #tpu.memory_space<vmem>>, vector<1x128xf32>
    %11 = arith.truncf %8 : vector<64x128xf32> to vector<64x128xbf16>
    %cst_10 = arith.constant dense<0.000000e+00> : vector<64x128xf32>
    %12 = tpu.matmul %11, %9, %cst_10 {dimension_numbers = #tpu.dot_dimension_numbers<[1], [0], [0], [1], [0, 0, 1, 1], [], []>} : vector<64x128xbf16>, vector<128x128xbf16>, vector<64x128xf32> -> vector<64x128xf32>
    %13 = vector.broadcast %10 : vector<1x128xf32> to vector<64x128xf32>
    %14 = arith.addf %12, %13 : vector<64x128xf32>
    %cst_11 = arith.constant 0.000000e+00 : f32
    %15 = vector.broadcast %cst_11 : f32 to vector<64x128xf32>
    %16 = arith.maximumf %14, %15 : vector<64x128xf32>
    %c0_12 = arith.constant 0 : index
    %c0_13 = arith.constant 0 : index
    %17 = vector.load %arg6[%c0_12, %c0_13] : memref<128x128xbf16, #tpu.memory_space<vmem>>, vector<128x128xbf16>
    %c0_14 = arith.constant 0 : index
    %c0_15 = arith.constant 0 : index
    %18 = vector.load %arg7[%c0_14, %c0_15] : memref<1x128xf32, #tpu.memory_space<vmem>>, vector<1x128xf32>
    %19 = arith.truncf %16 : vector<64x128xf32> to vector<64x128xbf16>
    %cst_16 = arith.constant dense<0.000000e+00> : vector<64x128xf32>
    %20 = tpu.matmul %19, %17, %cst_16 {dimension_numbers = #tpu.dot_dimension_numbers<[1], [0], [0], [1], [0, 0, 1, 1], [], []>} : vector<64x128xbf16>, vector<128x128xbf16>, vector<64x128xf32> -> vector<64x128xf32>
    %21 = vector.broadcast %18 : vector<1x128xf32> to vector<64x128xf32>
    %22 = arith.addf %20, %21 : vector<64x128xf32>
    %c0_17 = arith.constant 0 : index
    %c0_18 = arith.constant 0 : index
    %23 = vector.load %arg8[%c0_17, %c0_18] : memref<1x128xf32, #tpu.memory_space<vmem>>, vector<1x128xf32>
    %c0_19 = arith.constant 0 : index
    %c0_20 = arith.constant 0 : index
    %24 = vector.load %arg9[%c0_19, %c0_20] : memref<1x128xf32, #tpu.memory_space<vmem>>, vector<1x128xf32>
    %cst_21 = arith.constant dense<0.000000e+00> : vector<64xf32>
    %25 = vector.multi_reduction <add>, %22, %cst_21 [1] : vector<64x128xf32> to vector<64xf32>
    %26 = vector.shape_cast %25 : vector<64xf32> to vector<64x1xf32>
    %cst_22 = arith.constant 1.280000e+02 : f32
    %27 = vector.broadcast %cst_22 : f32 to vector<64x1xf32>
    %28 = arith.divf %26, %27 : vector<64x1xf32>
    %29 = vector.broadcast %28 : vector<64x1xf32> to vector<64x128xf32>
    %30 = arith.subf %22, %29 : vector<64x128xf32>
    %31 = arith.mulf %30, %30 : vector<64x128xf32>
    %cst_23 = arith.constant dense<0.000000e+00> : vector<64xf32>
    %32 = vector.multi_reduction <add>, %31, %cst_23 [1] : vector<64x128xf32> to vector<64xf32>
    %33 = vector.shape_cast %32 : vector<64xf32> to vector<64x1xf32>
    %cst_24 = arith.constant 1.280000e+02 : f32
    %34 = vector.broadcast %cst_24 : f32 to vector<64x1xf32>
    %35 = arith.divf %33, %34 : vector<64x1xf32>
    %36 = vector.broadcast %28 : vector<64x1xf32> to vector<64x128xf32>
    %37 = arith.subf %22, %36 : vector<64x128xf32>
    %cst_25 = arith.constant 9.99999974E-6 : f32
    %38 = vector.broadcast %cst_25 : f32 to vector<64x1xf32>
    %39 = arith.addf %35, %38 : vector<64x1xf32>
    %40 = math.rsqrt %39 : vector<64x1xf32>
    %41 = vector.broadcast %40 : vector<64x1xf32> to vector<64x128xf32>
    %42 = arith.mulf %37, %41 : vector<64x128xf32>
    %43 = vector.broadcast %23 : vector<1x128xf32> to vector<64x128xf32>
    %44 = arith.mulf %42, %43 : vector<64x128xf32>
    %45 = vector.broadcast %24 : vector<1x128xf32> to vector<64x128xf32>
    %46 = arith.addf %44, %45 : vector<64x128xf32>
    %47 = arith.truncf %46 : vector<64x128xf32> to vector<64x128xbf16>
    %c0_26 = arith.constant 0 : index
    %c0_27 = arith.constant 0 : index
    %48 = vector.load %arg10[%c0_26, %c0_27] : memref<64x128xbf16, #tpu.memory_space<vmem>>, vector<64x128xbf16>
    tpu.vector_store %arg10[%c0_26, %c0_27], %47 {strides = array<i32>} : memref<64x128xbf16, #tpu.memory_space<vmem>>, vector<64x128xbf16>,
    return
  }
  func.func @transform_0(%arg0: i32) -> (i32, i32) {
    %c0_i32 = arith.constant 0 : i32
    %c0_i32_0 = arith.constant 0 : i32
    return %arg0, %c0_i32 : i32, i32
  }
  func.func @transform_1(%arg0: i32) -> (i32, i32) {
    %c0_i32 = arith.constant 0 : i32
    %c0_i32_0 = arith.constant 0 : i32
    %c0_i32_1 = arith.constant 0 : i32
    return %c0_i32, %c0_i32_0 : i32, i32
  }
  func.func @transform_2(%arg0: i32) -> (i32, i32) {
    %c0_i32 = arith.constant 0 : i32
    %c0_i32_0 = arith.constant 0 : i32
    %c0_i32_1 = arith.constant 0 : i32
    return %c0_i32, %c0_i32_0 : i32, i32
  }
  func.func @transform_3(%arg0: i32) -> (i32, i32) {
    %c0_i32 = arith.constant 0 : i32
    %c0_i32_0 = arith.constant 0 : i32
    %c0_i32_1 = arith.constant 0 : i32
    return %c0_i32, %c0_i32_0 : i32, i32
  }
  func.func @transform_4(%arg0: i32) -> (i32, i32) {
    %c0_i32 = arith.constant 0 : i32
    %c0_i32_0 = arith.constant 0 : i32
    %c0_i32_1 = arith.constant 0 : i32
    return %c0_i32, %c0_i32_0 : i32, i32
  }
  func.func @transform_5(%arg0: i32) -> (i32, i32) {
    %c0_i32 = arith.constant 0 : i32
    %c0_i32_0 = arith.constant 0 : i32
    %c0_i32_1 = arith.constant 0 : i32
    return %c0_i32, %c0_i32_0 : i32, i32
  }
  func.func @transform_6(%arg0: i32) -> (i32, i32) {
    %c0_i32 = arith.constant 0 : i32
    %c0_i32_0 = arith.constant 0 : i32
    %c0_i32_1 = arith.constant 0 : i32
    return %c0_i32, %c0_i32_0 : i32, i32
  }
  func.func @transform_7(%arg0: i32) -> (i32, i32) {
    %c0_i32 = arith.constant 0 : i32
    %c0_i32_0 = arith.constant 0 : i32
    %c0_i32_1 = arith.constant 0 : i32
    return %c0_i32, %c0_i32_0 : i32, i32
  }
  func.func @transform_8(%arg0: i32) -> (i32, i32) {
    %c0_i32 = arith.constant 0 : i32
    %c0_i32_0 = arith.constant 0 : i32
    %c0_i32_1 = arith.constant 0 : i32
    return %c0_i32, %c0_i32_0 : i32, i32
  }
  func.func @transform_9(%arg0: i32) -> (i32, i32) {
    %c0_i32 = arith.constant 0 : i32
    %c0_i32_0 = arith.constant 0 : i32
    return %arg0, %c0_i32 : i32, i32
  }
}

module attributes {stable_mosaic.version = 11 : i64} {
  func.func @_mlp_kernel(%arg0: i32, %arg1: memref<64x128xbf16, #tpu.memory_space<vmem>>, %arg2: memref<64x128xbf16, #tpu.memory_space<vmem>>, %arg3: memref<64x128xbf16, #tpu.memory_space<vmem>>, %arg4: memref<384x128xbf16, #tpu.memory_space<vmem>>, %arg5: memref<1x128xf32, #tpu.memory_space<vmem>>, %arg6: memref<128x128xbf16, #tpu.memory_space<vmem>>, %arg7: memref<1x128xf32, #tpu.memory_space<vmem>>, %arg8: memref<128x128xbf16, #tpu.memory_space<vmem>>, %arg9: memref<1x128xf32, #tpu.memory_space<vmem>>, %arg10: memref<1x128xf32, #tpu.memory_space<vmem>>, %arg11: memref<1x128xf32, #tpu.memory_space<vmem>>, %arg12: memref<64x128xbf16, #tpu.memory_space<vmem>>) attributes {dimension_semantics = [#tpu.dimension_semantics<parallel>], iteration_bounds = array<i64: 2>, scalar_prefetch = 0 : i64, scratch_operands = 0 : i64, tpu.core_type = #tpu.core_type<tc>, window_params = [{transform_indices = @transform_0, window_bounds = array<i64: 64, 128>}, {transform_indices = @transform_1, window_bounds = array<i64: 64, 128>}, {transform_indices = @transform_2, window_bounds = array<i64: 64, 128>}, {pipeline_mode = #tpu.pipeline_mode<synchronous>, transform_indices = @transform_3, window_bounds = array<i64: 384, 128>}, {pipeline_mode = #tpu.pipeline_mode<synchronous>, transform_indices = @transform_4, window_bounds = array<i64: 1, 128>}, {pipeline_mode = #tpu.pipeline_mode<synchronous>, transform_indices = @transform_5, window_bounds = array<i64: 128, 128>}, {pipeline_mode = #tpu.pipeline_mode<synchronous>, transform_indices = @transform_6, window_bounds = array<i64: 1, 128>}, {pipeline_mode = #tpu.pipeline_mode<synchronous>, transform_indices = @transform_7, window_bounds = array<i64: 128, 128>}, {pipeline_mode = #tpu.pipeline_mode<synchronous>, transform_indices = @transform_8, window_bounds = array<i64: 1, 128>}, {pipeline_mode = #tpu.pipeline_mode<synchronous>, transform_indices = @transform_9, window_bounds = array<i64: 1, 128>}, {pipeline_mode = #tpu.pipeline_mode<synchronous>, transform_indices = @transform_10, window_bounds = array<i64: 1, 128>}, {transform_indices = @transform_11, window_bounds = array<i64: 64, 128>}]} {
    %c0 = arith.constant 0 : index
    %c0_0 = arith.constant 0 : index
    %0 = vector.load %arg1[%c0, %c0_0] : memref<64x128xbf16, #tpu.memory_space<vmem>>, vector<64x128xbf16>
    %c0_1 = arith.constant 0 : index
    %c0_2 = arith.constant 0 : index
    %1 = vector.load %arg2[%c0_1, %c0_2] : memref<64x128xbf16, #tpu.memory_space<vmem>>, vector<64x128xbf16>
    %c0_3 = arith.constant 0 : index
    %c0_4 = arith.constant 0 : index
    %2 = vector.load %arg3[%c0_3, %c0_4] : memref<64x128xbf16, #tpu.memory_space<vmem>>, vector<64x128xbf16>
    %3 = tpu.concatenate %0, %1, %2 in 1 : vector<64x128xbf16>, vector<64x128xbf16>, vector<64x128xbf16> -> vector<64x384xbf16>
    %c0_5 = arith.constant 0 : index
    %c0_6 = arith.constant 0 : index
    %4 = vector.load %arg4[%c0_5, %c0_6] : memref<384x128xbf16, #tpu.memory_space<vmem>>, vector<384x128xbf16>
    %c0_7 = arith.constant 0 : index
    %c0_8 = arith.constant 0 : index
    %5 = vector.load %arg5[%c0_7, %c0_8] : memref<1x128xf32, #tpu.memory_space<vmem>>, vector<1x128xf32>
    %cst = arith.constant dense<0.000000e+00> : vector<64x128xf32>
    %6 = tpu.matmul %3, %4, %cst {dimension_numbers = #tpu.dot_dimension_numbers<[1], [0], [0], [1], [0, 0, 1, 1], [], []>} : vector<64x384xbf16>, vector<384x128xbf16>, vector<64x128xf32> -> vector<64x128xf32>
    %7 = vector.broadcast %5 : vector<1x128xf32> to vector<64x128xf32>
    %8 = arith.addf %6, %7 : vector<64x128xf32>
    %cst_9 = arith.constant 0.000000e+00 : f32
    %9 = vector.broadcast %cst_9 : f32 to vector<64x128xf32>
    %10 = arith.maximumf %8, %9 : vector<64x128xf32>
    %c0_10 = arith.constant 0 : index
    %c0_11 = arith.constant 0 : index
    %11 = vector.load %arg6[%c0_10, %c0_11] : memref<128x128xbf16, #tpu.memory_space<vmem>>, vector<128x128xbf16>
    %c0_12 = arith.constant 0 : index
    %c0_13 = arith.constant 0 : index
    %12 = vector.load %arg7[%c0_12, %c0_13] : memref<1x128xf32, #tpu.memory_space<vmem>>, vector<1x128xf32>
    %13 = arith.truncf %10 : vector<64x128xf32> to vector<64x128xbf16>
    %cst_14 = arith.constant dense<0.000000e+00> : vector<64x128xf32>
    %14 = tpu.matmul %13, %11, %cst_14 {dimension_numbers = #tpu.dot_dimension_numbers<[1], [0], [0], [1], [0, 0, 1, 1], [], []>} : vector<64x128xbf16>, vector<128x128xbf16>, vector<64x128xf32> -> vector<64x128xf32>
    %15 = vector.broadcast %12 : vector<1x128xf32> to vector<64x128xf32>
    %16 = arith.addf %14, %15 : vector<64x128xf32>
    %cst_15 = arith.constant 0.000000e+00 : f32
    %17 = vector.broadcast %cst_15 : f32 to vector<64x128xf32>
    %18 = arith.maximumf %16, %17 : vector<64x128xf32>
    %c0_16 = arith.constant 0 : index
    %c0_17 = arith.constant 0 : index
    %19 = vector.load %arg8[%c0_16, %c0_17] : memref<128x128xbf16, #tpu.memory_space<vmem>>, vector<128x128xbf16>
    %c0_18 = arith.constant 0 : index
    %c0_19 = arith.constant 0 : index
    %20 = vector.load %arg9[%c0_18, %c0_19] : memref<1x128xf32, #tpu.memory_space<vmem>>, vector<1x128xf32>
    %21 = arith.truncf %18 : vector<64x128xf32> to vector<64x128xbf16>
    %cst_20 = arith.constant dense<0.000000e+00> : vector<64x128xf32>
    %22 = tpu.matmul %21, %19, %cst_20 {dimension_numbers = #tpu.dot_dimension_numbers<[1], [0], [0], [1], [0, 0, 1, 1], [], []>} : vector<64x128xbf16>, vector<128x128xbf16>, vector<64x128xf32> -> vector<64x128xf32>
    %23 = vector.broadcast %20 : vector<1x128xf32> to vector<64x128xf32>
    %24 = arith.addf %22, %23 : vector<64x128xf32>
    %c0_21 = arith.constant 0 : index
    %c0_22 = arith.constant 0 : index
    %25 = vector.load %arg10[%c0_21, %c0_22] : memref<1x128xf32, #tpu.memory_space<vmem>>, vector<1x128xf32>
    %c0_23 = arith.constant 0 : index
    %c0_24 = arith.constant 0 : index
    %26 = vector.load %arg11[%c0_23, %c0_24] : memref<1x128xf32, #tpu.memory_space<vmem>>, vector<1x128xf32>
    %cst_25 = arith.constant dense<0.000000e+00> : vector<64xf32>
    %27 = vector.multi_reduction <add>, %24, %cst_25 [1] : vector<64x128xf32> to vector<64xf32>
    %28 = vector.shape_cast %27 : vector<64xf32> to vector<64x1xf32>
    %cst_26 = arith.constant 1.280000e+02 : f32
    %29 = vector.broadcast %cst_26 : f32 to vector<64x1xf32>
    %30 = arith.divf %28, %29 : vector<64x1xf32>
    %31 = vector.broadcast %30 : vector<64x1xf32> to vector<64x128xf32>
    %32 = arith.subf %24, %31 : vector<64x128xf32>
    %33 = arith.mulf %32, %32 : vector<64x128xf32>
    %cst_27 = arith.constant dense<0.000000e+00> : vector<64xf32>
    %34 = vector.multi_reduction <add>, %33, %cst_27 [1] : vector<64x128xf32> to vector<64xf32>
    %35 = vector.shape_cast %34 : vector<64xf32> to vector<64x1xf32>
    %cst_28 = arith.constant 1.280000e+02 : f32
    %36 = vector.broadcast %cst_28 : f32 to vector<64x1xf32>
    %37 = arith.divf %35, %36 : vector<64x1xf32>
    %38 = vector.broadcast %30 : vector<64x1xf32> to vector<64x128xf32>
    %39 = arith.subf %24, %38 : vector<64x128xf32>
    %cst_29 = arith.constant 9.99999974E-6 : f32
    %40 = vector.broadcast %cst_29 : f32 to vector<64x1xf32>
    %41 = arith.addf %37, %40 : vector<64x1xf32>
    %42 = math.rsqrt %41 : vector<64x1xf32>
    %43 = vector.broadcast %42 : vector<64x1xf32> to vector<64x128xf32>
    %44 = arith.mulf %39, %43 : vector<64x128xf32>
    %45 = vector.broadcast %25 : vector<1x128xf32> to vector<64x128xf32>
    %46 = arith.mulf %44, %45 : vector<64x128xf32>
    %47 = vector.broadcast %26 : vector<1x128xf32> to vector<64x128xf32>
    %48 = arith.addf %46, %47 : vector<64x128xf32>
    %49 = arith.truncf %48 : vector<64x128xf32> to vector<64x128xbf16>
    %c0_30 = arith.constant 0 : index
    %c0_31 = arith.constant 0 : index
    %50 = vector.load %arg12[%c0_30, %c0_31] : memref<64x128xbf16, #tpu.memory_space<vmem>>, vector<64x128xbf16>
    tpu.vector_store %arg12[%c0_30, %c0_31], %49 {strides = array<i32>} : memref<64x128xbf16, #tpu.memory_space<vmem>>, vector<64x128xbf16>,
    return
  }
  func.func @transform_0(%arg0: i32) -> (i32, i32) {
    %c0_i32 = arith.constant 0 : i32
    %c0_i32_0 = arith.constant 0 : i32
    return %arg0, %c0_i32 : i32, i32
  }
  func.func @transform_1(%arg0: i32) -> (i32, i32) {
    %c0_i32 = arith.constant 0 : i32
    %c0_i32_0 = arith.constant 0 : i32
    return %arg0, %c0_i32 : i32, i32
  }
  func.func @transform_2(%arg0: i32) -> (i32, i32) {
    %c0_i32 = arith.constant 0 : i32
    %c0_i32_0 = arith.constant 0 : i32
    return %arg0, %c0_i32 : i32, i32
  }
  func.func @transform_3(%arg0: i32) -> (i32, i32) {
    %c0_i32 = arith.constant 0 : i32
    %c0_i32_0 = arith.constant 0 : i32
    %c0_i32_1 = arith.constant 0 : i32
    return %c0_i32, %c0_i32_0 : i32, i32
  }
  func.func @transform_4(%arg0: i32) -> (i32, i32) {
    %c0_i32 = arith.constant 0 : i32
    %c0_i32_0 = arith.constant 0 : i32
    %c0_i32_1 = arith.constant 0 : i32
    return %c0_i32, %c0_i32_0 : i32, i32
  }
  func.func @transform_5(%arg0: i32) -> (i32, i32) {
    %c0_i32 = arith.constant 0 : i32
    %c0_i32_0 = arith.constant 0 : i32
    %c0_i32_1 = arith.constant 0 : i32
    return %c0_i32, %c0_i32_0 : i32, i32
  }
  func.func @transform_6(%arg0: i32) -> (i32, i32) {
    %c0_i32 = arith.constant 0 : i32
    %c0_i32_0 = arith.constant 0 : i32
    %c0_i32_1 = arith.constant 0 : i32
    return %c0_i32, %c0_i32_0 : i32, i32
  }
  func.func @transform_7(%arg0: i32) -> (i32, i32) {
    %c0_i32 = arith.constant 0 : i32
    %c0_i32_0 = arith.constant 0 : i32
    %c0_i32_1 = arith.constant 0 : i32
    return %c0_i32, %c0_i32_0 : i32, i32
  }
  func.func @transform_8(%arg0: i32) -> (i32, i32) {
    %c0_i32 = arith.constant 0 : i32
    %c0_i32_0 = arith.constant 0 : i32
    %c0_i32_1 = arith.constant 0 : i32
    return %c0_i32, %c0_i32_0 : i32, i32
  }
  func.func @transform_9(%arg0: i32) -> (i32, i32) {
    %c0_i32 = arith.constant 0 : i32
    %c0_i32_0 = arith.constant 0 : i32
    %c0_i32_1 = arith.constant 0 : i32
    return %c0_i32, %c0_i32_0 : i32, i32
  }
  func.func @transform_10(%arg0: i32) -> (i32, i32) {
    %c0_i32 = arith.constant 0 : i32
    %c0_i32_0 = arith.constant 0 : i32
    %c0_i32_1 = arith.constant 0 : i32
    return %c0_i32, %c0_i32_0 : i32, i32
  }
  func.func @transform_11(%arg0: i32) -> (i32, i32) {
    %c0_i32 = arith.constant 0 : i32
    %c0_i32_0 = arith.constant 0 : i32
    return %arg0, %c0_i32 : i32, i32
  }
}

module attributes {stable_mosaic.version = 11 : i64} {
  func.func @_mlp_kernel(%arg0: i32, %arg1: memref<32x128xbf16, #tpu.memory_space<vmem>>, %arg2: memref<32x128xbf16, #tpu.memory_space<vmem>>, %arg3: memref<256x128xbf16, #tpu.memory_space<vmem>>, %arg4: memref<1x128xf32, #tpu.memory_space<vmem>>, %arg5: memref<128x128xbf16, #tpu.memory_space<vmem>>, %arg6: memref<1x128xf32, #tpu.memory_space<vmem>>, %arg7: memref<128x128xbf16, #tpu.memory_space<vmem>>, %arg8: memref<1x128xf32, #tpu.memory_space<vmem>>, %arg9: memref<1x128xf32, #tpu.memory_space<vmem>>, %arg10: memref<1x128xf32, #tpu.memory_space<vmem>>, %arg11: memref<32x128xbf16, #tpu.memory_space<vmem>>, %arg12: memref<32x128xbf16, #tpu.memory_space<vmem>>, %arg13: memref<32x128xbf16, #tpu.memory_space<vmem>>) attributes {dimension_semantics = [#tpu.dimension_semantics<parallel>], iteration_bounds = array<i64: 2>, scalar_prefetch = 0 : i64, scratch_operands = 0 : i64, tpu.core_type = #tpu.core_type<tc>, window_params = [{transform_indices = @transform_0, window_bounds = array<i64: 32, 128>}, {transform_indices = @transform_1, window_bounds = array<i64: 32, 128>}, {pipeline_mode = #tpu.pipeline_mode<synchronous>, transform_indices = @transform_2, window_bounds = array<i64: 256, 128>}, {pipeline_mode = #tpu.pipeline_mode<synchronous>, transform_indices = @transform_3, window_bounds = array<i64: 1, 128>}, {pipeline_mode = #tpu.pipeline_mode<synchronous>, transform_indices = @transform_4, window_bounds = array<i64: 128, 128>}, {pipeline_mode = #tpu.pipeline_mode<synchronous>, transform_indices = @transform_5, window_bounds = array<i64: 1, 128>}, {pipeline_mode = #tpu.pipeline_mode<synchronous>, transform_indices = @transform_6, window_bounds = array<i64: 128, 128>}, {pipeline_mode = #tpu.pipeline_mode<synchronous>, transform_indices = @transform_7, window_bounds = array<i64: 1, 128>}, {pipeline_mode = #tpu.pipeline_mode<synchronous>, transform_indices = @transform_8, window_bounds = array<i64: 1, 128>}, {pipeline_mode = #tpu.pipeline_mode<synchronous>, transform_indices = @transform_9, window_bounds = array<i64: 1, 128>}, {transform_indices = @transform_10, window_bounds = array<i64: 32, 128>}, {transform_indices = @transform_11, window_bounds = array<i64: 32, 128>}, {transform_indices = @transform_12, window_bounds = array<i64: 32, 128>}]} {
    %c0 = arith.constant 0 : index
    %c0_0 = arith.constant 0 : index
    %0 = vector.load %arg1[%c0, %c0_0] : memref<32x128xbf16, #tpu.memory_space<vmem>>, vector<32x128xbf16>
    %c0_1 = arith.constant 0 : index
    %c0_2 = arith.constant 0 : index
    %1 = vector.load %arg2[%c0_1, %c0_2] : memref<32x128xbf16, #tpu.memory_space<vmem>>, vector<32x128xbf16>
    %2 = tpu.concatenate %0, %1 in 1 : vector<32x128xbf16>, vector<32x128xbf16> -> vector<32x256xbf16>
    %c0_3 = arith.constant 0 : index
    %c0_4 = arith.constant 0 : index
    %3 = vector.load %arg3[%c0_3, %c0_4] : memref<256x128xbf16, #tpu.memory_space<vmem>>, vector<256x128xbf16>
    %c0_5 = arith.constant 0 : index
    %c0_6 = arith.constant 0 : index
    %4 = vector.load %arg4[%c0_5, %c0_6] : memref<1x128xf32, #tpu.memory_space<vmem>>, vector<1x128xf32>
    %cst = arith.constant dense<0.000000e+00> : vector<32x128xf32>
    %5 = tpu.matmul %2, %3, %cst {dimension_numbers = #tpu.dot_dimension_numbers<[1], [0], [0], [1], [0, 0, 1, 1], [], []>} : vector<32x256xbf16>, vector<256x128xbf16>, vector<32x128xf32> -> vector<32x128xf32>
    %6 = vector.broadcast %4 : vector<1x128xf32> to vector<32x128xf32>
    %7 = arith.addf %5, %6 : vector<32x128xf32>
    %cst_7 = arith.constant 0.000000e+00 : f32
    %8 = vector.broadcast %cst_7 : f32 to vector<32x128xf32>
    %9 = arith.maximumf %7, %8 : vector<32x128xf32>
    %c0_8 = arith.constant 0 : index
    %c0_9 = arith.constant 0 : index
    %10 = vector.load %arg5[%c0_8, %c0_9] : memref<128x128xbf16, #tpu.memory_space<vmem>>, vector<128x128xbf16>
    %c0_10 = arith.constant 0 : index
    %c0_11 = arith.constant 0 : index
    %11 = vector.load %arg6[%c0_10, %c0_11] : memref<1x128xf32, #tpu.memory_space<vmem>>, vector<1x128xf32>
    %12 = arith.truncf %9 : vector<32x128xf32> to vector<32x128xbf16>
    %cst_12 = arith.constant dense<0.000000e+00> : vector<32x128xf32>
    %13 = tpu.matmul %12, %10, %cst_12 {dimension_numbers = #tpu.dot_dimension_numbers<[1], [0], [0], [1], [0, 0, 1, 1], [], []>} : vector<32x128xbf16>, vector<128x128xbf16>, vector<32x128xf32> -> vector<32x128xf32>
    %14 = vector.broadcast %11 : vector<1x128xf32> to vector<32x128xf32>
    %15 = arith.addf %13, %14 : vector<32x128xf32>
    %cst_13 = arith.constant 0.000000e+00 : f32
    %16 = vector.broadcast %cst_13 : f32 to vector<32x128xf32>
    %17 = arith.maximumf %15, %16 : vector<32x128xf32>
    %c0_14 = arith.constant 0 : index
    %c0_15 = arith.constant 0 : index
    %18 = vector.load %arg7[%c0_14, %c0_15] : memref<128x128xbf16, #tpu.memory_space<vmem>>, vector<128x128xbf16>
    %c0_16 = arith.constant 0 : index
    %c0_17 = arith.constant 0 : index
    %19 = vector.load %arg8[%c0_16, %c0_17] : memref<1x128xf32, #tpu.memory_space<vmem>>, vector<1x128xf32>
    %20 = arith.truncf %17 : vector<32x128xf32> to vector<32x128xbf16>
    %cst_18 = arith.constant dense<0.000000e+00> : vector<32x128xf32>
    %21 = tpu.matmul %20, %18, %cst_18 {dimension_numbers = #tpu.dot_dimension_numbers<[1], [0], [0], [1], [0, 0, 1, 1], [], []>} : vector<32x128xbf16>, vector<128x128xbf16>, vector<32x128xf32> -> vector<32x128xf32>
    %22 = vector.broadcast %19 : vector<1x128xf32> to vector<32x128xf32>
    %23 = arith.addf %21, %22 : vector<32x128xf32>
    %c0_19 = arith.constant 0 : index
    %c0_20 = arith.constant 0 : index
    %24 = vector.load %arg9[%c0_19, %c0_20] : memref<1x128xf32, #tpu.memory_space<vmem>>, vector<1x128xf32>
    %c0_21 = arith.constant 0 : index
    %c0_22 = arith.constant 0 : index
    %25 = vector.load %arg10[%c0_21, %c0_22] : memref<1x128xf32, #tpu.memory_space<vmem>>, vector<1x128xf32>
    %cst_23 = arith.constant dense<0.000000e+00> : vector<32xf32>
    %26 = vector.multi_reduction <add>, %23, %cst_23 [1] : vector<32x128xf32> to vector<32xf32>
    %27 = vector.shape_cast %26 : vector<32xf32> to vector<32x1xf32>
    %cst_24 = arith.constant 1.280000e+02 : f32
    %28 = vector.broadcast %cst_24 : f32 to vector<32x1xf32>
    %29 = arith.divf %27, %28 : vector<32x1xf32>
    %30 = vector.broadcast %29 : vector<32x1xf32> to vector<32x128xf32>
    %31 = arith.subf %23, %30 : vector<32x128xf32>
    %32 = arith.mulf %31, %31 : vector<32x128xf32>
    %cst_25 = arith.constant dense<0.000000e+00> : vector<32xf32>
    %33 = vector.multi_reduction <add>, %32, %cst_25 [1] : vector<32x128xf32> to vector<32xf32>
    %34 = vector.shape_cast %33 : vector<32xf32> to vector<32x1xf32>
    %cst_26 = arith.constant 1.280000e+02 : f32
    %35 = vector.broadcast %cst_26 : f32 to vector<32x1xf32>
    %36 = arith.divf %34, %35 : vector<32x1xf32>
    %37 = vector.broadcast %29 : vector<32x1xf32> to vector<32x128xf32>
    %38 = arith.subf %23, %37 : vector<32x128xf32>
    %cst_27 = arith.constant 9.99999974E-6 : f32
    %39 = vector.broadcast %cst_27 : f32 to vector<32x1xf32>
    %40 = arith.addf %36, %39 : vector<32x1xf32>
    %41 = math.rsqrt %40 : vector<32x1xf32>
    %42 = vector.broadcast %41 : vector<32x1xf32> to vector<32x128xf32>
    %43 = arith.mulf %38, %42 : vector<32x128xf32>
    %44 = vector.broadcast %24 : vector<1x128xf32> to vector<32x128xf32>
    %45 = arith.mulf %43, %44 : vector<32x128xf32>
    %46 = vector.broadcast %25 : vector<1x128xf32> to vector<32x128xf32>
    %47 = arith.addf %45, %46 : vector<32x128xf32>
    %c0_28 = arith.constant 0 : index
    %c0_29 = arith.constant 0 : index
    %48 = vector.load %arg11[%c0_28, %c0_29] : memref<32x128xbf16, #tpu.memory_space<vmem>>, vector<32x128xbf16>
    %49 = arith.extf %48 : vector<32x128xbf16> to vector<32x128xf32>
    %50 = arith.truncf %47 : vector<32x128xf32> to vector<32x128xbf16>
    %c0_30 = arith.constant 0 : index
    %c0_31 = arith.constant 0 : index
    %51 = vector.load %arg12[%c0_30, %c0_31] : memref<32x128xbf16, #tpu.memory_space<vmem>>, vector<32x128xbf16>
    tpu.vector_store %arg12[%c0_30, %c0_31], %50 {strides = array<i32>} : memref<32x128xbf16, #tpu.memory_space<vmem>>, vector<32x128xbf16>,
    %52 = arith.addf %47, %49 : vector<32x128xf32>
    %53 = arith.truncf %52 : vector<32x128xf32> to vector<32x128xbf16>
    %c0_32 = arith.constant 0 : index
    %c0_33 = arith.constant 0 : index
    %54 = vector.load %arg13[%c0_32, %c0_33] : memref<32x128xbf16, #tpu.memory_space<vmem>>, vector<32x128xbf16>
    tpu.vector_store %arg13[%c0_32, %c0_33], %53 {strides = array<i32>} : memref<32x128xbf16, #tpu.memory_space<vmem>>, vector<32x128xbf16>,
    return
  }
  func.func @transform_0(%arg0: i32) -> (i32, i32) {
    %c0_i32 = arith.constant 0 : i32
    %c0_i32_0 = arith.constant 0 : i32
    return %arg0, %c0_i32 : i32, i32
  }
  func.func @transform_1(%arg0: i32) -> (i32, i32) {
    %c0_i32 = arith.constant 0 : i32
    %c0_i32_0 = arith.constant 0 : i32
    return %arg0, %c0_i32 : i32, i32
  }
  func.func @transform_2(%arg0: i32) -> (i32, i32) {
    %c0_i32 = arith.constant 0 : i32
    %c0_i32_0 = arith.constant 0 : i32
    %c0_i32_1 = arith.constant 0 : i32
    return %c0_i32, %c0_i32_0 : i32, i32
  }
  func.func @transform_3(%arg0: i32) -> (i32, i32) {
    %c0_i32 = arith.constant 0 : i32
    %c0_i32_0 = arith.constant 0 : i32
    %c0_i32_1 = arith.constant 0 : i32
    return %c0_i32, %c0_i32_0 : i32, i32
  }
  func.func @transform_4(%arg0: i32) -> (i32, i32) {
    %c0_i32 = arith.constant 0 : i32
    %c0_i32_0 = arith.constant 0 : i32
    %c0_i32_1 = arith.constant 0 : i32
    return %c0_i32, %c0_i32_0 : i32, i32
  }
  func.func @transform_5(%arg0: i32) -> (i32, i32) {
    %c0_i32 = arith.constant 0 : i32
    %c0_i32_0 = arith.constant 0 : i32
    %c0_i32_1 = arith.constant 0 : i32
    return %c0_i32, %c0_i32_0 : i32, i32
  }
  func.func @transform_6(%arg0: i32) -> (i32, i32) {
    %c0_i32 = arith.constant 0 : i32
    %c0_i32_0 = arith.constant 0 : i32
    %c0_i32_1 = arith.constant 0 : i32
    return %c0_i32, %c0_i32_0 : i32, i32
  }
  func.func @transform_7(%arg0: i32) -> (i32, i32) {
    %c0_i32 = arith.constant 0 : i32
    %c0_i32_0 = arith.constant 0 : i32
    %c0_i32_1 = arith.constant 0 : i32
    return %c0_i32, %c0_i32_0 : i32, i32
  }
  func.func @transform_8(%arg0: i32) -> (i32, i32) {
    %c0_i32 = arith.constant 0 : i32
    %c0_i32_0 = arith.constant 0 : i32
    %c0_i32_1 = arith.constant 0 : i32
    return %c0_i32, %c0_i32_0 : i32, i32
  }
  func.func @transform_9(%arg0: i32) -> (i32, i32) {
    %c0_i32 = arith.constant 0 : i32
    %c0_i32_0 = arith.constant 0 : i32
    %c0_i32_1 = arith.constant 0 : i32
    return %c0_i32, %c0_i32_0 : i32, i32
  }
  func.func @transform_10(%arg0: i32) -> (i32, i32) {
    %c0_i32 = arith.constant 0 : i32
    %c0_i32_0 = arith.constant 0 : i32
    return %arg0, %c0_i32 : i32, i32
  }
  func.func @transform_11(%arg0: i32) -> (i32, i32) {
    %c0_i32 = arith.constant 0 : i32
    %c0_i32_0 = arith.constant 0 : i32
    return %arg0, %c0_i32 : i32, i32
  }
  func.func @transform_12(%arg0: i32) -> (i32, i32) {
    %c0_i32 = arith.constant 0 : i32
    %c0_i32_0 = arith.constant 0 : i32
    return %arg0, %c0_i32 : i32, i32
  }
}

module attributes {stable_mosaic.version = 11 : i64} {
  func.func @_mlp_kernel(%arg0: i32, %arg1: memref<64x128xbf16, #tpu.memory_space<vmem>>, %arg2: memref<64x128xbf16, #tpu.memory_space<vmem>>, %arg3: memref<64x128xbf16, #tpu.memory_space<vmem>>, %arg4: memref<384x128xbf16, #tpu.memory_space<vmem>>, %arg5: memref<1x128xf32, #tpu.memory_space<vmem>>, %arg6: memref<128x128xbf16, #tpu.memory_space<vmem>>, %arg7: memref<1x128xf32, #tpu.memory_space<vmem>>, %arg8: memref<128x128xbf16, #tpu.memory_space<vmem>>, %arg9: memref<1x128xf32, #tpu.memory_space<vmem>>, %arg10: memref<1x128xf32, #tpu.memory_space<vmem>>, %arg11: memref<1x128xf32, #tpu.memory_space<vmem>>, %arg12: memref<64x128xbf16, #tpu.memory_space<vmem>>, %arg13: memref<64x128xbf16, #tpu.memory_space<vmem>>) attributes {dimension_semantics = [#tpu.dimension_semantics<parallel>], iteration_bounds = array<i64: 2>, scalar_prefetch = 0 : i64, scratch_operands = 0 : i64, tpu.core_type = #tpu.core_type<tc>, window_params = [{transform_indices = @transform_0, window_bounds = array<i64: 64, 128>}, {transform_indices = @transform_1, window_bounds = array<i64: 64, 128>}, {transform_indices = @transform_2, window_bounds = array<i64: 64, 128>}, {pipeline_mode = #tpu.pipeline_mode<synchronous>, transform_indices = @transform_3, window_bounds = array<i64: 384, 128>}, {pipeline_mode = #tpu.pipeline_mode<synchronous>, transform_indices = @transform_4, window_bounds = array<i64: 1, 128>}, {pipeline_mode = #tpu.pipeline_mode<synchronous>, transform_indices = @transform_5, window_bounds = array<i64: 128, 128>}, {pipeline_mode = #tpu.pipeline_mode<synchronous>, transform_indices = @transform_6, window_bounds = array<i64: 1, 128>}, {pipeline_mode = #tpu.pipeline_mode<synchronous>, transform_indices = @transform_7, window_bounds = array<i64: 128, 128>}, {pipeline_mode = #tpu.pipeline_mode<synchronous>, transform_indices = @transform_8, window_bounds = array<i64: 1, 128>}, {pipeline_mode = #tpu.pipeline_mode<synchronous>, transform_indices = @transform_9, window_bounds = array<i64: 1, 128>}, {pipeline_mode = #tpu.pipeline_mode<synchronous>, transform_indices = @transform_10, window_bounds = array<i64: 1, 128>}, {transform_indices = @transform_11, window_bounds = array<i64: 64, 128>}, {transform_indices = @transform_12, window_bounds = array<i64: 64, 128>}]} {
    %c0 = arith.constant 0 : index
    %c0_0 = arith.constant 0 : index
    %0 = vector.load %arg1[%c0, %c0_0] : memref<64x128xbf16, #tpu.memory_space<vmem>>, vector<64x128xbf16>
    %c0_1 = arith.constant 0 : index
    %c0_2 = arith.constant 0 : index
    %1 = vector.load %arg2[%c0_1, %c0_2] : memref<64x128xbf16, #tpu.memory_space<vmem>>, vector<64x128xbf16>
    %c0_3 = arith.constant 0 : index
    %c0_4 = arith.constant 0 : index
    %2 = vector.load %arg3[%c0_3, %c0_4] : memref<64x128xbf16, #tpu.memory_space<vmem>>, vector<64x128xbf16>
    %3 = tpu.concatenate %0, %1, %2 in 1 : vector<64x128xbf16>, vector<64x128xbf16>, vector<64x128xbf16> -> vector<64x384xbf16>
    %c0_5 = arith.constant 0 : index
    %c0_6 = arith.constant 0 : index
    %4 = vector.load %arg4[%c0_5, %c0_6] : memref<384x128xbf16, #tpu.memory_space<vmem>>, vector<384x128xbf16>
    %c0_7 = arith.constant 0 : index
    %c0_8 = arith.constant 0 : index
    %5 = vector.load %arg5[%c0_7, %c0_8] : memref<1x128xf32, #tpu.memory_space<vmem>>, vector<1x128xf32>
    %cst = arith.constant dense<0.000000e+00> : vector<64x128xf32>
    %6 = tpu.matmul %3, %4, %cst {dimension_numbers = #tpu.dot_dimension_numbers<[1], [0], [0], [1], [0, 0, 1, 1], [], []>} : vector<64x384xbf16>, vector<384x128xbf16>, vector<64x128xf32> -> vector<64x128xf32>
    %7 = vector.broadcast %5 : vector<1x128xf32> to vector<64x128xf32>
    %8 = arith.addf %6, %7 : vector<64x128xf32>
    %cst_9 = arith.constant 0.000000e+00 : f32
    %9 = vector.broadcast %cst_9 : f32 to vector<64x128xf32>
    %10 = arith.maximumf %8, %9 : vector<64x128xf32>
    %c0_10 = arith.constant 0 : index
    %c0_11 = arith.constant 0 : index
    %11 = vector.load %arg6[%c0_10, %c0_11] : memref<128x128xbf16, #tpu.memory_space<vmem>>, vector<128x128xbf16>
    %c0_12 = arith.constant 0 : index
    %c0_13 = arith.constant 0 : index
    %12 = vector.load %arg7[%c0_12, %c0_13] : memref<1x128xf32, #tpu.memory_space<vmem>>, vector<1x128xf32>
    %13 = arith.truncf %10 : vector<64x128xf32> to vector<64x128xbf16>
    %cst_14 = arith.constant dense<0.000000e+00> : vector<64x128xf32>
    %14 = tpu.matmul %13, %11, %cst_14 {dimension_numbers = #tpu.dot_dimension_numbers<[1], [0], [0], [1], [0, 0, 1, 1], [], []>} : vector<64x128xbf16>, vector<128x128xbf16>, vector<64x128xf32> -> vector<64x128xf32>
    %15 = vector.broadcast %12 : vector<1x128xf32> to vector<64x128xf32>
    %16 = arith.addf %14, %15 : vector<64x128xf32>
    %cst_15 = arith.constant 0.000000e+00 : f32
    %17 = vector.broadcast %cst_15 : f32 to vector<64x128xf32>
    %18 = arith.maximumf %16, %17 : vector<64x128xf32>
    %c0_16 = arith.constant 0 : index
    %c0_17 = arith.constant 0 : index
    %19 = vector.load %arg8[%c0_16, %c0_17] : memref<128x128xbf16, #tpu.memory_space<vmem>>, vector<128x128xbf16>
    %c0_18 = arith.constant 0 : index
    %c0_19 = arith.constant 0 : index
    %20 = vector.load %arg9[%c0_18, %c0_19] : memref<1x128xf32, #tpu.memory_space<vmem>>, vector<1x128xf32>
    %21 = arith.truncf %18 : vector<64x128xf32> to vector<64x128xbf16>
    %cst_20 = arith.constant dense<0.000000e+00> : vector<64x128xf32>
    %22 = tpu.matmul %21, %19, %cst_20 {dimension_numbers = #tpu.dot_dimension_numbers<[1], [0], [0], [1], [0, 0, 1, 1], [], []>} : vector<64x128xbf16>, vector<128x128xbf16>, vector<64x128xf32> -> vector<64x128xf32>
    %23 = vector.broadcast %20 : vector<1x128xf32> to vector<64x128xf32>
    %24 = arith.addf %22, %23 : vector<64x128xf32>
    %c0_21 = arith.constant 0 : index
    %c0_22 = arith.constant 0 : index
    %25 = vector.load %arg10[%c0_21, %c0_22] : memref<1x128xf32, #tpu.memory_space<vmem>>, vector<1x128xf32>
    %c0_23 = arith.constant 0 : index
    %c0_24 = arith.constant 0 : index
    %26 = vector.load %arg11[%c0_23, %c0_24] : memref<1x128xf32, #tpu.memory_space<vmem>>, vector<1x128xf32>
    %cst_25 = arith.constant dense<0.000000e+00> : vector<64xf32>
    %27 = vector.multi_reduction <add>, %24, %cst_25 [1] : vector<64x128xf32> to vector<64xf32>
    %28 = vector.shape_cast %27 : vector<64xf32> to vector<64x1xf32>
    %cst_26 = arith.constant 1.280000e+02 : f32
    %29 = vector.broadcast %cst_26 : f32 to vector<64x1xf32>
    %30 = arith.divf %28, %29 : vector<64x1xf32>
    %31 = vector.broadcast %30 : vector<64x1xf32> to vector<64x128xf32>
    %32 = arith.subf %24, %31 : vector<64x128xf32>
    %33 = arith.mulf %32, %32 : vector<64x128xf32>
    %cst_27 = arith.constant dense<0.000000e+00> : vector<64xf32>
    %34 = vector.multi_reduction <add>, %33, %cst_27 [1] : vector<64x128xf32> to vector<64xf32>
    %35 = vector.shape_cast %34 : vector<64xf32> to vector<64x1xf32>
    %cst_28 = arith.constant 1.280000e+02 : f32
    %36 = vector.broadcast %cst_28 : f32 to vector<64x1xf32>
    %37 = arith.divf %35, %36 : vector<64x1xf32>
    %38 = vector.broadcast %30 : vector<64x1xf32> to vector<64x128xf32>
    %39 = arith.subf %24, %38 : vector<64x128xf32>
    %cst_29 = arith.constant 9.99999974E-6 : f32
    %40 = vector.broadcast %cst_29 : f32 to vector<64x1xf32>
    %41 = arith.addf %37, %40 : vector<64x1xf32>
    %42 = math.rsqrt %41 : vector<64x1xf32>
    %43 = vector.broadcast %42 : vector<64x1xf32> to vector<64x128xf32>
    %44 = arith.mulf %39, %43 : vector<64x128xf32>
    %45 = vector.broadcast %25 : vector<1x128xf32> to vector<64x128xf32>
    %46 = arith.mulf %44, %45 : vector<64x128xf32>
    %47 = vector.broadcast %26 : vector<1x128xf32> to vector<64x128xf32>
    %48 = arith.addf %46, %47 : vector<64x128xf32>
    %c0_30 = arith.constant 0 : index
    %c0_31 = arith.constant 0 : index
    %49 = vector.load %arg12[%c0_30, %c0_31] : memref<64x128xbf16, #tpu.memory_space<vmem>>, vector<64x128xbf16>
    %50 = arith.extf %49 : vector<64x128xbf16> to vector<64x128xf32>
    %51 = arith.addf %48, %50 : vector<64x128xf32>
    %52 = arith.truncf %51 : vector<64x128xf32> to vector<64x128xbf16>
    %c0_32 = arith.constant 0 : index
    %c0_33 = arith.constant 0 : index
    %53 = vector.load %arg13[%c0_32, %c0_33] : memref<64x128xbf16, #tpu.memory_space<vmem>>, vector<64x128xbf16>
    tpu.vector_store %arg13[%c0_32, %c0_33], %52 {strides = array<i32>} : memref<64x128xbf16, #tpu.memory_space<vmem>>, vector<64x128xbf16>,
    return
  }
  func.func @transform_0(%arg0: i32) -> (i32, i32) {
    %c0_i32 = arith.constant 0 : i32
    %c0_i32_0 = arith.constant 0 : i32
    return %arg0, %c0_i32 : i32, i32
  }
  func.func @transform_1(%arg0: i32) -> (i32, i32) {
    %c0_i32 = arith.constant 0 : i32
    %c0_i32_0 = arith.constant 0 : i32
    return %arg0, %c0_i32 : i32, i32
  }
  func.func @transform_2(%arg0: i32) -> (i32, i32) {
    %c0_i32 = arith.constant 0 : i32
    %c0_i32_0 = arith.constant 0 : i32
    return %arg0, %c0_i32 : i32, i32
  }
  func.func @transform_3(%arg0: i32) -> (i32, i32) {
    %c0_i32 = arith.constant 0 : i32
    %c0_i32_0 = arith.constant 0 : i32
    %c0_i32_1 = arith.constant 0 : i32
    return %c0_i32, %c0_i32_0 : i32, i32
  }
  func.func @transform_4(%arg0: i32) -> (i32, i32) {
    %c0_i32 = arith.constant 0 : i32
    %c0_i32_0 = arith.constant 0 : i32
    %c0_i32_1 = arith.constant 0 : i32
    return %c0_i32, %c0_i32_0 : i32, i32
  }
  func.func @transform_5(%arg0: i32) -> (i32, i32) {
    %c0_i32 = arith.constant 0 : i32
    %c0_i32_0 = arith.constant 0 : i32
    %c0_i32_1 = arith.constant 0 : i32
    return %c0_i32, %c0_i32_0 : i32, i32
  }
  func.func @transform_6(%arg0: i32) -> (i32, i32) {
    %c0_i32 = arith.constant 0 : i32
    %c0_i32_0 = arith.constant 0 : i32
    %c0_i32_1 = arith.constant 0 : i32
    return %c0_i32, %c0_i32_0 : i32, i32
  }
  func.func @transform_7(%arg0: i32) -> (i32, i32) {
    %c0_i32 = arith.constant 0 : i32
    %c0_i32_0 = arith.constant 0 : i32
    %c0_i32_1 = arith.constant 0 : i32
    return %c0_i32, %c0_i32_0 : i32, i32
  }
  func.func @transform_8(%arg0: i32) -> (i32, i32) {
    %c0_i32 = arith.constant 0 : i32
    %c0_i32_0 = arith.constant 0 : i32
    %c0_i32_1 = arith.constant 0 : i32
    return %c0_i32, %c0_i32_0 : i32, i32
  }
  func.func @transform_9(%arg0: i32) -> (i32, i32) {
    %c0_i32 = arith.constant 0 : i32
    %c0_i32_0 = arith.constant 0 : i32
    %c0_i32_1 = arith.constant 0 : i32
    return %c0_i32, %c0_i32_0 : i32, i32
  }
  func.func @transform_10(%arg0: i32) -> (i32, i32) {
    %c0_i32 = arith.constant 0 : i32
    %c0_i32_0 = arith.constant 0 : i32
    %c0_i32_1 = arith.constant 0 : i32
    return %c0_i32, %c0_i32_0 : i32, i32
  }
  func.func @transform_11(%arg0: i32) -> (i32, i32) {
    %c0_i32 = arith.constant 0 : i32
    %c0_i32_0 = arith.constant 0 : i32
    return %arg0, %c0_i32 : i32, i32
  }
  func.func @transform_12(%arg0: i32) -> (i32, i32) {
    %c0_i32 = arith.constant 0 : i32
    %c0_i32_0 = arith.constant 0 : i32
    return %arg0, %c0_i32 : i32, i32
  }
}

module attributes {stable_mosaic.version = 11 : i64} {
  func.func @_mlp_kernel(%arg0: i32, %arg1: memref<64x128xbf16, #tpu.memory_space<vmem>>, %arg2: memref<128x128xbf16, #tpu.memory_space<vmem>>, %arg3: memref<1x128xf32, #tpu.memory_space<vmem>>, %arg4: memref<128x128xbf16, #tpu.memory_space<vmem>>, %arg5: memref<1x128xf32, #tpu.memory_space<vmem>>, %arg6: memref<128x128xbf16, #tpu.memory_space<vmem>>, %arg7: memref<1x128xf32, #tpu.memory_space<vmem>>, %arg8: memref<64x128xf32, #tpu.memory_space<vmem>>) attributes {dimension_semantics = [#tpu.dimension_semantics<parallel>], iteration_bounds = array<i64: 2>, scalar_prefetch = 0 : i64, scratch_operands = 0 : i64, tpu.core_type = #tpu.core_type<tc>, window_params = [{transform_indices = @transform_0, window_bounds = array<i64: 64, 128>}, {pipeline_mode = #tpu.pipeline_mode<synchronous>, transform_indices = @transform_1, window_bounds = array<i64: 128, 128>}, {pipeline_mode = #tpu.pipeline_mode<synchronous>, transform_indices = @transform_2, window_bounds = array<i64: 1, 128>}, {pipeline_mode = #tpu.pipeline_mode<synchronous>, transform_indices = @transform_3, window_bounds = array<i64: 128, 128>}, {pipeline_mode = #tpu.pipeline_mode<synchronous>, transform_indices = @transform_4, window_bounds = array<i64: 1, 128>}, {pipeline_mode = #tpu.pipeline_mode<synchronous>, transform_indices = @transform_5, window_bounds = array<i64: 128, 128>}, {pipeline_mode = #tpu.pipeline_mode<synchronous>, transform_indices = @transform_6, window_bounds = array<i64: 1, 128>}, {transform_indices = @transform_7, window_bounds = array<i64: 64, 128>}]} {
    %c0 = arith.constant 0 : index
    %c0_0 = arith.constant 0 : index
    %0 = vector.load %arg1[%c0, %c0_0] : memref<64x128xbf16, #tpu.memory_space<vmem>>, vector<64x128xbf16>
    %c0_1 = arith.constant 0 : index
    %c0_2 = arith.constant 0 : index
    %1 = vector.load %arg2[%c0_1, %c0_2] : memref<128x128xbf16, #tpu.memory_space<vmem>>, vector<128x128xbf16>
    %c0_3 = arith.constant 0 : index
    %c0_4 = arith.constant 0 : index
    %2 = vector.load %arg3[%c0_3, %c0_4] : memref<1x128xf32, #tpu.memory_space<vmem>>, vector<1x128xf32>
    %cst = arith.constant dense<0.000000e+00> : vector<64x128xf32>
    %3 = tpu.matmul %0, %1, %cst {dimension_numbers = #tpu.dot_dimension_numbers<[1], [0], [0], [1], [0, 0, 1, 1], [], []>} : vector<64x128xbf16>, vector<128x128xbf16>, vector<64x128xf32> -> vector<64x128xf32>
    %4 = vector.broadcast %2 : vector<1x128xf32> to vector<64x128xf32>
    %5 = arith.addf %3, %4 : vector<64x128xf32>
    %cst_5 = arith.constant 0.000000e+00 : f32
    %6 = vector.broadcast %cst_5 : f32 to vector<64x128xf32>
    %7 = arith.maximumf %5, %6 : vector<64x128xf32>
    %c0_6 = arith.constant 0 : index
    %c0_7 = arith.constant 0 : index
    %8 = vector.load %arg4[%c0_6, %c0_7] : memref<128x128xbf16, #tpu.memory_space<vmem>>, vector<128x128xbf16>
    %c0_8 = arith.constant 0 : index
    %c0_9 = arith.constant 0 : index
    %9 = vector.load %arg5[%c0_8, %c0_9] : memref<1x128xf32, #tpu.memory_space<vmem>>, vector<1x128xf32>
    %10 = arith.truncf %7 : vector<64x128xf32> to vector<64x128xbf16>
    %cst_10 = arith.constant dense<0.000000e+00> : vector<64x128xf32>
    %11 = tpu.matmul %10, %8, %cst_10 {dimension_numbers = #tpu.dot_dimension_numbers<[1], [0], [0], [1], [0, 0, 1, 1], [], []>} : vector<64x128xbf16>, vector<128x128xbf16>, vector<64x128xf32> -> vector<64x128xf32>
    %12 = vector.broadcast %9 : vector<1x128xf32> to vector<64x128xf32>
    %13 = arith.addf %11, %12 : vector<64x128xf32>
    %cst_11 = arith.constant 0.000000e+00 : f32
    %14 = vector.broadcast %cst_11 : f32 to vector<64x128xf32>
    %15 = arith.maximumf %13, %14 : vector<64x128xf32>
    %c0_12 = arith.constant 0 : index
    %c0_13 = arith.constant 0 : index
    %16 = vector.load %arg6[%c0_12, %c0_13] : memref<128x128xbf16, #tpu.memory_space<vmem>>, vector<128x128xbf16>
    %c0_14 = arith.constant 0 : index
    %c0_15 = arith.constant 0 : index
    %17 = vector.load %arg7[%c0_14, %c0_15] : memref<1x128xf32, #tpu.memory_space<vmem>>, vector<1x128xf32>
    %18 = arith.truncf %15 : vector<64x128xf32> to vector<64x128xbf16>
    %cst_16 = arith.constant dense<0.000000e+00> : vector<64x128xf32>
    %19 = tpu.matmul %18, %16, %cst_16 {dimension_numbers = #tpu.dot_dimension_numbers<[1], [0], [0], [1], [0, 0, 1, 1], [], []>} : vector<64x128xbf16>, vector<128x128xbf16>, vector<64x128xf32> -> vector<64x128xf32>
    %20 = vector.broadcast %17 : vector<1x128xf32> to vector<64x128xf32>
    %21 = arith.addf %19, %20 : vector<64x128xf32>
    %c0_17 = arith.constant 0 : index
    %c0_18 = arith.constant 0 : index
    %22 = vector.load %arg8[%c0_17, %c0_18] : memref<64x128xf32, #tpu.memory_space<vmem>>, vector<64x128xf32>
    tpu.vector_store %arg8[%c0_17, %c0_18], %21 {strides = array<i32>} : memref<64x128xf32, #tpu.memory_space<vmem>>, vector<64x128xf32>,
    return
  }
  func.func @transform_0(%arg0: i32) -> (i32, i32) {
    %c0_i32 = arith.constant 0 : i32
    %c0_i32_0 = arith.constant 0 : i32
    return %arg0, %c0_i32 : i32, i32
  }
  func.func @transform_1(%arg0: i32) -> (i32, i32) {
    %c0_i32 = arith.constant 0 : i32
    %c0_i32_0 = arith.constant 0 : i32
    %c0_i32_1 = arith.constant 0 : i32
    return %c0_i32, %c0_i32_0 : i32, i32
  }
  func.func @transform_2(%arg0: i32) -> (i32, i32) {
    %c0_i32 = arith.constant 0 : i32
    %c0_i32_0 = arith.constant 0 : i32
    %c0_i32_1 = arith.constant 0 : i32
    return %c0_i32, %c0_i32_0 : i32, i32
  }
  func.func @transform_3(%arg0: i32) -> (i32, i32) {
    %c0_i32 = arith.constant 0 : i32
    %c0_i32_0 = arith.constant 0 : i32
    %c0_i32_1 = arith.constant 0 : i32
    return %c0_i32, %c0_i32_0 : i32, i32
  }
  func.func @transform_4(%arg0: i32) -> (i32, i32) {
    %c0_i32 = arith.constant 0 : i32
    %c0_i32_0 = arith.constant 0 : i32
    %c0_i32_1 = arith.constant 0 : i32
    return %c0_i32, %c0_i32_0 : i32, i32
  }
  func.func @transform_5(%arg0: i32) -> (i32, i32) {
    %c0_i32 = arith.constant 0 : i32
    %c0_i32_0 = arith.constant 0 : i32
    %c0_i32_1 = arith.constant 0 : i32
    return %c0_i32, %c0_i32_0 : i32, i32
  }
  func.func @transform_6(%arg0: i32) -> (i32, i32) {
    %c0_i32 = arith.constant 0 : i32
    %c0_i32_0 = arith.constant 0 : i32
    %c0_i32_1 = arith.constant 0 : i32
    return %c0_i32, %c0_i32_0 : i32, i32
  }
  func.func @transform_7(%arg0: i32) -> (i32, i32) {
    %c0_i32 = arith.constant 0 : i32
    %c0_i32_0 = arith.constant 0 : i32
    return %arg0, %c0_i32 : i32, i32
  }
}

module attributes {stable_mosaic.version = 11 : i64} {
  func.func @_mlp_kernel(%arg0: i32, %arg1: memref<32x128xbf16, #tpu.memory_space<vmem>>, %arg2: memref<128x128xbf16, #tpu.memory_space<vmem>>, %arg3: memref<1x128xf32, #tpu.memory_space<vmem>>, %arg4: memref<128x128xbf16, #tpu.memory_space<vmem>>, %arg5: memref<1x128xf32, #tpu.memory_space<vmem>>, %arg6: memref<128x128xbf16, #tpu.memory_space<vmem>>, %arg7: memref<1x128xf32, #tpu.memory_space<vmem>>, %arg8: memref<32x128xf32, #tpu.memory_space<vmem>>) attributes {dimension_semantics = [#tpu.dimension_semantics<parallel>], iteration_bounds = array<i64: 2>, scalar_prefetch = 0 : i64, scratch_operands = 0 : i64, tpu.core_type = #tpu.core_type<tc>, window_params = [{transform_indices = @transform_0, window_bounds = array<i64: 32, 128>}, {pipeline_mode = #tpu.pipeline_mode<synchronous>, transform_indices = @transform_1, window_bounds = array<i64: 128, 128>}, {pipeline_mode = #tpu.pipeline_mode<synchronous>, transform_indices = @transform_2, window_bounds = array<i64: 1, 128>}, {pipeline_mode = #tpu.pipeline_mode<synchronous>, transform_indices = @transform_3, window_bounds = array<i64: 128, 128>}, {pipeline_mode = #tpu.pipeline_mode<synchronous>, transform_indices = @transform_4, window_bounds = array<i64: 1, 128>}, {pipeline_mode = #tpu.pipeline_mode<synchronous>, transform_indices = @transform_5, window_bounds = array<i64: 128, 128>}, {pipeline_mode = #tpu.pipeline_mode<synchronous>, transform_indices = @transform_6, window_bounds = array<i64: 1, 128>}, {transform_indices = @transform_7, window_bounds = array<i64: 32, 128>}]} {
    %c0 = arith.constant 0 : index
    %c0_0 = arith.constant 0 : index
    %0 = vector.load %arg1[%c0, %c0_0] : memref<32x128xbf16, #tpu.memory_space<vmem>>, vector<32x128xbf16>
    %c0_1 = arith.constant 0 : index
    %c0_2 = arith.constant 0 : index
    %1 = vector.load %arg2[%c0_1, %c0_2] : memref<128x128xbf16, #tpu.memory_space<vmem>>, vector<128x128xbf16>
    %c0_3 = arith.constant 0 : index
    %c0_4 = arith.constant 0 : index
    %2 = vector.load %arg3[%c0_3, %c0_4] : memref<1x128xf32, #tpu.memory_space<vmem>>, vector<1x128xf32>
    %cst = arith.constant dense<0.000000e+00> : vector<32x128xf32>
    %3 = tpu.matmul %0, %1, %cst {dimension_numbers = #tpu.dot_dimension_numbers<[1], [0], [0], [1], [0, 0, 1, 1], [], []>} : vector<32x128xbf16>, vector<128x128xbf16>, vector<32x128xf32> -> vector<32x128xf32>
    %4 = vector.broadcast %2 : vector<1x128xf32> to vector<32x128xf32>
    %5 = arith.addf %3, %4 : vector<32x128xf32>
    %cst_5 = arith.constant 0.000000e+00 : f32
    %6 = vector.broadcast %cst_5 : f32 to vector<32x128xf32>
    %7 = arith.maximumf %5, %6 : vector<32x128xf32>
    %c0_6 = arith.constant 0 : index
    %c0_7 = arith.constant 0 : index
    %8 = vector.load %arg4[%c0_6, %c0_7] : memref<128x128xbf16, #tpu.memory_space<vmem>>, vector<128x128xbf16>
    %c0_8 = arith.constant 0 : index
    %c0_9 = arith.constant 0 : index
    %9 = vector.load %arg5[%c0_8, %c0_9] : memref<1x128xf32, #tpu.memory_space<vmem>>, vector<1x128xf32>
    %10 = arith.truncf %7 : vector<32x128xf32> to vector<32x128xbf16>
    %cst_10 = arith.constant dense<0.000000e+00> : vector<32x128xf32>
    %11 = tpu.matmul %10, %8, %cst_10 {dimension_numbers = #tpu.dot_dimension_numbers<[1], [0], [0], [1], [0, 0, 1, 1], [], []>} : vector<32x128xbf16>, vector<128x128xbf16>, vector<32x128xf32> -> vector<32x128xf32>
    %12 = vector.broadcast %9 : vector<1x128xf32> to vector<32x128xf32>
    %13 = arith.addf %11, %12 : vector<32x128xf32>
    %cst_11 = arith.constant 0.000000e+00 : f32
    %14 = vector.broadcast %cst_11 : f32 to vector<32x128xf32>
    %15 = arith.maximumf %13, %14 : vector<32x128xf32>
    %c0_12 = arith.constant 0 : index
    %c0_13 = arith.constant 0 : index
    %16 = vector.load %arg6[%c0_12, %c0_13] : memref<128x128xbf16, #tpu.memory_space<vmem>>, vector<128x128xbf16>
    %c0_14 = arith.constant 0 : index
    %c0_15 = arith.constant 0 : index
    %17 = vector.load %arg7[%c0_14, %c0_15] : memref<1x128xf32, #tpu.memory_space<vmem>>, vector<1x128xf32>
    %18 = arith.truncf %15 : vector<32x128xf32> to vector<32x128xbf16>
    %cst_16 = arith.constant dense<0.000000e+00> : vector<32x128xf32>
    %19 = tpu.matmul %18, %16, %cst_16 {dimension_numbers = #tpu.dot_dimension_numbers<[1], [0], [0], [1], [0, 0, 1, 1], [], []>} : vector<32x128xbf16>, vector<128x128xbf16>, vector<32x128xf32> -> vector<32x128xf32>
    %20 = vector.broadcast %17 : vector<1x128xf32> to vector<32x128xf32>
    %21 = arith.addf %19, %20 : vector<32x128xf32>
    %c0_17 = arith.constant 0 : index
    %c0_18 = arith.constant 0 : index
    %22 = vector.load %arg8[%c0_17, %c0_18] : memref<32x128xf32, #tpu.memory_space<vmem>>, vector<32x128xf32>
    tpu.vector_store %arg8[%c0_17, %c0_18], %21 {strides = array<i32>} : memref<32x128xf32, #tpu.memory_space<vmem>>, vector<32x128xf32>,
    return
  }
  func.func @transform_0(%arg0: i32) -> (i32, i32) {
    %c0_i32 = arith.constant 0 : i32
    %c0_i32_0 = arith.constant 0 : i32
    return %arg0, %c0_i32 : i32, i32
  }
  func.func @transform_1(%arg0: i32) -> (i32, i32) {
    %c0_i32 = arith.constant 0 : i32
    %c0_i32_0 = arith.constant 0 : i32
    %c0_i32_1 = arith.constant 0 : i32
    return %c0_i32, %c0_i32_0 : i32, i32
  }
  func.func @transform_2(%arg0: i32) -> (i32, i32) {
    %c0_i32 = arith.constant 0 : i32
    %c0_i32_0 = arith.constant 0 : i32
    %c0_i32_1 = arith.constant 0 : i32
    return %c0_i32, %c0_i32_0 : i32, i32
  }
  func.func @transform_3(%arg0: i32) -> (i32, i32) {
    %c0_i32 = arith.constant 0 : i32
    %c0_i32_0 = arith.constant 0 : i32
    %c0_i32_1 = arith.constant 0 : i32
    return %c0_i32, %c0_i32_0 : i32, i32
  }
  func.func @transform_4(%arg0: i32) -> (i32, i32) {
    %c0_i32 = arith.constant 0 : i32
    %c0_i32_0 = arith.constant 0 : i32
    %c0_i32_1 = arith.constant 0 : i32
    return %c0_i32, %c0_i32_0 : i32, i32
  }
  func.func @transform_5(%arg0: i32) -> (i32, i32) {
    %c0_i32 = arith.constant 0 : i32
    %c0_i32_0 = arith.constant 0 : i32
    %c0_i32_1 = arith.constant 0 : i32
    return %c0_i32, %c0_i32_0 : i32, i32
  }
  func.func @transform_6(%arg0: i32) -> (i32, i32) {
    %c0_i32 = arith.constant 0 : i32
    %c0_i32_0 = arith.constant 0 : i32
    %c0_i32_1 = arith.constant 0 : i32
    return %c0_i32, %c0_i32_0 : i32, i32
  }
  func.func @transform_7(%arg0: i32) -> (i32, i32) {
    %c0_i32 = arith.constant 0 : i32
    %c0_i32_0 = arith.constant 0 : i32
    return %arg0, %c0_i32 : i32, i32
  }
}

</mosaic_0001>

<llo_original>
// kernel: encode_process_decode.10
$region0: #{encode_process_decode.10}
  #allocation0 [shape = 'u32[]', space=smem, size = 0x4, offset = 0x4, fixed_abs, tag = 'smem constant byte address 0x4 - core index']
  #allocation1 [shape = 'u32[144,128]{1,0:T(1,128)}', space=vmem, size = 0x12000, scoped, tag = 'internal scratch']
  %s0 = inlined_call_operand.vmem [shape: f32[64,8], index: 0, kind: input, shape index: {}]
  %s1 = inlined_call_operand.vmem [shape: bf16[8,128], index: 1, kind: input, shape index: {}]
  %s2 = inlined_call_operand.vmem [shape: f32[1,128], index: 2, kind: input, shape index: {}]
  %s3 = inlined_call_operand.vmem [shape: bf16[128,128], index: 3, kind: input, shape index: {}]
  %s4 = inlined_call_operand.vmem [shape: f32[1,128], index: 4, kind: input, shape index: {}]
  %s5 = inlined_call_operand.vmem [shape: bf16[128,128], index: 5, kind: input, shape index: {}]
  %s6 = inlined_call_operand.vmem [shape: f32[1,128], index: 6, kind: input, shape index: {}]
  %s7 = inlined_call_operand.vmem [shape: f32[1,128], index: 7, kind: input, shape index: {}]
  %s8 = inlined_call_operand.vmem [shape: f32[1,128], index: 8, kind: input, shape index: {}]
  %s9 = inlined_call_operand.vmem [shape: bf16[64,128], index: 9, kind: output, shape index: {}]
  %s10 = sld [smem:[#allocation0]]
  $region69: #{encode_process_decode.10} parent=0
    _
  %s12 = ssub.s32 1, %s10
  %s13 = scalar_select 0, %s12, %s10
  loop: start=0, step=1, limit=4
  $region2: #{encode_process_decode.10} parent=0 // loop_pre_header
    _
  $region3: #{encode_process_decode.10} parent=0 // loop_header
    %s15 = sphi 0, %s19
    %p16 = scmp.ge.s32.totalorder %s15, 4
    %s25 = sphi 0, %s27
    %s28 = sphi 0, %s25
    %s29 = sphi 0, %s28
    %s45 = sphi 0, %s29
    %s49 = sphi 0, %s49
    %s51 = sphi 0, %s49
    %s52 = sphi 0, %s51
    %s66 = sphi 0, %s52
    %s70 = sphi 0, %s70
    %s72 = sphi 0, %s70
    %s73 = sphi 0, %s72
    %s87 = sphi 0, %s73
    %s91 = sphi 0, %s91
    %s93 = sphi 0, %s91
    %s94 = sphi 0, %s93
    %s108 = sphi 0, %s94
    %s112 = sphi 0, %s112
    %s114 = sphi 0, %s112
    %s115 = sphi 0, %s114
    %s129 = sphi 0, %s115
    %s133 = sphi 0, %s133
    %s135 = sphi 0, %s133
    %s136 = sphi 0, %s135
    %s150 = sphi 0, %s136
    %s154 = sphi 0, %s154
    %s156 = sphi 0, %s154
    %s157 = sphi 0, %s156
    %s171 = sphi 0, %s157
    %s175 = sphi 0, %s175
    %s177 = sphi 0, %s175
    %s178 = sphi 0, %s177
    %s192 = sphi 0, %s178
    %s196 = sphi 0, %s196
    %s198 = sphi 0, %s196
    %s199 = sphi 0, %s198
    %s213 = sphi 0, %s199
    %s219 = sphi 0, %s221
    %s222 = sphi 0, %s219
    %s223 = sphi 0, %s222
    %s239 = sphi 0, %s223
  $region4: #{encode_process_decode.10} parent=0 // loop_header_branch
    %18 = sbr.rel (%p16) target = $region8
  $region5: #{encode_process_decode.10} parent=0 // loop_body
    %s20 = ssub.s32 %s15, 1
    %s21 = ssub.s32 %s15, 2
    %s22 = sadd.s32 %s15, 1
    %s23 = ssub.s32 %s15, %s22
    %p24 = scmp.eq.s32.totalorder %s23, 0
    %s26 = sadd.s32 %s25, 1
    %s27 = scalar_select %p24, %s25, %s26
    %p30 = pneg %p24
    %p31 = scmp.eq.s32.totalorder %s15, 1
    %p32 = por %p30, %p31
    %p33 = scmp.ne.s32.totalorder %s25, %s28
    %p34 = scmp.eq.s32.totalorder %s15, 0
    %p35 = por %p33, %p34
    %p36 = scmp.ne.s32.totalorder %s25, %s28
    %p37 = scmp.eq.s32.totalorder %s20, 1
    %p38 = por %p36, %p37
    %p39 = scmp.ne.s32.totalorder %s28, %s29
    %p40 = scmp.eq.s32.totalorder %s20, 0
    %p41 = por %p39, %p40
    %p42 = scmp.ne.s32.totalorder %s28, %s29
    %p43 = scmp.eq.s32.totalorder %s21, 1
    %p44 = por %p42, %p43
    %p46 = scmp.ne.s32.totalorder %s29, %s45
    %p47 = scmp.eq.s32.totalorder %s21, 0
    %p48 = por %p46, %p47
    %s50 = sadd.s32 %s49, 1
    %p53 = scmp.eq.s32.totalorder %s15, 1
    %p54 = scmp.ne.s32.totalorder %s49, %s51
    %p55 = scmp.eq.s32.totalorder %s15, 0
    %p56 = por %p54, %p55
    %p57 = scmp.ne.s32.totalorder %s49, %s51
    %p58 = scmp.eq.s32.totalorder %s20, 1
    %p59 = por %p57, %p58
    %p60 = scmp.ne.s32.totalorder %s51, %s52
    %p61 = scmp.eq.s32.totalorder %s20, 0
    %p62 = por %p60, %p61
    %p63 = scmp.ne.s32.totalorder %s51, %s52
    %p64 = scmp.eq.s32.totalorder %s21, 1
    %p65 = por %p63, %p64
    %p67 = scmp.ne.s32.totalorder %s52, %s66
    %p68 = scmp.eq.s32.totalorder %s21, 0
    %p69 = por %p67, %p68
    %s71 = sadd.s32 %s70, 1
    %p74 = scmp.eq.s32.totalorder %s15, 1
    %p75 = scmp.ne.s32.totalorder %s70, %s72
    %p76 = scmp.eq.s32.totalorder %s15, 0
    %p77 = por %p75, %p76
    %p78 = scmp.ne.s32.totalorder %s70, %s72
    %p79 = scmp.eq.s32.totalorder %s20, 1
    %p80 = por %p78, %p79
    %p81 = scmp.ne.s32.totalorder %s72, %s73
    %p82 = scmp.eq.s32.totalorder %s20, 0
    %p83 = por %p81, %p82
    %p84 = scmp.ne.s32.totalorder %s72, %s73
    %p85 = scmp.eq.s32.totalorder %s21, 1
    %p86 = por %p84, %p85
    %p88 = scmp.ne.s32.totalorder %s73, %s87
    %p89 = scmp.eq.s32.totalorder %s21, 0
    %p90 = por %p88, %p89
    %s92 = sadd.s32 %s91, 1
    %p95 = scmp.eq.s32.totalorder %s15, 1
    %p96 = scmp.ne.s32.totalorder %s91, %s93
    %p97 = scmp.eq.s32.totalorder %s15, 0
    %p98 = por %p96, %p97
    %p99 = scmp.ne.s32.totalorder %s91, %s93
    %p100 = scmp.eq.s32.totalorder %s20, 1
    %p101 = por %p99, %p100
    %p102 = scmp.ne.s32.totalorder %s93, %s94
    %p103 = scmp.eq.s32.totalorder %s20, 0
    %p104 = por %p102, %p103
    %p105 = scmp.ne.s32.totalorder %s93, %s94
    %p106 = scmp.eq.s32.totalorder %s21, 1
    %p107 = por %p105, %p106
    %p109 = scmp.ne.s32.totalorder %s94, %s108
    %p110 = scmp.eq.s32.totalorder %s21, 0
    %p111 = por %p109, %p110
    %s113 = sadd.s32 %s112, 1
    %p116 = scmp.eq.s32.totalorder %s15, 1
    %p117 = scmp.ne.s32.totalorder %s112, %s114
    %p118 = scmp.eq.s32.totalorder %s15, 0
    %p119 = por %p117, %p118
    %p120 = scmp.ne.s32.totalorder %s112, %s114
    %p121 = scmp.eq.s32.totalorder %s20, 1
    %p122 = por %p120, %p121
    %p123 = scmp.ne.s32.totalorder %s114, %s115
    %p124 = scmp.eq.s32.totalorder %s20, 0
    %p125 = por %p123, %p124
    %p126 = scmp.ne.s32.totalorder %s114, %s115
    %p127 = scmp.eq.s32.totalorder %s21, 1
    %p128 = por %p126, %p127
    %p130 = scmp.ne.s32.totalorder %s115, %s129
    %p131 = scmp.eq.s32.totalorder %s21, 0
    %p132 = por %p130, %p131
    %s134 = sadd.s32 %s133, 1
    %p137 = scmp.eq.s32.totalorder %s15, 1
    %p138 = scmp.ne.s32.totalorder %s133, %s135
    %p139 = scmp.eq.s32.totalorder %s15, 0
    %p140 = por %p138, %p139
    %p141 = scmp.ne.s32.totalorder %s133, %s135
    %p142 = scmp.eq.s32.totalorder %s20, 1
    %p143 = por %p141, %p142
    %p144 = scmp.ne.s32.totalorder %s135, %s136
    %p145 = scmp.eq.s32.totalorder %s20, 0
    %p146 = por %p144, %p145
    %p147 = scmp.ne.s32.totalorder %s135, %s136
    %p148 = scmp.eq.s32.totalorder %s21, 1
    %p149 = por %p147, %p148
    %p151 = scmp.ne.s32.totalorder %s136, %s150
    %p152 = scmp.eq.s32.totalorder %s21, 0
    %p153 = por %p151, %p152
    %s155 = sadd.s32 %s154, 1
    %p158 = scmp.eq.s32.totalorder %s15, 1
    %p159 = scmp.ne.s32.totalorder %s154, %s156
    %p160 = scmp.eq.s32.totalorder %s15, 0
    %p161 = por %p159, %p160
    %p162 = scmp.ne.s32.totalorder %s154, %s156
    %p163 = scmp.eq.s32.totalorder %s20, 1
    %p164 = por %p162, %p163
    %p165 = scmp.ne.s32.totalorder %s156, %s157
    %p166 = scmp.eq.s32.totalorder %s20, 0
    %p167 = por %p165, %p166
    %p168 = scmp.ne.s32.totalorder %s156, %s157
    %p169 = scmp.eq.s32.totalorder %s21, 1
    %p170 = por %p168, %p169
    %p172 = scmp.ne.s32.totalorder %s157, %s171
    %p173 = scmp.eq.s32.totalorder %s21, 0
    %p174 = por %p172, %p173
    %s176 = sadd.s32 %s175, 1
    %p179 = scmp.eq.s32.totalorder %s15, 1
    %p180 = scmp.ne.s32.totalorder %s175, %s177
    %p181 = scmp.eq.s32.totalorder %s15, 0
    %p182 = por %p180, %p181
    %p183 = scmp.ne.s32.totalorder %s175, %s177
    %p184 = scmp.eq.s32.totalorder %s20, 1
    %p185 = por %p183, %p184
    %p186 = scmp.ne.s32.totalorder %s177, %s178
    %p187 = scmp.eq.s32.totalorder %s20, 0
    %p188 = por %p186, %p187
    %p189 = scmp.ne.s32.totalorder %s177, %s178
    %p190 = scmp.eq.s32.totalorder %s21, 1
    %p191 = por %p189, %p190
    %p193 = scmp.ne.s32.totalorder %s178, %s192
    %p194 = scmp.eq.s32.totalorder %s21, 0
    %p195 = por %p193, %p194
    %s197 = sadd.s32 %s196, 1
    %p200 = scmp.eq.s32.totalorder %s15, 1
    %p201 = scmp.ne.s32.totalorder %s196, %s198
    %p202 = scmp.eq.s32.totalorder %s15, 0
    %p203 = por %p201, %p202
    %p204 = scmp.ne.s32.totalorder %s196, %s198
    %p205 = scmp.eq.s32.totalorder %s20, 1
    %p206 = por %p204, %p205
    %p207 = scmp.ne.s32.totalorder %s198, %s199
    %p208 = scmp.eq.s32.totalorder %s20, 0
    %p209 = por %p207, %p208
    %p210 = scmp.ne.s32.totalorder %s198, %s199
    %p211 = scmp.eq.s32.totalorder %s21, 1
    %p212 = por %p210, %p211
    %p214 = scmp.ne.s32.totalorder %s199, %s213
    %p215 = scmp.eq.s32.totalorder %s21, 0
    %p216 = por %p214, %p215
    %s217 = ssub.s32 %s15, %s22
    %p218 = scmp.eq.s32.totalorder %s217, 0
    %s220 = sadd.s32 %s219, 1
    %s221 = scalar_select %p218, %s219, %s220
    %p224 = pneg %p218
    %p225 = scmp.eq.s32.totalorder %s15, 1
    %p226 = por %p224, %p225
    %p227 = scmp.ne.s32.totalorder %s219, %s222
    %p228 = scmp.eq.s32.totalorder %s15, 0
    %p229 = por %p227, %p228
    %p230 = scmp.ne.s32.totalorder %s219, %s222
    %p231 = scmp.eq.s32.totalorder %s20, 1
    %p232 = por %p230, %p231
    %p233 = scmp.ne.s32.totalorder %s222, %s223
    %p234 = scmp.eq.s32.totalorder %s20, 0
    %p235 = por %p233, %p234
    %p236 = scmp.ne.s32.totalorder %s222, %s223
    %p237 = scmp.eq.s32.totalorder %s21, 1
    %p238 = por %p236, %p237
    %p240 = scmp.ne.s32.totalorder %s223, %s239
    %p241 = scmp.eq.s32.totalorder %s21, 0
    %p242 = por %p240, %p241
    %p243 = scmp.le.s32.totalorder 1, %s15
    %p244 = scmp.lt.s32.totalorder %s15, 3
    %p245 = pnand %p243, %p244
    %p246 = pneg %p245
    // Predicated region
    $region9: #{encode_process_decode.10} parent=5 // pred_check
      _
    $region10: #{encode_process_decode.10} parent=5 // pred_check_branch
      %248 = sbr.rel (%p245) target = $region12
    $region11: #{encode_process_decode.10} parent=5 // pred_region
      %s249 = ssub.s32 %s15, 1
      // Predicated region
      $region13: #{encode_process_decode.10} parent=11 // pred_check
        %p250 = pneg %p62
      $region14: #{encode_process_decode.10} parent=11 // pred_check_branch
        %252 = sbr.rel (%p250) target = $region16
      $region15: #{encode_process_decode.10} parent=11 // pred_region
        _
      $region16: #{encode_process_decode.10} parent=11 // pred_fallthru
        _
      // Predicated region
      $region17: #{encode_process_decode.10} parent=11 // pred_check
        %p253 = pneg %p83
      $region18: #{encode_process_decode.10} parent=11 // pred_check_branch
        %255 = sbr.rel (%p253) target = $region20
      $region19: #{encode_process_decode.10} parent=11 // pred_region
        _
      $region20: #{encode_process_decode.10} parent=11 // pred_fallthru
        _
      // Predicated region
      $region21: #{encode_process_decode.10} parent=11 // pred_check
        %p256 = pneg %p104
      $region22: #{encode_process_decode.10} parent=11 // pred_check_branch
        %258 = sbr.rel (%p256) target = $region24
      $region23: #{encode_process_decode.10} parent=11 // pred_region
        _
      $region24: #{encode_process_decode.10} parent=11 // pred_fallthru
        _
      // Predicated region
      $region25: #{encode_process_decode.10} parent=11 // pred_check
        %p259 = pneg %p125
      $region26: #{encode_process_decode.10} parent=11 // pred_check_branch
        %261 = sbr.rel (%p259) target = $region28
      $region27: #{encode_process_decode.10} parent=11 // pred_region
        _
      $region28: #{encode_process_decode.10} parent=11 // pred_fallthru
        _
      // Predicated region
      $region29: #{encode_process_decode.10} parent=11 // pred_check
        %p262 = pneg %p146
      $region30: #{encode_process_decode.10} parent=11 // pred_check_branch
        %264 = sbr.rel (%p262) target = $region32
      $region31: #{encode_process_decode.10} parent=11 // pred_region
        _
      $region32: #{encode_process_decode.10} parent=11 // pred_fallthru
        _
      // Predicated region
      $region33: #{encode_process_decode.10} parent=11 // pred_check
        %p265 = pneg %p167
      $region34: #{encode_process_decode.10} parent=11 // pred_check_branch
        %267 = sbr.rel (%p265) target = $region36
      $region35: #{encode_process_decode.10} parent=11 // pred_region
        _
      $region36: #{encode_process_decode.10} parent=11 // pred_fallthru
        _
      // Predicated region
      $region37: #{encode_process_decode.10} parent=11 // pred_check
        %p268 = pneg %p188
      $region38: #{encode_process_decode.10} parent=11 // pred_check_branch
        %270 = sbr.rel (%p268) target = $region40
      $region39: #{encode_process_decode.10} parent=11 // pred_region
        _
      $region40: #{encode_process_decode.10} parent=11 // pred_fallthru
        _
      // Predicated region
      $region41: #{encode_process_decode.10} parent=11 // pred_check
        %p271 = pneg %p209
      $region42: #{encode_process_decode.10} parent=11 // pred_check_branch
        %273 = sbr.rel (%p271) target = $region44
      $region43: #{encode_process_decode.10} parent=11 // pred_region
        _
      $region44: #{encode_process_decode.10} parent=11 // pred_fallthru
        _
    $region12: #{encode_process_decode.10} parent=5 // pred_fallthru
      _
    %p274 = scmp.lt.s32.totalorder %s15, 2
    // Predicated region
    $region45: #{encode_process_decode.10} parent=5 // pred_check
      %p275 = pneg %p274
    $region46: #{encode_process_decode.10} parent=5 // pred_check_branch
      %277 = sbr.rel (%p275) target = $region48
    $region47: #{encode_process_decode.10} parent=5 // pred_region
      // Predicated region
      $region49: #{encode_process_decode.10} parent=47 // pred_check
        %p278 = pneg %p35
      $region50: #{encode_process_decode.10} parent=47 // pred_check_branch
        %280 = sbr.rel (%p278) target = $region52
      $region51: #{encode_process_decode.10} parent=47 // pred_region
        %s281 = smul.u32 4, %s15
        %p282 = scmp.lt.s32.totalorder %s281, 7
        %s283 = scalar_select %p282, %s281, 7
        %s284 = smul.addr %s283, 8
        %s285 = scalar_lea.vmem %s0, %s284
        %s286 = smul.u32 4, %s15
      $region52: #{encode_process_decode.10} parent=47 // pred_fallthru
        _
    $region48: #{encode_process_decode.10} parent=5 // pred_fallthru
      _
    %p287 = scmp.le.s32.totalorder 1, %s15
    %p288 = scmp.lt.s32.totalorder %s15, 3
    %p289 = pnand %p287, %p288
    %p290 = pneg %p289
    // Predicated region
    $region53: #{encode_process_decode.10} parent=5 // pred_check
      _
    $region54: #{encode_process_decode.10} parent=5 // pred_check_branch
      %292 = sbr.rel (%p289) target = $region56
    $region55: #{encode_process_decode.10} parent=5 // pred_region
      %s293 = ssub.s32 %s15, 1
      %s294 = smul.u32 4, %s20
      %p295 = scmp.lt.s32.totalorder %s294, 7
      %s296 = scalar_select %p295, %s294, 7
      %s297 = smul.addr %s296, 8
      %s298 = scalar_lea.vmem %s0, %s297
      %p299 = pneg %p41
      %p300 = pneg %p38
      %p301 = pneg %p62
      %p302 = pneg %p59
      %p303 = pneg %p83
      %p304 = pneg %p80
      %p305 = pneg %p104
      %p306 = pneg %p101
      %p307 = pneg %p125
      %p308 = pneg %p122
      %p309 = pneg %p146
      %p310 = pneg %p143
      %p311 = pneg %p167
      %p312 = pneg %p164
      %p313 = pneg %p188
      %p314 = pneg %p185
      %p315 = pneg %p209
      %p316 = pneg %p206
      %p317 = pneg %p235
      %p318 = pneg %p232
      %s319 = smul.u32 4, %s20
      %p320 = scmp.lt.s32.totalorder %s319, 7
      %s321 = scalar_select %p320, %s319, 7
      %s322 = smul.addr %s321, 4
      %s323 = scalar_lea.vmem %s9, %s322
      %s324 = smul.u32 4, %s20
      %p325 = scmp.lt.s32.totalorder %s324, 7
      %s326 = scalar_select %p325, %s324, 7
      %s327 = smul.addr %s326, 8
      %s328 = scalar_lea.vmem %s0, %s327
      %s329 = smul.u32 4, %s20
      %s330 = smul.u32 4, %s20
      %p331 = scmp.lt.s32.totalorder %s330, 7
      %s332 = scalar_select %p331, %s330, 7
      %s333 = smul.addr %s332, 4
      %s334 = scalar_lea.vmem %s9, %s333
      %s335 = smul.u32 4, %s20
      %v337 = vld [vmem:[%s328] sm:$0xff]
      %v338 = vld [vmem:[%s328 + $0x8] sm:$0xff]
      %v339 = vld [vmem:[%s328 + $0x10] sm:$0xff]
      %v340 = vld [vmem:[%s328 + $0x18] sm:$0xff]
      %v341 = vpack.c.bf16 %v338, %v337
      %v342 = vpack.c.bf16 %v340, %v339
      %v343 = vld [vmem:[%s1] sm:$0xf]
      %v344 = vld [vmem:[%s2] sm:$0x1]
      %v346 = vlaneseq
      %v347 = vshrl.u32 %v346, 7
      %v348 = vsub.s32 0, %v347
      %v349 = vrot.slane %v344, %v348
      %vm351 = vcmask 64512
      %v353 = vsel %vm351, %v341, 0
      %v356 = vsel %vm351, %v342, 0
      %vm358 = vcmask 1043456
      %v360 = vsel %vm358, %v343, 0
      %362 = vmatprep.subr.bf16.mxu0 0
      %363 = vmatpush1.bf16.msra.mxu0 0
      %364 = vmatprep.subr.bf16.mxu0 0
      %365 = vmatpush1.bf16.msra.mxu0 0
      %366 = vmatprep.subr.bf16.mxu0 0
      %367 = vmatpush1.bf16.msra.mxu0 0
      %368 = vmatprep.subr.bf16.mxu0 0
      %369 = vmatpush1.bf16.msra.mxu0 0
      %370 = vmatprep.subr.bf16.mxu0 0
      %371 = vmatpush1.bf16.msra.mxu0 0
      %372 = vmatprep.subr.bf16.mxu0 0
      %373 = vmatpush1.bf16.msra.mxu0 0
      %374 = vmatprep.subr.bf16.mxu0 0
      %375 = vmatpush1.bf16.msra.mxu0 0
      %376 = vmatprep.subr.bf16.mxu0 0
      %377 = vmatpush1.bf16.msra.mxu0 %v360
      %378 = vmatprep.subr.bf16.mxu0 0
      %379 = vmatpush2.bf16.msra.mxu0 0
      %380 = vmatprep.subr.bf16.mxu0 0
      %381 = vmatpush2.bf16.msra.mxu0 0
      %382 = vmatprep.subr.bf16.mxu0 0
      %383 = vmatpush2.bf16.msra.mxu0 0
      %384 = vmatprep.subr.bf16.mxu0 0
      %385 = vmatpush2.bf16.msra.mxu0 0
      %386 = vmatprep.subr.bf16.mxu0 0
      %387 = vmatpush2.bf16.msra.mxu0 0
      %388 = vmatprep.subr.bf16.mxu0 0
      %389 = vmatpush2.bf16.msra.mxu0 0
      %390 = vmatprep.subr.bf16.mxu0 0
      %391 = vmatpush2.bf16.msra.mxu0 0
      %392 = vmatprep.subr.bf16.mxu0 0
      %393 = vmatpush2.bf16.msra.mxu0 0
      %394 = vmatprep.mubr.bf16.mxu0 0
      %395 = vmatmul.mubr.bf16.gmra.mxu0 %v353
      %v396 = vpop.f32.mrf.mxu0
      %v397 = vadd.f32 %v349, %v396
      %v398 = vpop.f32.mrf.mxu0
      %v399 = vpop.f32.mrf.mxu0
      %v400 = vadd.f32 %v349, %v399
      %v401 = vpop.f32.mrf.mxu0
      %402 = vmatprep.mubr.bf16.mxu0 0
      %403 = vmatmul.mubr.bf16.gmra.mxu0 %v356
      %v404 = vpop.f32.mrf.mxu0
      %v405 = vadd.f32 %v349, %v404
      %v406 = vpop.f32.mrf.mxu0
      %v407 = vpop.f32.mrf.mxu0
      %v408 = vadd.f32 %v349, %v407
      %v409 = vpop.f32.mrf.mxu0
      %410 = vdwg.mxu0
      %v411 = vmax.f32 %v397, 0.0
      %v412 = vmax.f32 %v400, 0.0
      %v413 = vmax.f32 %v405, 0.0
      %v414 = vmax.f32 %v408, 0.0
      %v415 = vld [vmem:[%s3] sm:$0xf]
      %v416 = vld [vmem:[%s3 + $0x4] sm:$0xf]
      %v417 = vld [vmem:[%s3 + $0x8] sm:$0xf]
      %v418 = vld [vmem:[%s3 + $0xc] sm:$0xf]
      %v419 = vld [vmem:[%s3 + $0x10] sm:$0xf]
      %v420 = vld [vmem:[%s3 + $0x14] sm:$0xf]
      %v421 = vld [vmem:[%s3 + $0x18] sm:$0xf]
      %v422 = vld [vmem:[%s3 + $0x1c] sm:$0xf]
      %v423 = vld [vmem:[%s3 + $0x20] sm:$0xf]
      %v424 = vld [vmem:[%s3 + $0x24] sm:$0xf]
      %v425 = vld [vmem:[%s3 + $0x28] sm:$0xf]
      %v426 = vld [vmem:[%s3 + $0x2c] sm:$0xf]
      %v427 = vld [vmem:[%s3 + $0x30] sm:$0xf]
      %v428 = vld [vmem:[%s3 + $0x34] sm:$0xf]
      %v429 = vld [vmem:[%s3 + $0x38] sm:$0xf]
      %v430 = vld [vmem:[%s3 + $0x3c] sm:$0xf]
      %v431 = vld [vmem:[%s4] sm:$0x1]
      %v432 = vpack.c.bf16 %v412, %v411
      %v433 = vpack.c.bf16 %v414, %v413
      %v435 = vlaneseq
      %v436 = vshrl.u32 %v435, 7
      %v437 = vsub.s32 0, %v436
      %v438 = vrot.slane %v431, %v437
      %v456 = vunpack.c.l.b16 %v415
      %v457 = vunpack.c.l.b16 %v416
      %v458 = vunpack.c.l.b16 %v417
      %v459 = vunpack.c.l.b16 %v418
      %v460 = vunpack.c.l.b16 %v419
      %v461 = vunpack.c.l.b16 %v420
      %v462 = vunpack.c.l.b16 %v421
      %v463 = vunpack.c.l.b16 %v422
      %v464 = vunpack.c.l.b16 %v423
      %v465 = vunpack.c.l.b16 %v424
      %v466 = vunpack.c.l.b16 %v425
      %v467 = vunpack.c.l.b16 %v426
      %v468 = vunpack.c.l.b16 %v427
      %v469 = vunpack.c.l.b16 %v428
      %v470 = vunpack.c.l.b16 %v429
      %v471 = vunpack.c.l.b16 %v430
      %v472 = vpack.c.b16 %v457, %v456
      %v473 = vpack.c.b16 %v459, %v458
      %v474 = vpack.c.b16 %v461, %v460
      %v475 = vpack.c.b16 %v463, %v462
      %v476 = vpack.c.b16 %v465, %v464
      %v477 = vpack.c.b16 %v467, %v466
      %v478 = vpack.c.b16 %v469, %v468
      %v479 = vpack.c.b16 %v471, %v470
      %488 = vmatprep.subr.bf16.mxu0 0
      %489 = vmatpush1.bf16.msra.mxu0 %v479
      %490 = vmatprep.subr.bf16.mxu0 0
      %491 = vmatpush1.bf16.msra.mxu0 %v478
      %492 = vmatprep.subr.bf16.mxu0 0
      %493 = vmatpush1.bf16.msra.mxu0 %v477
      %494 = vmatprep.subr.bf16.mxu0 0
      %495 = vmatpush1.bf16.msra.mxu0 %v476
      %496 = vmatprep.subr.bf16.mxu0 0
      %497 = vmatpush1.bf16.msra.mxu0 %v475
      %498 = vmatprep.subr.bf16.mxu0 0
      %499 = vmatpush1.bf16.msra.mxu0 %v474
      %500 = vmatprep.subr.bf16.mxu0 0
      %501 = vmatpush1.bf16.msra.mxu0 %v473
      %502 = vmatprep.subr.bf16.mxu0 0
      %503 = vmatpush1.bf16.msra.mxu0 %v472
      %504 = vmatprep.subr.bf16.mxu0 0
      %505 = vmatpush2.bf16.msra.mxu0 0
      %506 = vmatprep.subr.bf16.mxu0 0
      %507 = vmatpush2.bf16.msra.mxu0 0
      %508 = vmatprep.subr.bf16.mxu0 0
      %509 = vmatpush2.bf16.msra.mxu0 0
      %510 = vmatprep.subr.bf16.mxu0 0
      %511 = vmatpush2.bf16.msra.mxu0 0
      %512 = vmatprep.subr.bf16.mxu0 0
      %513 = vmatpush2.bf16.msra.mxu0 0
      %514 = vmatprep.subr.bf16.mxu0 0
      %515 = vmatpush2.bf16.msra.mxu0 0
      %516 = vmatprep.subr.bf16.mxu0 0
      %517 = vmatpush2.bf16.msra.mxu0 0
      %518 = vmatprep.subr.bf16.mxu0 0
      %519 = vmatpush2.bf16.msra.mxu0 0
      %520 = vmatprep.mubr.bf16.mxu0 0
      %521 = vmatmul.mubr.bf16.gmra.mxu0 %v432
      %v522 = vpop.f32.mrf.mxu0
      %v523 = vadd.f32 %v438, %v522
      %v524 = vpop.f32.mrf.mxu0
      %v525 = vpop.f32.mrf.mxu0
      %v526 = vadd.f32 %v438, %v525
      %v527 = vpop.f32.mrf.mxu0
      %528 = vmatprep.mubr.bf16.mxu0 0
      %529 = vmatmul.mubr.bf16.gmra.mxu0 %v433
      %v530 = vpop.f32.mrf.mxu0
      %v531 = vadd.f32 %v438, %v530
      %v532 = vpop.f32.mrf.mxu0
      %v533 = vpop.f32.mrf.mxu0
      %v534 = vadd.f32 %v438, %v533
      %v535 = vpop.f32.mrf.mxu0
      %536 = vdwg.mxu0
      %v537 = vmax.f32 %v523, 0.0
      %v538 = vmax.f32 %v526, 0.0
      %v539 = vmax.f32 %v531, 0.0
      %v540 = vmax.f32 %v534, 0.0
      %v541 = vld [vmem:[%s5] sm:$0xf]
      %v542 = vld [vmem:[%s5 + $0x4] sm:$0xf]
      %v543 = vld [vmem:[%s5 + $0x8] sm:$0xf]
      %v544 = vld [vmem:[%s5 + $0xc] sm:$0xf]
      %v545 = vld [vmem:[%s5 + $0x10] sm:$0xf]
      %v546 = vld [vmem:[%s5 + $0x14] sm:$0xf]
      %v547 = vld [vmem:[%s5 + $0x18] sm:$0xf]
      %v548 = vld [vmem:[%s5 + $0x1c] sm:$0xf]
      %v549 = vld [vmem:[%s5 + $0x20] sm:$0xf]
      %v550 = vld [vmem:[%s5 + $0x24] sm:$0xf]
      %v551 = vld [vmem:[%s5 + $0x28] sm:$0xf]
      %v552 = vld [vmem:[%s5 + $0x2c] sm:$0xf]
      %v553 = vld [vmem:[%s5 + $0x30] sm:$0xf]
      %v554 = vld [vmem:[%s5 + $0x34] sm:$0xf]
      %v555 = vld [vmem:[%s5 + $0x38] sm:$0xf]
      %v556 = vld [vmem:[%s5 + $0x3c] sm:$0xf]
      %v557 = vld [vmem:[%s6] sm:$0x1]
      %v558 = vpack.c.bf16 %v538, %v537
      %v559 = vpack.c.bf16 %v540, %v539
      %v561 = vlaneseq
      %v562 = vshrl.u32 %v561, 7
      %v563 = vsub.s32 0, %v562
      %v564 = vrot.slane %v557, %v563
      %v582 = vunpack.c.l.b16 %v541
      %v583 = vunpack.c.l.b16 %v542
      %v584 = vunpack.c.l.b16 %v543
      %v585 = vunpack.c.l.b16 %v544
      %v586 = vunpack.c.l.b16 %v545
      %v587 = vunpack.c.l.b16 %v546
      %v588 = vunpack.c.l.b16 %v547
      %v589 = vunpack.c.l.b16 %v548
      %v590 = vunpack.c.l.b16 %v549
      %v591 = vunpack.c.l.b16 %v550
      %v592 = vunpack.c.l.b16 %v551
      %v593 = vunpack.c.l.b16 %v552
      %v594 = vunpack.c.l.b16 %v553
      %v595 = vunpack.c.l.b16 %v554
      %v596 = vunpack.c.l.b16 %v555
      %v597 = vunpack.c.l.b16 %v556
      %v598 = vpack.c.b16 %v583, %v582
      %v599 = vpack.c.b16 %v585, %v584
      %v600 = vpack.c.b16 %v587, %v586
      %v601 = vpack.c.b16 %v589, %v588
      %v602 = vpack.c.b16 %v591, %v590
      %v603 = vpack.c.b16 %v593, %v592
      %v604 = vpack.c.b16 %v595, %v594
      %v605 = vpack.c.b16 %v597, %v596
      %614 = vmatprep.subr.bf16.mxu0 0
      %615 = vmatpush1.bf16.msra.mxu0 %v605
      %616 = vmatprep.subr.bf16.mxu0 0
      %617 = vmatpush1.bf16.msra.mxu0 %v604
      %618 = vmatprep.subr.bf16.mxu0 0
      %619 = vmatpush1.bf16.msra.mxu0 %v603
      %620 = vmatprep.subr.bf16.mxu0 0
      %621 = vmatpush1.bf16.msra.mxu0 %v602
      %622 = vmatprep.subr.bf16.mxu0 0
      %623 = vmatpush1.bf16.msra.mxu0 %v601
      %624 = vmatprep.subr.bf16.mxu0 0
      %625 = vmatpush1.bf16.msra.mxu0 %v600
      %626 = vmatprep.subr.bf16.mxu0 0
      %627 = vmatpush1.bf16.msra.mxu0 %v599
      %628 = vmatprep.subr.bf16.mxu0 0
      %629 = vmatpush1.bf16.msra.mxu0 %v598
      %630 = vmatprep.subr.bf16.mxu0 0
      %631 = vmatpush2.bf16.msra.mxu0 0
      %632 = vmatprep.subr.bf16.mxu0 0
      %633 = vmatpush2.bf16.msra.mxu0 0
      %634 = vmatprep.subr.bf16.mxu0 0
      %635 = vmatpush2.bf16.msra.mxu0 0
      %636 = vmatprep.subr.bf16.mxu0 0
      %637 = vmatpush2.bf16.msra.mxu0 0
      %638 = vmatprep.subr.bf16.mxu0 0
      %639 = vmatpush2.bf16.msra.mxu0 0
      %640 = vmatprep.subr.bf16.mxu0 0
      %641 = vmatpush2.bf16.msra.mxu0 0
      %642 = vmatprep.subr.bf16.mxu0 0
      %643 = vmatpush2.bf16.msra.mxu0 0
      %644 = vmatprep.subr.bf16.mxu0 0
      %645 = vmatpush2.bf16.msra.mxu0 0
      %646 = vmatprep.mubr.bf16.mxu0 0
      %647 = vmatmul.mubr.bf16.gmra.mxu0 %v558
      %v648 = vpop.f32.mrf.mxu0
      %v649 = vadd.f32 %v564, %v648
      %v650 = vpop.f32.mrf.mxu0
      %v651 = vpop.f32.mrf.mxu0
      %v652 = vadd.f32 %v564, %v651
      %v653 = vpop.f32.mrf.mxu0
      %654 = vmatprep.mubr.bf16.mxu0 0
      %655 = vmatmul.mubr.bf16.gmra.mxu0 %v559
      %v656 = vpop.f32.mrf.mxu0
      %v657 = vadd.f32 %v564, %v656
      %v658 = vpop.f32.mrf.mxu0
      %v659 = vpop.f32.mrf.mxu0
      %v660 = vadd.f32 %v564, %v659
      %v661 = vpop.f32.mrf.mxu0
      %662 = vdwg.mxu0
      %v663 = vld [vmem:[%s7] sm:$0x1]
      %v664 = vld [vmem:[%s8] sm:$0x1]
      %665 = vadd.xlane.f32.xlu0 %v649
      %v666 = vpop.xlane.xlu0 %665
      %667 = vadd.xlane.f32.xlu0 %v652
      %v668 = vpop.xlane.xlu0 %667
      %669 = vadd.xlane.f32.xlu0 %v657
      %v670 = vpop.xlane.xlu0 %669
      %671 = vadd.xlane.f32.xlu0 %v660
      %v672 = vpop.xlane.xlu0 %671
      %v673 = vrcp.pop 128.0
      %v674 = vmul.f32 %v666, %v673
      %v675 = vmul.f32 %v668, %v673
      %v676 = vmul.f32 %v670, %v673
      %v677 = vmul.f32 %v672, %v673
      %v678 = vsub.f32 %v649, %v674
      %v679 = vsub.f32 %v652, %v675
      %v680 = vsub.f32 %v657, %v676
      %v681 = vsub.f32 %v660, %v677
      %v682 = vmul.f32 %v678, %v678
      %v683 = vmul.f32 %v679, %v679
      %v684 = vmul.f32 %v680, %v680
      %v685 = vmul.f32 %v681, %v681
      %686 = vadd.xlane.f32.xlu0 %v682
      %v687 = vpop.xlane.xlu0 %686
      %688 = vadd.xlane.f32.xlu0 %v683
      %v689 = vpop.xlane.xlu0 %688
      %690 = vadd.xlane.f32.xlu0 %v684
      %v691 = vpop.xlane.xlu0 %690
      %692 = vadd.xlane.f32.xlu0 %v685
      %v693 = vpop.xlane.xlu0 %692
      %v694 = vmul.f32 %v687, %v673
      %v695 = vmul.f32 %v689, %v673
      %v696 = vmul.f32 %v691, %v673
      %v697 = vmul.f32 %v693, %v673
      %v698 = vadd.f32 %v694, 1e-05
      %v699 = vadd.f32 %v695, 1e-05
      %v700 = vadd.f32 %v696, 1e-05
      %v701 = vadd.f32 %v697, 1e-05
      %v702 = vrsqrt.pop %v698
      %v703 = vrsqrt.pop %v699
      %v704 = vrsqrt.pop %v700
      %v705 = vrsqrt.pop %v701
      %v706 = vmul.f32 %v678, %v702
      %v707 = vmul.f32 %v679, %v703
      %v708 = vmul.f32 %v680, %v704
      %v709 = vmul.f32 %v681, %v705
      %v711 = vlaneseq
      %v712 = vshrl.u32 %v711, 7
      %v713 = vsub.s32 0, %v712
      %v714 = vrot.slane %v663, %v713
      %v716 = vmul.f32 %v706, %v714
      %v717 = vmul.f32 %v707, %v714
      %v718 = vmul.f32 %v708, %v714
      %v719 = vmul.f32 %v709, %v714
      %v721 = vlaneseq
      %v722 = vshrl.u32 %v721, 7
      %v723 = vsub.s32 0, %v722
      %v724 = vrot.slane %v664, %v723
      %v726 = vadd.f32 %v716, %v724
      %v727 = vadd.f32 %v717, %v724
      %v728 = vadd.f32 %v718, %v724
      %v729 = vadd.f32 %v719, %v724
      %v730 = vpack.c.bf16 %v727, %v726
      %v731 = vpack.c.bf16 %v729, %v728
      %v734 = vunpack.c.l.b16 %v730
      %v735 = vunpack.c.h.b16 %v730
      %v736 = vunpack.c.l.b16 %v731
      %v737 = vunpack.c.h.b16 %v731
      %v738 = vpack.c.b16 %v734, %v734
      %v739 = vpack.c.b16 %v735, %v735
      %v740 = vpack.c.b16 %v736, %v736
      %v741 = vpack.c.b16 %v737, %v737
      %746 = vst [vmem:[%s334] sm:$0xf] %v738
      %747 = vst [vmem:[%s334 + $0x4] sm:$0xf] %v739
      %748 = vst [vmem:[%s334 + $0x8] sm:$0xf] %v740
      %749 = vst [vmem:[%s334 + $0xc] sm:$0xf] %v741
      %s750 = smul.u32 4, %s20
      %p751 = scmp.lt.s32.totalorder %s750, 7
      %s752 = scalar_select %p751, %s750, 7
      %s753 = smul.addr %s752, 4
      %s754 = scalar_lea.vmem %s9, %s753
      // Predicated region
      $region57: #{encode_process_decode.10} parent=55 // pred_check
        %p755 = pneg %p232
      $region58: #{encode_process_decode.10} parent=55 // pred_check_branch
        %757 = sbr.rel (%p755) target = $region60
      $region59: #{encode_process_decode.10} parent=55 // pred_region
        %s758 = smul.u32 4, %s20
      $region60: #{encode_process_decode.10} parent=55 // pred_fallthru
        _
    $region56: #{encode_process_decode.10} parent=5 // pred_fallthru
      _
    %p759 = scmp.le.s32.totalorder 2, %s15
    // Predicated region
    $region61: #{encode_process_decode.10} parent=5 // pred_check
      %p760 = pneg %p759
    $region62: #{encode_process_decode.10} parent=5 // pred_check_branch
      %762 = sbr.rel (%p760) target = $region64
    $region63: #{encode_process_decode.10} parent=5 // pred_region
      %s763 = ssub.s32 %s15, 2
      // Predicated region
      $region65: #{encode_process_decode.10} parent=63 // pred_check
        %p764 = pneg %p238
      $region66: #{encode_process_decode.10} parent=63 // pred_check_branch
        %766 = sbr.rel (%p764) target = $region68
      $region67: #{encode_process_decode.10} parent=63 // pred_region
        %s767 = smul.u32 4, %s21
        %p768 = scmp.lt.s32.totalorder %s767, 7
        %s769 = scalar_select %p768, %s767, 7
        %s770 = smul.addr %s769, 4
        %s771 = scalar_lea.vmem %s9, %s770
      $region68: #{encode_process_decode.10} parent=63 // pred_fallthru
        _
    $region64: #{encode_process_decode.10} parent=5 // pred_fallthru
      _
  $region6: #{encode_process_decode.10} parent=0 // loop_footer
    %s19 = sadd.s32 1, %s15
  $region7: #{encode_process_decode.10} parent=0 // loop_footer_branch
    %14 = sbr.rel target = $region3
  $region8: #{encode_process_decode.10} parent=0 // loop_exit
    _

// kernel: encode_process_decode.11
$region0: #{encode_process_decode.11}
  #allocation0 [shape = 'u32[]', space=smem, size = 0x4, offset = 0x4, fixed_abs, tag = 'smem constant byte address 0x4 - core index']
  #allocation1 [shape = 'u32[144,128]{1,0:T(1,128)}', space=vmem, size = 0x12000, scoped, tag = 'internal scratch']
  %s0 = inlined_call_operand.vmem [shape: f32[128,10], index: 0, kind: input, shape index: {}]
  %s1 = inlined_call_operand.vmem [shape: bf16[10,128], index: 1, kind: input, shape index: {}]
  %s2 = inlined_call_operand.vmem [shape: f32[1,128], index: 2, kind: input, shape index: {}]
  %s3 = inlined_call_operand.vmem [shape: bf16[128,128], index: 3, kind: input, shape index: {}]
  %s4 = inlined_call_operand.vmem [shape: f32[1,128], index: 4, kind: input, shape index: {}]
  %s5 = inlined_call_operand.vmem [shape: bf16[128,128], index: 5, kind: input, shape index: {}]
  %s6 = inlined_call_operand.vmem [shape: f32[1,128], index: 6, kind: input, shape index: {}]
  %s7 = inlined_call_operand.vmem [shape: f32[1,128], index: 7, kind: input, shape index: {}]
  %s8 = inlined_call_operand.vmem [shape: f32[1,128], index: 8, kind: input, shape index: {}]
  %s9 = inlined_call_operand.vmem [shape: bf16[128,128], index: 9, kind: output, shape index: {}]
  %s10 = sld [smem:[#allocation0]]
  $region69: #{encode_process_decode.11} parent=0
    _
  %s12 = ssub.s32 1, %s10
  %s13 = scalar_select 0, %s12, %s10
  loop: start=0, step=1, limit=4
  $region2: #{encode_process_decode.11} parent=0 // loop_pre_header
    _
  $region3: #{encode_process_decode.11} parent=0 // loop_header
    %s15 = sphi 0, %s19
    %p16 = scmp.ge.s32.totalorder %s15, 4
    %s25 = sphi 0, %s27
    %s28 = sphi 0, %s25
    %s29 = sphi 0, %s28
    %s45 = sphi 0, %s29
    %s49 = sphi 0, %s49
    %s51 = sphi 0, %s49
    %s52 = sphi 0, %s51
    %s66 = sphi 0, %s52
    %s70 = sphi 0, %s70
    %s72 = sphi 0, %s70
    %s73 = sphi 0, %s72
    %s87 = sphi 0, %s73
    %s91 = sphi 0, %s91
    %s93 = sphi 0, %s91
    %s94 = sphi 0, %s93
    %s108 = sphi 0, %s94
    %s112 = sphi 0, %s112
    %s114 = sphi 0, %s112
    %s115 = sphi 0, %s114
    %s129 = sphi 0, %s115
    %s133 = sphi 0, %s133
    %s135 = sphi 0, %s133
    %s136 = sphi 0, %s135
    %s150 = sphi 0, %s136
    %s154 = sphi 0, %s154
    %s156 = sphi 0, %s154
    %s157 = sphi 0, %s156
    %s171 = sphi 0, %s157
    %s175 = sphi 0, %s175
    %s177 = sphi 0, %s175
    %s178 = sphi 0, %s177
    %s192 = sphi 0, %s178
    %s196 = sphi 0, %s196
    %s198 = sphi 0, %s196
    %s199 = sphi 0, %s198
    %s213 = sphi 0, %s199
    %s219 = sphi 0, %s221
    %s222 = sphi 0, %s219
    %s223 = sphi 0, %s222
    %s239 = sphi 0, %s223
  $region4: #{encode_process_decode.11} parent=0 // loop_header_branch
    %18 = sbr.rel (%p16) target = $region8
  $region5: #{encode_process_decode.11} parent=0 // loop_body
    %s20 = ssub.s32 %s15, 1
    %s21 = ssub.s32 %s15, 2
    %s22 = sadd.s32 %s15, 1
    %s23 = ssub.s32 %s15, %s22
    %p24 = scmp.eq.s32.totalorder %s23, 0
    %s26 = sadd.s32 %s25, 1
    %s27 = scalar_select %p24, %s25, %s26
    %p30 = pneg %p24
    %p31 = scmp.eq.s32.totalorder %s15, 1
    %p32 = por %p30, %p31
    %p33 = scmp.ne.s32.totalorder %s25, %s28
    %p34 = scmp.eq.s32.totalorder %s15, 0
    %p35 = por %p33, %p34
    %p36 = scmp.ne.s32.totalorder %s25, %s28
    %p37 = scmp.eq.s32.totalorder %s20, 1
    %p38 = por %p36, %p37
    %p39 = scmp.ne.s32.totalorder %s28, %s29
    %p40 = scmp.eq.s32.totalorder %s20, 0
    %p41 = por %p39, %p40
    %p42 = scmp.ne.s32.totalorder %s28, %s29
    %p43 = scmp.eq.s32.totalorder %s21, 1
    %p44 = por %p42, %p43
    %p46 = scmp.ne.s32.totalorder %s29, %s45
    %p47 = scmp.eq.s32.totalorder %s21, 0
    %p48 = por %p46, %p47
    %s50 = sadd.s32 %s49, 1
    %p53 = scmp.eq.s32.totalorder %s15, 1
    %p54 = scmp.ne.s32.totalorder %s49, %s51
    %p55 = scmp.eq.s32.totalorder %s15, 0
    %p56 = por %p54, %p55
    %p57 = scmp.ne.s32.totalorder %s49, %s51
    %p58 = scmp.eq.s32.totalorder %s20, 1
    %p59 = por %p57, %p58
    %p60 = scmp.ne.s32.totalorder %s51, %s52
    %p61 = scmp.eq.s32.totalorder %s20, 0
    %p62 = por %p60, %p61
    %p63 = scmp.ne.s32.totalorder %s51, %s52
    %p64 = scmp.eq.s32.totalorder %s21, 1
    %p65 = por %p63, %p64
    %p67 = scmp.ne.s32.totalorder %s52, %s66
    %p68 = scmp.eq.s32.totalorder %s21, 0
    %p69 = por %p67, %p68
    %s71 = sadd.s32 %s70, 1
    %p74 = scmp.eq.s32.totalorder %s15, 1
    %p75 = scmp.ne.s32.totalorder %s70, %s72
    %p76 = scmp.eq.s32.totalorder %s15, 0
    %p77 = por %p75, %p76
    %p78 = scmp.ne.s32.totalorder %s70, %s72
    %p79 = scmp.eq.s32.totalorder %s20, 1
    %p80 = por %p78, %p79
    %p81 = scmp.ne.s32.totalorder %s72, %s73
    %p82 = scmp.eq.s32.totalorder %s20, 0
    %p83 = por %p81, %p82
    %p84 = scmp.ne.s32.totalorder %s72, %s73
    %p85 = scmp.eq.s32.totalorder %s21, 1
    %p86 = por %p84, %p85
    %p88 = scmp.ne.s32.totalorder %s73, %s87
    %p89 = scmp.eq.s32.totalorder %s21, 0
    %p90 = por %p88, %p89
    %s92 = sadd.s32 %s91, 1
    %p95 = scmp.eq.s32.totalorder %s15, 1
    %p96 = scmp.ne.s32.totalorder %s91, %s93
    %p97 = scmp.eq.s32.totalorder %s15, 0
    %p98 = por %p96, %p97
    %p99 = scmp.ne.s32.totalorder %s91, %s93
    %p100 = scmp.eq.s32.totalorder %s20, 1
    %p101 = por %p99, %p100
    %p102 = scmp.ne.s32.totalorder %s93, %s94
    %p103 = scmp.eq.s32.totalorder %s20, 0
    %p104 = por %p102, %p103
    %p105 = scmp.ne.s32.totalorder %s93, %s94
    %p106 = scmp.eq.s32.totalorder %s21, 1
    %p107 = por %p105, %p106
    %p109 = scmp.ne.s32.totalorder %s94, %s108
    %p110 = scmp.eq.s32.totalorder %s21, 0
    %p111 = por %p109, %p110
    %s113 = sadd.s32 %s112, 1
    %p116 = scmp.eq.s32.totalorder %s15, 1
    %p117 = scmp.ne.s32.totalorder %s112, %s114
    %p118 = scmp.eq.s32.totalorder %s15, 0
    %p119 = por %p117, %p118
    %p120 = scmp.ne.s32.totalorder %s112, %s114
    %p121 = scmp.eq.s32.totalorder %s20, 1
    %p122 = por %p120, %p121
    %p123 = scmp.ne.s32.totalorder %s114, %s115
    %p124 = scmp.eq.s32.totalorder %s20, 0
    %p125 = por %p123, %p124
    %p126 = scmp.ne.s32.totalorder %s114, %s115
    %p127 = scmp.eq.s32.totalorder %s21, 1
    %p128 = por %p126, %p127
    %p130 = scmp.ne.s32.totalorder %s115, %s129
    %p131 = scmp.eq.s32.totalorder %s21, 0
    %p132 = por %p130, %p131
    %s134 = sadd.s32 %s133, 1
    %p137 = scmp.eq.s32.totalorder %s15, 1
    %p138 = scmp.ne.s32.totalorder %s133, %s135
    %p139 = scmp.eq.s32.totalorder %s15, 0
    %p140 = por %p138, %p139
    %p141 = scmp.ne.s32.totalorder %s133, %s135
    %p142 = scmp.eq.s32.totalorder %s20, 1
    %p143 = por %p141, %p142
    %p144 = scmp.ne.s32.totalorder %s135, %s136
    %p145 = scmp.eq.s32.totalorder %s20, 0
    %p146 = por %p144, %p145
    %p147 = scmp.ne.s32.totalorder %s135, %s136
    %p148 = scmp.eq.s32.totalorder %s21, 1
    %p149 = por %p147, %p148
    %p151 = scmp.ne.s32.totalorder %s136, %s150
    %p152 = scmp.eq.s32.totalorder %s21, 0
    %p153 = por %p151, %p152
    %s155 = sadd.s32 %s154, 1
    %p158 = scmp.eq.s32.totalorder %s15, 1
    %p159 = scmp.ne.s32.totalorder %s154, %s156
    %p160 = scmp.eq.s32.totalorder %s15, 0
    %p161 = por %p159, %p160
    %p162 = scmp.ne.s32.totalorder %s154, %s156
    %p163 = scmp.eq.s32.totalorder %s20, 1
    %p164 = por %p162, %p163
    %p165 = scmp.ne.s32.totalorder %s156, %s157
    %p166 = scmp.eq.s32.totalorder %s20, 0
    %p167 = por %p165, %p166
    %p168 = scmp.ne.s32.totalorder %s156, %s157
    %p169 = scmp.eq.s32.totalorder %s21, 1
    %p170 = por %p168, %p169
    %p172 = scmp.ne.s32.totalorder %s157, %s171
    %p173 = scmp.eq.s32.totalorder %s21, 0
    %p174 = por %p172, %p173
    %s176 = sadd.s32 %s175, 1
    %p179 = scmp.eq.s32.totalorder %s15, 1
    %p180 = scmp.ne.s32.totalorder %s175, %s177
    %p181 = scmp.eq.s32.totalorder %s15, 0
    %p182 = por %p180, %p181
    %p183 = scmp.ne.s32.totalorder %s175, %s177
    %p184 = scmp.eq.s32.totalorder %s20, 1
    %p185 = por %p183, %p184
    %p186 = scmp.ne.s32.totalorder %s177, %s178
    %p187 = scmp.eq.s32.totalorder %s20, 0
    %p188 = por %p186, %p187
    %p189 = scmp.ne.s32.totalorder %s177, %s178
    %p190 = scmp.eq.s32.totalorder %s21, 1
    %p191 = por %p189, %p190
    %p193 = scmp.ne.s32.totalorder %s178, %s192
    %p194 = scmp.eq.s32.totalorder %s21, 0
    %p195 = por %p193, %p194
    %s197 = sadd.s32 %s196, 1
    %p200 = scmp.eq.s32.totalorder %s15, 1
    %p201 = scmp.ne.s32.totalorder %s196, %s198
    %p202 = scmp.eq.s32.totalorder %s15, 0
    %p203 = por %p201, %p202
    %p204 = scmp.ne.s32.totalorder %s196, %s198
    %p205 = scmp.eq.s32.totalorder %s20, 1
    %p206 = por %p204, %p205
    %p207 = scmp.ne.s32.totalorder %s198, %s199
    %p208 = scmp.eq.s32.totalorder %s20, 0
    %p209 = por %p207, %p208
    %p210 = scmp.ne.s32.totalorder %s198, %s199
    %p211 = scmp.eq.s32.totalorder %s21, 1
    %p212 = por %p210, %p211
    %p214 = scmp.ne.s32.totalorder %s199, %s213
    %p215 = scmp.eq.s32.totalorder %s21, 0
    %p216 = por %p214, %p215
    %s217 = ssub.s32 %s15, %s22
    %p218 = scmp.eq.s32.totalorder %s217, 0
    %s220 = sadd.s32 %s219, 1
    %s221 = scalar_select %p218, %s219, %s220
    %p224 = pneg %p218
    %p225 = scmp.eq.s32.totalorder %s15, 1
    %p226 = por %p224, %p225
    %p227 = scmp.ne.s32.totalorder %s219, %s222
    %p228 = scmp.eq.s32.totalorder %s15, 0
    %p229 = por %p227, %p228
    %p230 = scmp.ne.s32.totalorder %s219, %s222
    %p231 = scmp.eq.s32.totalorder %s20, 1
    %p232 = por %p230, %p231
    %p233 = scmp.ne.s32.totalorder %s222, %s223
    %p234 = scmp.eq.s32.totalorder %s20, 0
    %p235 = por %p233, %p234
    %p236 = scmp.ne.s32.totalorder %s222, %s223
    %p237 = scmp.eq.s32.totalorder %s21, 1
    %p238 = por %p236, %p237
    %p240 = scmp.ne.s32.totalorder %s223, %s239
    %p241 = scmp.eq.s32.totalorder %s21, 0
    %p242 = por %p240, %p241
    %p243 = scmp.le.s32.totalorder 1, %s15
    %p244 = scmp.lt.s32.totalorder %s15, 3
    %p245 = pnand %p243, %p244
    %p246 = pneg %p245
    // Predicated region
    $region9: #{encode_process_decode.11} parent=5 // pred_check
      _
    $region10: #{encode_process_decode.11} parent=5 // pred_check_branch
      %248 = sbr.rel (%p245) target = $region12
    $region11: #{encode_process_decode.11} parent=5 // pred_region
      %s249 = ssub.s32 %s15, 1
      // Predicated region
      $region13: #{encode_process_decode.11} parent=11 // pred_check
        %p250 = pneg %p62
      $region14: #{encode_process_decode.11} parent=11 // pred_check_branch
        %252 = sbr.rel (%p250) target = $region16
      $region15: #{encode_process_decode.11} parent=11 // pred_region
        _
      $region16: #{encode_process_decode.11} parent=11 // pred_fallthru
        _
      // Predicated region
      $region17: #{encode_process_decode.11} parent=11 // pred_check
        %p253 = pneg %p83
      $region18: #{encode_process_decode.11} parent=11 // pred_check_branch
        %255 = sbr.rel (%p253) target = $region20
      $region19: #{encode_process_decode.11} parent=11 // pred_region
        _
      $region20: #{encode_process_decode.11} parent=11 // pred_fallthru
        _
      // Predicated region
      $region21: #{encode_process_decode.11} parent=11 // pred_check
        %p256 = pneg %p104
      $region22: #{encode_process_decode.11} parent=11 // pred_check_branch
        %258 = sbr.rel (%p256) target = $region24
      $region23: #{encode_process_decode.11} parent=11 // pred_region
        _
      $region24: #{encode_process_decode.11} parent=11 // pred_fallthru
        _
      // Predicated region
      $region25: #{encode_process_decode.11} parent=11 // pred_check
        %p259 = pneg %p125
      $region26: #{encode_process_decode.11} parent=11 // pred_check_branch
        %261 = sbr.rel (%p259) target = $region28
      $region27: #{encode_process_decode.11} parent=11 // pred_region
        _
      $region28: #{encode_process_decode.11} parent=11 // pred_fallthru
        _
      // Predicated region
      $region29: #{encode_process_decode.11} parent=11 // pred_check
        %p262 = pneg %p146
      $region30: #{encode_process_decode.11} parent=11 // pred_check_branch
        %264 = sbr.rel (%p262) target = $region32
      $region31: #{encode_process_decode.11} parent=11 // pred_region
        _
      $region32: #{encode_process_decode.11} parent=11 // pred_fallthru
        _
      // Predicated region
      $region33: #{encode_process_decode.11} parent=11 // pred_check
        %p265 = pneg %p167
      $region34: #{encode_process_decode.11} parent=11 // pred_check_branch
        %267 = sbr.rel (%p265) target = $region36
      $region35: #{encode_process_decode.11} parent=11 // pred_region
        _
      $region36: #{encode_process_decode.11} parent=11 // pred_fallthru
        _
      // Predicated region
      $region37: #{encode_process_decode.11} parent=11 // pred_check
        %p268 = pneg %p188
      $region38: #{encode_process_decode.11} parent=11 // pred_check_branch
        %270 = sbr.rel (%p268) target = $region40
      $region39: #{encode_process_decode.11} parent=11 // pred_region
        _
      $region40: #{encode_process_decode.11} parent=11 // pred_fallthru
        _
      // Predicated region
      $region41: #{encode_process_decode.11} parent=11 // pred_check
        %p271 = pneg %p209
      $region42: #{encode_process_decode.11} parent=11 // pred_check_branch
        %273 = sbr.rel (%p271) target = $region44
      $region43: #{encode_process_decode.11} parent=11 // pred_region
        _
      $region44: #{encode_process_decode.11} parent=11 // pred_fallthru
        _
    $region12: #{encode_process_decode.11} parent=5 // pred_fallthru
      _
    %p274 = scmp.lt.s32.totalorder %s15, 2
    // Predicated region
    $region45: #{encode_process_decode.11} parent=5 // pred_check
      %p275 = pneg %p274
    $region46: #{encode_process_decode.11} parent=5 // pred_check_branch
      %277 = sbr.rel (%p275) target = $region48
    $region47: #{encode_process_decode.11} parent=5 // pred_region
      // Predicated region
      $region49: #{encode_process_decode.11} parent=47 // pred_check
        %p278 = pneg %p35
      $region50: #{encode_process_decode.11} parent=47 // pred_check_branch
        %280 = sbr.rel (%p278) target = $region52
      $region51: #{encode_process_decode.11} parent=47 // pred_region
        %s281 = smul.u32 8, %s15
        %p282 = scmp.lt.s32.totalorder %s281, 15
        %s283 = scalar_select %p282, %s281, 15
        %s284 = smul.addr %s283, 8
        %s285 = scalar_lea.vmem %s0, %s284
        %s286 = smul.u32 8, %s15
      $region52: #{encode_process_decode.11} parent=47 // pred_fallthru
        _
    $region48: #{encode_process_decode.11} parent=5 // pred_fallthru
      _
    %p287 = scmp.le.s32.totalorder 1, %s15
    %p288 = scmp.lt.s32.totalorder %s15, 3
    %p289 = pnand %p287, %p288
    %p290 = pneg %p289
    // Predicated region
    $region53: #{encode_process_decode.11} parent=5 // pred_check
      _
    $region54: #{encode_process_decode.11} parent=5 // pred_check_branch
      %292 = sbr.rel (%p289) target = $region56
    $region55: #{encode_process_decode.11} parent=5 // pred_region
      %s293 = ssub.s32 %s15, 1
      %s294 = smul.u32 8, %s20
      %p295 = scmp.lt.s32.totalorder %s294, 15
      %s296 = scalar_select %p295, %s294, 15
      %s297 = smul.addr %s296, 8
      %s298 = scalar_lea.vmem %s0, %s297
      %p299 = pneg %p41
      %p300 = pneg %p38
      %p301 = pneg %p62
      %p302 = pneg %p59
      %p303 = pneg %p83
      %p304 = pneg %p80
      %p305 = pneg %p104
      %p306 = pneg %p101
      %p307 = pneg %p125
      %p308 = pneg %p122
      %p309 = pneg %p146
      %p310 = pneg %p143
      %p311 = pneg %p167
      %p312 = pneg %p164
      %p313 = pneg %p188
      %p314 = pneg %p185
      %p315 = pneg %p209
      %p316 = pneg %p206
      %p317 = pneg %p235
      %p318 = pneg %p232
      %s319 = smul.u32 8, %s20
      %p320 = scmp.lt.s32.totalorder %s319, 15
      %s321 = scalar_select %p320, %s319, 15
      %s322 = smul.addr %s321, 4
      %s323 = scalar_lea.vmem %s9, %s322
      %s324 = smul.u32 8, %s20
      %p325 = scmp.lt.s32.totalorder %s324, 15
      %s326 = scalar_select %p325, %s324, 15
      %s327 = smul.addr %s326, 8
      %s328 = scalar_lea.vmem %s0, %s327
      %s329 = smul.u32 8, %s20
      %s330 = smul.u32 8, %s20
      %p331 = scmp.lt.s32.totalorder %s330, 15
      %s332 = scalar_select %p331, %s330, 15
      %s333 = smul.addr %s332, 4
      %s334 = scalar_lea.vmem %s9, %s333
      %s335 = smul.u32 8, %s20
      %v337 = vld [vmem:[%s328] sm:$0xff]
      %v338 = vld [vmem:[%s328 + $0x8] sm:$0xff]
      %v339 = vld [vmem:[%s328 + $0x10] sm:$0xff]
      %v340 = vld [vmem:[%s328 + $0x18] sm:$0xff]
      %v341 = vld [vmem:[%s328 + $0x20] sm:$0xff]
      %v342 = vld [vmem:[%s328 + $0x28] sm:$0xff]
      %v343 = vld [vmem:[%s328 + $0x30] sm:$0xff]
      %v344 = vld [vmem:[%s328 + $0x38] sm:$0xff]
      %v345 = vpack.c.bf16 %v338, %v337
      %v346 = vpack.c.bf16 %v340, %v339
      %v347 = vpack.c.bf16 %v342, %v341
      %v348 = vpack.c.bf16 %v344, %v343
      %v349 = vld [vmem:[%s1] sm:$0xf]
      %v350 = vld [vmem:[%s1 + $0x4] sm:$0x1]
      %v351 = vld [vmem:[%s2] sm:$0x1]
      %v353 = vlaneseq
      %v354 = vshrl.u32 %v353, 7
      %v355 = vsub.s32 0, %v354
      %v356 = vrot.slane %v351, %v355
      %v360 = vunpack.c.l.b16 %v349
      %v361 = vunpack.c.l.b16 %v350
      %v362 = vpack.c.b16 %v361, %v360
      %vm363 = vcmask 80896
      %v365 = vsel %vm363, %v345, 0
      %v368 = vsel %vm363, %v346, 0
      %v371 = vsel %vm363, %v347, 0
      %v374 = vsel %vm363, %v348, 0
      %vm376 = vcmask 1044480
      %v378 = vsel %vm376, %v362, 0
      %380 = vmatprep.subr.bf16.mxu0 0
      %381 = vmatpush1.bf16.msra.mxu0 0
      %382 = vmatprep.subr.bf16.mxu0 0
      %383 = vmatpush1.bf16.msra.mxu0 0
      %384 = vmatprep.subr.bf16.mxu0 0
      %385 = vmatpush1.bf16.msra.mxu0 0
      %386 = vmatprep.subr.bf16.mxu0 0
      %387 = vmatpush1.bf16.msra.mxu0 0
      %388 = vmatprep.subr.bf16.mxu0 0
      %389 = vmatpush1.bf16.msra.mxu0 0
      %390 = vmatprep.subr.bf16.mxu0 0
      %391 = vmatpush1.bf16.msra.mxu0 0
      %392 = vmatprep.subr.bf16.mxu0 0
      %393 = vmatpush1.bf16.msra.mxu0 0
      %394 = vmatprep.subr.bf16.mxu0 0
      %395 = vmatpush1.bf16.msra.mxu0 %v378
      %396 = vmatprep.subr.bf16.mxu0 0
      %397 = vmatpush2.bf16.msra.mxu0 0
      %398 = vmatprep.subr.bf16.mxu0 0
      %399 = vmatpush2.bf16.msra.mxu0 0
      %400 = vmatprep.subr.bf16.mxu0 0
      %401 = vmatpush2.bf16.msra.mxu0 0
      %402 = vmatprep.subr.bf16.mxu0 0
      %403 = vmatpush2.bf16.msra.mxu0 0
      %404 = vmatprep.subr.bf16.mxu0 0
      %405 = vmatpush2.bf16.msra.mxu0 0
      %406 = vmatprep.subr.bf16.mxu0 0
      %407 = vmatpush2.bf16.msra.mxu0 0
      %408 = vmatprep.subr.bf16.mxu0 0
      %409 = vmatpush2.bf16.msra.mxu0 0
      %410 = vmatprep.subr.bf16.mxu0 0
      %411 = vmatpush2.bf16.msra.mxu0 0
      %412 = vmatprep.mubr.bf16.mxu0 0
      %413 = vmatmul.mubr.bf16.gmra.mxu0 %v365
      %v414 = vpop.f32.mrf.mxu0
      %v415 = vadd.f32 %v356, %v414
      %v416 = vpop.f32.mrf.mxu0
      %v417 = vpop.f32.mrf.mxu0
      %v418 = vadd.f32 %v356, %v417
      %v419 = vpop.f32.mrf.mxu0
      %420 = vmatprep.mubr.bf16.mxu0 0
      %421 = vmatmul.mubr.bf16.gmra.mxu0 %v368
      %v422 = vpop.f32.mrf.mxu0
      %v423 = vadd.f32 %v356, %v422
      %v424 = vpop.f32.mrf.mxu0
      %v425 = vpop.f32.mrf.mxu0
      %v426 = vadd.f32 %v356, %v425
      %v427 = vpop.f32.mrf.mxu0
      %428 = vmatprep.mubr.bf16.mxu0 0
      %429 = vmatmul.mubr.bf16.gmra.mxu0 %v371
      %v430 = vpop.f32.mrf.mxu0
      %v431 = vadd.f32 %v356, %v430
      %v432 = vpop.f32.mrf.mxu0
      %v433 = vpop.f32.mrf.mxu0
      %v434 = vadd.f32 %v356, %v433
      %v435 = vpop.f32.mrf.mxu0
      %436 = vmatprep.mubr.bf16.mxu0 0
      %437 = vmatmul.mubr.bf16.gmra.mxu0 %v374
      %v438 = vpop.f32.mrf.mxu0
      %v439 = vadd.f32 %v356, %v438
      %v440 = vpop.f32.mrf.mxu0
      %v441 = vpop.f32.mrf.mxu0
      %v442 = vadd.f32 %v356, %v441
      %v443 = vpop.f32.mrf.mxu0
      %444 = vdwg.mxu0
      %v445 = vmax.f32 %v415, 0.0
      %v446 = vmax.f32 %v418, 0.0
      %v447 = vmax.f32 %v423, 0.0
      %v448 = vmax.f32 %v426, 0.0
      %v449 = vmax.f32 %v431, 0.0
      %v450 = vmax.f32 %v434, 0.0
      %v451 = vmax.f32 %v439, 0.0
      %v452 = vmax.f32 %v442, 0.0
      %v453 = vld [vmem:[%s3] sm:$0xf]
      %v454 = vld [vmem:[%s3 + $0x4] sm:$0xf]
      %v455 = vld [vmem:[%s3 + $0x8] sm:$0xf]
      %v456 = vld [vmem:[%s3 + $0xc] sm:$0xf]
      %v457 = vld [vmem:[%s3 + $0x10] sm:$0xf]
      %v458 = vld [vmem:[%s3 + $0x14] sm:$0xf]
      %v459 = vld [vmem:[%s3 + $0x18] sm:$0xf]
      %v460 = vld [vmem:[%s3 + $0x1c] sm:$0xf]
      %v461 = vld [vmem:[%s3 + $0x20] sm:$0xf]
      %v462 = vld [vmem:[%s3 + $0x24] sm:$0xf]
      %v463 = vld [vmem:[%s3 + $0x28] sm:$0xf]
      %v464 = vld [vmem:[%s3 + $0x2c] sm:$0xf]
      %v465 = vld [vmem:[%s3 + $0x30] sm:$0xf]
      %v466 = vld [vmem:[%s3 + $0x34] sm:$0xf]
      %v467 = vld [vmem:[%s3 + $0x38] sm:$0xf]
      %v468 = vld [vmem:[%s3 + $0x3c] sm:$0xf]
      %v469 = vld [vmem:[%s4] sm:$0x1]
      %v470 = vpack.c.bf16 %v446, %v445
      %v471 = vpack.c.bf16 %v448, %v447
      %v472 = vpack.c.bf16 %v450, %v449
      %v473 = vpack.c.bf16 %v452, %v451
      %v475 = vlaneseq
      %v476 = vshrl.u32 %v475, 7
      %v477 = vsub.s32 0, %v476
      %v478 = vrot.slane %v469, %v477
      %v496 = vunpack.c.l.b16 %v453
      %v497 = vunpack.c.l.b16 %v454
      %v498 = vunpack.c.l.b16 %v455
      %v499 = vunpack.c.l.b16 %v456
      %v500 = vunpack.c.l.b16 %v457
      %v501 = vunpack.c.l.b16 %v458
      %v502 = vunpack.c.l.b16 %v459
      %v503 = vunpack.c.l.b16 %v460
      %v504 = vunpack.c.l.b16 %v461
      %v505 = vunpack.c.l.b16 %v462
      %v506 = vunpack.c.l.b16 %v463
      %v507 = vunpack.c.l.b16 %v464
      %v508 = vunpack.c.l.b16 %v465
      %v509 = vunpack.c.l.b16 %v466
      %v510 = vunpack.c.l.b16 %v467
      %v511 = vunpack.c.l.b16 %v468
      %v512 = vpack.c.b16 %v497, %v496
      %v513 = vpack.c.b16 %v499, %v498
      %v514 = vpack.c.b16 %v501, %v500
      %v515 = vpack.c.b16 %v503, %v502
      %v516 = vpack.c.b16 %v505, %v504
      %v517 = vpack.c.b16 %v507, %v506
      %v518 = vpack.c.b16 %v509, %v508
      %v519 = vpack.c.b16 %v511, %v510
      %528 = vmatprep.subr.bf16.mxu0 0
      %529 = vmatpush1.bf16.msra.mxu0 %v519
      %530 = vmatprep.subr.bf16.mxu0 0
      %531 = vmatpush1.bf16.msra.mxu0 %v518
      %532 = vmatprep.subr.bf16.mxu0 0
      %533 = vmatpush1.bf16.msra.mxu0 %v517
      %534 = vmatprep.subr.bf16.mxu0 0
      %535 = vmatpush1.bf16.msra.mxu0 %v516
      %536 = vmatprep.subr.bf16.mxu0 0
      %537 = vmatpush1.bf16.msra.mxu0 %v515
      %538 = vmatprep.subr.bf16.mxu0 0
      %539 = vmatpush1.bf16.msra.mxu0 %v514
      %540 = vmatprep.subr.bf16.mxu0 0
      %541 = vmatpush1.bf16.msra.mxu0 %v513
      %542 = vmatprep.subr.bf16.mxu0 0
      %543 = vmatpush1.bf16.msra.mxu0 %v512
      %544 = vmatprep.subr.bf16.mxu0 0
      %545 = vmatpush2.bf16.msra.mxu0 0
      %546 = vmatprep.subr.bf16.mxu0 0
      %547 = vmatpush2.bf16.msra.mxu0 0
      %548 = vmatprep.subr.bf16.mxu0 0
      %549 = vmatpush2.bf16.msra.mxu0 0
      %550 = vmatprep.subr.bf16.mxu0 0
      %551 = vmatpush2.bf16.msra.mxu0 0
      %552 = vmatprep.subr.bf16.mxu0 0
      %553 = vmatpush2.bf16.msra.mxu0 0
      %554 = vmatprep.subr.bf16.mxu0 0
      %555 = vmatpush2.bf16.msra.mxu0 0
      %556 = vmatprep.subr.bf16.mxu0 0
      %557 = vmatpush2.bf16.msra.mxu0 0
      %558 = vmatprep.subr.bf16.mxu0 0
      %559 = vmatpush2.bf16.msra.mxu0 0
      %560 = vmatprep.mubr.bf16.mxu0 0
      %561 = vmatmul.mubr.bf16.gmra.mxu0 %v470
      %v562 = vpop.f32.mrf.mxu0
      %v563 = vadd.f32 %v478, %v562
      %v564 = vpop.f32.mrf.mxu0
      %v565 = vpop.f32.mrf.mxu0
      %v566 = vadd.f32 %v478, %v565
      %v567 = vpop.f32.mrf.mxu0
      %568 = vmatprep.mubr.bf16.mxu0 0
      %569 = vmatmul.mubr.bf16.gmra.mxu0 %v471
      %v570 = vpop.f32.mrf.mxu0
      %v571 = vadd.f32 %v478, %v570
      %v572 = vpop.f32.mrf.mxu0
      %v573 = vpop.f32.mrf.mxu0
      %v574 = vadd.f32 %v478, %v573
      %v575 = vpop.f32.mrf.mxu0
      %576 = vmatprep.mubr.bf16.mxu0 0
      %577 = vmatmul.mubr.bf16.gmra.mxu0 %v472
      %v578 = vpop.f32.mrf.mxu0
      %v579 = vadd.f32 %v478, %v578
      %v580 = vpop.f32.mrf.mxu0
      %v581 = vpop.f32.mrf.mxu0
      %v582 = vadd.f32 %v478, %v581
      %v583 = vpop.f32.mrf.mxu0
      %584 = vmatprep.mubr.bf16.mxu0 0
      %585 = vmatmul.mubr.bf16.gmra.mxu0 %v473
      %v586 = vpop.f32.mrf.mxu0
      %v587 = vadd.f32 %v478, %v586
      %v588 = vpop.f32.mrf.mxu0
      %v589 = vpop.f32.mrf.mxu0
      %v590 = vadd.f32 %v478, %v589
      %v591 = vpop.f32.mrf.mxu0
      %592 = vdwg.mxu0
      %v593 = vmax.f32 %v563, 0.0
      %v594 = vmax.f32 %v566, 0.0
      %v595 = vmax.f32 %v571, 0.0
      %v596 = vmax.f32 %v574, 0.0
      %v597 = vmax.f32 %v579, 0.0
      %v598 = vmax.f32 %v582, 0.0
      %v599 = vmax.f32 %v587, 0.0
      %v600 = vmax.f32 %v590, 0.0
      %v601 = vld [vmem:[%s5] sm:$0xf]
      %v602 = vld [vmem:[%s5 + $0x4] sm:$0xf]
      %v603 = vld [vmem:[%s5 + $0x8] sm:$0xf]
      %v604 = vld [vmem:[%s5 + $0xc] sm:$0xf]
      %v605 = vld [vmem:[%s5 + $0x10] sm:$0xf]
      %v606 = vld [vmem:[%s5 + $0x14] sm:$0xf]
      %v607 = vld [vmem:[%s5 + $0x18] sm:$0xf]
      %v608 = vld [vmem:[%s5 + $0x1c] sm:$0xf]
      %v609 = vld [vmem:[%s5 + $0x20] sm:$0xf]
      %v610 = vld [vmem:[%s5 + $0x24] sm:$0xf]
      %v611 = vld [vmem:[%s5 + $0x28] sm:$0xf]
      %v612 = vld [vmem:[%s5 + $0x2c] sm:$0xf]
      %v613 = vld [vmem:[%s5 + $0x30] sm:$0xf]
      %v614 = vld [vmem:[%s5 + $0x34] sm:$0xf]
      %v615 = vld [vmem:[%s5 + $0x38] sm:$0xf]
      %v616 = vld [vmem:[%s5 + $0x3c] sm:$0xf]
      %v617 = vld [vmem:[%s6] sm:$0x1]
      %v618 = vpack.c.bf16 %v594, %v593
      %v619 = vpack.c.bf16 %v596, %v595
      %v620 = vpack.c.bf16 %v598, %v597
      %v621 = vpack.c.bf16 %v600, %v599
      %v623 = vlaneseq
      %v624 = vshrl.u32 %v623, 7
      %v625 = vsub.s32 0, %v624
      %v626 = vrot.slane %v617, %v625
      %v644 = vunpack.c.l.b16 %v601
      %v645 = vunpack.c.l.b16 %v602
      %v646 = vunpack.c.l.b16 %v603
      %v647 = vunpack.c.l.b16 %v604
      %v648 = vunpack.c.l.b16 %v605
      %v649 = vunpack.c.l.b16 %v606
      %v650 = vunpack.c.l.b16 %v607
      %v651 = vunpack.c.l.b16 %v608
      %v652 = vunpack.c.l.b16 %v609
      %v653 = vunpack.c.l.b16 %v610
      %v654 = vunpack.c.l.b16 %v611
      %v655 = vunpack.c.l.b16 %v612
      %v656 = vunpack.c.l.b16 %v613
      %v657 = vunpack.c.l.b16 %v614
      %v658 = vunpack.c.l.b16 %v615
      %v659 = vunpack.c.l.b16 %v616
      %v660 = vpack.c.b16 %v645, %v644
      %v661 = vpack.c.b16 %v647, %v646
      %v662 = vpack.c.b16 %v649, %v648
      %v663 = vpack.c.b16 %v651, %v650
      %v664 = vpack.c.b16 %v653, %v652
      %v665 = vpack.c.b16 %v655, %v654
      %v666 = vpack.c.b16 %v657, %v656
      %v667 = vpack.c.b16 %v659, %v658
      %676 = vmatprep.subr.bf16.mxu0 0
      %677 = vmatpush1.bf16.msra.mxu0 %v667
      %678 = vmatprep.subr.bf16.mxu0 0
      %679 = vmatpush1.bf16.msra.mxu0 %v666
      %680 = vmatprep.subr.bf16.mxu0 0
      %681 = vmatpush1.bf16.msra.mxu0 %v665
      %682 = vmatprep.subr.bf16.mxu0 0
      %683 = vmatpush1.bf16.msra.mxu0 %v664
      %684 = vmatprep.subr.bf16.mxu0 0
      %685 = vmatpush1.bf16.msra.mxu0 %v663
      %686 = vmatprep.subr.bf16.mxu0 0
      %687 = vmatpush1.bf16.msra.mxu0 %v662
      %688 = vmatprep.subr.bf16.mxu0 0
      %689 = vmatpush1.bf16.msra.mxu0 %v661
      %690 = vmatprep.subr.bf16.mxu0 0
      %691 = vmatpush1.bf16.msra.mxu0 %v660
      %692 = vmatprep.subr.bf16.mxu0 0
      %693 = vmatpush2.bf16.msra.mxu0 0
      %694 = vmatprep.subr.bf16.mxu0 0
      %695 = vmatpush2.bf16.msra.mxu0 0
      %696 = vmatprep.subr.bf16.mxu0 0
      %697 = vmatpush2.bf16.msra.mxu0 0
      %698 = vmatprep.subr.bf16.mxu0 0
      %699 = vmatpush2.bf16.msra.mxu0 0
      %700 = vmatprep.subr.bf16.mxu0 0
      %701 = vmatpush2.bf16.msra.mxu0 0
      %702 = vmatprep.subr.bf16.mxu0 0
      %703 = vmatpush2.bf16.msra.mxu0 0
      %704 = vmatprep.subr.bf16.mxu0 0
      %705 = vmatpush2.bf16.msra.mxu0 0
      %706 = vmatprep.subr.bf16.mxu0 0
      %707 = vmatpush2.bf16.msra.mxu0 0
      %708 = vmatprep.mubr.bf16.mxu0 0
      %709 = vmatmul.mubr.bf16.gmra.mxu0 %v618
      %v710 = vpop.f32.mrf.mxu0
      %v711 = vadd.f32 %v626, %v710
      %v712 = vpop.f32.mrf.mxu0
      %v713 = vpop.f32.mrf.mxu0
      %v714 = vadd.f32 %v626, %v713
      %v715 = vpop.f32.mrf.mxu0
      %716 = vmatprep.mubr.bf16.mxu0 0
      %717 = vmatmul.mubr.bf16.gmra.mxu0 %v619
      %v718 = vpop.f32.mrf.mxu0
      %v719 = vadd.f32 %v626, %v718
      %v720 = vpop.f32.mrf.mxu0
      %v721 = vpop.f32.mrf.mxu0
      %v722 = vadd.f32 %v626, %v721
      %v723 = vpop.f32.mrf.mxu0
      %724 = vmatprep.mubr.bf16.mxu0 0
      %725 = vmatmul.mubr.bf16.gmra.mxu0 %v620
      %v726 = vpop.f32.mrf.mxu0
      %v727 = vadd.f32 %v626, %v726
      %v728 = vpop.f32.mrf.mxu0
      %v729 = vpop.f32.mrf.mxu0
      %v730 = vadd.f32 %v626, %v729
      %v731 = vpop.f32.mrf.mxu0
      %732 = vmatprep.mubr.bf16.mxu0 0
      %733 = vmatmul.mubr.bf16.gmra.mxu0 %v621
      %v734 = vpop.f32.mrf.mxu0
      %v735 = vadd.f32 %v626, %v734
      %v736 = vpop.f32.mrf.mxu0
      %v737 = vpop.f32.mrf.mxu0
      %v738 = vadd.f32 %v626, %v737
      %v739 = vpop.f32.mrf.mxu0
      %740 = vdwg.mxu0
      %v741 = vld [vmem:[%s7] sm:$0x1]
      %v742 = vld [vmem:[%s8] sm:$0x1]
      %743 = vadd.xlane.f32.xlu0 %v711
      %v744 = vpop.xlane.xlu0 %743
      %745 = vadd.xlane.f32.xlu0 %v714
      %v746 = vpop.xlane.xlu0 %745
      %747 = vadd.xlane.f32.xlu0 %v719
      %v748 = vpop.xlane.xlu0 %747
      %749 = vadd.xlane.f32.xlu0 %v722
      %v750 = vpop.xlane.xlu0 %749
      %751 = vadd.xlane.f32.xlu0 %v727
      %v752 = vpop.xlane.xlu0 %751
      %753 = vadd.xlane.f32.xlu0 %v730
      %v754 = vpop.xlane.xlu0 %753
      %755 = vadd.xlane.f32.xlu0 %v735
      %v756 = vpop.xlane.xlu0 %755
      %757 = vadd.xlane.f32.xlu0 %v738
      %v758 = vpop.xlane.xlu0 %757
      %v759 = vrcp.pop 128.0
      %v760 = vmul.f32 %v744, %v759
      %v761 = vmul.f32 %v746, %v759
      %v762 = vmul.f32 %v748, %v759
      %v763 = vmul.f32 %v750, %v759
      %v764 = vmul.f32 %v752, %v759
      %v765 = vmul.f32 %v754, %v759
      %v766 = vmul.f32 %v756, %v759
      %v767 = vmul.f32 %v758, %v759
      %v768 = vsub.f32 %v711, %v760
      %v769 = vsub.f32 %v714, %v761
      %v770 = vsub.f32 %v719, %v762
      %v771 = vsub.f32 %v722, %v763
      %v772 = vsub.f32 %v727, %v764
      %v773 = vsub.f32 %v730, %v765
      %v774 = vsub.f32 %v735, %v766
      %v775 = vsub.f32 %v738, %v767
      %v776 = vmul.f32 %v768, %v768
      %v777 = vmul.f32 %v769, %v769
      %v778 = vmul.f32 %v770, %v770
      %v779 = vmul.f32 %v771, %v771
      %v780 = vmul.f32 %v772, %v772
      %v781 = vmul.f32 %v773, %v773
      %v782 = vmul.f32 %v774, %v774
      %v783 = vmul.f32 %v775, %v775
      %784 = vadd.xlane.f32.xlu0 %v776
      %v785 = vpop.xlane.xlu0 %784
      %786 = vadd.xlane.f32.xlu0 %v777
      %v787 = vpop.xlane.xlu0 %786
      %788 = vadd.xlane.f32.xlu0 %v778
      %v789 = vpop.xlane.xlu0 %788
      %790 = vadd.xlane.f32.xlu0 %v779
      %v791 = vpop.xlane.xlu0 %790
      %792 = vadd.xlane.f32.xlu0 %v780
      %v793 = vpop.xlane.xlu0 %792
      %794 = vadd.xlane.f32.xlu0 %v781
      %v795 = vpop.xlane.xlu0 %794
      %796 = vadd.xlane.f32.xlu0 %v782
      %v797 = vpop.xlane.xlu0 %796
      %798 = vadd.xlane.f32.xlu0 %v783
      %v799 = vpop.xlane.xlu0 %798
      %v800 = vmul.f32 %v785, %v759
      %v801 = vmul.f32 %v787, %v759
      %v802 = vmul.f32 %v789, %v759
      %v803 = vmul.f32 %v791, %v759
      %v804 = vmul.f32 %v793, %v759
      %v805 = vmul.f32 %v795, %v759
      %v806 = vmul.f32 %v797, %v759
      %v807 = vmul.f32 %v799, %v759
      %v808 = vadd.f32 %v800, 1e-05
      %v809 = vadd.f32 %v801, 1e-05
      %v810 = vadd.f32 %v802, 1e-05
      %v811 = vadd.f32 %v803, 1e-05
      %v812 = vadd.f32 %v804, 1e-05
      %v813 = vadd.f32 %v805, 1e-05
      %v814 = vadd.f32 %v806, 1e-05
      %v815 = vadd.f32 %v807, 1e-05
      %v816 = vrsqrt.pop %v808
      %v817 = vrsqrt.pop %v809
      %v818 = vrsqrt.pop %v810
      %v819 = vrsqrt.pop %v811
      %v820 = vrsqrt.pop %v812
      %v821 = vrsqrt.pop %v813
      %v822 = vrsqrt.pop %v814
      %v823 = vrsqrt.pop %v815
      %v824 = vmul.f32 %v768, %v816
      %v825 = vmul.f32 %v769, %v817
      %v826 = vmul.f32 %v770, %v818
      %v827 = vmul.f32 %v771, %v819
      %v828 = vmul.f32 %v772, %v820
      %v829 = vmul.f32 %v773, %v821
      %v830 = vmul.f32 %v774, %v822
      %v831 = vmul.f32 %v775, %v823
      %v833 = vlaneseq
      %v834 = vshrl.u32 %v833, 7
      %v835 = vsub.s32 0, %v834
      %v836 = vrot.slane %v741, %v835
      %v838 = vmul.f32 %v824, %v836
      %v839 = vmul.f32 %v825, %v836
      %v840 = vmul.f32 %v826, %v836
      %v841 = vmul.f32 %v827, %v836
      %v842 = vmul.f32 %v828, %v836
      %v843 = vmul.f32 %v829, %v836
      %v844 = vmul.f32 %v830, %v836
      %v845 = vmul.f32 %v831, %v836
      %v847 = vlaneseq
      %v848 = vshrl.u32 %v847, 7
      %v849 = vsub.s32 0, %v848
      %v850 = vrot.slane %v742, %v849
      %v852 = vadd.f32 %v838, %v850
      %v853 = vadd.f32 %v839, %v850
      %v854 = vadd.f32 %v840, %v850
      %v855 = vadd.f32 %v841, %v850
      %v856 = vadd.f32 %v842, %v850
      %v857 = vadd.f32 %v843, %v850
      %v858 = vadd.f32 %v844, %v850
      %v859 = vadd.f32 %v845, %v850
      %v860 = vpack.c.bf16 %v853, %v852
      %v861 = vpack.c.bf16 %v855, %v854
      %v862 = vpack.c.bf16 %v857, %v856
      %v863 = vpack.c.bf16 %v859, %v858
      %v868 = vunpack.c.l.b16 %v860
      %v869 = vunpack.c.h.b16 %v860
      %v870 = vunpack.c.l.b16 %v861
      %v871 = vunpack.c.h.b16 %v861
      %v872 = vunpack.c.l.b16 %v862
      %v873 = vunpack.c.h.b16 %v862
      %v874 = vunpack.c.l.b16 %v863
      %v875 = vunpack.c.h.b16 %v863
      %v876 = vpack.c.b16 %v868, %v868
      %v877 = vpack.c.b16 %v869, %v869
      %v878 = vpack.c.b16 %v870, %v870
      %v879 = vpack.c.b16 %v871, %v871
      %v880 = vpack.c.b16 %v872, %v872
      %v881 = vpack.c.b16 %v873, %v873
      %v882 = vpack.c.b16 %v874, %v874
      %v883 = vpack.c.b16 %v875, %v875
      %892 = vst [vmem:[%s334] sm:$0xf] %v876
      %893 = vst [vmem:[%s334 + $0x4] sm:$0xf] %v877
      %894 = vst [vmem:[%s334 + $0x8] sm:$0xf] %v878
      %895 = vst [vmem:[%s334 + $0xc] sm:$0xf] %v879
      %896 = vst [vmem:[%s334 + $0x10] sm:$0xf] %v880
      %897 = vst [vmem:[%s334 + $0x14] sm:$0xf] %v881
      %898 = vst [vmem:[%s334 + $0x18] sm:$0xf] %v882
      %899 = vst [vmem:[%s334 + $0x1c] sm:$0xf] %v883
      %s900 = smul.u32 8, %s20
      %p901 = scmp.lt.s32.totalorder %s900, 15
      %s902 = scalar_select %p901, %s900, 15
      %s903 = smul.addr %s902, 4
      %s904 = scalar_lea.vmem %s9, %s903
      // Predicated region
      $region57: #{encode_process_decode.11} parent=55 // pred_check
        %p905 = pneg %p232
      $region58: #{encode_process_decode.11} parent=55 // pred_check_branch
        %907 = sbr.rel (%p905) target = $region60
      $region59: #{encode_process_decode.11} parent=55 // pred_region
        %s908 = smul.u32 8, %s20
      $region60: #{encode_process_decode.11} parent=55 // pred_fallthru
        _
    $region56: #{encode_process_decode.11} parent=5 // pred_fallthru
      _
    %p909 = scmp.le.s32.totalorder 2, %s15
    // Predicated region
    $region61: #{encode_process_decode.11} parent=5 // pred_check
      %p910 = pneg %p909
    $region62: #{encode_process_decode.11} parent=5 // pred_check_branch
      %912 = sbr.rel (%p910) target = $region64
    $region63: #{encode_process_decode.11} parent=5 // pred_region
      %s913 = ssub.s32 %s15, 2
      // Predicated region
      $region65: #{encode_process_decode.11} parent=63 // pred_check
        %p914 = pneg %p238
      $region66: #{encode_process_decode.11} parent=63 // pred_check_branch
        %916 = sbr.rel (%p914) target = $region68
      $region67: #{encode_process_decode.11} parent=63 // pred_region
        %s917 = smul.u32 8, %s21
        %p918 = scmp.lt.s32.totalorder %s917, 15
        %s919 = scalar_select %p918, %s917, 15
        %s920 = smul.addr %s919, 4
        %s921 = scalar_lea.vmem %s9, %s920
      $region68: #{encode_process_decode.11} parent=63 // pred_fallthru
        _
    $region64: #{encode_process_decode.11} parent=5 // pred_fallthru
      _
  $region6: #{encode_process_decode.11} parent=0 // loop_footer
    %s19 = sadd.s32 1, %s15
  $region7: #{encode_process_decode.11} parent=0 // loop_footer_branch
    %14 = sbr.rel target = $region3
  $region8: #{encode_process_decode.11} parent=0 // loop_exit
    _

// kernel: encode_process_decode.12
$region0: #{encode_process_decode.12}
  #allocation0 [shape = 'u32[]', space=smem, size = 0x4, offset = 0x4, fixed_abs, tag = 'smem constant byte address 0x4 - core index']
  #allocation1 [shape = 'u32[144,128]{1,0:T(1,128)}', space=vmem, size = 0x12000, scoped, tag = 'internal scratch']
  %s0 = inlined_call_operand.vmem [shape: bf16[128,128], index: 0, kind: input, shape index: {}]
  %s1 = inlined_call_operand.vmem [shape: bf16[128,128], index: 1, kind: input, shape index: {}]
  %s2 = inlined_call_operand.vmem [shape: bf16[128,128], index: 2, kind: input, shape index: {}]
  %s3 = inlined_call_operand.vmem [shape: bf16[384,128], index: 3, kind: input, shape index: {}]
  %s4 = inlined_call_operand.vmem [shape: f32[1,128], index: 4, kind: input, shape index: {}]
  %s5 = inlined_call_operand.vmem [shape: bf16[128,128], index: 5, kind: input, shape index: {}]
  %s6 = inlined_call_operand.vmem [shape: f32[1,128], index: 6, kind: input, shape index: {}]
  %s7 = inlined_call_operand.vmem [shape: bf16[128,128], index: 7, kind: input, shape index: {}]
  %s8 = inlined_call_operand.vmem [shape: f32[1,128], index: 8, kind: input, shape index: {}]
  %s9 = inlined_call_operand.vmem [shape: f32[1,128], index: 9, kind: input, shape index: {}]
  %s10 = inlined_call_operand.vmem [shape: f32[1,128], index: 10, kind: input, shape index: {}]
  %s11 = inlined_call_operand.vmem [shape: bf16[128,128], index: 11, kind: output, shape index: {}]
  %s12 = sld [smem:[#allocation0]]
  $region77: #{encode_process_decode.12} parent=0
    _
  %s14 = ssub.s32 1, %s12
  %s15 = scalar_select 0, %s14, %s12
  loop: start=0, step=1, limit=4
  $region2: #{encode_process_decode.12} parent=0 // loop_pre_header
    _
  $region3: #{encode_process_decode.12} parent=0 // loop_header
    %s17 = sphi 0, %s21
    %p18 = scmp.ge.s32.totalorder %s17, 4
    %s27 = sphi 0, %s29
    %s30 = sphi 0, %s27
    %s31 = sphi 0, %s30
    %s47 = sphi 0, %s31
    %s53 = sphi 0, %s55
    %s56 = sphi 0, %s53
    %s57 = sphi 0, %s56
    %s73 = sphi 0, %s57
    %s79 = sphi 0, %s81
    %s82 = sphi 0, %s79
    %s83 = sphi 0, %s82
    %s99 = sphi 0, %s83
    %s103 = sphi 0, %s103
    %s105 = sphi 0, %s103
    %s106 = sphi 0, %s105
    %s120 = sphi 0, %s106
    %s124 = sphi 0, %s124
    %s126 = sphi 0, %s124
    %s127 = sphi 0, %s126
    %s141 = sphi 0, %s127
    %s145 = sphi 0, %s145
    %s147 = sphi 0, %s145
    %s148 = sphi 0, %s147
    %s162 = sphi 0, %s148
    %s166 = sphi 0, %s166
    %s168 = sphi 0, %s166
    %s169 = sphi 0, %s168
    %s183 = sphi 0, %s169
    %s187 = sphi 0, %s187
    %s189 = sphi 0, %s187
    %s190 = sphi 0, %s189
    %s204 = sphi 0, %s190
    %s208 = sphi 0, %s208
    %s210 = sphi 0, %s208
    %s211 = sphi 0, %s210
    %s225 = sphi 0, %s211
    %s229 = sphi 0, %s229
    %s231 = sphi 0, %s229
    %s232 = sphi 0, %s231
    %s246 = sphi 0, %s232
    %s250 = sphi 0, %s250
    %s252 = sphi 0, %s250
    %s253 = sphi 0, %s252
    %s267 = sphi 0, %s253
    %s273 = sphi 0, %s275
    %s276 = sphi 0, %s273
    %s277 = sphi 0, %s276
    %s293 = sphi 0, %s277
  $region4: #{encode_process_decode.12} parent=0 // loop_header_branch
    %20 = sbr.rel (%p18) target = $region8
  $region5: #{encode_process_decode.12} parent=0 // loop_body
    %s22 = ssub.s32 %s17, 1
    %s23 = ssub.s32 %s17, 2
    %s24 = sadd.s32 %s17, 1
    %s25 = ssub.s32 %s17, %s24
    %p26 = scmp.eq.s32.totalorder %s25, 0
    %s28 = sadd.s32 %s27, 1
    %s29 = scalar_select %p26, %s27, %s28
    %p32 = pneg %p26
    %p33 = scmp.eq.s32.totalorder %s17, 1
    %p34 = por %p32, %p33
    %p35 = scmp.ne.s32.totalorder %s27, %s30
    %p36 = scmp.eq.s32.totalorder %s17, 0
    %p37 = por %p35, %p36
    %p38 = scmp.ne.s32.totalorder %s27, %s30
    %p39 = scmp.eq.s32.totalorder %s22, 1
    %p40 = por %p38, %p39
    %p41 = scmp.ne.s32.totalorder %s30, %s31
    %p42 = scmp.eq.s32.totalorder %s22, 0
    %p43 = por %p41, %p42
    %p44 = scmp.ne.s32.totalorder %s30, %s31
    %p45 = scmp.eq.s32.totalorder %s23, 1
    %p46 = por %p44, %p45
    %p48 = scmp.ne.s32.totalorder %s31, %s47
    %p49 = scmp.eq.s32.totalorder %s23, 0
    %p50 = por %p48, %p49
    %s51 = ssub.s32 %s17, %s24
    %p52 = scmp.eq.s32.totalorder %s51, 0
    %s54 = sadd.s32 %s53, 1
    %s55 = scalar_select %p52, %s53, %s54
    %p58 = pneg %p52
    %p59 = scmp.eq.s32.totalorder %s17, 1
    %p60 = por %p58, %p59
    %p61 = scmp.ne.s32.totalorder %s53, %s56
    %p62 = scmp.eq.s32.totalorder %s17, 0
    %p63 = por %p61, %p62
    %p64 = scmp.ne.s32.totalorder %s53, %s56
    %p65 = scmp.eq.s32.totalorder %s22, 1
    %p66 = por %p64, %p65
    %p67 = scmp.ne.s32.totalorder %s56, %s57
    %p68 = scmp.eq.s32.totalorder %s22, 0
    %p69 = por %p67, %p68
    %p70 = scmp.ne.s32.totalorder %s56, %s57
    %p71 = scmp.eq.s32.totalorder %s23, 1
    %p72 = por %p70, %p71
    %p74 = scmp.ne.s32.totalorder %s57, %s73
    %p75 = scmp.eq.s32.totalorder %s23, 0
    %p76 = por %p74, %p75
    %s77 = ssub.s32 %s17, %s24
    %p78 = scmp.eq.s32.totalorder %s77, 0
    %s80 = sadd.s32 %s79, 1
    %s81 = scalar_select %p78, %s79, %s80
    %p84 = pneg %p78
    %p85 = scmp.eq.s32.totalorder %s17, 1
    %p86 = por %p84, %p85
    %p87 = scmp.ne.s32.totalorder %s79, %s82
    %p88 = scmp.eq.s32.totalorder %s17, 0
    %p89 = por %p87, %p88
    %p90 = scmp.ne.s32.totalorder %s79, %s82
    %p91 = scmp.eq.s32.totalorder %s22, 1
    %p92 = por %p90, %p91
    %p93 = scmp.ne.s32.totalorder %s82, %s83
    %p94 = scmp.eq.s32.totalorder %s22, 0
    %p95 = por %p93, %p94
    %p96 = scmp.ne.s32.totalorder %s82, %s83
    %p97 = scmp.eq.s32.totalorder %s23, 1
    %p98 = por %p96, %p97
    %p100 = scmp.ne.s32.totalorder %s83, %s99
    %p101 = scmp.eq.s32.totalorder %s23, 0
    %p102 = por %p100, %p101
    %s104 = sadd.s32 %s103, 1
    %p107 = scmp.eq.s32.totalorder %s17, 1
    %p108 = scmp.ne.s32.totalorder %s103, %s105
    %p109 = scmp.eq.s32.totalorder %s17, 0
    %p110 = por %p108, %p109
    %p111 = scmp.ne.s32.totalorder %s103, %s105
    %p112 = scmp.eq.s32.totalorder %s22, 1
    %p113 = por %p111, %p112
    %p114 = scmp.ne.s32.totalorder %s105, %s106
    %p115 = scmp.eq.s32.totalorder %s22, 0
    %p116 = por %p114, %p115
    %p117 = scmp.ne.s32.totalorder %s105, %s106
    %p118 = scmp.eq.s32.totalorder %s23, 1
    %p119 = por %p117, %p118
    %p121 = scmp.ne.s32.totalorder %s106, %s120
    %p122 = scmp.eq.s32.totalorder %s23, 0
    %p123 = por %p121, %p122
    %s125 = sadd.s32 %s124, 1
    %p128 = scmp.eq.s32.totalorder %s17, 1
    %p129 = scmp.ne.s32.totalorder %s124, %s126
    %p130 = scmp.eq.s32.totalorder %s17, 0
    %p131 = por %p129, %p130
    %p132 = scmp.ne.s32.totalorder %s124, %s126
    %p133 = scmp.eq.s32.totalorder %s22, 1
    %p134 = por %p132, %p133
    %p135 = scmp.ne.s32.totalorder %s126, %s127
    %p136 = scmp.eq.s32.totalorder %s22, 0
    %p137 = por %p135, %p136
    %p138 = scmp.ne.s32.totalorder %s126, %s127
    %p139 = scmp.eq.s32.totalorder %s23, 1
    %p140 = por %p138, %p139
    %p142 = scmp.ne.s32.totalorder %s127, %s141
    %p143 = scmp.eq.s32.totalorder %s23, 0
    %p144 = por %p142, %p143
    %s146 = sadd.s32 %s145, 1
    %p149 = scmp.eq.s32.totalorder %s17, 1
    %p150 = scmp.ne.s32.totalorder %s145, %s147
    %p151 = scmp.eq.s32.totalorder %s17, 0
    %p152 = por %p150, %p151
    %p153 = scmp.ne.s32.totalorder %s145, %s147
    %p154 = scmp.eq.s32.totalorder %s22, 1
    %p155 = por %p153, %p154
    %p156 = scmp.ne.s32.totalorder %s147, %s148
    %p157 = scmp.eq.s32.totalorder %s22, 0
    %p158 = por %p156, %p157
    %p159 = scmp.ne.s32.totalorder %s147, %s148
    %p160 = scmp.eq.s32.totalorder %s23, 1
    %p161 = por %p159, %p160
    %p163 = scmp.ne.s32.totalorder %s148, %s162
    %p164 = scmp.eq.s32.totalorder %s23, 0
    %p165 = por %p163, %p164
    %s167 = sadd.s32 %s166, 1
    %p170 = scmp.eq.s32.totalorder %s17, 1
    %p171 = scmp.ne.s32.totalorder %s166, %s168
    %p172 = scmp.eq.s32.totalorder %s17, 0
    %p173 = por %p171, %p172
    %p174 = scmp.ne.s32.totalorder %s166, %s168
    %p175 = scmp.eq.s32.totalorder %s22, 1
    %p176 = por %p174, %p175
    %p177 = scmp.ne.s32.totalorder %s168, %s169
    %p178 = scmp.eq.s32.totalorder %s22, 0
    %p179 = por %p177, %p178
    %p180 = scmp.ne.s32.totalorder %s168, %s169
    %p181 = scmp.eq.s32.totalorder %s23, 1
    %p182 = por %p180, %p181
    %p184 = scmp.ne.s32.totalorder %s169, %s183
    %p185 = scmp.eq.s32.totalorder %s23, 0
    %p186 = por %p184, %p185
    %s188 = sadd.s32 %s187, 1
    %p191 = scmp.eq.s32.totalorder %s17, 1
    %p192 = scmp.ne.s32.totalorder %s187, %s189
    %p193 = scmp.eq.s32.totalorder %s17, 0
    %p194 = por %p192, %p193
    %p195 = scmp.ne.s32.totalorder %s187, %s189
    %p196 = scmp.eq.s32.totalorder %s22, 1
    %p197 = por %p195, %p196
    %p198 = scmp.ne.s32.totalorder %s189, %s190
    %p199 = scmp.eq.s32.totalorder %s22, 0
    %p200 = por %p198, %p199
    %p201 = scmp.ne.s32.totalorder %s189, %s190
    %p202 = scmp.eq.s32.totalorder %s23, 1
    %p203 = por %p201, %p202
    %p205 = scmp.ne.s32.totalorder %s190, %s204
    %p206 = scmp.eq.s32.totalorder %s23, 0
    %p207 = por %p205, %p206
    %s209 = sadd.s32 %s208, 1
    %p212 = scmp.eq.s32.totalorder %s17, 1
    %p213 = scmp.ne.s32.totalorder %s208, %s210
    %p214 = scmp.eq.s32.totalorder %s17, 0
    %p215 = por %p213, %p214
    %p216 = scmp.ne.s32.totalorder %s208, %s210
    %p217 = scmp.eq.s32.totalorder %s22, 1
    %p218 = por %p216, %p217
    %p219 = scmp.ne.s32.totalorder %s210, %s211
    %p220 = scmp.eq.s32.totalorder %s22, 0
    %p221 = por %p219, %p220
    %p222 = scmp.ne.s32.totalorder %s210, %s211
    %p223 = scmp.eq.s32.totalorder %s23, 1
    %p224 = por %p222, %p223
    %p226 = scmp.ne.s32.totalorder %s211, %s225
    %p227 = scmp.eq.s32.totalorder %s23, 0
    %p228 = por %p226, %p227
    %s230 = sadd.s32 %s229, 1
    %p233 = scmp.eq.s32.totalorder %s17, 1
    %p234 = scmp.ne.s32.totalorder %s229, %s231
    %p235 = scmp.eq.s32.totalorder %s17, 0
    %p236 = por %p234, %p235
    %p237 = scmp.ne.s32.totalorder %s229, %s231
    %p238 = scmp.eq.s32.totalorder %s22, 1
    %p239 = por %p237, %p238
    %p240 = scmp.ne.s32.totalorder %s231, %s232
    %p241 = scmp.eq.s32.totalorder %s22, 0
    %p242 = por %p240, %p241
    %p243 = scmp.ne.s32.totalorder %s231, %s232
    %p244 = scmp.eq.s32.totalorder %s23, 1
    %p245 = por %p243, %p244
    %p247 = scmp.ne.s32.totalorder %s232, %s246
    %p248 = scmp.eq.s32.totalorder %s23, 0
    %p249 = por %p247, %p248
    %s251 = sadd.s32 %s250, 1
    %p254 = scmp.eq.s32.totalorder %s17, 1
    %p255 = scmp.ne.s32.totalorder %s250, %s252
    %p256 = scmp.eq.s32.totalorder %s17, 0
    %p257 = por %p255, %p256
    %p258 = scmp.ne.s32.totalorder %s250, %s252
    %p259 = scmp.eq.s32.totalorder %s22, 1
    %p260 = por %p258, %p259
    %p261 = scmp.ne.s32.totalorder %s252, %s253
    %p262 = scmp.eq.s32.totalorder %s22, 0
    %p263 = por %p261, %p262
    %p264 = scmp.ne.s32.totalorder %s252, %s253
    %p265 = scmp.eq.s32.totalorder %s23, 1
    %p266 = por %p264, %p265
    %p268 = scmp.ne.s32.totalorder %s253, %s267
    %p269 = scmp.eq.s32.totalorder %s23, 0
    %p270 = por %p268, %p269
    %s271 = ssub.s32 %s17, %s24
    %p272 = scmp.eq.s32.totalorder %s271, 0
    %s274 = sadd.s32 %s273, 1
    %s275 = scalar_select %p272, %s273, %s274
    %p278 = pneg %p272
    %p279 = scmp.eq.s32.totalorder %s17, 1
    %p280 = por %p278, %p279
    %p281 = scmp.ne.s32.totalorder %s273, %s276
    %p282 = scmp.eq.s32.totalorder %s17, 0
    %p283 = por %p281, %p282
    %p284 = scmp.ne.s32.totalorder %s273, %s276
    %p285 = scmp.eq.s32.totalorder %s22, 1
    %p286 = por %p284, %p285
    %p287 = scmp.ne.s32.totalorder %s276, %s277
    %p288 = scmp.eq.s32.totalorder %s22, 0
    %p289 = por %p287, %p288
    %p290 = scmp.ne.s32.totalorder %s276, %s277
    %p291 = scmp.eq.s32.totalorder %s23, 1
    %p292 = por %p290, %p291
    %p294 = scmp.ne.s32.totalorder %s277, %s293
    %p295 = scmp.eq.s32.totalorder %s23, 0
    %p296 = por %p294, %p295
    %p297 = scmp.le.s32.totalorder 1, %s17
    %p298 = scmp.lt.s32.totalorder %s17, 3
    %p299 = pnand %p297, %p298
    %p300 = pneg %p299
    // Predicated region
    $region9: #{encode_process_decode.12} parent=5 // pred_check
      _
    $region10: #{encode_process_decode.12} parent=5 // pred_check_branch
      %302 = sbr.rel (%p299) target = $region12
    $region11: #{encode_process_decode.12} parent=5 // pred_region
      %s303 = ssub.s32 %s17, 1
      // Predicated region
      $region13: #{encode_process_decode.12} parent=11 // pred_check
        %p304 = pneg %p116
      $region14: #{encode_process_decode.12} parent=11 // pred_check_branch
        %306 = sbr.rel (%p304) target = $region16
      $region15: #{encode_process_decode.12} parent=11 // pred_region
        _
      $region16: #{encode_process_decode.12} parent=11 // pred_fallthru
        _
      // Predicated region
      $region17: #{encode_process_decode.12} parent=11 // pred_check
        %p307 = pneg %p137
      $region18: #{encode_process_decode.12} parent=11 // pred_check_branch
        %309 = sbr.rel (%p307) target = $region20
      $region19: #{encode_process_decode.12} parent=11 // pred_region
        _
      $region20: #{encode_process_decode.12} parent=11 // pred_fallthru
        _
      // Predicated region
      $region21: #{encode_process_decode.12} parent=11 // pred_check
        %p310 = pneg %p158
      $region22: #{encode_process_decode.12} parent=11 // pred_check_branch
        %312 = sbr.rel (%p310) target = $region24
      $region23: #{encode_process_decode.12} parent=11 // pred_region
        _
      $region24: #{encode_process_decode.12} parent=11 // pred_fallthru
        _
      // Predicated region
      $region25: #{encode_process_decode.12} parent=11 // pred_check
        %p313 = pneg %p179
      $region26: #{encode_process_decode.12} parent=11 // pred_check_branch
        %315 = sbr.rel (%p313) target = $region28
      $region27: #{encode_process_decode.12} parent=11 // pred_region
        _
      $region28: #{encode_process_decode.12} parent=11 // pred_fallthru
        _
      // Predicated region
      $region29: #{encode_process_decode.12} parent=11 // pred_check
        %p316 = pneg %p200
      $region30: #{encode_process_decode.12} parent=11 // pred_check_branch
        %318 = sbr.rel (%p316) target = $region32
      $region31: #{encode_process_decode.12} parent=11 // pred_region
        _
      $region32: #{encode_process_decode.12} parent=11 // pred_fallthru
        _
      // Predicated region
      $region33: #{encode_process_decode.12} parent=11 // pred_check
        %p319 = pneg %p221
      $region34: #{encode_process_decode.12} parent=11 // pred_check_branch
        %321 = sbr.rel (%p319) target = $region36
      $region35: #{encode_process_decode.12} parent=11 // pred_region
        _
      $region36: #{encode_process_decode.12} parent=11 // pred_fallthru
        _
      // Predicated region
      $region37: #{encode_process_decode.12} parent=11 // pred_check
        %p322 = pneg %p242
      $region38: #{encode_process_decode.12} parent=11 // pred_check_branch
        %324 = sbr.rel (%p322) target = $region40
      $region39: #{encode_process_decode.12} parent=11 // pred_region
        _
      $region40: #{encode_process_decode.12} parent=11 // pred_fallthru
        _
      // Predicated region
      $region41: #{encode_process_decode.12} parent=11 // pred_check
        %p325 = pneg %p263
      $region42: #{encode_process_decode.12} parent=11 // pred_check_branch
        %327 = sbr.rel (%p325) target = $region44
      $region43: #{encode_process_decode.12} parent=11 // pred_region
        _
      $region44: #{encode_process_decode.12} parent=11 // pred_fallthru
        _
    $region12: #{encode_process_decode.12} parent=5 // pred_fallthru
      _
    %p328 = scmp.lt.s32.totalorder %s17, 2
    // Predicated region
    $region45: #{encode_process_decode.12} parent=5 // pred_check
      %p329 = pneg %p328
    $region46: #{encode_process_decode.12} parent=5 // pred_check_branch
      %331 = sbr.rel (%p329) target = $region48
    $region47: #{encode_process_decode.12} parent=5 // pred_region
      // Predicated region
      $region49: #{encode_process_decode.12} parent=47 // pred_check
        %p332 = pneg %p37
      $region50: #{encode_process_decode.12} parent=47 // pred_check_branch
        %334 = sbr.rel (%p332) target = $region52
      $region51: #{encode_process_decode.12} parent=47 // pred_region
        %s335 = smul.u32 8, %s17
        %p336 = scmp.lt.s32.totalorder %s335, 15
        %s337 = scalar_select %p336, %s335, 15
        %s338 = smul.addr %s337, 4
        %s339 = scalar_lea.vmem %s0, %s338
        %s340 = smul.u32 8, %s17
      $region52: #{encode_process_decode.12} parent=47 // pred_fallthru
        _
      // Predicated region
      $region53: #{encode_process_decode.12} parent=47 // pred_check
        %p341 = pneg %p63
      $region54: #{encode_process_decode.12} parent=47 // pred_check_branch
        %343 = sbr.rel (%p341) target = $region56
      $region55: #{encode_process_decode.12} parent=47 // pred_region
        %s344 = smul.u32 8, %s17
        %p345 = scmp.lt.s32.totalorder %s344, 15
        %s346 = scalar_select %p345, %s344, 15
        %s347 = smul.addr %s346, 4
        %s348 = scalar_lea.vmem %s1, %s347
        %s349 = smul.u32 8, %s17
      $region56: #{encode_process_decode.12} parent=47 // pred_fallthru
        _
      // Predicated region
      $region57: #{encode_process_decode.12} parent=47 // pred_check
        %p350 = pneg %p89
      $region58: #{encode_process_decode.12} parent=47 // pred_check_branch
        %352 = sbr.rel (%p350) target = $region60
      $region59: #{encode_process_decode.12} parent=47 // pred_region
        %s353 = smul.u32 8, %s17
        %p354 = scmp.lt.s32.totalorder %s353, 15
        %s355 = scalar_select %p354, %s353, 15
        %s356 = smul.addr %s355, 4
        %s357 = scalar_lea.vmem %s2, %s356
        %s358 = smul.u32 8, %s17
      $region60: #{encode_process_decode.12} parent=47 // pred_fallthru
        _
    $region48: #{encode_process_decode.12} parent=5 // pred_fallthru
      _
    %p359 = scmp.le.s32.totalorder 1, %s17
    %p360 = scmp.lt.s32.totalorder %s17, 3
    %p361 = pnand %p359, %p360
    %p362 = pneg %p361
    // Predicated region
    $region61: #{encode_process_decode.12} parent=5 // pred_check
      _
    $region62: #{encode_process_decode.12} parent=5 // pred_check_branch
      %364 = sbr.rel (%p361) target = $region64
    $region63: #{encode_process_decode.12} parent=5 // pred_region
      %s365 = ssub.s32 %s17, 1
      %s366 = smul.u32 8, %s22
      %p367 = scmp.lt.s32.totalorder %s366, 15
      %s368 = scalar_select %p367, %s366, 15
      %s369 = smul.addr %s368, 4
      %s370 = scalar_lea.vmem %s0, %s369
      %p371 = pneg %p43
      %p372 = pneg %p40
      %s373 = smul.u32 8, %s22
      %p374 = scmp.lt.s32.totalorder %s373, 15
      %s375 = scalar_select %p374, %s373, 15
      %s376 = smul.addr %s375, 4
      %s377 = scalar_lea.vmem %s1, %s376
      %p378 = pneg %p69
      %p379 = pneg %p66
      %s380 = smul.u32 8, %s22
      %p381 = scmp.lt.s32.totalorder %s380, 15
      %s382 = scalar_select %p381, %s380, 15
      %s383 = smul.addr %s382, 4
      %s384 = scalar_lea.vmem %s2, %s383
      %p385 = pneg %p95
      %p386 = pneg %p92
      %p387 = pneg %p116
      %p388 = pneg %p113
      %p389 = pneg %p137
      %p390 = pneg %p134
      %p391 = pneg %p158
      %p392 = pneg %p155
      %p393 = pneg %p179
      %p394 = pneg %p176
      %p395 = pneg %p200
      %p396 = pneg %p197
      %p397 = pneg %p221
      %p398 = pneg %p218
      %p399 = pneg %p242
      %p400 = pneg %p239
      %p401 = pneg %p263
      %p402 = pneg %p260
      %p403 = pneg %p289
      %p404 = pneg %p286
      %s405 = smul.u32 8, %s22
      %p406 = scmp.lt.s32.totalorder %s405, 15
      %s407 = scalar_select %p406, %s405, 15
      %s408 = smul.addr %s407, 4
      %s409 = scalar_lea.vmem %s11, %s408
      %s410 = smul.u32 8, %s22
      %p411 = scmp.lt.s32.totalorder %s410, 15
      %s412 = scalar_select %p411, %s410, 15
      %s413 = smul.addr %s412, 4
      %s414 = scalar_lea.vmem %s0, %s413
      %s415 = smul.u32 8, %s22
      %s416 = smul.u32 8, %s22
      %p417 = scmp.lt.s32.totalorder %s416, 15
      %s418 = scalar_select %p417, %s416, 15
      %s419 = smul.addr %s418, 4
      %s420 = scalar_lea.vmem %s1, %s419
      %s421 = smul.u32 8, %s22
      %s422 = smul.u32 8, %s22
      %p423 = scmp.lt.s32.totalorder %s422, 15
      %s424 = scalar_select %p423, %s422, 15
      %s425 = smul.addr %s424, 4
      %s426 = scalar_lea.vmem %s2, %s425
      %s427 = smul.u32 8, %s22
      %s428 = smul.u32 8, %s22
      %p429 = scmp.lt.s32.totalorder %s428, 15
      %s430 = scalar_select %p429, %s428, 15
      %s431 = smul.addr %s430, 4
      %s432 = scalar_lea.vmem %s11, %s431
      %s433 = smul.u32 8, %s22
      %v435 = vld [vmem:[%s414] sm:$0xf]
      %v436 = vld [vmem:[%s414 + $0x4] sm:$0xf]
      %v437 = vld [vmem:[%s414 + $0x8] sm:$0xf]
      %v438 = vld [vmem:[%s414 + $0xc] sm:$0xf]
      %v439 = vld [vmem:[%s414 + $0x10] sm:$0xf]
      %v440 = vld [vmem:[%s414 + $0x14] sm:$0xf]
      %v441 = vld [vmem:[%s414 + $0x18] sm:$0xf]
      %v442 = vld [vmem:[%s414 + $0x1c] sm:$0xf]
      %v443 = vld [vmem:[%s420] sm:$0xf]
      %v444 = vld [vmem:[%s420 + $0x4] sm:$0xf]
      %v445 = vld [vmem:[%s420 + $0x8] sm:$0xf]
      %v446 = vld [vmem:[%s420 + $0xc] sm:$0xf]
      %v447 = vld [vmem:[%s420 + $0x10] sm:$0xf]
      %v448 = vld [vmem:[%s420 + $0x14] sm:$0xf]
      %v449 = vld [vmem:[%s420 + $0x18] sm:$0xf]
      %v450 = vld [vmem:[%s420 + $0x1c] sm:$0xf]
      %v451 = vld [vmem:[%s426] sm:$0xf]
      %v452 = vld [vmem:[%s426 + $0x4] sm:$0xf]
      %v453 = vld [vmem:[%s426 + $0x8] sm:$0xf]
      %v454 = vld [vmem:[%s426 + $0xc] sm:$0xf]
      %v455 = vld [vmem:[%s426 + $0x10] sm:$0xf]
      %v456 = vld [vmem:[%s426 + $0x14] sm:$0xf]
      %v457 = vld [vmem:[%s426 + $0x18] sm:$0xf]
      %v458 = vld [vmem:[%s426 + $0x1c] sm:$0xf]
      %v467 = vunpack.c.l.b16 %v435
      %v468 = vunpack.c.l.b16 %v436
      %v469 = vunpack.c.l.b16 %v437
      %v470 = vunpack.c.l.b16 %v438
      %v471 = vunpack.c.l.b16 %v439
      %v472 = vunpack.c.l.b16 %v440
      %v473 = vunpack.c.l.b16 %v441
      %v474 = vunpack.c.l.b16 %v442
      %v475 = vpack.c.b16 %v468, %v467
      %v476 = vpack.c.b16 %v470, %v469
      %v477 = vpack.c.b16 %v472, %v471
      %v478 = vpack.c.b16 %v474, %v473
      %v491 = vunpack.c.l.b16 %v443
      %v492 = vunpack.c.l.b16 %v444
      %v493 = vunpack.c.l.b16 %v445
      %v494 = vunpack.c.l.b16 %v446
      %v495 = vunpack.c.l.b16 %v447
      %v496 = vunpack.c.l.b16 %v448
      %v497 = vunpack.c.l.b16 %v449
      %v498 = vunpack.c.l.b16 %v450
      %v499 = vpack.c.b16 %v492, %v491
      %v500 = vpack.c.b16 %v494, %v493
      %v501 = vpack.c.b16 %v496, %v495
      %v502 = vpack.c.b16 %v498, %v497
      %v515 = vunpack.c.l.b16 %v451
      %v516 = vunpack.c.l.b16 %v452
      %v517 = vunpack.c.l.b16 %v453
      %v518 = vunpack.c.l.b16 %v454
      %v519 = vunpack.c.l.b16 %v455
      %v520 = vunpack.c.l.b16 %v456
      %v521 = vunpack.c.l.b16 %v457
      %v522 = vunpack.c.l.b16 %v458
      %v523 = vpack.c.b16 %v516, %v515
      %v524 = vpack.c.b16 %v518, %v517
      %v525 = vpack.c.b16 %v520, %v519
      %v526 = vpack.c.b16 %v522, %v521
      %v531 = vld [vmem:[%s3] sm:$0xf]
      %v532 = vld [vmem:[%s3 + $0x4] sm:$0xf]
      %v533 = vld [vmem:[%s3 + $0x8] sm:$0xf]
      %v534 = vld [vmem:[%s3 + $0xc] sm:$0xf]
      %v535 = vld [vmem:[%s3 + $0x10] sm:$0xf]
      %v536 = vld [vmem:[%s3 + $0x14] sm:$0xf]
      %v537 = vld [vmem:[%s3 + $0x18] sm:$0xf]
      %v538 = vld [vmem:[%s3 + $0x1c] sm:$0xf]
      %v539 = vld [vmem:[%s3 + $0x20] sm:$0xf]
      %v540 = vld [vmem:[%s3 + $0x24] sm:$0xf]
      %v541 = vld [vmem:[%s3 + $0x28] sm:$0xf]
      %v542 = vld [vmem:[%s3 + $0x2c] sm:$0xf]
      %v543 = vld [vmem:[%s3 + $0x30] sm:$0xf]
      %v544 = vld [vmem:[%s3 + $0x34] sm:$0xf]
      %v545 = vld [vmem:[%s3 + $0x38] sm:$0xf]
      %v546 = vld [vmem:[%s3 + $0x3c] sm:$0xf]
      %v547 = vld [vmem:[%s3 + $0x40] sm:$0xf]
      %v548 = vld [vmem:[%s3 + $0x44] sm:$0xf]
      %v549 = vld [vmem:[%s3 + $0x48] sm:$0xf]
      %v550 = vld [vmem:[%s3 + $0x4c] sm:$0xf]
      %v551 = vld [vmem:[%s3 + $0x50] sm:$0xf]
      %v552 = vld [vmem:[%s3 + $0x54] sm:$0xf]
      %v553 = vld [vmem:[%s3 + $0x58] sm:$0xf]
      %v554 = vld [vmem:[%s3 + $0x5c] sm:$0xf]
      %v555 = vld [vmem:[%s3 + $0x60] sm:$0xf]
      %v556 = vld [vmem:[%s3 + $0x64] sm:$0xf]
      %v557 = vld [vmem:[%s3 + $0x68] sm:$0xf]
      %v558 = vld [vmem:[%s3 + $0x6c] sm:$0xf]
      %v559 = vld [vmem:[%s3 + $0x70] sm:$0xf]
      %v560 = vld [vmem:[%s3 + $0x74] sm:$0xf]
      %v561 = vld [vmem:[%s3 + $0x78] sm:$0xf]
      %v562 = vld [vmem:[%s3 + $0x7c] sm:$0xf]
      %v563 = vld [vmem:[%s3 + $0x80] sm:$0xf]
      %v564 = vld [vmem:[%s3 + $0x84] sm:$0xf]
      %v565 = vld [vmem:[%s3 + $0x88] sm:$0xf]
      %v566 = vld [vmem:[%s3 + $0x8c] sm:$0xf]
      %v567 = vld [vmem:[%s3 + $0x90] sm:$0xf]
      %v568 = vld [vmem:[%s3 + $0x94] sm:$0xf]
      %v569 = vld [vmem:[%s3 + $0x98] sm:$0xf]
      %v570 = vld [vmem:[%s3 + $0x9c] sm:$0xf]
      %v571 = vld [vmem:[%s3 + $0xa0] sm:$0xf]
      %v572 = vld [vmem:[%s3 + $0xa4] sm:$0xf]
      %v573 = vld [vmem:[%s3 + $0xa8] sm:$0xf]
      %v574 = vld [vmem:[%s3 + $0xac] sm:$0xf]
      %v575 = vld [vmem:[%s3 + $0xb0] sm:$0xf]
      %v576 = vld [vmem:[%s3 + $0xb4] sm:$0xf]
      %v577 = vld [vmem:[%s3 + $0xb8] sm:$0xf]
      %v578 = vld [vmem:[%s3 + $0xbc] sm:$0xf]
      %v579 = vld [vmem:[%s4] sm:$0x1]
      %v581 = vlaneseq
      %v582 = vshrl.u32 %v581, 7
      %v583 = vsub.s32 0, %v582
      %v584 = vrot.slane %v579, %v583
      %v634 = vunpack.c.l.b16 %v531
      %v635 = vunpack.c.l.b16 %v532
      %v636 = vunpack.c.l.b16 %v533
      %v637 = vunpack.c.l.b16 %v534
      %v638 = vunpack.c.l.b16 %v535
      %v639 = vunpack.c.l.b16 %v536
      %v640 = vunpack.c.l.b16 %v537
      %v641 = vunpack.c.l.b16 %v538
      %v642 = vunpack.c.l.b16 %v539
      %v643 = vunpack.c.l.b16 %v540
      %v644 = vunpack.c.l.b16 %v541
      %v645 = vunpack.c.l.b16 %v542
      %v646 = vunpack.c.l.b16 %v543
      %v647 = vunpack.c.l.b16 %v544
      %v648 = vunpack.c.l.b16 %v545
      %v649 = vunpack.c.l.b16 %v546
      %v650 = vunpack.c.l.b16 %v547
      %v651 = vunpack.c.l.b16 %v548
      %v652 = vunpack.c.l.b16 %v549
      %v653 = vunpack.c.l.b16 %v550
      %v654 = vunpack.c.l.b16 %v551
      %v655 = vunpack.c.l.b16 %v552
      %v656 = vunpack.c.l.b16 %v553
      %v657 = vunpack.c.l.b16 %v554
      %v658 = vunpack.c.l.b16 %v555
      %v659 = vunpack.c.l.b16 %v556
      %v660 = vunpack.c.l.b16 %v557
      %v661 = vunpack.c.l.b16 %v558
      %v662 = vunpack.c.l.b16 %v559
      %v663 = vunpack.c.l.b16 %v560
      %v664 = vunpack.c.l.b16 %v561
      %v665 = vunpack.c.l.b16 %v562
      %v666 = vunpack.c.l.b16 %v563
      %v667 = vunpack.c.l.b16 %v564
      %v668 = vunpack.c.l.b16 %v565
      %v669 = vunpack.c.l.b16 %v566
      %v670 = vunpack.c.l.b16 %v567
      %v671 = vunpack.c.l.b16 %v568
      %v672 = vunpack.c.l.b16 %v569
      %v673 = vunpack.c.l.b16 %v570
      %v674 = vunpack.c.l.b16 %v571
      %v675 = vunpack.c.l.b16 %v572
      %v676 = vunpack.c.l.b16 %v573
      %v677 = vunpack.c.l.b16 %v574
      %v678 = vunpack.c.l.b16 %v575
      %v679 = vunpack.c.l.b16 %v576
      %v680 = vunpack.c.l.b16 %v577
      %v681 = vunpack.c.l.b16 %v578
      %v682 = vpack.c.b16 %v635, %v634
      %v683 = vpack.c.b16 %v637, %v636
      %v684 = vpack.c.b16 %v639, %v638
      %v685 = vpack.c.b16 %v641, %v640
      %v686 = vpack.c.b16 %v643, %v642
      %v687 = vpack.c.b16 %v645, %v644
      %v688 = vpack.c.b16 %v647, %v646
      %v689 = vpack.c.b16 %v649, %v648
      %v690 = vpack.c.b16 %v651, %v650
      %v691 = vpack.c.b16 %v653, %v652
      %v692 = vpack.c.b16 %v655, %v654
      %v693 = vpack.c.b16 %v657, %v656
      %v694 = vpack.c.b16 %v659, %v658
      %v695 = vpack.c.b16 %v661, %v660
      %v696 = vpack.c.b16 %v663, %v662
      %v697 = vpack.c.b16 %v665, %v664
      %v698 = vpack.c.b16 %v667, %v666
      %v699 = vpack.c.b16 %v669, %v668
      %v700 = vpack.c.b16 %v671, %v670
      %v701 = vpack.c.b16 %v673, %v672
      %v702 = vpack.c.b16 %v675, %v674
      %v703 = vpack.c.b16 %v677, %v676
      %v704 = vpack.c.b16 %v679, %v678
      %v705 = vpack.c.b16 %v681, %v680
      %730 = vmatprep.subr.bf16.mxu0 0
      %731 = vmatpush1.bf16.msra.mxu0 %v689
      %732 = vmatprep.subr.bf16.mxu0 0
      %733 = vmatpush1.bf16.msra.mxu0 %v688
      %734 = vmatprep.subr.bf16.mxu0 0
      %735 = vmatpush1.bf16.msra.mxu0 %v687
      %736 = vmatprep.subr.bf16.mxu0 0
      %737 = vmatpush1.bf16.msra.mxu0 %v686
      %738 = vmatprep.subr.bf16.mxu0 0
      %739 = vmatpush1.bf16.msra.mxu0 %v685
      %740 = vmatprep.subr.bf16.mxu0 0
      %741 = vmatpush1.bf16.msra.mxu0 %v684
      %742 = vmatprep.subr.bf16.mxu0 0
      %743 = vmatpush1.bf16.msra.mxu0 %v683
      %744 = vmatprep.subr.bf16.mxu0 0
      %745 = vmatpush1.bf16.msra.mxu0 %v682
      %746 = vmatprep.subr.bf16.mxu0 0
      %747 = vmatpush2.bf16.msra.mxu0 %v697
      %748 = vmatprep.subr.bf16.mxu0 0
      %749 = vmatpush2.bf16.msra.mxu0 %v696
      %750 = vmatprep.subr.bf16.mxu0 0
      %751 = vmatpush2.bf16.msra.mxu0 %v695
      %752 = vmatprep.subr.bf16.mxu0 0
      %753 = vmatpush2.bf16.msra.mxu0 %v694
      %754 = vmatprep.subr.bf16.mxu0 0
      %755 = vmatpush2.bf16.msra.mxu0 %v693
      %756 = vmatprep.subr.bf16.mxu0 0
      %757 = vmatpush2.bf16.msra.mxu0 %v692
      %758 = vmatprep.subr.bf16.mxu0 0
      %759 = vmatpush2.bf16.msra.mxu0 %v691
      %760 = vmatprep.subr.bf16.mxu0 0
      %761 = vmatpush2.bf16.msra.mxu0 %v690
      %762 = vmatprep.mubr.bf16.mxu0 %v499
      %763 = vmatmul.mubr.bf16.gmra.mxu0 %v475
      %v764 = vpop.f32.mrf.mxu0
      %v765 = vadd.f32 %v584, %v764
      %v766 = vpop.f32.mrf.mxu0
      %v767 = vpop.f32.mrf.mxu0
      %v768 = vadd.f32 %v584, %v767
      %v769 = vpop.f32.mrf.mxu0
      %770 = vmatprep.mubr.bf16.mxu0 %v500
      %771 = vmatmul.mubr.bf16.gmra.mxu0 %v476
      %v772 = vpop.f32.mrf.mxu0
      %v773 = vadd.f32 %v584, %v772
      %v774 = vpop.f32.mrf.mxu0
      %v775 = vpop.f32.mrf.mxu0
      %v776 = vadd.f32 %v584, %v775
      %v777 = vpop.f32.mrf.mxu0
      %778 = vmatprep.mubr.bf16.mxu0 %v501
      %779 = vmatmul.mubr.bf16.gmra.mxu0 %v477
      %v780 = vpop.f32.mrf.mxu0
      %v781 = vadd.f32 %v584, %v780
      %v782 = vpop.f32.mrf.mxu0
      %v783 = vpop.f32.mrf.mxu0
      %v784 = vadd.f32 %v584, %v783
      %v785 = vpop.f32.mrf.mxu0
      %786 = vmatprep.mubr.bf16.mxu0 %v502
      %787 = vmatmul.mubr.bf16.gmra.mxu0 %v478
      %v788 = vpop.f32.mrf.mxu0
      %v789 = vadd.f32 %v584, %v788
      %v790 = vpop.f32.mrf.mxu0
      %v791 = vpop.f32.mrf.mxu0
      %v792 = vadd.f32 %v584, %v791
      %v793 = vpop.f32.mrf.mxu0
      %794 = vdwg.mxu0
      %795 = vmatprep.subr.bf16.mxu0 0
      %796 = vmatpush1.bf16.msra.mxu0 %v705
      %797 = vmatprep.subr.bf16.mxu0 0
      %798 = vmatpush1.bf16.msra.mxu0 %v704
      %799 = vmatprep.subr.bf16.mxu0 0
      %800 = vmatpush1.bf16.msra.mxu0 %v703
      %801 = vmatprep.subr.bf16.mxu0 0
      %802 = vmatpush1.bf16.msra.mxu0 %v702
      %803 = vmatprep.subr.bf16.mxu0 0
      %804 = vmatpush1.bf16.msra.mxu0 %v701
      %805 = vmatprep.subr.bf16.mxu0 0
      %806 = vmatpush1.bf16.msra.mxu0 %v700
      %807 = vmatprep.subr.bf16.mxu0 0
      %808 = vmatpush1.bf16.msra.mxu0 %v699
      %809 = vmatprep.subr.bf16.mxu0 0
      %810 = vmatpush1.bf16.msra.mxu0 %v698
      %811 = vmatprep.subr.bf16.mxu0 0
      %812 = vmatpush2.bf16.msra.mxu0 0
      %813 = vmatprep.subr.bf16.mxu0 0
      %814 = vmatpush2.bf16.msra.mxu0 0
      %815 = vmatprep.subr.bf16.mxu0 0
      %816 = vmatpush2.bf16.msra.mxu0 0
      %817 = vmatprep.subr.bf16.mxu0 0
      %818 = vmatpush2.bf16.msra.mxu0 0
      %819 = vmatprep.subr.bf16.mxu0 0
      %820 = vmatpush2.bf16.msra.mxu0 0
      %821 = vmatprep.subr.bf16.mxu0 0
      %822 = vmatpush2.bf16.msra.mxu0 0
      %823 = vmatprep.subr.bf16.mxu0 0
      %824 = vmatpush2.bf16.msra.mxu0 0
      %825 = vmatprep.subr.bf16.mxu0 0
      %826 = vmatpush2.bf16.msra.mxu0 0
      %827 = vmatprep.mubr.bf16.mxu0 0
      %828 = vmatmul.mubr.bf16.gmra.mxu0 %v523
      %v829 = vpop.f32.mrf.mxu0
      %v830 = vadd.f32 %v765, %v829
      %v831 = vpop.f32.mrf.mxu0
      %v832 = vpop.f32.mrf.mxu0
      %v833 = vadd.f32 %v768, %v832
      %v834 = vpop.f32.mrf.mxu0
      %835 = vmatprep.mubr.bf16.mxu0 0
      %836 = vmatmul.mubr.bf16.gmra.mxu0 %v524
      %v837 = vpop.f32.mrf.mxu0
      %v838 = vadd.f32 %v773, %v837
      %v839 = vpop.f32.mrf.mxu0
      %v840 = vpop.f32.mrf.mxu0
      %v841 = vadd.f32 %v776, %v840
      %v842 = vpop.f32.mrf.mxu0
      %843 = vmatprep.mubr.bf16.mxu0 0
      %844 = vmatmul.mubr.bf16.gmra.mxu0 %v525
      %v845 = vpop.f32.mrf.mxu0
      %v846 = vadd.f32 %v781, %v845
      %v847 = vpop.f32.mrf.mxu0
      %v848 = vpop.f32.mrf.mxu0
      %v849 = vadd.f32 %v784, %v848
      %v850 = vpop.f32.mrf.mxu0
      %851 = vmatprep.mubr.bf16.mxu0 0
      %852 = vmatmul.mubr.bf16.gmra.mxu0 %v526
      %v853 = vpop.f32.mrf.mxu0
      %v854 = vadd.f32 %v789, %v853
      %v855 = vpop.f32.mrf.mxu0
      %v856 = vpop.f32.mrf.mxu0
      %v857 = vadd.f32 %v792, %v856
      %v858 = vpop.f32.mrf.mxu0
      %859 = vdwg.mxu0
      %v860 = vmax.f32 %v830, 0.0
      %v861 = vmax.f32 %v833, 0.0
      %v862 = vmax.f32 %v838, 0.0
      %v863 = vmax.f32 %v841, 0.0
      %v864 = vmax.f32 %v846, 0.0
      %v865 = vmax.f32 %v849, 0.0
      %v866 = vmax.f32 %v854, 0.0
      %v867 = vmax.f32 %v857, 0.0
      %v868 = vld [vmem:[%s5] sm:$0xf]
      %v869 = vld [vmem:[%s5 + $0x4] sm:$0xf]
      %v870 = vld [vmem:[%s5 + $0x8] sm:$0xf]
      %v871 = vld [vmem:[%s5 + $0xc] sm:$0xf]
      %v872 = vld [vmem:[%s5 + $0x10] sm:$0xf]
      %v873 = vld [vmem:[%s5 + $0x14] sm:$0xf]
      %v874 = vld [vmem:[%s5 + $0x18] sm:$0xf]
      %v875 = vld [vmem:[%s5 + $0x1c] sm:$0xf]
      %v876 = vld [vmem:[%s5 + $0x20] sm:$0xf]
      %v877 = vld [vmem:[%s5 + $0x24] sm:$0xf]
      %v878 = vld [vmem:[%s5 + $0x28] sm:$0xf]
      %v879 = vld [vmem:[%s5 + $0x2c] sm:$0xf]
      %v880 = vld [vmem:[%s5 + $0x30] sm:$0xf]
      %v881 = vld [vmem:[%s5 + $0x34] sm:$0xf]
      %v882 = vld [vmem:[%s5 + $0x38] sm:$0xf]
      %v883 = vld [vmem:[%s5 + $0x3c] sm:$0xf]
      %v884 = vld [vmem:[%s6] sm:$0x1]
      %v885 = vpack.c.bf16 %v861, %v860
      %v886 = vpack.c.bf16 %v863, %v862
      %v887 = vpack.c.bf16 %v865, %v864
      %v888 = vpack.c.bf16 %v867, %v866
      %v890 = vlaneseq
      %v891 = vshrl.u32 %v890, 7
      %v892 = vsub.s32 0, %v891
      %v893 = vrot.slane %v884, %v892
      %v911 = vunpack.c.l.b16 %v868
      %v912 = vunpack.c.l.b16 %v869
      %v913 = vunpack.c.l.b16 %v870
      %v914 = vunpack.c.l.b16 %v871
      %v915 = vunpack.c.l.b16 %v872
      %v916 = vunpack.c.l.b16 %v873
      %v917 = vunpack.c.l.b16 %v874
      %v918 = vunpack.c.l.b16 %v875
      %v919 = vunpack.c.l.b16 %v876
      %v920 = vunpack.c.l.b16 %v877
      %v921 = vunpack.c.l.b16 %v878
      %v922 = vunpack.c.l.b16 %v879
      %v923 = vunpack.c.l.b16 %v880
      %v924 = vunpack.c.l.b16 %v881
      %v925 = vunpack.c.l.b16 %v882
      %v926 = vunpack.c.l.b16 %v883
      %v927 = vpack.c.b16 %v912, %v911
      %v928 = vpack.c.b16 %v914, %v913
      %v929 = vpack.c.b16 %v916, %v915
      %v930 = vpack.c.b16 %v918, %v917
      %v931 = vpack.c.b16 %v920, %v919
      %v932 = vpack.c.b16 %v922, %v921
      %v933 = vpack.c.b16 %v924, %v923
      %v934 = vpack.c.b16 %v926, %v925
      %943 = vmatprep.subr.bf16.mxu0 0
      %944 = vmatpush1.bf16.msra.mxu0 %v934
      %945 = vmatprep.subr.bf16.mxu0 0
      %946 = vmatpush1.bf16.msra.mxu0 %v933
      %947 = vmatprep.subr.bf16.mxu0 0
      %948 = vmatpush1.bf16.msra.mxu0 %v932
      %949 = vmatprep.subr.bf16.mxu0 0
      %950 = vmatpush1.bf16.msra.mxu0 %v931
      %951 = vmatprep.subr.bf16.mxu0 0
      %952 = vmatpush1.bf16.msra.mxu0 %v930
      %953 = vmatprep.subr.bf16.mxu0 0
      %954 = vmatpush1.bf16.msra.mxu0 %v929
      %955 = vmatprep.subr.bf16.mxu0 0
      %956 = vmatpush1.bf16.msra.mxu0 %v928
      %957 = vmatprep.subr.bf16.mxu0 0
      %958 = vmatpush1.bf16.msra.mxu0 %v927
      %959 = vmatprep.subr.bf16.mxu0 0
      %960 = vmatpush2.bf16.msra.mxu0 0
      %961 = vmatprep.subr.bf16.mxu0 0
      %962 = vmatpush2.bf16.msra.mxu0 0
      %963 = vmatprep.subr.bf16.mxu0 0
      %964 = vmatpush2.bf16.msra.mxu0 0
      %965 = vmatprep.subr.bf16.mxu0 0
      %966 = vmatpush2.bf16.msra.mxu0 0
      %967 = vmatprep.subr.bf16.mxu0 0
      %968 = vmatpush2.bf16.msra.mxu0 0
      %969 = vmatprep.subr.bf16.mxu0 0
      %970 = vmatpush2.bf16.msra.mxu0 0
      %971 = vmatprep.subr.bf16.mxu0 0
      %972 = vmatpush2.bf16.msra.mxu0 0
      %973 = vmatprep.subr.bf16.mxu0 0
      %974 = vmatpush2.bf16.msra.mxu0 0
      %975 = vmatprep.mubr.bf16.mxu0 0
      %976 = vmatmul.mubr.bf16.gmra.mxu0 %v885
      %v977 = vpop.f32.mrf.mxu0
      %v978 = vadd.f32 %v893, %v977
      %v979 = vpop.f32.mrf.mxu0
      %v980 = vpop.f32.mrf.mxu0
      %v981 = vadd.f32 %v893, %v980
      %v982 = vpop.f32.mrf.mxu0
      %983 = vmatprep.mubr.bf16.mxu0 0
      %984 = vmatmul.mubr.bf16.gmra.mxu0 %v886
      %v985 = vpop.f32.mrf.mxu0
      %v986 = vadd.f32 %v893, %v985
      %v987 = vpop.f32.mrf.mxu0
      %v988 = vpop.f32.mrf.mxu0
      %v989 = vadd.f32 %v893, %v988
      %v990 = vpop.f32.mrf.mxu0
      %991 = vmatprep.mubr.bf16.mxu0 0
      %992 = vmatmul.mubr.bf16.gmra.mxu0 %v887
      %v993 = vpop.f32.mrf.mxu0
      %v994 = vadd.f32 %v893, %v993
      %v995 = vpop.f32.mrf.mxu0
      %v996 = vpop.f32.mrf.mxu0
      %v997 = vadd.f32 %v893, %v996
      %v998 = vpop.f32.mrf.mxu0
      %999 = vmatprep.mubr.bf16.mxu0 0
      %1000 = vmatmul.mubr.bf16.gmra.mxu0 %v888
      %v1001 = vpop.f32.mrf.mxu0
      %v1002 = vadd.f32 %v893, %v1001
      %v1003 = vpop.f32.mrf.mxu0
      %v1004 = vpop.f32.mrf.mxu0
      %v1005 = vadd.f32 %v893, %v1004
      %v1006 = vpop.f32.mrf.mxu0
      %1007 = vdwg.mxu0
      %v1008 = vmax.f32 %v978, 0.0
      %v1009 = vmax.f32 %v981, 0.0
      %v1010 = vmax.f32 %v986, 0.0
      %v1011 = vmax.f32 %v989, 0.0
      %v1012 = vmax.f32 %v994, 0.0
      %v1013 = vmax.f32 %v997, 0.0
      %v1014 = vmax.f32 %v1002, 0.0
      %v1015 = vmax.f32 %v1005, 0.0
      %v1016 = vld [vmem:[%s7] sm:$0xf]
      %v1017 = vld [vmem:[%s7 + $0x4] sm:$0xf]
      %v1018 = vld [vmem:[%s7 + $0x8] sm:$0xf]
      %v1019 = vld [vmem:[%s7 + $0xc] sm:$0xf]
      %v1020 = vld [vmem:[%s7 + $0x10] sm:$0xf]
      %v1021 = vld [vmem:[%s7 + $0x14] sm:$0xf]
      %v1022 = vld [vmem:[%s7 + $0x18] sm:$0xf]
      %v1023 = vld [vmem:[%s7 + $0x1c] sm:$0xf]
      %v1024 = vld [vmem:[%s7 + $0x20] sm:$0xf]
      %v1025 = vld [vmem:[%s7 + $0x24] sm:$0xf]
      %v1026 = vld [vmem:[%s7 + $0x28] sm:$0xf]
      %v1027 = vld [vmem:[%s7 + $0x2c] sm:$0xf]
      %v1028 = vld [vmem:[%s7 + $0x30] sm:$0xf]
      %v1029 = vld [vmem:[%s7 + $0x34] sm:$0xf]
      %v1030 = vld [vmem:[%s7 + $0x38] sm:$0xf]
      %v1031 = vld [vmem:[%s7 + $0x3c] sm:$0xf]
      %v1032 = vld [vmem:[%s8] sm:$0x1]
      %v1033 = vpack.c.bf16 %v1009, %v1008
      %v1034 = vpack.c.bf16 %v1011, %v1010
      %v1035 = vpack.c.bf16 %v1013, %v1012
      %v1036 = vpack.c.bf16 %v1015, %v1014
      %v1038 = vlaneseq
      %v1039 = vshrl.u32 %v1038, 7
      %v1040 = vsub.s32 0, %v1039
      %v1041 = vrot.slane %v1032, %v1040
      %v1059 = vunpack.c.l.b16 %v1016
      %v1060 = vunpack.c.l.b16 %v1017
      %v1061 = vunpack.c.l.b16 %v1018
      %v1062 = vunpack.c.l.b16 %v1019
      %v1063 = vunpack.c.l.b16 %v1020
      %v1064 = vunpack.c.l.b16 %v1021
      %v1065 = vunpack.c.l.b16 %v1022
      %v1066 = vunpack.c.l.b16 %v1023
      %v1067 = vunpack.c.l.b16 %v1024
      %v1068 = vunpack.c.l.b16 %v1025
      %v1069 = vunpack.c.l.b16 %v1026
      %v1070 = vunpack.c.l.b16 %v1027
      %v1071 = vunpack.c.l.b16 %v1028
      %v1072 = vunpack.c.l.b16 %v1029
      %v1073 = vunpack.c.l.b16 %v1030
      %v1074 = vunpack.c.l.b16 %v1031
      %v1075 = vpack.c.b16 %v1060, %v1059
      %v1076 = vpack.c.b16 %v1062, %v1061
      %v1077 = vpack.c.b16 %v1064, %v1063
      %v1078 = vpack.c.b16 %v1066, %v1065
      %v1079 = vpack.c.b16 %v1068, %v1067
      %v1080 = vpack.c.b16 %v1070, %v1069
      %v1081 = vpack.c.b16 %v1072, %v1071
      %v1082 = vpack.c.b16 %v1074, %v1073
      %1091 = vmatprep.subr.bf16.mxu0 0
      %1092 = vmatpush1.bf16.msra.mxu0 %v1082
      %1093 = vmatprep.subr.bf16.mxu0 0
      %1094 = vmatpush1.bf16.msra.mxu0 %v1081
      %1095 = vmatprep.subr.bf16.mxu0 0
      %1096 = vmatpush1.bf16.msra.mxu0 %v1080
      %1097 = vmatprep.subr.bf16.mxu0 0
      %1098 = vmatpush1.bf16.msra.mxu0 %v1079
      %1099 = vmatprep.subr.bf16.mxu0 0
      %1100 = vmatpush1.bf16.msra.mxu0 %v1078
      %1101 = vmatprep.subr.bf16.mxu0 0
      %1102 = vmatpush1.bf16.msra.mxu0 %v1077
      %1103 = vmatprep.subr.bf16.mxu0 0
      %1104 = vmatpush1.bf16.msra.mxu0 %v1076
      %1105 = vmatprep.subr.bf16.mxu0 0
      %1106 = vmatpush1.bf16.msra.mxu0 %v1075
      %1107 = vmatprep.subr.bf16.mxu0 0
      %1108 = vmatpush2.bf16.msra.mxu0 0
      %1109 = vmatprep.subr.bf16.mxu0 0
      %1110 = vmatpush2.bf16.msra.mxu0 0
      %1111 = vmatprep.subr.bf16.mxu0 0
      %1112 = vmatpush2.bf16.msra.mxu0 0
      %1113 = vmatprep.subr.bf16.mxu0 0
      %1114 = vmatpush2.bf16.msra.mxu0 0
      %1115 = vmatprep.subr.bf16.mxu0 0
      %1116 = vmatpush2.bf16.msra.mxu0 0
      %1117 = vmatprep.subr.bf16.mxu0 0
      %1118 = vmatpush2.bf16.msra.mxu0 0
      %1119 = vmatprep.subr.bf16.mxu0 0
      %1120 = vmatpush2.bf16.msra.mxu0 0
      %1121 = vmatprep.subr.bf16.mxu0 0
      %1122 = vmatpush2.bf16.msra.mxu0 0
      %1123 = vmatprep.mubr.bf16.mxu0 0
      %1124 = vmatmul.mubr.bf16.gmra.mxu0 %v1033
      %v1125 = vpop.f32.mrf.mxu0
      %v1126 = vadd.f32 %v1041, %v1125
      %v1127 = vpop.f32.mrf.mxu0
      %v1128 = vpop.f32.mrf.mxu0
      %v1129 = vadd.f32 %v1041, %v1128
      %v1130 = vpop.f32.mrf.mxu0
      %1131 = vmatprep.mubr.bf16.mxu0 0
      %1132 = vmatmul.mubr.bf16.gmra.mxu0 %v1034
      %v1133 = vpop.f32.mrf.mxu0
      %v1134 = vadd.f32 %v1041, %v1133
      %v1135 = vpop.f32.mrf.mxu0
      %v1136 = vpop.f32.mrf.mxu0
      %v1137 = vadd.f32 %v1041, %v1136
      %v1138 = vpop.f32.mrf.mxu0
      %1139 = vmatprep.mubr.bf16.mxu0 0
      %1140 = vmatmul.mubr.bf16.gmra.mxu0 %v1035
      %v1141 = vpop.f32.mrf.mxu0
      %v1142 = vadd.f32 %v1041, %v1141
      %v1143 = vpop.f32.mrf.mxu0
      %v1144 = vpop.f32.mrf.mxu0
      %v1145 = vadd.f32 %v1041, %v1144
      %v1146 = vpop.f32.mrf.mxu0
      %1147 = vmatprep.mubr.bf16.mxu0 0
      %1148 = vmatmul.mubr.bf16.gmra.mxu0 %v1036
      %v1149 = vpop.f32.mrf.mxu0
      %v1150 = vadd.f32 %v1041, %v1149
      %v1151 = vpop.f32.mrf.mxu0
      %v1152 = vpop.f32.mrf.mxu0
      %v1153 = vadd.f32 %v1041, %v1152
      %v1154 = vpop.f32.mrf.mxu0
      %1155 = vdwg.mxu0
      %v1156 = vld [vmem:[%s9] sm:$0x1]
      %v1157 = vld [vmem:[%s10] sm:$0x1]
      %1158 = vadd.xlane.f32.xlu0 %v1126
      %v1159 = vpop.xlane.xlu0 %1158
      %1160 = vadd.xlane.f32.xlu0 %v1129
      %v1161 = vpop.xlane.xlu0 %1160
      %1162 = vadd.xlane.f32.xlu0 %v1134
      %v1163 = vpop.xlane.xlu0 %1162
      %1164 = vadd.xlane.f32.xlu0 %v1137
      %v1165 = vpop.xlane.xlu0 %1164
      %1166 = vadd.xlane.f32.xlu0 %v1142
      %v1167 = vpop.xlane.xlu0 %1166
      %1168 = vadd.xlane.f32.xlu0 %v1145
      %v1169 = vpop.xlane.xlu0 %1168
      %1170 = vadd.xlane.f32.xlu0 %v1150
      %v1171 = vpop.xlane.xlu0 %1170
      %1172 = vadd.xlane.f32.xlu0 %v1153
      %v1173 = vpop.xlane.xlu0 %1172
      %v1174 = vrcp.pop 128.0
      %v1175 = vmul.f32 %v1159, %v1174
      %v1176 = vmul.f32 %v1161, %v1174
      %v1177 = vmul.f32 %v1163, %v1174
      %v1178 = vmul.f32 %v1165, %v1174
      %v1179 = vmul.f32 %v1167, %v1174
      %v1180 = vmul.f32 %v1169, %v1174
      %v1181 = vmul.f32 %v1171, %v1174
      %v1182 = vmul.f32 %v1173, %v1174
      %v1183 = vsub.f32 %v1126, %v1175
      %v1184 = vsub.f32 %v1129, %v1176
      %v1185 = vsub.f32 %v1134, %v1177
      %v1186 = vsub.f32 %v1137, %v1178
      %v1187 = vsub.f32 %v1142, %v1179
      %v1188 = vsub.f32 %v1145, %v1180
      %v1189 = vsub.f32 %v1150, %v1181
      %v1190 = vsub.f32 %v1153, %v1182
      %v1191 = vmul.f32 %v1183, %v1183
      %v1192 = vmul.f32 %v1184, %v1184
      %v1193 = vmul.f32 %v1185, %v1185
      %v1194 = vmul.f32 %v1186, %v1186
      %v1195 = vmul.f32 %v1187, %v1187
      %v1196 = vmul.f32 %v1188, %v1188
      %v1197 = vmul.f32 %v1189, %v1189
      %v1198 = vmul.f32 %v1190, %v1190
      %1199 = vadd.xlane.f32.xlu0 %v1191
      %v1200 = vpop.xlane.xlu0 %1199
      %1201 = vadd.xlane.f32.xlu0 %v1192
      %v1202 = vpop.xlane.xlu0 %1201
      %1203 = vadd.xlane.f32.xlu0 %v1193
      %v1204 = vpop.xlane.xlu0 %1203
      %1205 = vadd.xlane.f32.xlu0 %v1194
      %v1206 = vpop.xlane.xlu0 %1205
      %1207 = vadd.xlane.f32.xlu0 %v1195
      %v1208 = vpop.xlane.xlu0 %1207
      %1209 = vadd.xlane.f32.xlu0 %v1196
      %v1210 = vpop.xlane.xlu0 %1209
      %1211 = vadd.xlane.f32.xlu0 %v1197
      %v1212 = vpop.xlane.xlu0 %1211
      %1213 = vadd.xlane.f32.xlu0 %v1198
      %v1214 = vpop.xlane.xlu0 %1213
      %v1215 = vmul.f32 %v1200, %v1174
      %v1216 = vmul.f32 %v1202, %v1174
      %v1217 = vmul.f32 %v1204, %v1174
      %v1218 = vmul.f32 %v1206, %v1174
      %v1219 = vmul.f32 %v1208, %v1174
      %v1220 = vmul.f32 %v1210, %v1174
      %v1221 = vmul.f32 %v1212, %v1174
      %v1222 = vmul.f32 %v1214, %v1174
      %v1223 = vadd.f32 %v1215, 1e-05
      %v1224 = vadd.f32 %v1216, 1e-05
      %v1225 = vadd.f32 %v1217, 1e-05
      %v1226 = vadd.f32 %v1218, 1e-05
      %v1227 = vadd.f32 %v1219, 1e-05
      %v1228 = vadd.f32 %v1220, 1e-05
      %v1229 = vadd.f32 %v1221, 1e-05
      %v1230 = vadd.f32 %v1222, 1e-05
      %v1231 = vrsqrt.pop %v1223
      %v1232 = vrsqrt.pop %v1224
      %v1233 = vrsqrt.pop %v1225
      %v1234 = vrsqrt.pop %v1226
      %v1235 = vrsqrt.pop %v1227
      %v1236 = vrsqrt.pop %v1228
      %v1237 = vrsqrt.pop %v1229
      %v1238 = vrsqrt.pop %v1230
      %v1239 = vmul.f32 %v1183, %v1231
      %v1240 = vmul.f32 %v1184, %v1232
      %v1241 = vmul.f32 %v1185, %v1233
      %v1242 = vmul.f32 %v1186, %v1234
      %v1243 = vmul.f32 %v1187, %v1235
      %v1244 = vmul.f32 %v1188, %v1236
      %v1245 = vmul.f32 %v1189, %v1237
      %v1246 = vmul.f32 %v1190, %v1238
      %v1248 = vlaneseq
      %v1249 = vshrl.u32 %v1248, 7
      %v1250 = vsub.s32 0, %v1249
      %v1251 = vrot.slane %v1156, %v1250
      %v1253 = vmul.f32 %v1239, %v1251
      %v1254 = vmul.f32 %v1240, %v1251
      %v1255 = vmul.f32 %v1241, %v1251
      %v1256 = vmul.f32 %v1242, %v1251
      %v1257 = vmul.f32 %v1243, %v1251
      %v1258 = vmul.f32 %v1244, %v1251
      %v1259 = vmul.f32 %v1245, %v1251
      %v1260 = vmul.f32 %v1246, %v1251
      %v1262 = vlaneseq
      %v1263 = vshrl.u32 %v1262, 7
      %v1264 = vsub.s32 0, %v1263
      %v1265 = vrot.slane %v1157, %v1264
      %v1267 = vadd.f32 %v1253, %v1265
      %v1268 = vadd.f32 %v1254, %v1265
      %v1269 = vadd.f32 %v1255, %v1265
      %v1270 = vadd.f32 %v1256, %v1265
      %v1271 = vadd.f32 %v1257, %v1265
      %v1272 = vadd.f32 %v1258, %v1265
      %v1273 = vadd.f32 %v1259, %v1265
      %v1274 = vadd.f32 %v1260, %v1265
      %v1275 = vpack.c.bf16 %v1268, %v1267
      %v1276 = vpack.c.bf16 %v1270, %v1269
      %v1277 = vpack.c.bf16 %v1272, %v1271
      %v1278 = vpack.c.bf16 %v1274, %v1273
      %v1283 = vunpack.c.l.b16 %v1275
      %v1284 = vunpack.c.h.b16 %v1275
      %v1285 = vunpack.c.l.b16 %v1276
      %v1286 = vunpack.c.h.b16 %v1276
      %v1287 = vunpack.c.l.b16 %v1277
      %v1288 = vunpack.c.h.b16 %v1277
      %v1289 = vunpack.c.l.b16 %v1278
      %v1290 = vunpack.c.h.b16 %v1278
      %v1291 = vpack.c.b16 %v1283, %v1283
      %v1292 = vpack.c.b16 %v1284, %v1284
      %v1293 = vpack.c.b16 %v1285, %v1285
      %v1294 = vpack.c.b16 %v1286, %v1286
      %v1295 = vpack.c.b16 %v1287, %v1287
      %v1296 = vpack.c.b16 %v1288, %v1288
      %v1297 = vpack.c.b16 %v1289, %v1289
      %v1298 = vpack.c.b16 %v1290, %v1290
      %1307 = vst [vmem:[%s432] sm:$0xf] %v1291
      %1308 = vst [vmem:[%s432 + $0x4] sm:$0xf] %v1292
      %1309 = vst [vmem:[%s432 + $0x8] sm:$0xf] %v1293
      %1310 = vst [vmem:[%s432 + $0xc] sm:$0xf] %v1294
      %1311 = vst [vmem:[%s432 + $0x10] sm:$0xf] %v1295
      %1312 = vst [vmem:[%s432 + $0x14] sm:$0xf] %v1296
      %1313 = vst [vmem:[%s432 + $0x18] sm:$0xf] %v1297
      %1314 = vst [vmem:[%s432 + $0x1c] sm:$0xf] %v1298
      %s1315 = smul.u32 8, %s22
      %p1316 = scmp.lt.s32.totalorder %s1315, 15
      %s1317 = scalar_select %p1316, %s1315, 15
      %s1318 = smul.addr %s1317, 4
      %s1319 = scalar_lea.vmem %s11, %s1318
      // Predicated region
      $region65: #{encode_process_decode.12} parent=63 // pred_check
        %p1320 = pneg %p286
      $region66: #{encode_process_decode.12} parent=63 // pred_check_branch
        %1322 = sbr.rel (%p1320) target = $region68
      $region67: #{encode_process_decode.12} parent=63 // pred_region
        %s1323 = smul.u32 8, %s22
      $region68: #{encode_process_decode.12} parent=63 // pred_fallthru
        _
    $region64: #{encode_process_decode.12} parent=5 // pred_fallthru
      _
    %p1324 = scmp.le.s32.totalorder 2, %s17
    // Predicated region
    $region69: #{encode_process_decode.12} parent=5 // pred_check
      %p1325 = pneg %p1324
    $region70: #{encode_process_decode.12} parent=5 // pred_check_branch
      %1327 = sbr.rel (%p1325) target = $region72
    $region71: #{encode_process_decode.12} parent=5 // pred_region
      %s1328 = ssub.s32 %s17, 2
      // Predicated region
      $region73: #{encode_process_decode.12} parent=71 // pred_check
        %p1329 = pneg %p292
      $region74: #{encode_process_decode.12} parent=71 // pred_check_branch
        %1331 = sbr.rel (%p1329) target = $region76
      $region75: #{encode_process_decode.12} parent=71 // pred_region
        %s1332 = smul.u32 8, %s23
        %p1333 = scmp.lt.s32.totalorder %s1332, 15
        %s1334 = scalar_select %p1333, %s1332, 15
        %s1335 = smul.addr %s1334, 4
        %s1336 = scalar_lea.vmem %s11, %s1335
      $region76: #{encode_process_decode.12} parent=71 // pred_fallthru
        _
    $region72: #{encode_process_decode.12} parent=5 // pred_fallthru
      _
  $region6: #{encode_process_decode.12} parent=0 // loop_footer
    %s21 = sadd.s32 1, %s17
  $region7: #{encode_process_decode.12} parent=0 // loop_footer_branch
    %16 = sbr.rel target = $region3
  $region8: #{encode_process_decode.12} parent=0 // loop_exit
    _

// kernel: encode_process_decode.13
$region0: #{encode_process_decode.13}
  #allocation0 [shape = 'u32[]', space=smem, size = 0x4, offset = 0x4, fixed_abs, tag = 'smem constant byte address 0x4 - core index']
  #allocation1 [shape = 'u32[144,128]{1,0:T(1,128)}', space=vmem, size = 0x12000, scoped, tag = 'internal scratch']
  %s0 = inlined_call_operand.vmem [shape: bf16[64,128], index: 0, kind: input, shape index: {}]
  %s1 = inlined_call_operand.vmem [shape: bf16[64,128], index: 1, kind: input, shape index: {}, may-alias: {1,10}]
  %s2 = inlined_call_operand.vmem [shape: bf16[256,128], index: 2, kind: input, shape index: {}]
  %s3 = inlined_call_operand.vmem [shape: f32[1,128], index: 3, kind: input, shape index: {}]
  %s4 = inlined_call_operand.vmem [shape: bf16[128,128], index: 4, kind: input, shape index: {}]
  %s5 = inlined_call_operand.vmem [shape: f32[1,128], index: 5, kind: input, shape index: {}]
  %s6 = inlined_call_operand.vmem [shape: bf16[128,128], index: 6, kind: input, shape index: {}]
  %s7 = inlined_call_operand.vmem [shape: f32[1,128], index: 7, kind: input, shape index: {}]
  %s8 = inlined_call_operand.vmem [shape: f32[1,128], index: 8, kind: input, shape index: {}]
  %s9 = inlined_call_operand.vmem [shape: f32[1,128], index: 9, kind: input, shape index: {}]
  %s10 = inlined_call_operand.vmem [shape: bf16[64,128], index: 10, kind: input, shape index: {}, may-alias: {1,10}]
  %s11 = inlined_call_operand.vmem [shape: bf16[64,128], index: 11, kind: output, shape index: {0}]
  %s12 = inlined_call_operand.vmem [shape: bf16[64,128], index: 12, kind: output, shape index: {1}]
  %13 = xla_tuple %s11, %s12
  %s14 = sld [smem:[#allocation0]]
  $region85: #{encode_process_decode.13} parent=0
    _
  %s16 = ssub.s32 1, %s14
  %s17 = scalar_select 0, %s16, %s14
  loop: start=0, step=1, limit=4
  $region2: #{encode_process_decode.13} parent=0 // loop_pre_header
    _
  $region3: #{encode_process_decode.13} parent=0 // loop_header
    %s19 = sphi 0, %s23
    %p20 = scmp.ge.s32.totalorder %s19, 4
    %s29 = sphi 0, %s31
    %s32 = sphi 0, %s29
    %s33 = sphi 0, %s32
    %s49 = sphi 0, %s33
    %s55 = sphi 0, %s57
    %s58 = sphi 0, %s55
    %s59 = sphi 0, %s58
    %s75 = sphi 0, %s59
    %s79 = sphi 0, %s79
    %s81 = sphi 0, %s79
    %s82 = sphi 0, %s81
    %s96 = sphi 0, %s82
    %s100 = sphi 0, %s100
    %s102 = sphi 0, %s100
    %s103 = sphi 0, %s102
    %s117 = sphi 0, %s103
    %s121 = sphi 0, %s121
    %s123 = sphi 0, %s121
    %s124 = sphi 0, %s123
    %s138 = sphi 0, %s124
    %s142 = sphi 0, %s142
    %s144 = sphi 0, %s142
    %s145 = sphi 0, %s144
    %s159 = sphi 0, %s145
    %s163 = sphi 0, %s163
    %s165 = sphi 0, %s163
    %s166 = sphi 0, %s165
    %s180 = sphi 0, %s166
    %s184 = sphi 0, %s184
    %s186 = sphi 0, %s184
    %s187 = sphi 0, %s186
    %s201 = sphi 0, %s187
    %s205 = sphi 0, %s205
    %s207 = sphi 0, %s205
    %s208 = sphi 0, %s207
    %s222 = sphi 0, %s208
    %s226 = sphi 0, %s226
    %s228 = sphi 0, %s226
    %s229 = sphi 0, %s228
    %s243 = sphi 0, %s229
    %s249 = sphi 0, %s251
    %s252 = sphi 0, %s249
    %s253 = sphi 0, %s252
    %s269 = sphi 0, %s253
    %s275 = sphi 0, %s277
    %s278 = sphi 0, %s275
    %s279 = sphi 0, %s278
    %s295 = sphi 0, %s279
    %s301 = sphi 0, %s303
    %s304 = sphi 0, %s301
    %s305 = sphi 0, %s304
    %s321 = sphi 0, %s305
  $region4: #{encode_process_decode.13} parent=0 // loop_header_branch
    %22 = sbr.rel (%p20) target = $region8
  $region5: #{encode_process_decode.13} parent=0 // loop_body
    %s24 = ssub.s32 %s19, 1
    %s25 = ssub.s32 %s19, 2
    %s26 = sadd.s32 %s19, 1
    %s27 = ssub.s32 %s19, %s26
    %p28 = scmp.eq.s32.totalorder %s27, 0
    %s30 = sadd.s32 %s29, 1
    %s31 = scalar_select %p28, %s29, %s30
    %p34 = pneg %p28
    %p35 = scmp.eq.s32.totalorder %s19, 1
    %p36 = por %p34, %p35
    %p37 = scmp.ne.s32.totalorder %s29, %s32
    %p38 = scmp.eq.s32.totalorder %s19, 0
    %p39 = por %p37, %p38
    %p40 = scmp.ne.s32.totalorder %s29, %s32
    %p41 = scmp.eq.s32.totalorder %s24, 1
    %p42 = por %p40, %p41
    %p43 = scmp.ne.s32.totalorder %s32, %s33
    %p44 = scmp.eq.s32.totalorder %s24, 0
    %p45 = por %p43, %p44
    %p46 = scmp.ne.s32.totalorder %s32, %s33
    %p47 = scmp.eq.s32.totalorder %s25, 1
    %p48 = por %p46, %p47
    %p50 = scmp.ne.s32.totalorder %s33, %s49
    %p51 = scmp.eq.s32.totalorder %s25, 0
    %p52 = por %p50, %p51
    %s53 = ssub.s32 %s19, %s26
    %p54 = scmp.eq.s32.totalorder %s53, 0
    %s56 = sadd.s32 %s55, 1
    %s57 = scalar_select %p54, %s55, %s56
    %p60 = pneg %p54
    %p61 = scmp.eq.s32.totalorder %s19, 1
    %p62 = por %p60, %p61
    %p63 = scmp.ne.s32.totalorder %s55, %s58
    %p64 = scmp.eq.s32.totalorder %s19, 0
    %p65 = por %p63, %p64
    %p66 = scmp.ne.s32.totalorder %s55, %s58
    %p67 = scmp.eq.s32.totalorder %s24, 1
    %p68 = por %p66, %p67
    %p69 = scmp.ne.s32.totalorder %s58, %s59
    %p70 = scmp.eq.s32.totalorder %s24, 0
    %p71 = por %p69, %p70
    %p72 = scmp.ne.s32.totalorder %s58, %s59
    %p73 = scmp.eq.s32.totalorder %s25, 1
    %p74 = por %p72, %p73
    %p76 = scmp.ne.s32.totalorder %s59, %s75
    %p77 = scmp.eq.s32.totalorder %s25, 0
    %p78 = por %p76, %p77
    %s80 = sadd.s32 %s79, 1
    %p83 = scmp.eq.s32.totalorder %s19, 1
    %p84 = scmp.ne.s32.totalorder %s79, %s81
    %p85 = scmp.eq.s32.totalorder %s19, 0
    %p86 = por %p84, %p85
    %p87 = scmp.ne.s32.totalorder %s79, %s81
    %p88 = scmp.eq.s32.totalorder %s24, 1
    %p89 = por %p87, %p88
    %p90 = scmp.ne.s32.totalorder %s81, %s82
    %p91 = scmp.eq.s32.totalorder %s24, 0
    %p92 = por %p90, %p91
    %p93 = scmp.ne.s32.totalorder %s81, %s82
    %p94 = scmp.eq.s32.totalorder %s25, 1
    %p95 = por %p93, %p94
    %p97 = scmp.ne.s32.totalorder %s82, %s96
    %p98 = scmp.eq.s32.totalorder %s25, 0
    %p99 = por %p97, %p98
    %s101 = sadd.s32 %s100, 1
    %p104 = scmp.eq.s32.totalorder %s19, 1
    %p105 = scmp.ne.s32.totalorder %s100, %s102
    %p106 = scmp.eq.s32.totalorder %s19, 0
    %p107 = por %p105, %p106
    %p108 = scmp.ne.s32.totalorder %s100, %s102
    %p109 = scmp.eq.s32.totalorder %s24, 1
    %p110 = por %p108, %p109
    %p111 = scmp.ne.s32.totalorder %s102, %s103
    %p112 = scmp.eq.s32.totalorder %s24, 0
    %p113 = por %p111, %p112
    %p114 = scmp.ne.s32.totalorder %s102, %s103
    %p115 = scmp.eq.s32.totalorder %s25, 1
    %p116 = por %p114, %p115
    %p118 = scmp.ne.s32.totalorder %s103, %s117
    %p119 = scmp.eq.s32.totalorder %s25, 0
    %p120 = por %p118, %p119
    %s122 = sadd.s32 %s121, 1
    %p125 = scmp.eq.s32.totalorder %s19, 1
    %p126 = scmp.ne.s32.totalorder %s121, %s123
    %p127 = scmp.eq.s32.totalorder %s19, 0
    %p128 = por %p126, %p127
    %p129 = scmp.ne.s32.totalorder %s121, %s123
    %p130 = scmp.eq.s32.totalorder %s24, 1
    %p131 = por %p129, %p130
    %p132 = scmp.ne.s32.totalorder %s123, %s124
    %p133 = scmp.eq.s32.totalorder %s24, 0
    %p134 = por %p132, %p133
    %p135 = scmp.ne.s32.totalorder %s123, %s124
    %p136 = scmp.eq.s32.totalorder %s25, 1
    %p137 = por %p135, %p136
    %p139 = scmp.ne.s32.totalorder %s124, %s138
    %p140 = scmp.eq.s32.totalorder %s25, 0
    %p141 = por %p139, %p140
    %s143 = sadd.s32 %s142, 1
    %p146 = scmp.eq.s32.totalorder %s19, 1
    %p147 = scmp.ne.s32.totalorder %s142, %s144
    %p148 = scmp.eq.s32.totalorder %s19, 0
    %p149 = por %p147, %p148
    %p150 = scmp.ne.s32.totalorder %s142, %s144
    %p151 = scmp.eq.s32.totalorder %s24, 1
    %p152 = por %p150, %p151
    %p153 = scmp.ne.s32.totalorder %s144, %s145
    %p154 = scmp.eq.s32.totalorder %s24, 0
    %p155 = por %p153, %p154
    %p156 = scmp.ne.s32.totalorder %s144, %s145
    %p157 = scmp.eq.s32.totalorder %s25, 1
    %p158 = por %p156, %p157
    %p160 = scmp.ne.s32.totalorder %s145, %s159
    %p161 = scmp.eq.s32.totalorder %s25, 0
    %p162 = por %p160, %p161
    %s164 = sadd.s32 %s163, 1
    %p167 = scmp.eq.s32.totalorder %s19, 1
    %p168 = scmp.ne.s32.totalorder %s163, %s165
    %p169 = scmp.eq.s32.totalorder %s19, 0
    %p170 = por %p168, %p169
    %p171 = scmp.ne.s32.totalorder %s163, %s165
    %p172 = scmp.eq.s32.totalorder %s24, 1
    %p173 = por %p171, %p172
    %p174 = scmp.ne.s32.totalorder %s165, %s166
    %p175 = scmp.eq.s32.totalorder %s24, 0
    %p176 = por %p174, %p175
    %p177 = scmp.ne.s32.totalorder %s165, %s166
    %p178 = scmp.eq.s32.totalorder %s25, 1
    %p179 = por %p177, %p178
    %p181 = scmp.ne.s32.totalorder %s166, %s180
    %p182 = scmp.eq.s32.totalorder %s25, 0
    %p183 = por %p181, %p182
    %s185 = sadd.s32 %s184, 1
    %p188 = scmp.eq.s32.totalorder %s19, 1
    %p189 = scmp.ne.s32.totalorder %s184, %s186
    %p190 = scmp.eq.s32.totalorder %s19, 0
    %p191 = por %p189, %p190
    %p192 = scmp.ne.s32.totalorder %s184, %s186
    %p193 = scmp.eq.s32.totalorder %s24, 1
    %p194 = por %p192, %p193
    %p195 = scmp.ne.s32.totalorder %s186, %s187
    %p196 = scmp.eq.s32.totalorder %s24, 0
    %p197 = por %p195, %p196
    %p198 = scmp.ne.s32.totalorder %s186, %s187
    %p199 = scmp.eq.s32.totalorder %s25, 1
    %p200 = por %p198, %p199
    %p202 = scmp.ne.s32.totalorder %s187, %s201
    %p203 = scmp.eq.s32.totalorder %s25, 0
    %p204 = por %p202, %p203
    %s206 = sadd.s32 %s205, 1
    %p209 = scmp.eq.s32.totalorder %s19, 1
    %p210 = scmp.ne.s32.totalorder %s205, %s207
    %p211 = scmp.eq.s32.totalorder %s19, 0
    %p212 = por %p210, %p211
    %p213 = scmp.ne.s32.totalorder %s205, %s207
    %p214 = scmp.eq.s32.totalorder %s24, 1
    %p215 = por %p213, %p214
    %p216 = scmp.ne.s32.totalorder %s207, %s208
    %p217 = scmp.eq.s32.totalorder %s24, 0
    %p218 = por %p216, %p217
    %p219 = scmp.ne.s32.totalorder %s207, %s208
    %p220 = scmp.eq.s32.totalorder %s25, 1
    %p221 = por %p219, %p220
    %p223 = scmp.ne.s32.totalorder %s208, %s222
    %p224 = scmp.eq.s32.totalorder %s25, 0
    %p225 = por %p223, %p224
    %s227 = sadd.s32 %s226, 1
    %p230 = scmp.eq.s32.totalorder %s19, 1
    %p231 = scmp.ne.s32.totalorder %s226, %s228
    %p232 = scmp.eq.s32.totalorder %s19, 0
    %p233 = por %p231, %p232
    %p234 = scmp.ne.s32.totalorder %s226, %s228
    %p235 = scmp.eq.s32.totalorder %s24, 1
    %p236 = por %p234, %p235
    %p237 = scmp.ne.s32.totalorder %s228, %s229
    %p238 = scmp.eq.s32.totalorder %s24, 0
    %p239 = por %p237, %p238
    %p240 = scmp.ne.s32.totalorder %s228, %s229
    %p241 = scmp.eq.s32.totalorder %s25, 1
    %p242 = por %p240, %p241
    %p244 = scmp.ne.s32.totalorder %s229, %s243
    %p245 = scmp.eq.s32.totalorder %s25, 0
    %p246 = por %p244, %p245
    %s247 = ssub.s32 %s19, %s26
    %p248 = scmp.eq.s32.totalorder %s247, 0
    %s250 = sadd.s32 %s249, 1
    %s251 = scalar_select %p248, %s249, %s250
    %p254 = pneg %p248
    %p255 = scmp.eq.s32.totalorder %s19, 1
    %p256 = por %p254, %p255
    %p257 = scmp.ne.s32.totalorder %s249, %s252
    %p258 = scmp.eq.s32.totalorder %s19, 0
    %p259 = por %p257, %p258
    %p260 = scmp.ne.s32.totalorder %s249, %s252
    %p261 = scmp.eq.s32.totalorder %s24, 1
    %p262 = por %p260, %p261
    %p263 = scmp.ne.s32.totalorder %s252, %s253
    %p264 = scmp.eq.s32.totalorder %s24, 0
    %p265 = por %p263, %p264
    %p266 = scmp.ne.s32.totalorder %s252, %s253
    %p267 = scmp.eq.s32.totalorder %s25, 1
    %p268 = por %p266, %p267
    %p270 = scmp.ne.s32.totalorder %s253, %s269
    %p271 = scmp.eq.s32.totalorder %s25, 0
    %p272 = por %p270, %p271
    %s273 = ssub.s32 %s19, %s26
    %p274 = scmp.eq.s32.totalorder %s273, 0
    %s276 = sadd.s32 %s275, 1
    %s277 = scalar_select %p274, %s275, %s276
    %p280 = pneg %p274
    %p281 = scmp.eq.s32.totalorder %s19, 1
    %p282 = por %p280, %p281
    %p283 = scmp.ne.s32.totalorder %s275, %s278
    %p284 = scmp.eq.s32.totalorder %s19, 0
    %p285 = por %p283, %p284
    %p286 = scmp.ne.s32.totalorder %s275, %s278
    %p287 = scmp.eq.s32.totalorder %s24, 1
    %p288 = por %p286, %p287
    %p289 = scmp.ne.s32.totalorder %s278, %s279
    %p290 = scmp.eq.s32.totalorder %s24, 0
    %p291 = por %p289, %p290
    %p292 = scmp.ne.s32.totalorder %s278, %s279
    %p293 = scmp.eq.s32.totalorder %s25, 1
    %p294 = por %p292, %p293
    %p296 = scmp.ne.s32.totalorder %s279, %s295
    %p297 = scmp.eq.s32.totalorder %s25, 0
    %p298 = por %p296, %p297
    %s299 = ssub.s32 %s19, %s26
    %p300 = scmp.eq.s32.totalorder %s299, 0
    %s302 = sadd.s32 %s301, 1
    %s303 = scalar_select %p300, %s301, %s302
    %p306 = pneg %p300
    %p307 = scmp.eq.s32.totalorder %s19, 1
    %p308 = por %p306, %p307
    %p309 = scmp.ne.s32.totalorder %s301, %s304
    %p310 = scmp.eq.s32.totalorder %s19, 0
    %p311 = por %p309, %p310
    %p312 = scmp.ne.s32.totalorder %s301, %s304
    %p313 = scmp.eq.s32.totalorder %s24, 1
    %p314 = por %p312, %p313
    %p315 = scmp.ne.s32.totalorder %s304, %s305
    %p316 = scmp.eq.s32.totalorder %s24, 0
    %p317 = por %p315, %p316
    %p318 = scmp.ne.s32.totalorder %s304, %s305
    %p319 = scmp.eq.s32.totalorder %s25, 1
    %p320 = por %p318, %p319
    %p322 = scmp.ne.s32.totalorder %s305, %s321
    %p323 = scmp.eq.s32.totalorder %s25, 0
    %p324 = por %p322, %p323
    %p325 = scmp.le.s32.totalorder 1, %s19
    %p326 = scmp.lt.s32.totalorder %s19, 3
    %p327 = pnand %p325, %p326
    %p328 = pneg %p327
    // Predicated region
    $region9: #{encode_process_decode.13} parent=5 // pred_check
      _
    $region10: #{encode_process_decode.13} parent=5 // pred_check_branch
      %330 = sbr.rel (%p327) target = $region12
    $region11: #{encode_process_decode.13} parent=5 // pred_region
      %s331 = ssub.s32 %s19, 1
      // Predicated region
      $region13: #{encode_process_decode.13} parent=11 // pred_check
        %p332 = pneg %p92
      $region14: #{encode_process_decode.13} parent=11 // pred_check_branch
        %334 = sbr.rel (%p332) target = $region16
      $region15: #{encode_process_decode.13} parent=11 // pred_region
        _
      $region16: #{encode_process_decode.13} parent=11 // pred_fallthru
        _
      // Predicated region
      $region17: #{encode_process_decode.13} parent=11 // pred_check
        %p335 = pneg %p113
      $region18: #{encode_process_decode.13} parent=11 // pred_check_branch
        %337 = sbr.rel (%p335) target = $region20
      $region19: #{encode_process_decode.13} parent=11 // pred_region
        _
      $region20: #{encode_process_decode.13} parent=11 // pred_fallthru
        _
      // Predicated region
      $region21: #{encode_process_decode.13} parent=11 // pred_check
        %p338 = pneg %p134
      $region22: #{encode_process_decode.13} parent=11 // pred_check_branch
        %340 = sbr.rel (%p338) target = $region24
      $region23: #{encode_process_decode.13} parent=11 // pred_region
        _
      $region24: #{encode_process_decode.13} parent=11 // pred_fallthru
        _
      // Predicated region
      $region25: #{encode_process_decode.13} parent=11 // pred_check
        %p341 = pneg %p155
      $region26: #{encode_process_decode.13} parent=11 // pred_check_branch
        %343 = sbr.rel (%p341) target = $region28
      $region27: #{encode_process_decode.13} parent=11 // pred_region
        _
      $region28: #{encode_process_decode.13} parent=11 // pred_fallthru
        _
      // Predicated region
      $region29: #{encode_process_decode.13} parent=11 // pred_check
        %p344 = pneg %p176
      $region30: #{encode_process_decode.13} parent=11 // pred_check_branch
        %346 = sbr.rel (%p344) target = $region32
      $region31: #{encode_process_decode.13} parent=11 // pred_region
        _
      $region32: #{encode_process_decode.13} parent=11 // pred_fallthru
        _
      // Predicated region
      $region33: #{encode_process_decode.13} parent=11 // pred_check
        %p347 = pneg %p197
      $region34: #{encode_process_decode.13} parent=11 // pred_check_branch
        %349 = sbr.rel (%p347) target = $region36
      $region35: #{encode_process_decode.13} parent=11 // pred_region
        _
      $region36: #{encode_process_decode.13} parent=11 // pred_fallthru
        _
      // Predicated region
      $region37: #{encode_process_decode.13} parent=11 // pred_check
        %p350 = pneg %p218
      $region38: #{encode_process_decode.13} parent=11 // pred_check_branch
        %352 = sbr.rel (%p350) target = $region40
      $region39: #{encode_process_decode.13} parent=11 // pred_region
        _
      $region40: #{encode_process_decode.13} parent=11 // pred_fallthru
        _
      // Predicated region
      $region41: #{encode_process_decode.13} parent=11 // pred_check
        %p353 = pneg %p239
      $region42: #{encode_process_decode.13} parent=11 // pred_check_branch
        %355 = sbr.rel (%p353) target = $region44
      $region43: #{encode_process_decode.13} parent=11 // pred_region
        _
      $region44: #{encode_process_decode.13} parent=11 // pred_fallthru
        _
    $region12: #{encode_process_decode.13} parent=5 // pred_fallthru
      _
    %p356 = scmp.lt.s32.totalorder %s19, 2
    // Predicated region
    $region45: #{encode_process_decode.13} parent=5 // pred_check
      %p357 = pneg %p356
    $region46: #{encode_process_decode.13} parent=5 // pred_check_branch
      %359 = sbr.rel (%p357) target = $region48
    $region47: #{encode_process_decode.13} parent=5 // pred_region
      // Predicated region
      $region49: #{encode_process_decode.13} parent=47 // pred_check
        %p360 = pneg %p39
      $region50: #{encode_process_decode.13} parent=47 // pred_check_branch
        %362 = sbr.rel (%p360) target = $region52
      $region51: #{encode_process_decode.13} parent=47 // pred_region
        %s363 = smul.u32 4, %s19
        %p364 = scmp.lt.s32.totalorder %s363, 7
        %s365 = scalar_select %p364, %s363, 7
        %s366 = smul.addr %s365, 4
        %s367 = scalar_lea.vmem %s0, %s366
        %s368 = smul.u32 4, %s19
      $region52: #{encode_process_decode.13} parent=47 // pred_fallthru
        _
      // Predicated region
      $region53: #{encode_process_decode.13} parent=47 // pred_check
        %p369 = pneg %p65
      $region54: #{encode_process_decode.13} parent=47 // pred_check_branch
        %371 = sbr.rel (%p369) target = $region56
      $region55: #{encode_process_decode.13} parent=47 // pred_region
        %s372 = smul.u32 4, %s19
        %p373 = scmp.lt.s32.totalorder %s372, 7
        %s374 = scalar_select %p373, %s372, 7
        %s375 = smul.addr %s374, 4
        %s376 = scalar_lea.vmem %s1, %s375
        %s377 = smul.u32 4, %s19
      $region56: #{encode_process_decode.13} parent=47 // pred_fallthru
        _
      // Predicated region
      $region57: #{encode_process_decode.13} parent=47 // pred_check
        %p378 = pneg %p259
      $region58: #{encode_process_decode.13} parent=47 // pred_check_branch
        %380 = sbr.rel (%p378) target = $region60
      $region59: #{encode_process_decode.13} parent=47 // pred_region
        %s381 = smul.u32 4, %s19
        %p382 = scmp.lt.s32.totalorder %s381, 7
        %s383 = scalar_select %p382, %s381, 7
        %s384 = smul.addr %s383, 4
        %s385 = scalar_lea.vmem %s10, %s384
        %s386 = smul.u32 4, %s19
      $region60: #{encode_process_decode.13} parent=47 // pred_fallthru
        _
    $region48: #{encode_process_decode.13} parent=5 // pred_fallthru
      _
    %p387 = scmp.le.s32.totalorder 1, %s19
    %p388 = scmp.lt.s32.totalorder %s19, 3
    %p389 = pnand %p387, %p388
    %p390 = pneg %p389
    // Predicated region
    $region61: #{encode_process_decode.13} parent=5 // pred_check
      _
    $region62: #{encode_process_decode.13} parent=5 // pred_check_branch
      %392 = sbr.rel (%p389) target = $region64
    $region63: #{encode_process_decode.13} parent=5 // pred_region
      %s393 = ssub.s32 %s19, 1
      %s394 = smul.u32 4, %s24
      %p395 = scmp.lt.s32.totalorder %s394, 7
      %s396 = scalar_select %p395, %s394, 7
      %s397 = smul.addr %s396, 4
      %s398 = scalar_lea.vmem %s0, %s397
      %p399 = pneg %p45
      %p400 = pneg %p42
      %s401 = smul.u32 4, %s24
      %p402 = scmp.lt.s32.totalorder %s401, 7
      %s403 = scalar_select %p402, %s401, 7
      %s404 = smul.addr %s403, 4
      %s405 = scalar_lea.vmem %s1, %s404
      %p406 = pneg %p71
      %p407 = pneg %p68
      %p408 = pneg %p92
      %p409 = pneg %p89
      %p410 = pneg %p113
      %p411 = pneg %p110
      %p412 = pneg %p134
      %p413 = pneg %p131
      %p414 = pneg %p155
      %p415 = pneg %p152
      %p416 = pneg %p176
      %p417 = pneg %p173
      %p418 = pneg %p197
      %p419 = pneg %p194
      %p420 = pneg %p218
      %p421 = pneg %p215
      %p422 = pneg %p239
      %p423 = pneg %p236
      %s424 = smul.u32 4, %s24
      %p425 = scmp.lt.s32.totalorder %s424, 7
      %s426 = scalar_select %p425, %s424, 7
      %s427 = smul.addr %s426, 4
      %s428 = scalar_lea.vmem %s10, %s427
      %p429 = pneg %p265
      %p430 = pneg %p262
      %p431 = pneg %p291
      %p432 = pneg %p288
      %s433 = smul.u32 4, %s24
      %p434 = scmp.lt.s32.totalorder %s433, 7
      %s435 = scalar_select %p434, %s433, 7
      %s436 = smul.addr %s435, 4
      %s437 = scalar_lea.vmem %s11, %s436
      %p438 = pneg %p317
      %p439 = pneg %p314
      %s440 = smul.u32 4, %s24
      %p441 = scmp.lt.s32.totalorder %s440, 7
      %s442 = scalar_select %p441, %s440, 7
      %s443 = smul.addr %s442, 4
      %s444 = scalar_lea.vmem %s12, %s443
      %s445 = smul.u32 4, %s24
      %p446 = scmp.lt.s32.totalorder %s445, 7
      %s447 = scalar_select %p446, %s445, 7
      %s448 = smul.addr %s447, 4
      %s449 = scalar_lea.vmem %s0, %s448
      %s450 = smul.u32 4, %s24
      %s451 = smul.u32 4, %s24
      %p452 = scmp.lt.s32.totalorder %s451, 7
      %s453 = scalar_select %p452, %s451, 7
      %s454 = smul.addr %s453, 4
      %s455 = scalar_lea.vmem %s1, %s454
      %s456 = smul.u32 4, %s24
      %s457 = smul.u32 4, %s24
      %p458 = scmp.lt.s32.totalorder %s457, 7
      %s459 = scalar_select %p458, %s457, 7
      %s460 = smul.addr %s459, 4
      %s461 = scalar_lea.vmem %s10, %s460
      %s462 = smul.u32 4, %s24
      %s463 = smul.u32 4, %s24
      %p464 = scmp.lt.s32.totalorder %s463, 7
      %s465 = scalar_select %p464, %s463, 7
      %s466 = smul.addr %s465, 4
      %s467 = scalar_lea.vmem %s11, %s466
      %s468 = smul.u32 4, %s24
      %s469 = smul.u32 4, %s24
      %p470 = scmp.lt.s32.totalorder %s469, 7
      %s471 = scalar_select %p470, %s469, 7
      %s472 = smul.addr %s471, 4
      %s473 = scalar_lea.vmem %s12, %s472
      %s474 = smul.u32 4, %s24
      %v476 = vld [vmem:[%s449] sm:$0xf]
      %v477 = vld [vmem:[%s449 + $0x4] sm:$0xf]
      %v478 = vld [vmem:[%s449 + $0x8] sm:$0xf]
      %v479 = vld [vmem:[%s449 + $0xc] sm:$0xf]
      %v480 = vld [vmem:[%s455] sm:$0xf]
      %v481 = vld [vmem:[%s455 + $0x4] sm:$0xf]
      %v482 = vld [vmem:[%s455 + $0x8] sm:$0xf]
      %v483 = vld [vmem:[%s455 + $0xc] sm:$0xf]
      %v488 = vunpack.c.l.b16 %v476
      %v489 = vunpack.c.l.b16 %v477
      %v490 = vunpack.c.l.b16 %v478
      %v491 = vunpack.c.l.b16 %v479
      %v492 = vpack.c.b16 %v489, %v488
      %v493 = vpack.c.b16 %v491, %v490
      %v500 = vunpack.c.l.b16 %v480
      %v501 = vunpack.c.l.b16 %v481
      %v502 = vunpack.c.l.b16 %v482
      %v503 = vunpack.c.l.b16 %v483
      %v504 = vpack.c.b16 %v501, %v500
      %v505 = vpack.c.b16 %v503, %v502
      %v508 = vld [vmem:[%s2] sm:$0xf]
      %v509 = vld [vmem:[%s2 + $0x4] sm:$0xf]
      %v510 = vld [vmem:[%s2 + $0x8] sm:$0xf]
      %v511 = vld [vmem:[%s2 + $0xc] sm:$0xf]
      %v512 = vld [vmem:[%s2 + $0x10] sm:$0xf]
      %v513 = vld [vmem:[%s2 + $0x14] sm:$0xf]
      %v514 = vld [vmem:[%s2 + $0x18] sm:$0xf]
      %v515 = vld [vmem:[%s2 + $0x1c] sm:$0xf]
      %v516 = vld [vmem:[%s2 + $0x20] sm:$0xf]
      %v517 = vld [vmem:[%s2 + $0x24] sm:$0xf]
      %v518 = vld [vmem:[%s2 + $0x28] sm:$0xf]
      %v519 = vld [vmem:[%s2 + $0x2c] sm:$0xf]
      %v520 = vld [vmem:[%s2 + $0x30] sm:$0xf]
      %v521 = vld [vmem:[%s2 + $0x34] sm:$0xf]
      %v522 = vld [vmem:[%s2 + $0x38] sm:$0xf]
      %v523 = vld [vmem:[%s2 + $0x3c] sm:$0xf]
      %v524 = vld [vmem:[%s2 + $0x40] sm:$0xf]
      %v525 = vld [vmem:[%s2 + $0x44] sm:$0xf]
      %v526 = vld [vmem:[%s2 + $0x48] sm:$0xf]
      %v527 = vld [vmem:[%s2 + $0x4c] sm:$0xf]
      %v528 = vld [vmem:[%s2 + $0x50] sm:$0xf]
      %v529 = vld [vmem:[%s2 + $0x54] sm:$0xf]
      %v530 = vld [vmem:[%s2 + $0x58] sm:$0xf]
      %v531 = vld [vmem:[%s2 + $0x5c] sm:$0xf]
      %v532 = vld [vmem:[%s2 + $0x60] sm:$0xf]
      %v533 = vld [vmem:[%s2 + $0x64] sm:$0xf]
      %v534 = vld [vmem:[%s2 + $0x68] sm:$0xf]
      %v535 = vld [vmem:[%s2 + $0x6c] sm:$0xf]
      %v536 = vld [vmem:[%s2 + $0x70] sm:$0xf]
      %v537 = vld [vmem:[%s2 + $0x74] sm:$0xf]
      %v538 = vld [vmem:[%s2 + $0x78] sm:$0xf]
      %v539 = vld [vmem:[%s2 + $0x7c] sm:$0xf]
      %v540 = vld [vmem:[%s3] sm:$0x1]
      %v542 = vlaneseq
      %v543 = vshrl.u32 %v542, 7
      %v544 = vsub.s32 0, %v543
      %v545 = vrot.slane %v540, %v544
      %v579 = vunpack.c.l.b16 %v508
      %v580 = vunpack.c.l.b16 %v509
      %v581 = vunpack.c.l.b16 %v510
      %v582 = vunpack.c.l.b16 %v511
      %v583 = vunpack.c.l.b16 %v512
      %v584 = vunpack.c.l.b16 %v513
      %v585 = vunpack.c.l.b16 %v514
      %v586 = vunpack.c.l.b16 %v515
      %v587 = vunpack.c.l.b16 %v516
      %v588 = vunpack.c.l.b16 %v517
      %v589 = vunpack.c.l.b16 %v518
      %v590 = vunpack.c.l.b16 %v519
      %v591 = vunpack.c.l.b16 %v520
      %v592 = vunpack.c.l.b16 %v521
      %v593 = vunpack.c.l.b16 %v522
      %v594 = vunpack.c.l.b16 %v523
      %v595 = vunpack.c.l.b16 %v524
      %v596 = vunpack.c.l.b16 %v525
      %v597 = vunpack.c.l.b16 %v526
      %v598 = vunpack.c.l.b16 %v527
      %v599 = vunpack.c.l.b16 %v528
      %v600 = vunpack.c.l.b16 %v529
      %v601 = vunpack.c.l.b16 %v530
      %v602 = vunpack.c.l.b16 %v531
      %v603 = vunpack.c.l.b16 %v532
      %v604 = vunpack.c.l.b16 %v533
      %v605 = vunpack.c.l.b16 %v534
      %v606 = vunpack.c.l.b16 %v535
      %v607 = vunpack.c.l.b16 %v536
      %v608 = vunpack.c.l.b16 %v537
      %v609 = vunpack.c.l.b16 %v538
      %v610 = vunpack.c.l.b16 %v539
      %v611 = vpack.c.b16 %v580, %v579
      %v612 = vpack.c.b16 %v582, %v581
      %v613 = vpack.c.b16 %v584, %v583
      %v614 = vpack.c.b16 %v586, %v585
      %v615 = vpack.c.b16 %v588, %v587
      %v616 = vpack.c.b16 %v590, %v589
      %v617 = vpack.c.b16 %v592, %v591
      %v618 = vpack.c.b16 %v594, %v593
      %v619 = vpack.c.b16 %v596, %v595
      %v620 = vpack.c.b16 %v598, %v597
      %v621 = vpack.c.b16 %v600, %v599
      %v622 = vpack.c.b16 %v602, %v601
      %v623 = vpack.c.b16 %v604, %v603
      %v624 = vpack.c.b16 %v606, %v605
      %v625 = vpack.c.b16 %v608, %v607
      %v626 = vpack.c.b16 %v610, %v609
      %643 = vmatprep.subr.bf16.mxu0 0
      %644 = vmatpush1.bf16.msra.mxu0 %v618
      %645 = vmatprep.subr.bf16.mxu0 0
      %646 = vmatpush1.bf16.msra.mxu0 %v617
      %647 = vmatprep.subr.bf16.mxu0 0
      %648 = vmatpush1.bf16.msra.mxu0 %v616
      %649 = vmatprep.subr.bf16.mxu0 0
      %650 = vmatpush1.bf16.msra.mxu0 %v615
      %651 = vmatprep.subr.bf16.mxu0 0
      %652 = vmatpush1.bf16.msra.mxu0 %v614
      %653 = vmatprep.subr.bf16.mxu0 0
      %654 = vmatpush1.bf16.msra.mxu0 %v613
      %655 = vmatprep.subr.bf16.mxu0 0
      %656 = vmatpush1.bf16.msra.mxu0 %v612
      %657 = vmatprep.subr.bf16.mxu0 0
      %658 = vmatpush1.bf16.msra.mxu0 %v611
      %659 = vmatprep.subr.bf16.mxu0 0
      %660 = vmatpush2.bf16.msra.mxu0 %v626
      %661 = vmatprep.subr.bf16.mxu0 0
      %662 = vmatpush2.bf16.msra.mxu0 %v625
      %663 = vmatprep.subr.bf16.mxu0 0
      %664 = vmatpush2.bf16.msra.mxu0 %v624
      %665 = vmatprep.subr.bf16.mxu0 0
      %666 = vmatpush2.bf16.msra.mxu0 %v623
      %667 = vmatprep.subr.bf16.mxu0 0
      %668 = vmatpush2.bf16.msra.mxu0 %v622
      %669 = vmatprep.subr.bf16.mxu0 0
      %670 = vmatpush2.bf16.msra.mxu0 %v621
      %671 = vmatprep.subr.bf16.mxu0 0
      %672 = vmatpush2.bf16.msra.mxu0 %v620
      %673 = vmatprep.subr.bf16.mxu0 0
      %674 = vmatpush2.bf16.msra.mxu0 %v619
      %675 = vmatprep.mubr.bf16.mxu0 %v504
      %676 = vmatmul.mubr.bf16.gmra.mxu0 %v492
      %v677 = vpop.f32.mrf.mxu0
      %v678 = vadd.f32 %v545, %v677
      %v679 = vpop.f32.mrf.mxu0
      %v680 = vpop.f32.mrf.mxu0
      %v681 = vadd.f32 %v545, %v680
      %v682 = vpop.f32.mrf.mxu0
      %683 = vmatprep.mubr.bf16.mxu0 %v505
      %684 = vmatmul.mubr.bf16.gmra.mxu0 %v493
      %v685 = vpop.f32.mrf.mxu0
      %v686 = vadd.f32 %v545, %v685
      %v687 = vpop.f32.mrf.mxu0
      %v688 = vpop.f32.mrf.mxu0
      %v689 = vadd.f32 %v545, %v688
      %v690 = vpop.f32.mrf.mxu0
      %691 = vdwg.mxu0
      %v692 = vmax.f32 %v678, 0.0
      %v693 = vmax.f32 %v681, 0.0
      %v694 = vmax.f32 %v686, 0.0
      %v695 = vmax.f32 %v689, 0.0
      %v696 = vld [vmem:[%s4] sm:$0xf]
      %v697 = vld [vmem:[%s4 + $0x4] sm:$0xf]
      %v698 = vld [vmem:[%s4 + $0x8] sm:$0xf]
      %v699 = vld [vmem:[%s4 + $0xc] sm:$0xf]
      %v700 = vld [vmem:[%s4 + $0x10] sm:$0xf]
      %v701 = vld [vmem:[%s4 + $0x14] sm:$0xf]
      %v702 = vld [vmem:[%s4 + $0x18] sm:$0xf]
      %v703 = vld [vmem:[%s4 + $0x1c] sm:$0xf]
      %v704 = vld [vmem:[%s4 + $0x20] sm:$0xf]
      %v705 = vld [vmem:[%s4 + $0x24] sm:$0xf]
      %v706 = vld [vmem:[%s4 + $0x28] sm:$0xf]
      %v707 = vld [vmem:[%s4 + $0x2c] sm:$0xf]
      %v708 = vld [vmem:[%s4 + $0x30] sm:$0xf]
      %v709 = vld [vmem:[%s4 + $0x34] sm:$0xf]
      %v710 = vld [vmem:[%s4 + $0x38] sm:$0xf]
      %v711 = vld [vmem:[%s4 + $0x3c] sm:$0xf]
      %v712 = vld [vmem:[%s5] sm:$0x1]
      %v713 = vpack.c.bf16 %v693, %v692
      %v714 = vpack.c.bf16 %v695, %v694
      %v716 = vlaneseq
      %v717 = vshrl.u32 %v716, 7
      %v718 = vsub.s32 0, %v717
      %v719 = vrot.slane %v712, %v718
      %v737 = vunpack.c.l.b16 %v696
      %v738 = vunpack.c.l.b16 %v697
      %v739 = vunpack.c.l.b16 %v698
      %v740 = vunpack.c.l.b16 %v699
      %v741 = vunpack.c.l.b16 %v700
      %v742 = vunpack.c.l.b16 %v701
      %v743 = vunpack.c.l.b16 %v702
      %v744 = vunpack.c.l.b16 %v703
      %v745 = vunpack.c.l.b16 %v704
      %v746 = vunpack.c.l.b16 %v705
      %v747 = vunpack.c.l.b16 %v706
      %v748 = vunpack.c.l.b16 %v707
      %v749 = vunpack.c.l.b16 %v708
      %v750 = vunpack.c.l.b16 %v709
      %v751 = vunpack.c.l.b16 %v710
      %v752 = vunpack.c.l.b16 %v711
      %v753 = vpack.c.b16 %v738, %v737
      %v754 = vpack.c.b16 %v740, %v739
      %v755 = vpack.c.b16 %v742, %v741
      %v756 = vpack.c.b16 %v744, %v743
      %v757 = vpack.c.b16 %v746, %v745
      %v758 = vpack.c.b16 %v748, %v747
      %v759 = vpack.c.b16 %v750, %v749
      %v760 = vpack.c.b16 %v752, %v751
      %769 = vmatprep.subr.bf16.mxu0 0
      %770 = vmatpush1.bf16.msra.mxu0 %v760
      %771 = vmatprep.subr.bf16.mxu0 0
      %772 = vmatpush1.bf16.msra.mxu0 %v759
      %773 = vmatprep.subr.bf16.mxu0 0
      %774 = vmatpush1.bf16.msra.mxu0 %v758
      %775 = vmatprep.subr.bf16.mxu0 0
      %776 = vmatpush1.bf16.msra.mxu0 %v757
      %777 = vmatprep.subr.bf16.mxu0 0
      %778 = vmatpush1.bf16.msra.mxu0 %v756
      %779 = vmatprep.subr.bf16.mxu0 0
      %780 = vmatpush1.bf16.msra.mxu0 %v755
      %781 = vmatprep.subr.bf16.mxu0 0
      %782 = vmatpush1.bf16.msra.mxu0 %v754
      %783 = vmatprep.subr.bf16.mxu0 0
      %784 = vmatpush1.bf16.msra.mxu0 %v753
      %785 = vmatprep.subr.bf16.mxu0 0
      %786 = vmatpush2.bf16.msra.mxu0 0
      %787 = vmatprep.subr.bf16.mxu0 0
      %788 = vmatpush2.bf16.msra.mxu0 0
      %789 = vmatprep.subr.bf16.mxu0 0
      %790 = vmatpush2.bf16.msra.mxu0 0
      %791 = vmatprep.subr.bf16.mxu0 0
      %792 = vmatpush2.bf16.msra.mxu0 0
      %793 = vmatprep.subr.bf16.mxu0 0
      %794 = vmatpush2.bf16.msra.mxu0 0
      %795 = vmatprep.subr.bf16.mxu0 0
      %796 = vmatpush2.bf16.msra.mxu0 0
      %797 = vmatprep.subr.bf16.mxu0 0
      %798 = vmatpush2.bf16.msra.mxu0 0
      %799 = vmatprep.subr.bf16.mxu0 0
      %800 = vmatpush2.bf16.msra.mxu0 0
      %801 = vmatprep.mubr.bf16.mxu0 0
      %802 = vmatmul.mubr.bf16.gmra.mxu0 %v713
      %v803 = vpop.f32.mrf.mxu0
      %v804 = vadd.f32 %v719, %v803
      %v805 = vpop.f32.mrf.mxu0
      %v806 = vpop.f32.mrf.mxu0
      %v807 = vadd.f32 %v719, %v806
      %v808 = vpop.f32.mrf.mxu0
      %809 = vmatprep.mubr.bf16.mxu0 0
      %810 = vmatmul.mubr.bf16.gmra.mxu0 %v714
      %v811 = vpop.f32.mrf.mxu0
      %v812 = vadd.f32 %v719, %v811
      %v813 = vpop.f32.mrf.mxu0
      %v814 = vpop.f32.mrf.mxu0
      %v815 = vadd.f32 %v719, %v814
      %v816 = vpop.f32.mrf.mxu0
      %817 = vdwg.mxu0
      %v818 = vmax.f32 %v804, 0.0
      %v819 = vmax.f32 %v807, 0.0
      %v820 = vmax.f32 %v812, 0.0
      %v821 = vmax.f32 %v815, 0.0
      %v822 = vld [vmem:[%s6] sm:$0xf]
      %v823 = vld [vmem:[%s6 + $0x4] sm:$0xf]
      %v824 = vld [vmem:[%s6 + $0x8] sm:$0xf]
      %v825 = vld [vmem:[%s6 + $0xc] sm:$0xf]
      %v826 = vld [vmem:[%s6 + $0x10] sm:$0xf]
      %v827 = vld [vmem:[%s6 + $0x14] sm:$0xf]
      %v828 = vld [vmem:[%s6 + $0x18] sm:$0xf]
      %v829 = vld [vmem:[%s6 + $0x1c] sm:$0xf]
      %v830 = vld [vmem:[%s6 + $0x20] sm:$0xf]
      %v831 = vld [vmem:[%s6 + $0x24] sm:$0xf]
      %v832 = vld [vmem:[%s6 + $0x28] sm:$0xf]
      %v833 = vld [vmem:[%s6 + $0x2c] sm:$0xf]
      %v834 = vld [vmem:[%s6 + $0x30] sm:$0xf]
      %v835 = vld [vmem:[%s6 + $0x34] sm:$0xf]
      %v836 = vld [vmem:[%s6 + $0x38] sm:$0xf]
      %v837 = vld [vmem:[%s6 + $0x3c] sm:$0xf]
      %v838 = vld [vmem:[%s7] sm:$0x1]
      %v839 = vpack.c.bf16 %v819, %v818
      %v840 = vpack.c.bf16 %v821, %v820
      %v842 = vlaneseq
      %v843 = vshrl.u32 %v842, 7
      %v844 = vsub.s32 0, %v843
      %v845 = vrot.slane %v838, %v844
      %v863 = vunpack.c.l.b16 %v822
      %v864 = vunpack.c.l.b16 %v823
      %v865 = vunpack.c.l.b16 %v824
      %v866 = vunpack.c.l.b16 %v825
      %v867 = vunpack.c.l.b16 %v826
      %v868 = vunpack.c.l.b16 %v827
      %v869 = vunpack.c.l.b16 %v828
      %v870 = vunpack.c.l.b16 %v829
      %v871 = vunpack.c.l.b16 %v830
      %v872 = vunpack.c.l.b16 %v831
      %v873 = vunpack.c.l.b16 %v832
      %v874 = vunpack.c.l.b16 %v833
      %v875 = vunpack.c.l.b16 %v834
      %v876 = vunpack.c.l.b16 %v835
      %v877 = vunpack.c.l.b16 %v836
      %v878 = vunpack.c.l.b16 %v837
      %v879 = vpack.c.b16 %v864, %v863
      %v880 = vpack.c.b16 %v866, %v865
      %v881 = vpack.c.b16 %v868, %v867
      %v882 = vpack.c.b16 %v870, %v869
      %v883 = vpack.c.b16 %v872, %v871
      %v884 = vpack.c.b16 %v874, %v873
      %v885 = vpack.c.b16 %v876, %v875
      %v886 = vpack.c.b16 %v878, %v877
      %895 = vmatprep.subr.bf16.mxu0 0
      %896 = vmatpush1.bf16.msra.mxu0 %v886
      %897 = vmatprep.subr.bf16.mxu0 0
      %898 = vmatpush1.bf16.msra.mxu0 %v885
      %899 = vmatprep.subr.bf16.mxu0 0
      %900 = vmatpush1.bf16.msra.mxu0 %v884
      %901 = vmatprep.subr.bf16.mxu0 0
      %902 = vmatpush1.bf16.msra.mxu0 %v883
      %903 = vmatprep.subr.bf16.mxu0 0
      %904 = vmatpush1.bf16.msra.mxu0 %v882
      %905 = vmatprep.subr.bf16.mxu0 0
      %906 = vmatpush1.bf16.msra.mxu0 %v881
      %907 = vmatprep.subr.bf16.mxu0 0
      %908 = vmatpush1.bf16.msra.mxu0 %v880
      %909 = vmatprep.subr.bf16.mxu0 0
      %910 = vmatpush1.bf16.msra.mxu0 %v879
      %911 = vmatprep.subr.bf16.mxu0 0
      %912 = vmatpush2.bf16.msra.mxu0 0
      %913 = vmatprep.subr.bf16.mxu0 0
      %914 = vmatpush2.bf16.msra.mxu0 0
      %915 = vmatprep.subr.bf16.mxu0 0
      %916 = vmatpush2.bf16.msra.mxu0 0
      %917 = vmatprep.subr.bf16.mxu0 0
      %918 = vmatpush2.bf16.msra.mxu0 0
      %919 = vmatprep.subr.bf16.mxu0 0
      %920 = vmatpush2.bf16.msra.mxu0 0
      %921 = vmatprep.subr.bf16.mxu0 0
      %922 = vmatpush2.bf16.msra.mxu0 0
      %923 = vmatprep.subr.bf16.mxu0 0
      %924 = vmatpush2.bf16.msra.mxu0 0
      %925 = vmatprep.subr.bf16.mxu0 0
      %926 = vmatpush2.bf16.msra.mxu0 0
      %927 = vmatprep.mubr.bf16.mxu0 0
      %928 = vmatmul.mubr.bf16.gmra.mxu0 %v839
      %v929 = vpop.f32.mrf.mxu0
      %v930 = vadd.f32 %v845, %v929
      %v931 = vpop.f32.mrf.mxu0
      %v932 = vpop.f32.mrf.mxu0
      %v933 = vadd.f32 %v845, %v932
      %v934 = vpop.f32.mrf.mxu0
      %935 = vmatprep.mubr.bf16.mxu0 0
      %936 = vmatmul.mubr.bf16.gmra.mxu0 %v840
      %v937 = vpop.f32.mrf.mxu0
      %v938 = vadd.f32 %v845, %v937
      %v939 = vpop.f32.mrf.mxu0
      %v940 = vpop.f32.mrf.mxu0
      %v941 = vadd.f32 %v845, %v940
      %v942 = vpop.f32.mrf.mxu0
      %943 = vdwg.mxu0
      %v944 = vld [vmem:[%s8] sm:$0x1]
      %v945 = vld [vmem:[%s9] sm:$0x1]
      %946 = vadd.xlane.f32.xlu0 %v930
      %v947 = vpop.xlane.xlu0 %946
      %948 = vadd.xlane.f32.xlu0 %v933
      %v949 = vpop.xlane.xlu0 %948
      %950 = vadd.xlane.f32.xlu0 %v938
      %v951 = vpop.xlane.xlu0 %950
      %952 = vadd.xlane.f32.xlu0 %v941
      %v953 = vpop.xlane.xlu0 %952
      %v954 = vrcp.pop 128.0
      %v955 = vmul.f32 %v947, %v954
      %v956 = vmul.f32 %v949, %v954
      %v957 = vmul.f32 %v951, %v954
      %v958 = vmul.f32 %v953, %v954
      %v959 = vsub.f32 %v930, %v955
      %v960 = vsub.f32 %v933, %v956
      %v961 = vsub.f32 %v938, %v957
      %v962 = vsub.f32 %v941, %v958
      %v963 = vmul.f32 %v959, %v959
      %v964 = vmul.f32 %v960, %v960
      %v965 = vmul.f32 %v961, %v961
      %v966 = vmul.f32 %v962, %v962
      %967 = vadd.xlane.f32.xlu0 %v963
      %v968 = vpop.xlane.xlu0 %967
      %969 = vadd.xlane.f32.xlu0 %v964
      %v970 = vpop.xlane.xlu0 %969
      %971 = vadd.xlane.f32.xlu0 %v965
      %v972 = vpop.xlane.xlu0 %971
      %973 = vadd.xlane.f32.xlu0 %v966
      %v974 = vpop.xlane.xlu0 %973
      %v975 = vmul.f32 %v968, %v954
      %v976 = vmul.f32 %v970, %v954
      %v977 = vmul.f32 %v972, %v954
      %v978 = vmul.f32 %v974, %v954
      %v979 = vadd.f32 %v975, 1e-05
      %v980 = vadd.f32 %v976, 1e-05
      %v981 = vadd.f32 %v977, 1e-05
      %v982 = vadd.f32 %v978, 1e-05
      %v983 = vrsqrt.pop %v979
      %v984 = vrsqrt.pop %v980
      %v985 = vrsqrt.pop %v981
      %v986 = vrsqrt.pop %v982
      %v987 = vmul.f32 %v959, %v983
      %v988 = vmul.f32 %v960, %v984
      %v989 = vmul.f32 %v961, %v985
      %v990 = vmul.f32 %v962, %v986
      %v992 = vlaneseq
      %v993 = vshrl.u32 %v992, 7
      %v994 = vsub.s32 0, %v993
      %v995 = vrot.slane %v944, %v994
      %v997 = vmul.f32 %v987, %v995
      %v998 = vmul.f32 %v988, %v995
      %v999 = vmul.f32 %v989, %v995
      %v1000 = vmul.f32 %v990, %v995
      %v1002 = vlaneseq
      %v1003 = vshrl.u32 %v1002, 7
      %v1004 = vsub.s32 0, %v1003
      %v1005 = vrot.slane %v945, %v1004
      %v1007 = vadd.f32 %v997, %v1005
      %v1008 = vadd.f32 %v998, %v1005
      %v1009 = vadd.f32 %v999, %v1005
      %v1010 = vadd.f32 %v1000, %v1005
      %v1011 = vld [vmem:[%s461] sm:$0xf]
      %v1012 = vld [vmem:[%s461 + $0x4] sm:$0xf]
      %v1013 = vld [vmem:[%s461 + $0x8] sm:$0xf]
      %v1014 = vld [vmem:[%s461 + $0xc] sm:$0xf]
      %v1015 = vunpack.c.l.bf16 %v1011
      %v1016 = vunpack.c.l.bf16 %v1012
      %v1017 = vunpack.c.l.bf16 %v1013
      %v1018 = vunpack.c.l.bf16 %v1014
      %v1019 = vpack.c.bf16 %v1008, %v1007
      %v1020 = vpack.c.bf16 %v1010, %v1009
      %v1023 = vunpack.c.l.b16 %v1019
      %v1024 = vunpack.c.h.b16 %v1019
      %v1025 = vunpack.c.l.b16 %v1020
      %v1026 = vunpack.c.h.b16 %v1020
      %v1027 = vpack.c.b16 %v1023, %v1023
      %v1028 = vpack.c.b16 %v1024, %v1024
      %v1029 = vpack.c.b16 %v1025, %v1025
      %v1030 = vpack.c.b16 %v1026, %v1026
      %1035 = vst [vmem:[%s467] sm:$0xf] %v1027
      %1036 = vst [vmem:[%s467 + $0x4] sm:$0xf] %v1028
      %1037 = vst [vmem:[%s467 + $0x8] sm:$0xf] %v1029
      %1038 = vst [vmem:[%s467 + $0xc] sm:$0xf] %v1030
      %v1039 = vadd.f32 %v1007, %v1015
      %v1040 = vadd.f32 %v1008, %v1016
      %v1041 = vadd.f32 %v1009, %v1017
      %v1042 = vadd.f32 %v1010, %v1018
      %v1043 = vpack.c.bf16 %v1040, %v1039
      %v1044 = vpack.c.bf16 %v1042, %v1041
      %v1047 = vunpack.c.l.b16 %v1043
      %v1048 = vunpack.c.h.b16 %v1043
      %v1049 = vunpack.c.l.b16 %v1044
      %v1050 = vunpack.c.h.b16 %v1044
      %v1051 = vpack.c.b16 %v1047, %v1047
      %v1052 = vpack.c.b16 %v1048, %v1048
      %v1053 = vpack.c.b16 %v1049, %v1049
      %v1054 = vpack.c.b16 %v1050, %v1050
      %1059 = vst [vmem:[%s473] sm:$0xf] %v1051
      %1060 = vst [vmem:[%s473 + $0x4] sm:$0xf] %v1052
      %1061 = vst [vmem:[%s473 + $0x8] sm:$0xf] %v1053
      %1062 = vst [vmem:[%s473 + $0xc] sm:$0xf] %v1054
      %s1063 = smul.u32 4, %s24
      %p1064 = scmp.lt.s32.totalorder %s1063, 7
      %s1065 = scalar_select %p1064, %s1063, 7
      %s1066 = smul.addr %s1065, 4
      %s1067 = scalar_lea.vmem %s11, %s1066
      %s1068 = smul.u32 4, %s24
      %p1069 = scmp.lt.s32.totalorder %s1068, 7
      %s1070 = scalar_select %p1069, %s1068, 7
      %s1071 = smul.addr %s1070, 4
      %s1072 = scalar_lea.vmem %s12, %s1071
      // Predicated region
      $region65: #{encode_process_decode.13} parent=63 // pred_check
        %p1073 = pneg %p288
      $region66: #{encode_process_decode.13} parent=63 // pred_check_branch
        %1075 = sbr.rel (%p1073) target = $region68
      $region67: #{encode_process_decode.13} parent=63 // pred_region
        %s1076 = smul.u32 4, %s24
      $region68: #{encode_process_decode.13} parent=63 // pred_fallthru
        _
      // Predicated region
      $region69: #{encode_process_decode.13} parent=63 // pred_check
        %p1077 = pneg %p314
      $region70: #{encode_process_decode.13} parent=63 // pred_check_branch
        %1079 = sbr.rel (%p1077) target = $region72
      $region71: #{encode_process_decode.13} parent=63 // pred_region
        %s1080 = smul.u32 4, %s24
      $region72: #{encode_process_decode.13} parent=63 // pred_fallthru
        _
    $region64: #{encode_process_decode.13} parent=5 // pred_fallthru
      _
    %p1081 = scmp.le.s32.totalorder 2, %s19
    // Predicated region
    $region73: #{encode_process_decode.13} parent=5 // pred_check
      %p1082 = pneg %p1081
    $region74: #{encode_process_decode.13} parent=5 // pred_check_branch
      %1084 = sbr.rel (%p1082) target = $region76
    $region75: #{encode_process_decode.13} parent=5 // pred_region
      %s1085 = ssub.s32 %s19, 2
      // Predicated region
      $region77: #{encode_process_decode.13} parent=75 // pred_check
        %p1086 = pneg %p294
      $region78: #{encode_process_decode.13} parent=75 // pred_check_branch
        %1088 = sbr.rel (%p1086) target = $region80
      $region79: #{encode_process_decode.13} parent=75 // pred_region
        %s1089 = smul.u32 4, %s25
        %p1090 = scmp.lt.s32.totalorder %s1089, 7
        %s1091 = scalar_select %p1090, %s1089, 7
        %s1092 = smul.addr %s1091, 4
        %s1093 = scalar_lea.vmem %s11, %s1092
      $region80: #{encode_process_decode.13} parent=75 // pred_fallthru
        _
      // Predicated region
      $region81: #{encode_process_decode.13} parent=75 // pred_check
        %p1094 = pneg %p320
      $region82: #{encode_process_decode.13} parent=75 // pred_check_branch
        %1096 = sbr.rel (%p1094) target = $region84
      $region83: #{encode_process_decode.13} parent=75 // pred_region
        %s1097 = smul.u32 4, %s25
        %p1098 = scmp.lt.s32.totalorder %s1097, 7
        %s1099 = scalar_select %p1098, %s1097, 7
        %s1100 = smul.addr %s1099, 4
        %s1101 = scalar_lea.vmem %s12, %s1100
      $region84: #{encode_process_decode.13} parent=75 // pred_fallthru
        _
    $region76: #{encode_process_decode.13} parent=5 // pred_fallthru
      _
  $region6: #{encode_process_decode.13} parent=0 // loop_footer
    %s23 = sadd.s32 1, %s19
  $region7: #{encode_process_decode.13} parent=0 // loop_footer_branch
    %18 = sbr.rel target = $region3
  $region8: #{encode_process_decode.13} parent=0 // loop_exit
    _

// kernel: encode_process_decode.14
$region0: #{encode_process_decode.14}
  #allocation0 [shape = 'u32[]', space=smem, size = 0x4, offset = 0x4, fixed_abs, tag = 'smem constant byte address 0x4 - core index']
  #allocation1 [shape = 'u32[144,128]{1,0:T(1,128)}', space=vmem, size = 0x12000, scoped, tag = 'internal scratch']
  %s0 = inlined_call_operand.vmem [shape: bf16[128,128], index: 0, kind: input, shape index: {}]
  %s1 = inlined_call_operand.vmem [shape: bf16[128,128], index: 1, kind: input, shape index: {}]
  %s2 = inlined_call_operand.vmem [shape: bf16[128,128], index: 2, kind: input, shape index: {}, may-alias: {2,11}]
  %s3 = inlined_call_operand.vmem [shape: bf16[384,128], index: 3, kind: input, shape index: {}]
  %s4 = inlined_call_operand.vmem [shape: f32[1,128], index: 4, kind: input, shape index: {}]
  %s5 = inlined_call_operand.vmem [shape: bf16[128,128], index: 5, kind: input, shape index: {}]
  %s6 = inlined_call_operand.vmem [shape: f32[1,128], index: 6, kind: input, shape index: {}]
  %s7 = inlined_call_operand.vmem [shape: bf16[128,128], index: 7, kind: input, shape index: {}]
  %s8 = inlined_call_operand.vmem [shape: f32[1,128], index: 8, kind: input, shape index: {}]
  %s9 = inlined_call_operand.vmem [shape: f32[1,128], index: 9, kind: input, shape index: {}]
  %s10 = inlined_call_operand.vmem [shape: f32[1,128], index: 10, kind: input, shape index: {}]
  %s11 = inlined_call_operand.vmem [shape: bf16[128,128], index: 11, kind: input, shape index: {}, may-alias: {2,11}]
  %s12 = inlined_call_operand.vmem [shape: bf16[128,128], index: 12, kind: output, shape index: {}]
  %s13 = sld [smem:[#allocation0]]
  $region81: #{encode_process_decode.14} parent=0
    _
  %s15 = ssub.s32 1, %s13
  %s16 = scalar_select 0, %s15, %s13
  loop: start=0, step=1, limit=4
  $region2: #{encode_process_decode.14} parent=0 // loop_pre_header
    _
  $region3: #{encode_process_decode.14} parent=0 // loop_header
    %s18 = sphi 0, %s22
    %p19 = scmp.ge.s32.totalorder %s18, 4
    %s28 = sphi 0, %s30
    %s31 = sphi 0, %s28
    %s32 = sphi 0, %s31
    %s48 = sphi 0, %s32
    %s54 = sphi 0, %s56
    %s57 = sphi 0, %s54
    %s58 = sphi 0, %s57
    %s74 = sphi 0, %s58
    %s80 = sphi 0, %s82
    %s83 = sphi 0, %s80
    %s84 = sphi 0, %s83
    %s100 = sphi 0, %s84
    %s104 = sphi 0, %s104
    %s106 = sphi 0, %s104
    %s107 = sphi 0, %s106
    %s121 = sphi 0, %s107
    %s125 = sphi 0, %s125
    %s127 = sphi 0, %s125
    %s128 = sphi 0, %s127
    %s142 = sphi 0, %s128
    %s146 = sphi 0, %s146
    %s148 = sphi 0, %s146
    %s149 = sphi 0, %s148
    %s163 = sphi 0, %s149
    %s167 = sphi 0, %s167
    %s169 = sphi 0, %s167
    %s170 = sphi 0, %s169
    %s184 = sphi 0, %s170
    %s188 = sphi 0, %s188
    %s190 = sphi 0, %s188
    %s191 = sphi 0, %s190
    %s205 = sphi 0, %s191
    %s209 = sphi 0, %s209
    %s211 = sphi 0, %s209
    %s212 = sphi 0, %s211
    %s226 = sphi 0, %s212
    %s230 = sphi 0, %s230
    %s232 = sphi 0, %s230
    %s233 = sphi 0, %s232
    %s247 = sphi 0, %s233
    %s251 = sphi 0, %s251
    %s253 = sphi 0, %s251
    %s254 = sphi 0, %s253
    %s268 = sphi 0, %s254
    %s274 = sphi 0, %s276
    %s277 = sphi 0, %s274
    %s278 = sphi 0, %s277
    %s294 = sphi 0, %s278
    %s300 = sphi 0, %s302
    %s303 = sphi 0, %s300
    %s304 = sphi 0, %s303
    %s320 = sphi 0, %s304
  $region4: #{encode_process_decode.14} parent=0 // loop_header_branch
    %21 = sbr.rel (%p19) target = $region8
  $region5: #{encode_process_decode.14} parent=0 // loop_body
    %s23 = ssub.s32 %s18, 1
    %s24 = ssub.s32 %s18, 2
    %s25 = sadd.s32 %s18, 1
    %s26 = ssub.s32 %s18, %s25
    %p27 = scmp.eq.s32.totalorder %s26, 0
    %s29 = sadd.s32 %s28, 1
    %s30 = scalar_select %p27, %s28, %s29
    %p33 = pneg %p27
    %p34 = scmp.eq.s32.totalorder %s18, 1
    %p35 = por %p33, %p34
    %p36 = scmp.ne.s32.totalorder %s28, %s31
    %p37 = scmp.eq.s32.totalorder %s18, 0
    %p38 = por %p36, %p37
    %p39 = scmp.ne.s32.totalorder %s28, %s31
    %p40 = scmp.eq.s32.totalorder %s23, 1
    %p41 = por %p39, %p40
    %p42 = scmp.ne.s32.totalorder %s31, %s32
    %p43 = scmp.eq.s32.totalorder %s23, 0
    %p44 = por %p42, %p43
    %p45 = scmp.ne.s32.totalorder %s31, %s32
    %p46 = scmp.eq.s32.totalorder %s24, 1
    %p47 = por %p45, %p46
    %p49 = scmp.ne.s32.totalorder %s32, %s48
    %p50 = scmp.eq.s32.totalorder %s24, 0
    %p51 = por %p49, %p50
    %s52 = ssub.s32 %s18, %s25
    %p53 = scmp.eq.s32.totalorder %s52, 0
    %s55 = sadd.s32 %s54, 1
    %s56 = scalar_select %p53, %s54, %s55
    %p59 = pneg %p53
    %p60 = scmp.eq.s32.totalorder %s18, 1
    %p61 = por %p59, %p60
    %p62 = scmp.ne.s32.totalorder %s54, %s57
    %p63 = scmp.eq.s32.totalorder %s18, 0
    %p64 = por %p62, %p63
    %p65 = scmp.ne.s32.totalorder %s54, %s57
    %p66 = scmp.eq.s32.totalorder %s23, 1
    %p67 = por %p65, %p66
    %p68 = scmp.ne.s32.totalorder %s57, %s58
    %p69 = scmp.eq.s32.totalorder %s23, 0
    %p70 = por %p68, %p69
    %p71 = scmp.ne.s32.totalorder %s57, %s58
    %p72 = scmp.eq.s32.totalorder %s24, 1
    %p73 = por %p71, %p72
    %p75 = scmp.ne.s32.totalorder %s58, %s74
    %p76 = scmp.eq.s32.totalorder %s24, 0
    %p77 = por %p75, %p76
    %s78 = ssub.s32 %s18, %s25
    %p79 = scmp.eq.s32.totalorder %s78, 0
    %s81 = sadd.s32 %s80, 1
    %s82 = scalar_select %p79, %s80, %s81
    %p85 = pneg %p79
    %p86 = scmp.eq.s32.totalorder %s18, 1
    %p87 = por %p85, %p86
    %p88 = scmp.ne.s32.totalorder %s80, %s83
    %p89 = scmp.eq.s32.totalorder %s18, 0
    %p90 = por %p88, %p89
    %p91 = scmp.ne.s32.totalorder %s80, %s83
    %p92 = scmp.eq.s32.totalorder %s23, 1
    %p93 = por %p91, %p92
    %p94 = scmp.ne.s32.totalorder %s83, %s84
    %p95 = scmp.eq.s32.totalorder %s23, 0
    %p96 = por %p94, %p95
    %p97 = scmp.ne.s32.totalorder %s83, %s84
    %p98 = scmp.eq.s32.totalorder %s24, 1
    %p99 = por %p97, %p98
    %p101 = scmp.ne.s32.totalorder %s84, %s100
    %p102 = scmp.eq.s32.totalorder %s24, 0
    %p103 = por %p101, %p102
    %s105 = sadd.s32 %s104, 1
    %p108 = scmp.eq.s32.totalorder %s18, 1
    %p109 = scmp.ne.s32.totalorder %s104, %s106
    %p110 = scmp.eq.s32.totalorder %s18, 0
    %p111 = por %p109, %p110
    %p112 = scmp.ne.s32.totalorder %s104, %s106
    %p113 = scmp.eq.s32.totalorder %s23, 1
    %p114 = por %p112, %p113
    %p115 = scmp.ne.s32.totalorder %s106, %s107
    %p116 = scmp.eq.s32.totalorder %s23, 0
    %p117 = por %p115, %p116
    %p118 = scmp.ne.s32.totalorder %s106, %s107
    %p119 = scmp.eq.s32.totalorder %s24, 1
    %p120 = por %p118, %p119
    %p122 = scmp.ne.s32.totalorder %s107, %s121
    %p123 = scmp.eq.s32.totalorder %s24, 0
    %p124 = por %p122, %p123
    %s126 = sadd.s32 %s125, 1
    %p129 = scmp.eq.s32.totalorder %s18, 1
    %p130 = scmp.ne.s32.totalorder %s125, %s127
    %p131 = scmp.eq.s32.totalorder %s18, 0
    %p132 = por %p130, %p131
    %p133 = scmp.ne.s32.totalorder %s125, %s127
    %p134 = scmp.eq.s32.totalorder %s23, 1
    %p135 = por %p133, %p134
    %p136 = scmp.ne.s32.totalorder %s127, %s128
    %p137 = scmp.eq.s32.totalorder %s23, 0
    %p138 = por %p136, %p137
    %p139 = scmp.ne.s32.totalorder %s127, %s128
    %p140 = scmp.eq.s32.totalorder %s24, 1
    %p141 = por %p139, %p140
    %p143 = scmp.ne.s32.totalorder %s128, %s142
    %p144 = scmp.eq.s32.totalorder %s24, 0
    %p145 = por %p143, %p144
    %s147 = sadd.s32 %s146, 1
    %p150 = scmp.eq.s32.totalorder %s18, 1
    %p151 = scmp.ne.s32.totalorder %s146, %s148
    %p152 = scmp.eq.s32.totalorder %s18, 0
    %p153 = por %p151, %p152
    %p154 = scmp.ne.s32.totalorder %s146, %s148
    %p155 = scmp.eq.s32.totalorder %s23, 1
    %p156 = por %p154, %p155
    %p157 = scmp.ne.s32.totalorder %s148, %s149
    %p158 = scmp.eq.s32.totalorder %s23, 0
    %p159 = por %p157, %p158
    %p160 = scmp.ne.s32.totalorder %s148, %s149
    %p161 = scmp.eq.s32.totalorder %s24, 1
    %p162 = por %p160, %p161
    %p164 = scmp.ne.s32.totalorder %s149, %s163
    %p165 = scmp.eq.s32.totalorder %s24, 0
    %p166 = por %p164, %p165
    %s168 = sadd.s32 %s167, 1
    %p171 = scmp.eq.s32.totalorder %s18, 1
    %p172 = scmp.ne.s32.totalorder %s167, %s169
    %p173 = scmp.eq.s32.totalorder %s18, 0
    %p174 = por %p172, %p173
    %p175 = scmp.ne.s32.totalorder %s167, %s169
    %p176 = scmp.eq.s32.totalorder %s23, 1
    %p177 = por %p175, %p176
    %p178 = scmp.ne.s32.totalorder %s169, %s170
    %p179 = scmp.eq.s32.totalorder %s23, 0
    %p180 = por %p178, %p179
    %p181 = scmp.ne.s32.totalorder %s169, %s170
    %p182 = scmp.eq.s32.totalorder %s24, 1
    %p183 = por %p181, %p182
    %p185 = scmp.ne.s32.totalorder %s170, %s184
    %p186 = scmp.eq.s32.totalorder %s24, 0
    %p187 = por %p185, %p186
    %s189 = sadd.s32 %s188, 1
    %p192 = scmp.eq.s32.totalorder %s18, 1
    %p193 = scmp.ne.s32.totalorder %s188, %s190
    %p194 = scmp.eq.s32.totalorder %s18, 0
    %p195 = por %p193, %p194
    %p196 = scmp.ne.s32.totalorder %s188, %s190
    %p197 = scmp.eq.s32.totalorder %s23, 1
    %p198 = por %p196, %p197
    %p199 = scmp.ne.s32.totalorder %s190, %s191
    %p200 = scmp.eq.s32.totalorder %s23, 0
    %p201 = por %p199, %p200
    %p202 = scmp.ne.s32.totalorder %s190, %s191
    %p203 = scmp.eq.s32.totalorder %s24, 1
    %p204 = por %p202, %p203
    %p206 = scmp.ne.s32.totalorder %s191, %s205
    %p207 = scmp.eq.s32.totalorder %s24, 0
    %p208 = por %p206, %p207
    %s210 = sadd.s32 %s209, 1
    %p213 = scmp.eq.s32.totalorder %s18, 1
    %p214 = scmp.ne.s32.totalorder %s209, %s211
    %p215 = scmp.eq.s32.totalorder %s18, 0
    %p216 = por %p214, %p215
    %p217 = scmp.ne.s32.totalorder %s209, %s211
    %p218 = scmp.eq.s32.totalorder %s23, 1
    %p219 = por %p217, %p218
    %p220 = scmp.ne.s32.totalorder %s211, %s212
    %p221 = scmp.eq.s32.totalorder %s23, 0
    %p222 = por %p220, %p221
    %p223 = scmp.ne.s32.totalorder %s211, %s212
    %p224 = scmp.eq.s32.totalorder %s24, 1
    %p225 = por %p223, %p224
    %p227 = scmp.ne.s32.totalorder %s212, %s226
    %p228 = scmp.eq.s32.totalorder %s24, 0
    %p229 = por %p227, %p228
    %s231 = sadd.s32 %s230, 1
    %p234 = scmp.eq.s32.totalorder %s18, 1
    %p235 = scmp.ne.s32.totalorder %s230, %s232
    %p236 = scmp.eq.s32.totalorder %s18, 0
    %p237 = por %p235, %p236
    %p238 = scmp.ne.s32.totalorder %s230, %s232
    %p239 = scmp.eq.s32.totalorder %s23, 1
    %p240 = por %p238, %p239
    %p241 = scmp.ne.s32.totalorder %s232, %s233
    %p242 = scmp.eq.s32.totalorder %s23, 0
    %p243 = por %p241, %p242
    %p244 = scmp.ne.s32.totalorder %s232, %s233
    %p245 = scmp.eq.s32.totalorder %s24, 1
    %p246 = por %p244, %p245
    %p248 = scmp.ne.s32.totalorder %s233, %s247
    %p249 = scmp.eq.s32.totalorder %s24, 0
    %p250 = por %p248, %p249
    %s252 = sadd.s32 %s251, 1
    %p255 = scmp.eq.s32.totalorder %s18, 1
    %p256 = scmp.ne.s32.totalorder %s251, %s253
    %p257 = scmp.eq.s32.totalorder %s18, 0
    %p258 = por %p256, %p257
    %p259 = scmp.ne.s32.totalorder %s251, %s253
    %p260 = scmp.eq.s32.totalorder %s23, 1
    %p261 = por %p259, %p260
    %p262 = scmp.ne.s32.totalorder %s253, %s254
    %p263 = scmp.eq.s32.totalorder %s23, 0
    %p264 = por %p262, %p263
    %p265 = scmp.ne.s32.totalorder %s253, %s254
    %p266 = scmp.eq.s32.totalorder %s24, 1
    %p267 = por %p265, %p266
    %p269 = scmp.ne.s32.totalorder %s254, %s268
    %p270 = scmp.eq.s32.totalorder %s24, 0
    %p271 = por %p269, %p270
    %s272 = ssub.s32 %s18, %s25
    %p273 = scmp.eq.s32.totalorder %s272, 0
    %s275 = sadd.s32 %s274, 1
    %s276 = scalar_select %p273, %s274, %s275
    %p279 = pneg %p273
    %p280 = scmp.eq.s32.totalorder %s18, 1
    %p281 = por %p279, %p280
    %p282 = scmp.ne.s32.totalorder %s274, %s277
    %p283 = scmp.eq.s32.totalorder %s18, 0
    %p284 = por %p282, %p283
    %p285 = scmp.ne.s32.totalorder %s274, %s277
    %p286 = scmp.eq.s32.totalorder %s23, 1
    %p287 = por %p285, %p286
    %p288 = scmp.ne.s32.totalorder %s277, %s278
    %p289 = scmp.eq.s32.totalorder %s23, 0
    %p290 = por %p288, %p289
    %p291 = scmp.ne.s32.totalorder %s277, %s278
    %p292 = scmp.eq.s32.totalorder %s24, 1
    %p293 = por %p291, %p292
    %p295 = scmp.ne.s32.totalorder %s278, %s294
    %p296 = scmp.eq.s32.totalorder %s24, 0
    %p297 = por %p295, %p296
    %s298 = ssub.s32 %s18, %s25
    %p299 = scmp.eq.s32.totalorder %s298, 0
    %s301 = sadd.s32 %s300, 1
    %s302 = scalar_select %p299, %s300, %s301
    %p305 = pneg %p299
    %p306 = scmp.eq.s32.totalorder %s18, 1
    %p307 = por %p305, %p306
    %p308 = scmp.ne.s32.totalorder %s300, %s303
    %p309 = scmp.eq.s32.totalorder %s18, 0
    %p310 = por %p308, %p309
    %p311 = scmp.ne.s32.totalorder %s300, %s303
    %p312 = scmp.eq.s32.totalorder %s23, 1
    %p313 = por %p311, %p312
    %p314 = scmp.ne.s32.totalorder %s303, %s304
    %p315 = scmp.eq.s32.totalorder %s23, 0
    %p316 = por %p314, %p315
    %p317 = scmp.ne.s32.totalorder %s303, %s304
    %p318 = scmp.eq.s32.totalorder %s24, 1
    %p319 = por %p317, %p318
    %p321 = scmp.ne.s32.totalorder %s304, %s320
    %p322 = scmp.eq.s32.totalorder %s24, 0
    %p323 = por %p321, %p322
    %p324 = scmp.le.s32.totalorder 1, %s18
    %p325 = scmp.lt.s32.totalorder %s18, 3
    %p326 = pnand %p324, %p325
    %p327 = pneg %p326
    // Predicated region
    $region9: #{encode_process_decode.14} parent=5 // pred_check
      _
    $region10: #{encode_process_decode.14} parent=5 // pred_check_branch
      %329 = sbr.rel (%p326) target = $region12
    $region11: #{encode_process_decode.14} parent=5 // pred_region
      %s330 = ssub.s32 %s18, 1
      // Predicated region
      $region13: #{encode_process_decode.14} parent=11 // pred_check
        %p331 = pneg %p117
      $region14: #{encode_process_decode.14} parent=11 // pred_check_branch
        %333 = sbr.rel (%p331) target = $region16
      $region15: #{encode_process_decode.14} parent=11 // pred_region
        _
      $region16: #{encode_process_decode.14} parent=11 // pred_fallthru
        _
      // Predicated region
      $region17: #{encode_process_decode.14} parent=11 // pred_check
        %p334 = pneg %p138
      $region18: #{encode_process_decode.14} parent=11 // pred_check_branch
        %336 = sbr.rel (%p334) target = $region20
      $region19: #{encode_process_decode.14} parent=11 // pred_region
        _
      $region20: #{encode_process_decode.14} parent=11 // pred_fallthru
        _
      // Predicated region
      $region21: #{encode_process_decode.14} parent=11 // pred_check
        %p337 = pneg %p159
      $region22: #{encode_process_decode.14} parent=11 // pred_check_branch
        %339 = sbr.rel (%p337) target = $region24
      $region23: #{encode_process_decode.14} parent=11 // pred_region
        _
      $region24: #{encode_process_decode.14} parent=11 // pred_fallthru
        _
      // Predicated region
      $region25: #{encode_process_decode.14} parent=11 // pred_check
        %p340 = pneg %p180
      $region26: #{encode_process_decode.14} parent=11 // pred_check_branch
        %342 = sbr.rel (%p340) target = $region28
      $region27: #{encode_process_decode.14} parent=11 // pred_region
        _
      $region28: #{encode_process_decode.14} parent=11 // pred_fallthru
        _
      // Predicated region
      $region29: #{encode_process_decode.14} parent=11 // pred_check
        %p343 = pneg %p201
      $region30: #{encode_process_decode.14} parent=11 // pred_check_branch
        %345 = sbr.rel (%p343) target = $region32
      $region31: #{encode_process_decode.14} parent=11 // pred_region
        _
      $region32: #{encode_process_decode.14} parent=11 // pred_fallthru
        _
      // Predicated region
      $region33: #{encode_process_decode.14} parent=11 // pred_check
        %p346 = pneg %p222
      $region34: #{encode_process_decode.14} parent=11 // pred_check_branch
        %348 = sbr.rel (%p346) target = $region36
      $region35: #{encode_process_decode.14} parent=11 // pred_region
        _
      $region36: #{encode_process_decode.14} parent=11 // pred_fallthru
        _
      // Predicated region
      $region37: #{encode_process_decode.14} parent=11 // pred_check
        %p349 = pneg %p243
      $region38: #{encode_process_decode.14} parent=11 // pred_check_branch
        %351 = sbr.rel (%p349) target = $region40
      $region39: #{encode_process_decode.14} parent=11 // pred_region
        _
      $region40: #{encode_process_decode.14} parent=11 // pred_fallthru
        _
      // Predicated region
      $region41: #{encode_process_decode.14} parent=11 // pred_check
        %p352 = pneg %p264
      $region42: #{encode_process_decode.14} parent=11 // pred_check_branch
        %354 = sbr.rel (%p352) target = $region44
      $region43: #{encode_process_decode.14} parent=11 // pred_region
        _
      $region44: #{encode_process_decode.14} parent=11 // pred_fallthru
        _
    $region12: #{encode_process_decode.14} parent=5 // pred_fallthru
      _
    %p355 = scmp.lt.s32.totalorder %s18, 2
    // Predicated region
    $region45: #{encode_process_decode.14} parent=5 // pred_check
      %p356 = pneg %p355
    $region46: #{encode_process_decode.14} parent=5 // pred_check_branch
      %358 = sbr.rel (%p356) target = $region48
    $region47: #{encode_process_decode.14} parent=5 // pred_region
      // Predicated region
      $region49: #{encode_process_decode.14} parent=47 // pred_check
        %p359 = pneg %p38
      $region50: #{encode_process_decode.14} parent=47 // pred_check_branch
        %361 = sbr.rel (%p359) target = $region52
      $region51: #{encode_process_decode.14} parent=47 // pred_region
        %s362 = smul.u32 8, %s18
        %p363 = scmp.lt.s32.totalorder %s362, 15
        %s364 = scalar_select %p363, %s362, 15
        %s365 = smul.addr %s364, 4
        %s366 = scalar_lea.vmem %s0, %s365
        %s367 = smul.u32 8, %s18
      $region52: #{encode_process_decode.14} parent=47 // pred_fallthru
        _
      // Predicated region
      $region53: #{encode_process_decode.14} parent=47 // pred_check
        %p368 = pneg %p64
      $region54: #{encode_process_decode.14} parent=47 // pred_check_branch
        %370 = sbr.rel (%p368) target = $region56
      $region55: #{encode_process_decode.14} parent=47 // pred_region
        %s371 = smul.u32 8, %s18
        %p372 = scmp.lt.s32.totalorder %s371, 15
        %s373 = scalar_select %p372, %s371, 15
        %s374 = smul.addr %s373, 4
        %s375 = scalar_lea.vmem %s1, %s374
        %s376 = smul.u32 8, %s18
      $region56: #{encode_process_decode.14} parent=47 // pred_fallthru
        _
      // Predicated region
      $region57: #{encode_process_decode.14} parent=47 // pred_check
        %p377 = pneg %p90
      $region58: #{encode_process_decode.14} parent=47 // pred_check_branch
        %379 = sbr.rel (%p377) target = $region60
      $region59: #{encode_process_decode.14} parent=47 // pred_region
        %s380 = smul.u32 8, %s18
        %p381 = scmp.lt.s32.totalorder %s380, 15
        %s382 = scalar_select %p381, %s380, 15
        %s383 = smul.addr %s382, 4
        %s384 = scalar_lea.vmem %s2, %s383
        %s385 = smul.u32 8, %s18
      $region60: #{encode_process_decode.14} parent=47 // pred_fallthru
        _
      // Predicated region
      $region61: #{encode_process_decode.14} parent=47 // pred_check
        %p386 = pneg %p284
      $region62: #{encode_process_decode.14} parent=47 // pred_check_branch
        %388 = sbr.rel (%p386) target = $region64
      $region63: #{encode_process_decode.14} parent=47 // pred_region
        %s389 = smul.u32 8, %s18
        %p390 = scmp.lt.s32.totalorder %s389, 15
        %s391 = scalar_select %p390, %s389, 15
        %s392 = smul.addr %s391, 4
        %s393 = scalar_lea.vmem %s11, %s392
        %s394 = smul.u32 8, %s18
      $region64: #{encode_process_decode.14} parent=47 // pred_fallthru
        _
    $region48: #{encode_process_decode.14} parent=5 // pred_fallthru
      _
    %p395 = scmp.le.s32.totalorder 1, %s18
    %p396 = scmp.lt.s32.totalorder %s18, 3
    %p397 = pnand %p395, %p396
    %p398 = pneg %p397
    // Predicated region
    $region65: #{encode_process_decode.14} parent=5 // pred_check
      _
    $region66: #{encode_process_decode.14} parent=5 // pred_check_branch
      %400 = sbr.rel (%p397) target = $region68
    $region67: #{encode_process_decode.14} parent=5 // pred_region
      %s401 = ssub.s32 %s18, 1
      %s402 = smul.u32 8, %s23
      %p403 = scmp.lt.s32.totalorder %s402, 15
      %s404 = scalar_select %p403, %s402, 15
      %s405 = smul.addr %s404, 4
      %s406 = scalar_lea.vmem %s0, %s405
      %p407 = pneg %p44
      %p408 = pneg %p41
      %s409 = smul.u32 8, %s23
      %p410 = scmp.lt.s32.totalorder %s409, 15
      %s411 = scalar_select %p410, %s409, 15
      %s412 = smul.addr %s411, 4
      %s413 = scalar_lea.vmem %s1, %s412
      %p414 = pneg %p70
      %p415 = pneg %p67
      %s416 = smul.u32 8, %s23
      %p417 = scmp.lt.s32.totalorder %s416, 15
      %s418 = scalar_select %p417, %s416, 15
      %s419 = smul.addr %s418, 4
      %s420 = scalar_lea.vmem %s2, %s419
      %p421 = pneg %p96
      %p422 = pneg %p93
      %p423 = pneg %p117
      %p424 = pneg %p114
      %p425 = pneg %p138
      %p426 = pneg %p135
      %p427 = pneg %p159
      %p428 = pneg %p156
      %p429 = pneg %p180
      %p430 = pneg %p177
      %p431 = pneg %p201
      %p432 = pneg %p198
      %p433 = pneg %p222
      %p434 = pneg %p219
      %p435 = pneg %p243
      %p436 = pneg %p240
      %p437 = pneg %p264
      %p438 = pneg %p261
      %s439 = smul.u32 8, %s23
      %p440 = scmp.lt.s32.totalorder %s439, 15
      %s441 = scalar_select %p440, %s439, 15
      %s442 = smul.addr %s441, 4
      %s443 = scalar_lea.vmem %s11, %s442
      %p444 = pneg %p290
      %p445 = pneg %p287
      %p446 = pneg %p316
      %p447 = pneg %p313
      %s448 = smul.u32 8, %s23
      %p449 = scmp.lt.s32.totalorder %s448, 15
      %s450 = scalar_select %p449, %s448, 15
      %s451 = smul.addr %s450, 4
      %s452 = scalar_lea.vmem %s12, %s451
      %s453 = smul.u32 8, %s23
      %p454 = scmp.lt.s32.totalorder %s453, 15
      %s455 = scalar_select %p454, %s453, 15
      %s456 = smul.addr %s455, 4
      %s457 = scalar_lea.vmem %s0, %s456
      %s458 = smul.u32 8, %s23
      %s459 = smul.u32 8, %s23
      %p460 = scmp.lt.s32.totalorder %s459, 15
      %s461 = scalar_select %p460, %s459, 15
      %s462 = smul.addr %s461, 4
      %s463 = scalar_lea.vmem %s1, %s462
      %s464 = smul.u32 8, %s23
      %s465 = smul.u32 8, %s23
      %p466 = scmp.lt.s32.totalorder %s465, 15
      %s467 = scalar_select %p466, %s465, 15
      %s468 = smul.addr %s467, 4
      %s469 = scalar_lea.vmem %s2, %s468
      %s470 = smul.u32 8, %s23
      %s471 = smul.u32 8, %s23
      %p472 = scmp.lt.s32.totalorder %s471, 15
      %s473 = scalar_select %p472, %s471, 15
      %s474 = smul.addr %s473, 4
      %s475 = scalar_lea.vmem %s11, %s474
      %s476 = smul.u32 8, %s23
      %s477 = smul.u32 8, %s23
      %p478 = scmp.lt.s32.totalorder %s477, 15
      %s479 = scalar_select %p478, %s477, 15
      %s480 = smul.addr %s479, 4
      %s481 = scalar_lea.vmem %s12, %s480
      %s482 = smul.u32 8, %s23
      %v484 = vld [vmem:[%s457] sm:$0xf]
      %v485 = vld [vmem:[%s457 + $0x4] sm:$0xf]
      %v486 = vld [vmem:[%s457 + $0x8] sm:$0xf]
      %v487 = vld [vmem:[%s457 + $0xc] sm:$0xf]
      %v488 = vld [vmem:[%s457 + $0x10] sm:$0xf]
      %v489 = vld [vmem:[%s457 + $0x14] sm:$0xf]
      %v490 = vld [vmem:[%s457 + $0x18] sm:$0xf]
      %v491 = vld [vmem:[%s457 + $0x1c] sm:$0xf]
      %v492 = vld [vmem:[%s463] sm:$0xf]
      %v493 = vld [vmem:[%s463 + $0x4] sm:$0xf]
      %v494 = vld [vmem:[%s463 + $0x8] sm:$0xf]
      %v495 = vld [vmem:[%s463 + $0xc] sm:$0xf]
      %v496 = vld [vmem:[%s463 + $0x10] sm:$0xf]
      %v497 = vld [vmem:[%s463 + $0x14] sm:$0xf]
      %v498 = vld [vmem:[%s463 + $0x18] sm:$0xf]
      %v499 = vld [vmem:[%s463 + $0x1c] sm:$0xf]
      %v500 = vld [vmem:[%s469] sm:$0xf]
      %v501 = vld [vmem:[%s469 + $0x4] sm:$0xf]
      %v502 = vld [vmem:[%s469 + $0x8] sm:$0xf]
      %v503 = vld [vmem:[%s469 + $0xc] sm:$0xf]
      %v504 = vld [vmem:[%s469 + $0x10] sm:$0xf]
      %v505 = vld [vmem:[%s469 + $0x14] sm:$0xf]
      %v506 = vld [vmem:[%s469 + $0x18] sm:$0xf]
      %v507 = vld [vmem:[%s469 + $0x1c] sm:$0xf]
      %v516 = vunpack.c.l.b16 %v484
      %v517 = vunpack.c.l.b16 %v485
      %v518 = vunpack.c.l.b16 %v486
      %v519 = vunpack.c.l.b16 %v487
      %v520 = vunpack.c.l.b16 %v488
      %v521 = vunpack.c.l.b16 %v489
      %v522 = vunpack.c.l.b16 %v490
      %v523 = vunpack.c.l.b16 %v491
      %v524 = vpack.c.b16 %v517, %v516
      %v525 = vpack.c.b16 %v519, %v518
      %v526 = vpack.c.b16 %v521, %v520
      %v527 = vpack.c.b16 %v523, %v522
      %v540 = vunpack.c.l.b16 %v492
      %v541 = vunpack.c.l.b16 %v493
      %v542 = vunpack.c.l.b16 %v494
      %v543 = vunpack.c.l.b16 %v495
      %v544 = vunpack.c.l.b16 %v496
      %v545 = vunpack.c.l.b16 %v497
      %v546 = vunpack.c.l.b16 %v498
      %v547 = vunpack.c.l.b16 %v499
      %v548 = vpack.c.b16 %v541, %v540
      %v549 = vpack.c.b16 %v543, %v542
      %v550 = vpack.c.b16 %v545, %v544
      %v551 = vpack.c.b16 %v547, %v546
      %v564 = vunpack.c.l.b16 %v500
      %v565 = vunpack.c.l.b16 %v501
      %v566 = vunpack.c.l.b16 %v502
      %v567 = vunpack.c.l.b16 %v503
      %v568 = vunpack.c.l.b16 %v504
      %v569 = vunpack.c.l.b16 %v505
      %v570 = vunpack.c.l.b16 %v506
      %v571 = vunpack.c.l.b16 %v507
      %v572 = vpack.c.b16 %v565, %v564
      %v573 = vpack.c.b16 %v567, %v566
      %v574 = vpack.c.b16 %v569, %v568
      %v575 = vpack.c.b16 %v571, %v570
      %v580 = vld [vmem:[%s3] sm:$0xf]
      %v581 = vld [vmem:[%s3 + $0x4] sm:$0xf]
      %v582 = vld [vmem:[%s3 + $0x8] sm:$0xf]
      %v583 = vld [vmem:[%s3 + $0xc] sm:$0xf]
      %v584 = vld [vmem:[%s3 + $0x10] sm:$0xf]
      %v585 = vld [vmem:[%s3 + $0x14] sm:$0xf]
      %v586 = vld [vmem:[%s3 + $0x18] sm:$0xf]
      %v587 = vld [vmem:[%s3 + $0x1c] sm:$0xf]
      %v588 = vld [vmem:[%s3 + $0x20] sm:$0xf]
      %v589 = vld [vmem:[%s3 + $0x24] sm:$0xf]
      %v590 = vld [vmem:[%s3 + $0x28] sm:$0xf]
      %v591 = vld [vmem:[%s3 + $0x2c] sm:$0xf]
      %v592 = vld [vmem:[%s3 + $0x30] sm:$0xf]
      %v593 = vld [vmem:[%s3 + $0x34] sm:$0xf]
      %v594 = vld [vmem:[%s3 + $0x38] sm:$0xf]
      %v595 = vld [vmem:[%s3 + $0x3c] sm:$0xf]
      %v596 = vld [vmem:[%s3 + $0x40] sm:$0xf]
      %v597 = vld [vmem:[%s3 + $0x44] sm:$0xf]
      %v598 = vld [vmem:[%s3 + $0x48] sm:$0xf]
      %v599 = vld [vmem:[%s3 + $0x4c] sm:$0xf]
      %v600 = vld [vmem:[%s3 + $0x50] sm:$0xf]
      %v601 = vld [vmem:[%s3 + $0x54] sm:$0xf]
      %v602 = vld [vmem:[%s3 + $0x58] sm:$0xf]
      %v603 = vld [vmem:[%s3 + $0x5c] sm:$0xf]
      %v604 = vld [vmem:[%s3 + $0x60] sm:$0xf]
      %v605 = vld [vmem:[%s3 + $0x64] sm:$0xf]
      %v606 = vld [vmem:[%s3 + $0x68] sm:$0xf]
      %v607 = vld [vmem:[%s3 + $0x6c] sm:$0xf]
      %v608 = vld [vmem:[%s3 + $0x70] sm:$0xf]
      %v609 = vld [vmem:[%s3 + $0x74] sm:$0xf]
      %v610 = vld [vmem:[%s3 + $0x78] sm:$0xf]
      %v611 = vld [vmem:[%s3 + $0x7c] sm:$0xf]
      %v612 = vld [vmem:[%s3 + $0x80] sm:$0xf]
      %v613 = vld [vmem:[%s3 + $0x84] sm:$0xf]
      %v614 = vld [vmem:[%s3 + $0x88] sm:$0xf]
      %v615 = vld [vmem:[%s3 + $0x8c] sm:$0xf]
      %v616 = vld [vmem:[%s3 + $0x90] sm:$0xf]
      %v617 = vld [vmem:[%s3 + $0x94] sm:$0xf]
      %v618 = vld [vmem:[%s3 + $0x98] sm:$0xf]
      %v619 = vld [vmem:[%s3 + $0x9c] sm:$0xf]
      %v620 = vld [vmem:[%s3 + $0xa0] sm:$0xf]
      %v621 = vld [vmem:[%s3 + $0xa4] sm:$0xf]
      %v622 = vld [vmem:[%s3 + $0xa8] sm:$0xf]
      %v623 = vld [vmem:[%s3 + $0xac] sm:$0xf]
      %v624 = vld [vmem:[%s3 + $0xb0] sm:$0xf]
      %v625 = vld [vmem:[%s3 + $0xb4] sm:$0xf]
      %v626 = vld [vmem:[%s3 + $0xb8] sm:$0xf]
      %v627 = vld [vmem:[%s3 + $0xbc] sm:$0xf]
      %v628 = vld [vmem:[%s4] sm:$0x1]
      %v630 = vlaneseq
      %v631 = vshrl.u32 %v630, 7
      %v632 = vsub.s32 0, %v631
      %v633 = vrot.slane %v628, %v632
      %v683 = vunpack.c.l.b16 %v580
      %v684 = vunpack.c.l.b16 %v581
      %v685 = vunpack.c.l.b16 %v582
      %v686 = vunpack.c.l.b16 %v583
      %v687 = vunpack.c.l.b16 %v584
      %v688 = vunpack.c.l.b16 %v585
      %v689 = vunpack.c.l.b16 %v586
      %v690 = vunpack.c.l.b16 %v587
      %v691 = vunpack.c.l.b16 %v588
      %v692 = vunpack.c.l.b16 %v589
      %v693 = vunpack.c.l.b16 %v590
      %v694 = vunpack.c.l.b16 %v591
      %v695 = vunpack.c.l.b16 %v592
      %v696 = vunpack.c.l.b16 %v593
      %v697 = vunpack.c.l.b16 %v594
      %v698 = vunpack.c.l.b16 %v595
      %v699 = vunpack.c.l.b16 %v596
      %v700 = vunpack.c.l.b16 %v597
      %v701 = vunpack.c.l.b16 %v598
      %v702 = vunpack.c.l.b16 %v599
      %v703 = vunpack.c.l.b16 %v600
      %v704 = vunpack.c.l.b16 %v601
      %v705 = vunpack.c.l.b16 %v602
      %v706 = vunpack.c.l.b16 %v603
      %v707 = vunpack.c.l.b16 %v604
      %v708 = vunpack.c.l.b16 %v605
      %v709 = vunpack.c.l.b16 %v606
      %v710 = vunpack.c.l.b16 %v607
      %v711 = vunpack.c.l.b16 %v608
      %v712 = vunpack.c.l.b16 %v609
      %v713 = vunpack.c.l.b16 %v610
      %v714 = vunpack.c.l.b16 %v611
      %v715 = vunpack.c.l.b16 %v612
      %v716 = vunpack.c.l.b16 %v613
      %v717 = vunpack.c.l.b16 %v614
      %v718 = vunpack.c.l.b16 %v615
      %v719 = vunpack.c.l.b16 %v616
      %v720 = vunpack.c.l.b16 %v617
      %v721 = vunpack.c.l.b16 %v618
      %v722 = vunpack.c.l.b16 %v619
      %v723 = vunpack.c.l.b16 %v620
      %v724 = vunpack.c.l.b16 %v621
      %v725 = vunpack.c.l.b16 %v622
      %v726 = vunpack.c.l.b16 %v623
      %v727 = vunpack.c.l.b16 %v624
      %v728 = vunpack.c.l.b16 %v625
      %v729 = vunpack.c.l.b16 %v626
      %v730 = vunpack.c.l.b16 %v627
      %v731 = vpack.c.b16 %v684, %v683
      %v732 = vpack.c.b16 %v686, %v685
      %v733 = vpack.c.b16 %v688, %v687
      %v734 = vpack.c.b16 %v690, %v689
      %v735 = vpack.c.b16 %v692, %v691
      %v736 = vpack.c.b16 %v694, %v693
      %v737 = vpack.c.b16 %v696, %v695
      %v738 = vpack.c.b16 %v698, %v697
      %v739 = vpack.c.b16 %v700, %v699
      %v740 = vpack.c.b16 %v702, %v701
      %v741 = vpack.c.b16 %v704, %v703
      %v742 = vpack.c.b16 %v706, %v705
      %v743 = vpack.c.b16 %v708, %v707
      %v744 = vpack.c.b16 %v710, %v709
      %v745 = vpack.c.b16 %v712, %v711
      %v746 = vpack.c.b16 %v714, %v713
      %v747 = vpack.c.b16 %v716, %v715
      %v748 = vpack.c.b16 %v718, %v717
      %v749 = vpack.c.b16 %v720, %v719
      %v750 = vpack.c.b16 %v722, %v721
      %v751 = vpack.c.b16 %v724, %v723
      %v752 = vpack.c.b16 %v726, %v725
      %v753 = vpack.c.b16 %v728, %v727
      %v754 = vpack.c.b16 %v730, %v729
      %779 = vmatprep.subr.bf16.mxu0 0
      %780 = vmatpush1.bf16.msra.mxu0 %v738
      %781 = vmatprep.subr.bf16.mxu0 0
      %782 = vmatpush1.bf16.msra.mxu0 %v737
      %783 = vmatprep.subr.bf16.mxu0 0
      %784 = vmatpush1.bf16.msra.mxu0 %v736
      %785 = vmatprep.subr.bf16.mxu0 0
      %786 = vmatpush1.bf16.msra.mxu0 %v735
      %787 = vmatprep.subr.bf16.mxu0 0
      %788 = vmatpush1.bf16.msra.mxu0 %v734
      %789 = vmatprep.subr.bf16.mxu0 0
      %790 = vmatpush1.bf16.msra.mxu0 %v733
      %791 = vmatprep.subr.bf16.mxu0 0
      %792 = vmatpush1.bf16.msra.mxu0 %v732
      %793 = vmatprep.subr.bf16.mxu0 0
      %794 = vmatpush1.bf16.msra.mxu0 %v731
      %795 = vmatprep.subr.bf16.mxu0 0
      %796 = vmatpush2.bf16.msra.mxu0 %v746
      %797 = vmatprep.subr.bf16.mxu0 0
      %798 = vmatpush2.bf16.msra.mxu0 %v745
      %799 = vmatprep.subr.bf16.mxu0 0
      %800 = vmatpush2.bf16.msra.mxu0 %v744
      %801 = vmatprep.subr.bf16.mxu0 0
      %802 = vmatpush2.bf16.msra.mxu0 %v743
      %803 = vmatprep.subr.bf16.mxu0 0
      %804 = vmatpush2.bf16.msra.mxu0 %v742
      %805 = vmatprep.subr.bf16.mxu0 0
      %806 = vmatpush2.bf16.msra.mxu0 %v741
      %807 = vmatprep.subr.bf16.mxu0 0
      %808 = vmatpush2.bf16.msra.mxu0 %v740
      %809 = vmatprep.subr.bf16.mxu0 0
      %810 = vmatpush2.bf16.msra.mxu0 %v739
      %811 = vmatprep.mubr.bf16.mxu0 %v548
      %812 = vmatmul.mubr.bf16.gmra.mxu0 %v524
      %v813 = vpop.f32.mrf.mxu0
      %v814 = vadd.f32 %v633, %v813
      %v815 = vpop.f32.mrf.mxu0
      %v816 = vpop.f32.mrf.mxu0
      %v817 = vadd.f32 %v633, %v816
      %v818 = vpop.f32.mrf.mxu0
      %819 = vmatprep.mubr.bf16.mxu0 %v549
      %820 = vmatmul.mubr.bf16.gmra.mxu0 %v525
      %v821 = vpop.f32.mrf.mxu0
      %v822 = vadd.f32 %v633, %v821
      %v823 = vpop.f32.mrf.mxu0
      %v824 = vpop.f32.mrf.mxu0
      %v825 = vadd.f32 %v633, %v824
      %v826 = vpop.f32.mrf.mxu0
      %827 = vmatprep.mubr.bf16.mxu0 %v550
      %828 = vmatmul.mubr.bf16.gmra.mxu0 %v526
      %v829 = vpop.f32.mrf.mxu0
      %v830 = vadd.f32 %v633, %v829
      %v831 = vpop.f32.mrf.mxu0
      %v832 = vpop.f32.mrf.mxu0
      %v833 = vadd.f32 %v633, %v832
      %v834 = vpop.f32.mrf.mxu0
      %835 = vmatprep.mubr.bf16.mxu0 %v551
      %836 = vmatmul.mubr.bf16.gmra.mxu0 %v527
      %v837 = vpop.f32.mrf.mxu0
      %v838 = vadd.f32 %v633, %v837
      %v839 = vpop.f32.mrf.mxu0
      %v840 = vpop.f32.mrf.mxu0
      %v841 = vadd.f32 %v633, %v840
      %v842 = vpop.f32.mrf.mxu0
      %843 = vdwg.mxu0
      %844 = vmatprep.subr.bf16.mxu0 0
      %845 = vmatpush1.bf16.msra.mxu0 %v754
      %846 = vmatprep.subr.bf16.mxu0 0
      %847 = vmatpush1.bf16.msra.mxu0 %v753
      %848 = vmatprep.subr.bf16.mxu0 0
      %849 = vmatpush1.bf16.msra.mxu0 %v752
      %850 = vmatprep.subr.bf16.mxu0 0
      %851 = vmatpush1.bf16.msra.mxu0 %v751
      %852 = vmatprep.subr.bf16.mxu0 0
      %853 = vmatpush1.bf16.msra.mxu0 %v750
      %854 = vmatprep.subr.bf16.mxu0 0
      %855 = vmatpush1.bf16.msra.mxu0 %v749
      %856 = vmatprep.subr.bf16.mxu0 0
      %857 = vmatpush1.bf16.msra.mxu0 %v748
      %858 = vmatprep.subr.bf16.mxu0 0
      %859 = vmatpush1.bf16.msra.mxu0 %v747
      %860 = vmatprep.subr.bf16.mxu0 0
      %861 = vmatpush2.bf16.msra.mxu0 0
      %862 = vmatprep.subr.bf16.mxu0 0
      %863 = vmatpush2.bf16.msra.mxu0 0
      %864 = vmatprep.subr.bf16.mxu0 0
      %865 = vmatpush2.bf16.msra.mxu0 0
      %866 = vmatprep.subr.bf16.mxu0 0
      %867 = vmatpush2.bf16.msra.mxu0 0
      %868 = vmatprep.subr.bf16.mxu0 0
      %869 = vmatpush2.bf16.msra.mxu0 0
      %870 = vmatprep.subr.bf16.mxu0 0
      %871 = vmatpush2.bf16.msra.mxu0 0
      %872 = vmatprep.subr.bf16.mxu0 0
      %873 = vmatpush2.bf16.msra.mxu0 0
      %874 = vmatprep.subr.bf16.mxu0 0
      %875 = vmatpush2.bf16.msra.mxu0 0
      %876 = vmatprep.mubr.bf16.mxu0 0
      %877 = vmatmul.mubr.bf16.gmra.mxu0 %v572
      %v878 = vpop.f32.mrf.mxu0
      %v879 = vadd.f32 %v814, %v878
      %v880 = vpop.f32.mrf.mxu0
      %v881 = vpop.f32.mrf.mxu0
      %v882 = vadd.f32 %v817, %v881
      %v883 = vpop.f32.mrf.mxu0
      %884 = vmatprep.mubr.bf16.mxu0 0
      %885 = vmatmul.mubr.bf16.gmra.mxu0 %v573
      %v886 = vpop.f32.mrf.mxu0
      %v887 = vadd.f32 %v822, %v886
      %v888 = vpop.f32.mrf.mxu0
      %v889 = vpop.f32.mrf.mxu0
      %v890 = vadd.f32 %v825, %v889
      %v891 = vpop.f32.mrf.mxu0
      %892 = vmatprep.mubr.bf16.mxu0 0
      %893 = vmatmul.mubr.bf16.gmra.mxu0 %v574
      %v894 = vpop.f32.mrf.mxu0
      %v895 = vadd.f32 %v830, %v894
      %v896 = vpop.f32.mrf.mxu0
      %v897 = vpop.f32.mrf.mxu0
      %v898 = vadd.f32 %v833, %v897
      %v899 = vpop.f32.mrf.mxu0
      %900 = vmatprep.mubr.bf16.mxu0 0
      %901 = vmatmul.mubr.bf16.gmra.mxu0 %v575
      %v902 = vpop.f32.mrf.mxu0
      %v903 = vadd.f32 %v838, %v902
      %v904 = vpop.f32.mrf.mxu0
      %v905 = vpop.f32.mrf.mxu0
      %v906 = vadd.f32 %v841, %v905
      %v907 = vpop.f32.mrf.mxu0
      %908 = vdwg.mxu0
      %v909 = vmax.f32 %v879, 0.0
      %v910 = vmax.f32 %v882, 0.0
      %v911 = vmax.f32 %v887, 0.0
      %v912 = vmax.f32 %v890, 0.0
      %v913 = vmax.f32 %v895, 0.0
      %v914 = vmax.f32 %v898, 0.0
      %v915 = vmax.f32 %v903, 0.0
      %v916 = vmax.f32 %v906, 0.0
      %v917 = vld [vmem:[%s5] sm:$0xf]
      %v918 = vld [vmem:[%s5 + $0x4] sm:$0xf]
      %v919 = vld [vmem:[%s5 + $0x8] sm:$0xf]
      %v920 = vld [vmem:[%s5 + $0xc] sm:$0xf]
      %v921 = vld [vmem:[%s5 + $0x10] sm:$0xf]
      %v922 = vld [vmem:[%s5 + $0x14] sm:$0xf]
      %v923 = vld [vmem:[%s5 + $0x18] sm:$0xf]
      %v924 = vld [vmem:[%s5 + $0x1c] sm:$0xf]
      %v925 = vld [vmem:[%s5 + $0x20] sm:$0xf]
      %v926 = vld [vmem:[%s5 + $0x24] sm:$0xf]
      %v927 = vld [vmem:[%s5 + $0x28] sm:$0xf]
      %v928 = vld [vmem:[%s5 + $0x2c] sm:$0xf]
      %v929 = vld [vmem:[%s5 + $0x30] sm:$0xf]
      %v930 = vld [vmem:[%s5 + $0x34] sm:$0xf]
      %v931 = vld [vmem:[%s5 + $0x38] sm:$0xf]
      %v932 = vld [vmem:[%s5 + $0x3c] sm:$0xf]
      %v933 = vld [vmem:[%s6] sm:$0x1]
      %v934 = vpack.c.bf16 %v910, %v909
      %v935 = vpack.c.bf16 %v912, %v911
      %v936 = vpack.c.bf16 %v914, %v913
      %v937 = vpack.c.bf16 %v916, %v915
      %v939 = vlaneseq
      %v940 = vshrl.u32 %v939, 7
      %v941 = vsub.s32 0, %v940
      %v942 = vrot.slane %v933, %v941
      %v960 = vunpack.c.l.b16 %v917
      %v961 = vunpack.c.l.b16 %v918
      %v962 = vunpack.c.l.b16 %v919
      %v963 = vunpack.c.l.b16 %v920
      %v964 = vunpack.c.l.b16 %v921
      %v965 = vunpack.c.l.b16 %v922
      %v966 = vunpack.c.l.b16 %v923
      %v967 = vunpack.c.l.b16 %v924
      %v968 = vunpack.c.l.b16 %v925
      %v969 = vunpack.c.l.b16 %v926
      %v970 = vunpack.c.l.b16 %v927
      %v971 = vunpack.c.l.b16 %v928
      %v972 = vunpack.c.l.b16 %v929
      %v973 = vunpack.c.l.b16 %v930
      %v974 = vunpack.c.l.b16 %v931
      %v975 = vunpack.c.l.b16 %v932
      %v976 = vpack.c.b16 %v961, %v960
      %v977 = vpack.c.b16 %v963, %v962
      %v978 = vpack.c.b16 %v965, %v964
      %v979 = vpack.c.b16 %v967, %v966
      %v980 = vpack.c.b16 %v969, %v968
      %v981 = vpack.c.b16 %v971, %v970
      %v982 = vpack.c.b16 %v973, %v972
      %v983 = vpack.c.b16 %v975, %v974
      %992 = vmatprep.subr.bf16.mxu0 0
      %993 = vmatpush1.bf16.msra.mxu0 %v983
      %994 = vmatprep.subr.bf16.mxu0 0
      %995 = vmatpush1.bf16.msra.mxu0 %v982
      %996 = vmatprep.subr.bf16.mxu0 0
      %997 = vmatpush1.bf16.msra.mxu0 %v981
      %998 = vmatprep.subr.bf16.mxu0 0
      %999 = vmatpush1.bf16.msra.mxu0 %v980
      %1000 = vmatprep.subr.bf16.mxu0 0
      %1001 = vmatpush1.bf16.msra.mxu0 %v979
      %1002 = vmatprep.subr.bf16.mxu0 0
      %1003 = vmatpush1.bf16.msra.mxu0 %v978
      %1004 = vmatprep.subr.bf16.mxu0 0
      %1005 = vmatpush1.bf16.msra.mxu0 %v977
      %1006 = vmatprep.subr.bf16.mxu0 0
      %1007 = vmatpush1.bf16.msra.mxu0 %v976
      %1008 = vmatprep.subr.bf16.mxu0 0
      %1009 = vmatpush2.bf16.msra.mxu0 0
      %1010 = vmatprep.subr.bf16.mxu0 0
      %1011 = vmatpush2.bf16.msra.mxu0 0
      %1012 = vmatprep.subr.bf16.mxu0 0
      %1013 = vmatpush2.bf16.msra.mxu0 0
      %1014 = vmatprep.subr.bf16.mxu0 0
      %1015 = vmatpush2.bf16.msra.mxu0 0
      %1016 = vmatprep.subr.bf16.mxu0 0
      %1017 = vmatpush2.bf16.msra.mxu0 0
      %1018 = vmatprep.subr.bf16.mxu0 0
      %1019 = vmatpush2.bf16.msra.mxu0 0
      %1020 = vmatprep.subr.bf16.mxu0 0
      %1021 = vmatpush2.bf16.msra.mxu0 0
      %1022 = vmatprep.subr.bf16.mxu0 0
      %1023 = vmatpush2.bf16.msra.mxu0 0
      %1024 = vmatprep.mubr.bf16.mxu0 0
      %1025 = vmatmul.mubr.bf16.gmra.mxu0 %v934
      %v1026 = vpop.f32.mrf.mxu0
      %v1027 = vadd.f32 %v942, %v1026
      %v1028 = vpop.f32.mrf.mxu0
      %v1029 = vpop.f32.mrf.mxu0
      %v1030 = vadd.f32 %v942, %v1029
      %v1031 = vpop.f32.mrf.mxu0
      %1032 = vmatprep.mubr.bf16.mxu0 0
      %1033 = vmatmul.mubr.bf16.gmra.mxu0 %v935
      %v1034 = vpop.f32.mrf.mxu0
      %v1035 = vadd.f32 %v942, %v1034
      %v1036 = vpop.f32.mrf.mxu0
      %v1037 = vpop.f32.mrf.mxu0
      %v1038 = vadd.f32 %v942, %v1037
      %v1039 = vpop.f32.mrf.mxu0
      %1040 = vmatprep.mubr.bf16.mxu0 0
      %1041 = vmatmul.mubr.bf16.gmra.mxu0 %v936
      %v1042 = vpop.f32.mrf.mxu0
      %v1043 = vadd.f32 %v942, %v1042
      %v1044 = vpop.f32.mrf.mxu0
      %v1045 = vpop.f32.mrf.mxu0
      %v1046 = vadd.f32 %v942, %v1045
      %v1047 = vpop.f32.mrf.mxu0
      %1048 = vmatprep.mubr.bf16.mxu0 0
      %1049 = vmatmul.mubr.bf16.gmra.mxu0 %v937
      %v1050 = vpop.f32.mrf.mxu0
      %v1051 = vadd.f32 %v942, %v1050
      %v1052 = vpop.f32.mrf.mxu0
      %v1053 = vpop.f32.mrf.mxu0
      %v1054 = vadd.f32 %v942, %v1053
      %v1055 = vpop.f32.mrf.mxu0
      %1056 = vdwg.mxu0
      %v1057 = vmax.f32 %v1027, 0.0
      %v1058 = vmax.f32 %v1030, 0.0
      %v1059 = vmax.f32 %v1035, 0.0
      %v1060 = vmax.f32 %v1038, 0.0
      %v1061 = vmax.f32 %v1043, 0.0
      %v1062 = vmax.f32 %v1046, 0.0
      %v1063 = vmax.f32 %v1051, 0.0
      %v1064 = vmax.f32 %v1054, 0.0
      %v1065 = vld [vmem:[%s7] sm:$0xf]
      %v1066 = vld [vmem:[%s7 + $0x4] sm:$0xf]
      %v1067 = vld [vmem:[%s7 + $0x8] sm:$0xf]
      %v1068 = vld [vmem:[%s7 + $0xc] sm:$0xf]
      %v1069 = vld [vmem:[%s7 + $0x10] sm:$0xf]
      %v1070 = vld [vmem:[%s7 + $0x14] sm:$0xf]
      %v1071 = vld [vmem:[%s7 + $0x18] sm:$0xf]
      %v1072 = vld [vmem:[%s7 + $0x1c] sm:$0xf]
      %v1073 = vld [vmem:[%s7 + $0x20] sm:$0xf]
      %v1074 = vld [vmem:[%s7 + $0x24] sm:$0xf]
      %v1075 = vld [vmem:[%s7 + $0x28] sm:$0xf]
      %v1076 = vld [vmem:[%s7 + $0x2c] sm:$0xf]
      %v1077 = vld [vmem:[%s7 + $0x30] sm:$0xf]
      %v1078 = vld [vmem:[%s7 + $0x34] sm:$0xf]
      %v1079 = vld [vmem:[%s7 + $0x38] sm:$0xf]
      %v1080 = vld [vmem:[%s7 + $0x3c] sm:$0xf]
      %v1081 = vld [vmem:[%s8] sm:$0x1]
      %v1082 = vpack.c.bf16 %v1058, %v1057
      %v1083 = vpack.c.bf16 %v1060, %v1059
      %v1084 = vpack.c.bf16 %v1062, %v1061
      %v1085 = vpack.c.bf16 %v1064, %v1063
      %v1087 = vlaneseq
      %v1088 = vshrl.u32 %v1087, 7
      %v1089 = vsub.s32 0, %v1088
      %v1090 = vrot.slane %v1081, %v1089
      %v1108 = vunpack.c.l.b16 %v1065
      %v1109 = vunpack.c.l.b16 %v1066
      %v1110 = vunpack.c.l.b16 %v1067
      %v1111 = vunpack.c.l.b16 %v1068
      %v1112 = vunpack.c.l.b16 %v1069
      %v1113 = vunpack.c.l.b16 %v1070
      %v1114 = vunpack.c.l.b16 %v1071
      %v1115 = vunpack.c.l.b16 %v1072
      %v1116 = vunpack.c.l.b16 %v1073
      %v1117 = vunpack.c.l.b16 %v1074
      %v1118 = vunpack.c.l.b16 %v1075
      %v1119 = vunpack.c.l.b16 %v1076
      %v1120 = vunpack.c.l.b16 %v1077
      %v1121 = vunpack.c.l.b16 %v1078
      %v1122 = vunpack.c.l.b16 %v1079
      %v1123 = vunpack.c.l.b16 %v1080
      %v1124 = vpack.c.b16 %v1109, %v1108
      %v1125 = vpack.c.b16 %v1111, %v1110
      %v1126 = vpack.c.b16 %v1113, %v1112
      %v1127 = vpack.c.b16 %v1115, %v1114
      %v1128 = vpack.c.b16 %v1117, %v1116
      %v1129 = vpack.c.b16 %v1119, %v1118
      %v1130 = vpack.c.b16 %v1121, %v1120
      %v1131 = vpack.c.b16 %v1123, %v1122
      %1140 = vmatprep.subr.bf16.mxu0 0
      %1141 = vmatpush1.bf16.msra.mxu0 %v1131
      %1142 = vmatprep.subr.bf16.mxu0 0
      %1143 = vmatpush1.bf16.msra.mxu0 %v1130
      %1144 = vmatprep.subr.bf16.mxu0 0
      %1145 = vmatpush1.bf16.msra.mxu0 %v1129
      %1146 = vmatprep.subr.bf16.mxu0 0
      %1147 = vmatpush1.bf16.msra.mxu0 %v1128
      %1148 = vmatprep.subr.bf16.mxu0 0
      %1149 = vmatpush1.bf16.msra.mxu0 %v1127
      %1150 = vmatprep.subr.bf16.mxu0 0
      %1151 = vmatpush1.bf16.msra.mxu0 %v1126
      %1152 = vmatprep.subr.bf16.mxu0 0
      %1153 = vmatpush1.bf16.msra.mxu0 %v1125
      %1154 = vmatprep.subr.bf16.mxu0 0
      %1155 = vmatpush1.bf16.msra.mxu0 %v1124
      %1156 = vmatprep.subr.bf16.mxu0 0
      %1157 = vmatpush2.bf16.msra.mxu0 0
      %1158 = vmatprep.subr.bf16.mxu0 0
      %1159 = vmatpush2.bf16.msra.mxu0 0
      %1160 = vmatprep.subr.bf16.mxu0 0
      %1161 = vmatpush2.bf16.msra.mxu0 0
      %1162 = vmatprep.subr.bf16.mxu0 0
      %1163 = vmatpush2.bf16.msra.mxu0 0
      %1164 = vmatprep.subr.bf16.mxu0 0
      %1165 = vmatpush2.bf16.msra.mxu0 0
      %1166 = vmatprep.subr.bf16.mxu0 0
      %1167 = vmatpush2.bf16.msra.mxu0 0
      %1168 = vmatprep.subr.bf16.mxu0 0
      %1169 = vmatpush2.bf16.msra.mxu0 0
      %1170 = vmatprep.subr.bf16.mxu0 0
      %1171 = vmatpush2.bf16.msra.mxu0 0
      %1172 = vmatprep.mubr.bf16.mxu0 0
      %1173 = vmatmul.mubr.bf16.gmra.mxu0 %v1082
      %v1174 = vpop.f32.mrf.mxu0
      %v1175 = vadd.f32 %v1090, %v1174
      %v1176 = vpop.f32.mrf.mxu0
      %v1177 = vpop.f32.mrf.mxu0
      %v1178 = vadd.f32 %v1090, %v1177
      %v1179 = vpop.f32.mrf.mxu0
      %1180 = vmatprep.mubr.bf16.mxu0 0
      %1181 = vmatmul.mubr.bf16.gmra.mxu0 %v1083
      %v1182 = vpop.f32.mrf.mxu0
      %v1183 = vadd.f32 %v1090, %v1182
      %v1184 = vpop.f32.mrf.mxu0
      %v1185 = vpop.f32.mrf.mxu0
      %v1186 = vadd.f32 %v1090, %v1185
      %v1187 = vpop.f32.mrf.mxu0
      %1188 = vmatprep.mubr.bf16.mxu0 0
      %1189 = vmatmul.mubr.bf16.gmra.mxu0 %v1084
      %v1190 = vpop.f32.mrf.mxu0
      %v1191 = vadd.f32 %v1090, %v1190
      %v1192 = vpop.f32.mrf.mxu0
      %v1193 = vpop.f32.mrf.mxu0
      %v1194 = vadd.f32 %v1090, %v1193
      %v1195 = vpop.f32.mrf.mxu0
      %1196 = vmatprep.mubr.bf16.mxu0 0
      %1197 = vmatmul.mubr.bf16.gmra.mxu0 %v1085
      %v1198 = vpop.f32.mrf.mxu0
      %v1199 = vadd.f32 %v1090, %v1198
      %v1200 = vpop.f32.mrf.mxu0
      %v1201 = vpop.f32.mrf.mxu0
      %v1202 = vadd.f32 %v1090, %v1201
      %v1203 = vpop.f32.mrf.mxu0
      %1204 = vdwg.mxu0
      %v1205 = vld [vmem:[%s9] sm:$0x1]
      %v1206 = vld [vmem:[%s10] sm:$0x1]
      %1207 = vadd.xlane.f32.xlu0 %v1175
      %v1208 = vpop.xlane.xlu0 %1207
      %1209 = vadd.xlane.f32.xlu0 %v1178
      %v1210 = vpop.xlane.xlu0 %1209
      %1211 = vadd.xlane.f32.xlu0 %v1183
      %v1212 = vpop.xlane.xlu0 %1211
      %1213 = vadd.xlane.f32.xlu0 %v1186
      %v1214 = vpop.xlane.xlu0 %1213
      %1215 = vadd.xlane.f32.xlu0 %v1191
      %v1216 = vpop.xlane.xlu0 %1215
      %1217 = vadd.xlane.f32.xlu0 %v1194
      %v1218 = vpop.xlane.xlu0 %1217
      %1219 = vadd.xlane.f32.xlu0 %v1199
      %v1220 = vpop.xlane.xlu0 %1219
      %1221 = vadd.xlane.f32.xlu0 %v1202
      %v1222 = vpop.xlane.xlu0 %1221
      %v1223 = vrcp.pop 128.0
      %v1224 = vmul.f32 %v1208, %v1223
      %v1225 = vmul.f32 %v1210, %v1223
      %v1226 = vmul.f32 %v1212, %v1223
      %v1227 = vmul.f32 %v1214, %v1223
      %v1228 = vmul.f32 %v1216, %v1223
      %v1229 = vmul.f32 %v1218, %v1223
      %v1230 = vmul.f32 %v1220, %v1223
      %v1231 = vmul.f32 %v1222, %v1223
      %v1232 = vsub.f32 %v1175, %v1224
      %v1233 = vsub.f32 %v1178, %v1225
      %v1234 = vsub.f32 %v1183, %v1226
      %v1235 = vsub.f32 %v1186, %v1227
      %v1236 = vsub.f32 %v1191, %v1228
      %v1237 = vsub.f32 %v1194, %v1229
      %v1238 = vsub.f32 %v1199, %v1230
      %v1239 = vsub.f32 %v1202, %v1231
      %v1240 = vmul.f32 %v1232, %v1232
      %v1241 = vmul.f32 %v1233, %v1233
      %v1242 = vmul.f32 %v1234, %v1234
      %v1243 = vmul.f32 %v1235, %v1235
      %v1244 = vmul.f32 %v1236, %v1236
      %v1245 = vmul.f32 %v1237, %v1237
      %v1246 = vmul.f32 %v1238, %v1238
      %v1247 = vmul.f32 %v1239, %v1239
      %1248 = vadd.xlane.f32.xlu0 %v1240
      %v1249 = vpop.xlane.xlu0 %1248
      %1250 = vadd.xlane.f32.xlu0 %v1241
      %v1251 = vpop.xlane.xlu0 %1250
      %1252 = vadd.xlane.f32.xlu0 %v1242
      %v1253 = vpop.xlane.xlu0 %1252
      %1254 = vadd.xlane.f32.xlu0 %v1243
      %v1255 = vpop.xlane.xlu0 %1254
      %1256 = vadd.xlane.f32.xlu0 %v1244
      %v1257 = vpop.xlane.xlu0 %1256
      %1258 = vadd.xlane.f32.xlu0 %v1245
      %v1259 = vpop.xlane.xlu0 %1258
      %1260 = vadd.xlane.f32.xlu0 %v1246
      %v1261 = vpop.xlane.xlu0 %1260
      %1262 = vadd.xlane.f32.xlu0 %v1247
      %v1263 = vpop.xlane.xlu0 %1262
      %v1264 = vmul.f32 %v1249, %v1223
      %v1265 = vmul.f32 %v1251, %v1223
      %v1266 = vmul.f32 %v1253, %v1223
      %v1267 = vmul.f32 %v1255, %v1223
      %v1268 = vmul.f32 %v1257, %v1223
      %v1269 = vmul.f32 %v1259, %v1223
      %v1270 = vmul.f32 %v1261, %v1223
      %v1271 = vmul.f32 %v1263, %v1223
      %v1272 = vadd.f32 %v1264, 1e-05
      %v1273 = vadd.f32 %v1265, 1e-05
      %v1274 = vadd.f32 %v1266, 1e-05
      %v1275 = vadd.f32 %v1267, 1e-05
      %v1276 = vadd.f32 %v1268, 1e-05
      %v1277 = vadd.f32 %v1269, 1e-05
      %v1278 = vadd.f32 %v1270, 1e-05
      %v1279 = vadd.f32 %v1271, 1e-05
      %v1280 = vrsqrt.pop %v1272
      %v1281 = vrsqrt.pop %v1273
      %v1282 = vrsqrt.pop %v1274
      %v1283 = vrsqrt.pop %v1275
      %v1284 = vrsqrt.pop %v1276
      %v1285 = vrsqrt.pop %v1277
      %v1286 = vrsqrt.pop %v1278
      %v1287 = vrsqrt.pop %v1279
      %v1288 = vmul.f32 %v1232, %v1280
      %v1289 = vmul.f32 %v1233, %v1281
      %v1290 = vmul.f32 %v1234, %v1282
      %v1291 = vmul.f32 %v1235, %v1283
      %v1292 = vmul.f32 %v1236, %v1284
      %v1293 = vmul.f32 %v1237, %v1285
      %v1294 = vmul.f32 %v1238, %v1286
      %v1295 = vmul.f32 %v1239, %v1287
      %v1297 = vlaneseq
      %v1298 = vshrl.u32 %v1297, 7
      %v1299 = vsub.s32 0, %v1298
      %v1300 = vrot.slane %v1205, %v1299
      %v1302 = vmul.f32 %v1288, %v1300
      %v1303 = vmul.f32 %v1289, %v1300
      %v1304 = vmul.f32 %v1290, %v1300
      %v1305 = vmul.f32 %v1291, %v1300
      %v1306 = vmul.f32 %v1292, %v1300
      %v1307 = vmul.f32 %v1293, %v1300
      %v1308 = vmul.f32 %v1294, %v1300
      %v1309 = vmul.f32 %v1295, %v1300
      %v1311 = vlaneseq
      %v1312 = vshrl.u32 %v1311, 7
      %v1313 = vsub.s32 0, %v1312
      %v1314 = vrot.slane %v1206, %v1313
      %v1316 = vadd.f32 %v1302, %v1314
      %v1317 = vadd.f32 %v1303, %v1314
      %v1318 = vadd.f32 %v1304, %v1314
      %v1319 = vadd.f32 %v1305, %v1314
      %v1320 = vadd.f32 %v1306, %v1314
      %v1321 = vadd.f32 %v1307, %v1314
      %v1322 = vadd.f32 %v1308, %v1314
      %v1323 = vadd.f32 %v1309, %v1314
      %v1324 = vld [vmem:[%s475] sm:$0xf]
      %v1325 = vld [vmem:[%s475 + $0x4] sm:$0xf]
      %v1326 = vld [vmem:[%s475 + $0x8] sm:$0xf]
      %v1327 = vld [vmem:[%s475 + $0xc] sm:$0xf]
      %v1328 = vld [vmem:[%s475 + $0x10] sm:$0xf]
      %v1329 = vld [vmem:[%s475 + $0x14] sm:$0xf]
      %v1330 = vld [vmem:[%s475 + $0x18] sm:$0xf]
      %v1331 = vld [vmem:[%s475 + $0x1c] sm:$0xf]
      %v1332 = vunpack.c.l.bf16 %v1324
      %v1333 = vunpack.c.l.bf16 %v1325
      %v1334 = vunpack.c.l.bf16 %v1326
      %v1335 = vunpack.c.l.bf16 %v1327
      %v1336 = vunpack.c.l.bf16 %v1328
      %v1337 = vunpack.c.l.bf16 %v1329
      %v1338 = vunpack.c.l.bf16 %v1330
      %v1339 = vunpack.c.l.bf16 %v1331
      %v1340 = vadd.f32 %v1316, %v1332
      %v1341 = vadd.f32 %v1317, %v1333
      %v1342 = vadd.f32 %v1318, %v1334
      %v1343 = vadd.f32 %v1319, %v1335
      %v1344 = vadd.f32 %v1320, %v1336
      %v1345 = vadd.f32 %v1321, %v1337
      %v1346 = vadd.f32 %v1322, %v1338
      %v1347 = vadd.f32 %v1323, %v1339
      %v1348 = vpack.c.bf16 %v1341, %v1340
      %v1349 = vpack.c.bf16 %v1343, %v1342
      %v1350 = vpack.c.bf16 %v1345, %v1344
      %v1351 = vpack.c.bf16 %v1347, %v1346
      %v1356 = vunpack.c.l.b16 %v1348
      %v1357 = vunpack.c.h.b16 %v1348
      %v1358 = vunpack.c.l.b16 %v1349
      %v1359 = vunpack.c.h.b16 %v1349
      %v1360 = vunpack.c.l.b16 %v1350
      %v1361 = vunpack.c.h.b16 %v1350
      %v1362 = vunpack.c.l.b16 %v1351
      %v1363 = vunpack.c.h.b16 %v1351
      %v1364 = vpack.c.b16 %v1356, %v1356
      %v1365 = vpack.c.b16 %v1357, %v1357
      %v1366 = vpack.c.b16 %v1358, %v1358
      %v1367 = vpack.c.b16 %v1359, %v1359
      %v1368 = vpack.c.b16 %v1360, %v1360
      %v1369 = vpack.c.b16 %v1361, %v1361
      %v1370 = vpack.c.b16 %v1362, %v1362
      %v1371 = vpack.c.b16 %v1363, %v1363
      %1380 = vst [vmem:[%s481] sm:$0xf] %v1364
      %1381 = vst [vmem:[%s481 + $0x4] sm:$0xf] %v1365
      %1382 = vst [vmem:[%s481 + $0x8] sm:$0xf] %v1366
      %1383 = vst [vmem:[%s481 + $0xc] sm:$0xf] %v1367
      %1384 = vst [vmem:[%s481 + $0x10] sm:$0xf] %v1368
      %1385 = vst [vmem:[%s481 + $0x14] sm:$0xf] %v1369
      %1386 = vst [vmem:[%s481 + $0x18] sm:$0xf] %v1370
      %1387 = vst [vmem:[%s481 + $0x1c] sm:$0xf] %v1371
      %s1388 = smul.u32 8, %s23
      %p1389 = scmp.lt.s32.totalorder %s1388, 15
      %s1390 = scalar_select %p1389, %s1388, 15
      %s1391 = smul.addr %s1390, 4
      %s1392 = scalar_lea.vmem %s12, %s1391
      // Predicated region
      $region69: #{encode_process_decode.14} parent=67 // pred_check
        %p1393 = pneg %p313
      $region70: #{encode_process_decode.14} parent=67 // pred_check_branch
        %1395 = sbr.rel (%p1393) target = $region72
      $region71: #{encode_process_decode.14} parent=67 // pred_region
        %s1396 = smul.u32 8, %s23
      $region72: #{encode_process_decode.14} parent=67 // pred_fallthru
        _
    $region68: #{encode_process_decode.14} parent=5 // pred_fallthru
      _
    %p1397 = scmp.le.s32.totalorder 2, %s18
    // Predicated region
    $region73: #{encode_process_decode.14} parent=5 // pred_check
      %p1398 = pneg %p1397
    $region74: #{encode_process_decode.14} parent=5 // pred_check_branch
      %1400 = sbr.rel (%p1398) target = $region76
    $region75: #{encode_process_decode.14} parent=5 // pred_region
      %s1401 = ssub.s32 %s18, 2
      // Predicated region
      $region77: #{encode_process_decode.14} parent=75 // pred_check
        %p1402 = pneg %p319
      $region78: #{encode_process_decode.14} parent=75 // pred_check_branch
        %1404 = sbr.rel (%p1402) target = $region80
      $region79: #{encode_process_decode.14} parent=75 // pred_region
        %s1405 = smul.u32 8, %s24
        %p1406 = scmp.lt.s32.totalorder %s1405, 15
        %s1407 = scalar_select %p1406, %s1405, 15
        %s1408 = smul.addr %s1407, 4
        %s1409 = scalar_lea.vmem %s12, %s1408
      $region80: #{encode_process_decode.14} parent=75 // pred_fallthru
        _
    $region76: #{encode_process_decode.14} parent=5 // pred_fallthru
      _
  $region6: #{encode_process_decode.14} parent=0 // loop_footer
    %s22 = sadd.s32 1, %s18
  $region7: #{encode_process_decode.14} parent=0 // loop_footer_branch
    %17 = sbr.rel target = $region3
  $region8: #{encode_process_decode.14} parent=0 // loop_exit
    _

// kernel: encode_process_decode.19
$region0: #{encode_process_decode.19}
  #allocation0 [shape = 'u32[]', space=smem, size = 0x4, offset = 0x4, fixed_abs, tag = 'smem constant byte address 0x4 - core index']
  #allocation1 [shape = 'u32[144,128]{1,0:T(1,128)}', space=vmem, size = 0x12000, scoped, tag = 'internal scratch']
  %s0 = inlined_call_operand.vmem [shape: bf16[128,128], index: 0, kind: input, shape index: {}]
  %s1 = inlined_call_operand.vmem [shape: bf16[128,128], index: 1, kind: input, shape index: {}]
  %s2 = inlined_call_operand.vmem [shape: f32[1,128], index: 2, kind: input, shape index: {}]
  %s3 = inlined_call_operand.vmem [shape: bf16[128,128], index: 3, kind: input, shape index: {}]
  %s4 = inlined_call_operand.vmem [shape: f32[1,128], index: 4, kind: input, shape index: {}]
  %s5 = inlined_call_operand.vmem [shape: bf16[128,128], index: 5, kind: input, shape index: {}]
  %s6 = inlined_call_operand.vmem [shape: f32[1,128], index: 6, kind: input, shape index: {}]
  %s7 = inlined_call_operand.vmem [shape: f32[128,128], index: 7, kind: output, shape index: {}]
  %s8 = sld [smem:[#allocation0]]
  $region61: #{encode_process_decode.19} parent=0
    _
  %s10 = ssub.s32 1, %s8
  %s11 = scalar_select 0, %s10, %s8
  loop: start=0, step=1, limit=4
  $region2: #{encode_process_decode.19} parent=0 // loop_pre_header
    _
  $region3: #{encode_process_decode.19} parent=0 // loop_header
    %s13 = sphi 0, %s17
    %p14 = scmp.ge.s32.totalorder %s13, 4
    %s23 = sphi 0, %s25
    %s26 = sphi 0, %s23
    %s27 = sphi 0, %s26
    %s43 = sphi 0, %s27
    %s47 = sphi 0, %s47
    %s49 = sphi 0, %s47
    %s50 = sphi 0, %s49
    %s64 = sphi 0, %s50
    %s68 = sphi 0, %s68
    %s70 = sphi 0, %s68
    %s71 = sphi 0, %s70
    %s85 = sphi 0, %s71
    %s89 = sphi 0, %s89
    %s91 = sphi 0, %s89
    %s92 = sphi 0, %s91
    %s106 = sphi 0, %s92
    %s110 = sphi 0, %s110
    %s112 = sphi 0, %s110
    %s113 = sphi 0, %s112
    %s127 = sphi 0, %s113
    %s131 = sphi 0, %s131
    %s133 = sphi 0, %s131
    %s134 = sphi 0, %s133
    %s148 = sphi 0, %s134
    %s152 = sphi 0, %s152
    %s154 = sphi 0, %s152
    %s155 = sphi 0, %s154
    %s169 = sphi 0, %s155
    %s175 = sphi 0, %s177
    %s178 = sphi 0, %s175
    %s179 = sphi 0, %s178
    %s195 = sphi 0, %s179
  $region4: #{encode_process_decode.19} parent=0 // loop_header_branch
    %16 = sbr.rel (%p14) target = $region8
  $region5: #{encode_process_decode.19} parent=0 // loop_body
    %s18 = ssub.s32 %s13, 1
    %s19 = ssub.s32 %s13, 2
    %s20 = sadd.s32 %s13, 1
    %s21 = ssub.s32 %s13, %s20
    %p22 = scmp.eq.s32.totalorder %s21, 0
    %s24 = sadd.s32 %s23, 1
    %s25 = scalar_select %p22, %s23, %s24
    %p28 = pneg %p22
    %p29 = scmp.eq.s32.totalorder %s13, 1
    %p30 = por %p28, %p29
    %p31 = scmp.ne.s32.totalorder %s23, %s26
    %p32 = scmp.eq.s32.totalorder %s13, 0
    %p33 = por %p31, %p32
    %p34 = scmp.ne.s32.totalorder %s23, %s26
    %p35 = scmp.eq.s32.totalorder %s18, 1
    %p36 = por %p34, %p35
    %p37 = scmp.ne.s32.totalorder %s26, %s27
    %p38 = scmp.eq.s32.totalorder %s18, 0
    %p39 = por %p37, %p38
    %p40 = scmp.ne.s32.totalorder %s26, %s27
    %p41 = scmp.eq.s32.totalorder %s19, 1
    %p42 = por %p40, %p41
    %p44 = scmp.ne.s32.totalorder %s27, %s43
    %p45 = scmp.eq.s32.totalorder %s19, 0
    %p46 = por %p44, %p45
    %s48 = sadd.s32 %s47, 1
    %p51 = scmp.eq.s32.totalorder %s13, 1
    %p52 = scmp.ne.s32.totalorder %s47, %s49
    %p53 = scmp.eq.s32.totalorder %s13, 0
    %p54 = por %p52, %p53
    %p55 = scmp.ne.s32.totalorder %s47, %s49
    %p56 = scmp.eq.s32.totalorder %s18, 1
    %p57 = por %p55, %p56
    %p58 = scmp.ne.s32.totalorder %s49, %s50
    %p59 = scmp.eq.s32.totalorder %s18, 0
    %p60 = por %p58, %p59
    %p61 = scmp.ne.s32.totalorder %s49, %s50
    %p62 = scmp.eq.s32.totalorder %s19, 1
    %p63 = por %p61, %p62
    %p65 = scmp.ne.s32.totalorder %s50, %s64
    %p66 = scmp.eq.s32.totalorder %s19, 0
    %p67 = por %p65, %p66
    %s69 = sadd.s32 %s68, 1
    %p72 = scmp.eq.s32.totalorder %s13, 1
    %p73 = scmp.ne.s32.totalorder %s68, %s70
    %p74 = scmp.eq.s32.totalorder %s13, 0
    %p75 = por %p73, %p74
    %p76 = scmp.ne.s32.totalorder %s68, %s70
    %p77 = scmp.eq.s32.totalorder %s18, 1
    %p78 = por %p76, %p77
    %p79 = scmp.ne.s32.totalorder %s70, %s71
    %p80 = scmp.eq.s32.totalorder %s18, 0
    %p81 = por %p79, %p80
    %p82 = scmp.ne.s32.totalorder %s70, %s71
    %p83 = scmp.eq.s32.totalorder %s19, 1
    %p84 = por %p82, %p83
    %p86 = scmp.ne.s32.totalorder %s71, %s85
    %p87 = scmp.eq.s32.totalorder %s19, 0
    %p88 = por %p86, %p87
    %s90 = sadd.s32 %s89, 1
    %p93 = scmp.eq.s32.totalorder %s13, 1
    %p94 = scmp.ne.s32.totalorder %s89, %s91
    %p95 = scmp.eq.s32.totalorder %s13, 0
    %p96 = por %p94, %p95
    %p97 = scmp.ne.s32.totalorder %s89, %s91
    %p98 = scmp.eq.s32.totalorder %s18, 1
    %p99 = por %p97, %p98
    %p100 = scmp.ne.s32.totalorder %s91, %s92
    %p101 = scmp.eq.s32.totalorder %s18, 0
    %p102 = por %p100, %p101
    %p103 = scmp.ne.s32.totalorder %s91, %s92
    %p104 = scmp.eq.s32.totalorder %s19, 1
    %p105 = por %p103, %p104
    %p107 = scmp.ne.s32.totalorder %s92, %s106
    %p108 = scmp.eq.s32.totalorder %s19, 0
    %p109 = por %p107, %p108
    %s111 = sadd.s32 %s110, 1
    %p114 = scmp.eq.s32.totalorder %s13, 1
    %p115 = scmp.ne.s32.totalorder %s110, %s112
    %p116 = scmp.eq.s32.totalorder %s13, 0
    %p117 = por %p115, %p116
    %p118 = scmp.ne.s32.totalorder %s110, %s112
    %p119 = scmp.eq.s32.totalorder %s18, 1
    %p120 = por %p118, %p119
    %p121 = scmp.ne.s32.totalorder %s112, %s113
    %p122 = scmp.eq.s32.totalorder %s18, 0
    %p123 = por %p121, %p122
    %p124 = scmp.ne.s32.totalorder %s112, %s113
    %p125 = scmp.eq.s32.totalorder %s19, 1
    %p126 = por %p124, %p125
    %p128 = scmp.ne.s32.totalorder %s113, %s127
    %p129 = scmp.eq.s32.totalorder %s19, 0
    %p130 = por %p128, %p129
    %s132 = sadd.s32 %s131, 1
    %p135 = scmp.eq.s32.totalorder %s13, 1
    %p136 = scmp.ne.s32.totalorder %s131, %s133
    %p137 = scmp.eq.s32.totalorder %s13, 0
    %p138 = por %p136, %p137
    %p139 = scmp.ne.s32.totalorder %s131, %s133
    %p140 = scmp.eq.s32.totalorder %s18, 1
    %p141 = por %p139, %p140
    %p142 = scmp.ne.s32.totalorder %s133, %s134
    %p143 = scmp.eq.s32.totalorder %s18, 0
    %p144 = por %p142, %p143
    %p145 = scmp.ne.s32.totalorder %s133, %s134
    %p146 = scmp.eq.s32.totalorder %s19, 1
    %p147 = por %p145, %p146
    %p149 = scmp.ne.s32.totalorder %s134, %s148
    %p150 = scmp.eq.s32.totalorder %s19, 0
    %p151 = por %p149, %p150
    %s153 = sadd.s32 %s152, 1
    %p156 = scmp.eq.s32.totalorder %s13, 1
    %p157 = scmp.ne.s32.totalorder %s152, %s154
    %p158 = scmp.eq.s32.totalorder %s13, 0
    %p159 = por %p157, %p158
    %p160 = scmp.ne.s32.totalorder %s152, %s154
    %p161 = scmp.eq.s32.totalorder %s18, 1
    %p162 = por %p160, %p161
    %p163 = scmp.ne.s32.totalorder %s154, %s155
    %p164 = scmp.eq.s32.totalorder %s18, 0
    %p165 = por %p163, %p164
    %p166 = scmp.ne.s32.totalorder %s154, %s155
    %p167 = scmp.eq.s32.totalorder %s19, 1
    %p168 = por %p166, %p167
    %p170 = scmp.ne.s32.totalorder %s155, %s169
    %p171 = scmp.eq.s32.totalorder %s19, 0
    %p172 = por %p170, %p171
    %s173 = ssub.s32 %s13, %s20
    %p174 = scmp.eq.s32.totalorder %s173, 0
    %s176 = sadd.s32 %s175, 1
    %s177 = scalar_select %p174, %s175, %s176
    %p180 = pneg %p174
    %p181 = scmp.eq.s32.totalorder %s13, 1
    %p182 = por %p180, %p181
    %p183 = scmp.ne.s32.totalorder %s175, %s178
    %p184 = scmp.eq.s32.totalorder %s13, 0
    %p185 = por %p183, %p184
    %p186 = scmp.ne.s32.totalorder %s175, %s178
    %p187 = scmp.eq.s32.totalorder %s18, 1
    %p188 = por %p186, %p187
    %p189 = scmp.ne.s32.totalorder %s178, %s179
    %p190 = scmp.eq.s32.totalorder %s18, 0
    %p191 = por %p189, %p190
    %p192 = scmp.ne.s32.totalorder %s178, %s179
    %p193 = scmp.eq.s32.totalorder %s19, 1
    %p194 = por %p192, %p193
    %p196 = scmp.ne.s32.totalorder %s179, %s195
    %p197 = scmp.eq.s32.totalorder %s19, 0
    %p198 = por %p196, %p197
    %p199 = scmp.le.s32.totalorder 1, %s13
    %p200 = scmp.lt.s32.totalorder %s13, 3
    %p201 = pnand %p199, %p200
    %p202 = pneg %p201
    // Predicated region
    $region9: #{encode_process_decode.19} parent=5 // pred_check
      _
    $region10: #{encode_process_decode.19} parent=5 // pred_check_branch
      %204 = sbr.rel (%p201) target = $region12
    $region11: #{encode_process_decode.19} parent=5 // pred_region
      %s205 = ssub.s32 %s13, 1
      // Predicated region
      $region13: #{encode_process_decode.19} parent=11 // pred_check
        %p206 = pneg %p60
      $region14: #{encode_process_decode.19} parent=11 // pred_check_branch
        %208 = sbr.rel (%p206) target = $region16
      $region15: #{encode_process_decode.19} parent=11 // pred_region
        _
      $region16: #{encode_process_decode.19} parent=11 // pred_fallthru
        _
      // Predicated region
      $region17: #{encode_process_decode.19} parent=11 // pred_check
        %p209 = pneg %p81
      $region18: #{encode_process_decode.19} parent=11 // pred_check_branch
        %211 = sbr.rel (%p209) target = $region20
      $region19: #{encode_process_decode.19} parent=11 // pred_region
        _
      $region20: #{encode_process_decode.19} parent=11 // pred_fallthru
        _
      // Predicated region
      $region21: #{encode_process_decode.19} parent=11 // pred_check
        %p212 = pneg %p102
      $region22: #{encode_process_decode.19} parent=11 // pred_check_branch
        %214 = sbr.rel (%p212) target = $region24
      $region23: #{encode_process_decode.19} parent=11 // pred_region
        _
      $region24: #{encode_process_decode.19} parent=11 // pred_fallthru
        _
      // Predicated region
      $region25: #{encode_process_decode.19} parent=11 // pred_check
        %p215 = pneg %p123
      $region26: #{encode_process_decode.19} parent=11 // pred_check_branch
        %217 = sbr.rel (%p215) target = $region28
      $region27: #{encode_process_decode.19} parent=11 // pred_region
        _
      $region28: #{encode_process_decode.19} parent=11 // pred_fallthru
        _
      // Predicated region
      $region29: #{encode_process_decode.19} parent=11 // pred_check
        %p218 = pneg %p144
      $region30: #{encode_process_decode.19} parent=11 // pred_check_branch
        %220 = sbr.rel (%p218) target = $region32
      $region31: #{encode_process_decode.19} parent=11 // pred_region
        _
      $region32: #{encode_process_decode.19} parent=11 // pred_fallthru
        _
      // Predicated region
      $region33: #{encode_process_decode.19} parent=11 // pred_check
        %p221 = pneg %p165
      $region34: #{encode_process_decode.19} parent=11 // pred_check_branch
        %223 = sbr.rel (%p221) target = $region36
      $region35: #{encode_process_decode.19} parent=11 // pred_region
        _
      $region36: #{encode_process_decode.19} parent=11 // pred_fallthru
        _
    $region12: #{encode_process_decode.19} parent=5 // pred_fallthru
      _
    %p224 = scmp.lt.s32.totalorder %s13, 2
    // Predicated region
    $region37: #{encode_process_decode.19} parent=5 // pred_check
      %p225 = pneg %p224
    $region38: #{encode_process_decode.19} parent=5 // pred_check_branch
      %227 = sbr.rel (%p225) target = $region40
    $region39: #{encode_process_decode.19} parent=5 // pred_region
      // Predicated region
      $region41: #{encode_process_decode.19} parent=39 // pred_check
        %p228 = pneg %p33
      $region42: #{encode_process_decode.19} parent=39 // pred_check_branch
        %230 = sbr.rel (%p228) target = $region44
      $region43: #{encode_process_decode.19} parent=39 // pred_region
        %s231 = smul.u32 8, %s13
        %p232 = scmp.lt.s32.totalorder %s231, 15
        %s233 = scalar_select %p232, %s231, 15
        %s234 = smul.addr %s233, 4
        %s235 = scalar_lea.vmem %s0, %s234
        %s236 = smul.u32 8, %s13
      $region44: #{encode_process_decode.19} parent=39 // pred_fallthru
        _
    $region40: #{encode_process_decode.19} parent=5 // pred_fallthru
      _
    %p237 = scmp.le.s32.totalorder 1, %s13
    %p238 = scmp.lt.s32.totalorder %s13, 3
    %p239 = pnand %p237, %p238
    %p240 = pneg %p239
    // Predicated region
    $region45: #{encode_process_decode.19} parent=5 // pred_check
      _
    $region46: #{encode_process_decode.19} parent=5 // pred_check_branch
      %242 = sbr.rel (%p239) target = $region48
    $region47: #{encode_process_decode.19} parent=5 // pred_region
      %s243 = ssub.s32 %s13, 1
      %s244 = smul.u32 8, %s18
      %p245 = scmp.lt.s32.totalorder %s244, 15
      %s246 = scalar_select %p245, %s244, 15
      %s247 = smul.addr %s246, 4
      %s248 = scalar_lea.vmem %s0, %s247
      %p249 = pneg %p39
      %p250 = pneg %p36
      %p251 = pneg %p60
      %p252 = pneg %p57
      %p253 = pneg %p81
      %p254 = pneg %p78
      %p255 = pneg %p102
      %p256 = pneg %p99
      %p257 = pneg %p123
      %p258 = pneg %p120
      %p259 = pneg %p144
      %p260 = pneg %p141
      %p261 = pneg %p165
      %p262 = pneg %p162
      %p263 = pneg %p191
      %p264 = pneg %p188
      %s265 = smul.u32 8, %s18
      %p266 = scmp.lt.s32.totalorder %s265, 15
      %s267 = scalar_select %p266, %s265, 15
      %s268 = smul.addr %s267, 8
      %s269 = scalar_lea.vmem %s7, %s268
      %s270 = smul.u32 8, %s18
      %p271 = scmp.lt.s32.totalorder %s270, 15
      %s272 = scalar_select %p271, %s270, 15
      %s273 = smul.addr %s272, 4
      %s274 = scalar_lea.vmem %s0, %s273
      %s275 = smul.u32 8, %s18
      %s276 = smul.u32 8, %s18
      %p277 = scmp.lt.s32.totalorder %s276, 15
      %s278 = scalar_select %p277, %s276, 15
      %s279 = smul.addr %s278, 8
      %s280 = scalar_lea.vmem %s7, %s279
      %s281 = smul.u32 8, %s18
      %v283 = vld [vmem:[%s274] sm:$0xf]
      %v284 = vld [vmem:[%s274 + $0x4] sm:$0xf]
      %v285 = vld [vmem:[%s274 + $0x8] sm:$0xf]
      %v286 = vld [vmem:[%s274 + $0xc] sm:$0xf]
      %v287 = vld [vmem:[%s274 + $0x10] sm:$0xf]
      %v288 = vld [vmem:[%s274 + $0x14] sm:$0xf]
      %v289 = vld [vmem:[%s274 + $0x18] sm:$0xf]
      %v290 = vld [vmem:[%s274 + $0x1c] sm:$0xf]
      %v291 = vld [vmem:[%s1] sm:$0xf]
      %v292 = vld [vmem:[%s1 + $0x4] sm:$0xf]
      %v293 = vld [vmem:[%s1 + $0x8] sm:$0xf]
      %v294 = vld [vmem:[%s1 + $0xc] sm:$0xf]
      %v295 = vld [vmem:[%s1 + $0x10] sm:$0xf]
      %v296 = vld [vmem:[%s1 + $0x14] sm:$0xf]
      %v297 = vld [vmem:[%s1 + $0x18] sm:$0xf]
      %v298 = vld [vmem:[%s1 + $0x1c] sm:$0xf]
      %v299 = vld [vmem:[%s1 + $0x20] sm:$0xf]
      %v300 = vld [vmem:[%s1 + $0x24] sm:$0xf]
      %v301 = vld [vmem:[%s1 + $0x28] sm:$0xf]
      %v302 = vld [vmem:[%s1 + $0x2c] sm:$0xf]
      %v303 = vld [vmem:[%s1 + $0x30] sm:$0xf]
      %v304 = vld [vmem:[%s1 + $0x34] sm:$0xf]
      %v305 = vld [vmem:[%s1 + $0x38] sm:$0xf]
      %v306 = vld [vmem:[%s1 + $0x3c] sm:$0xf]
      %v307 = vld [vmem:[%s2] sm:$0x1]
      %v309 = vlaneseq
      %v310 = vshrl.u32 %v309, 7
      %v311 = vsub.s32 0, %v310
      %v312 = vrot.slane %v307, %v311
      %v322 = vunpack.c.l.b16 %v283
      %v323 = vunpack.c.l.b16 %v284
      %v324 = vunpack.c.l.b16 %v285
      %v325 = vunpack.c.l.b16 %v286
      %v326 = vunpack.c.l.b16 %v287
      %v327 = vunpack.c.l.b16 %v288
      %v328 = vunpack.c.l.b16 %v289
      %v329 = vunpack.c.l.b16 %v290
      %v330 = vpack.c.b16 %v323, %v322
      %v331 = vpack.c.b16 %v325, %v324
      %v332 = vpack.c.b16 %v327, %v326
      %v333 = vpack.c.b16 %v329, %v328
      %v354 = vunpack.c.l.b16 %v291
      %v355 = vunpack.c.l.b16 %v292
      %v356 = vunpack.c.l.b16 %v293
      %v357 = vunpack.c.l.b16 %v294
      %v358 = vunpack.c.l.b16 %v295
      %v359 = vunpack.c.l.b16 %v296
      %v360 = vunpack.c.l.b16 %v297
      %v361 = vunpack.c.l.b16 %v298
      %v362 = vunpack.c.l.b16 %v299
      %v363 = vunpack.c.l.b16 %v300
      %v364 = vunpack.c.l.b16 %v301
      %v365 = vunpack.c.l.b16 %v302
      %v366 = vunpack.c.l.b16 %v303
      %v367 = vunpack.c.l.b16 %v304
      %v368 = vunpack.c.l.b16 %v305
      %v369 = vunpack.c.l.b16 %v306
      %v370 = vpack.c.b16 %v355, %v354
      %v371 = vpack.c.b16 %v357, %v356
      %v372 = vpack.c.b16 %v359, %v358
      %v373 = vpack.c.b16 %v361, %v360
      %v374 = vpack.c.b16 %v363, %v362
      %v375 = vpack.c.b16 %v365, %v364
      %v376 = vpack.c.b16 %v367, %v366
      %v377 = vpack.c.b16 %v369, %v368
      %386 = vmatprep.subr.bf16.mxu0 0
      %387 = vmatpush1.bf16.msra.mxu0 %v377
      %388 = vmatprep.subr.bf16.mxu0 0
      %389 = vmatpush1.bf16.msra.mxu0 %v376
      %390 = vmatprep.subr.bf16.mxu0 0
      %391 = vmatpush1.bf16.msra.mxu0 %v375
      %392 = vmatprep.subr.bf16.mxu0 0
      %393 = vmatpush1.bf16.msra.mxu0 %v374
      %394 = vmatprep.subr.bf16.mxu0 0
      %395 = vmatpush1.bf16.msra.mxu0 %v373
      %396 = vmatprep.subr.bf16.mxu0 0
      %397 = vmatpush1.bf16.msra.mxu0 %v372
      %398 = vmatprep.subr.bf16.mxu0 0
      %399 = vmatpush1.bf16.msra.mxu0 %v371
      %400 = vmatprep.subr.bf16.mxu0 0
      %401 = vmatpush1.bf16.msra.mxu0 %v370
      %402 = vmatprep.subr.bf16.mxu0 0
      %403 = vmatpush2.bf16.msra.mxu0 0
      %404 = vmatprep.subr.bf16.mxu0 0
      %405 = vmatpush2.bf16.msra.mxu0 0
      %406 = vmatprep.subr.bf16.mxu0 0
      %407 = vmatpush2.bf16.msra.mxu0 0
      %408 = vmatprep.subr.bf16.mxu0 0
      %409 = vmatpush2.bf16.msra.mxu0 0
      %410 = vmatprep.subr.bf16.mxu0 0
      %411 = vmatpush2.bf16.msra.mxu0 0
      %412 = vmatprep.subr.bf16.mxu0 0
      %413 = vmatpush2.bf16.msra.mxu0 0
      %414 = vmatprep.subr.bf16.mxu0 0
      %415 = vmatpush2.bf16.msra.mxu0 0
      %416 = vmatprep.subr.bf16.mxu0 0
      %417 = vmatpush2.bf16.msra.mxu0 0
      %418 = vmatprep.mubr.bf16.mxu0 0
      %419 = vmatmul.mubr.bf16.gmra.mxu0 %v330
      %v420 = vpop.f32.mrf.mxu0
      %v421 = vadd.f32 %v312, %v420
      %v422 = vpop.f32.mrf.mxu0
      %v423 = vpop.f32.mrf.mxu0
      %v424 = vadd.f32 %v312, %v423
      %v425 = vpop.f32.mrf.mxu0
      %426 = vmatprep.mubr.bf16.mxu0 0
      %427 = vmatmul.mubr.bf16.gmra.mxu0 %v331
      %v428 = vpop.f32.mrf.mxu0
      %v429 = vadd.f32 %v312, %v428
      %v430 = vpop.f32.mrf.mxu0
      %v431 = vpop.f32.mrf.mxu0
      %v432 = vadd.f32 %v312, %v431
      %v433 = vpop.f32.mrf.mxu0
      %434 = vmatprep.mubr.bf16.mxu0 0
      %435 = vmatmul.mubr.bf16.gmra.mxu0 %v332
      %v436 = vpop.f32.mrf.mxu0
      %v437 = vadd.f32 %v312, %v436
      %v438 = vpop.f32.mrf.mxu0
      %v439 = vpop.f32.mrf.mxu0
      %v440 = vadd.f32 %v312, %v439
      %v441 = vpop.f32.mrf.mxu0
      %442 = vmatprep.mubr.bf16.mxu0 0
      %443 = vmatmul.mubr.bf16.gmra.mxu0 %v333
      %v444 = vpop.f32.mrf.mxu0
      %v445 = vadd.f32 %v312, %v444
      %v446 = vpop.f32.mrf.mxu0
      %v447 = vpop.f32.mrf.mxu0
      %v448 = vadd.f32 %v312, %v447
      %v449 = vpop.f32.mrf.mxu0
      %450 = vdwg.mxu0
      %v451 = vmax.f32 %v421, 0.0
      %v452 = vmax.f32 %v424, 0.0
      %v453 = vmax.f32 %v429, 0.0
      %v454 = vmax.f32 %v432, 0.0
      %v455 = vmax.f32 %v437, 0.0
      %v456 = vmax.f32 %v440, 0.0
      %v457 = vmax.f32 %v445, 0.0
      %v458 = vmax.f32 %v448, 0.0
      %v459 = vld [vmem:[%s3] sm:$0xf]
      %v460 = vld [vmem:[%s3 + $0x4] sm:$0xf]
      %v461 = vld [vmem:[%s3 + $0x8] sm:$0xf]
      %v462 = vld [vmem:[%s3 + $0xc] sm:$0xf]
      %v463 = vld [vmem:[%s3 + $0x10] sm:$0xf]
      %v464 = vld [vmem:[%s3 + $0x14] sm:$0xf]
      %v465 = vld [vmem:[%s3 + $0x18] sm:$0xf]
      %v466 = vld [vmem:[%s3 + $0x1c] sm:$0xf]
      %v467 = vld [vmem:[%s3 + $0x20] sm:$0xf]
      %v468 = vld [vmem:[%s3 + $0x24] sm:$0xf]
      %v469 = vld [vmem:[%s3 + $0x28] sm:$0xf]
      %v470 = vld [vmem:[%s3 + $0x2c] sm:$0xf]
      %v471 = vld [vmem:[%s3 + $0x30] sm:$0xf]
      %v472 = vld [vmem:[%s3 + $0x34] sm:$0xf]
      %v473 = vld [vmem:[%s3 + $0x38] sm:$0xf]
      %v474 = vld [vmem:[%s3 + $0x3c] sm:$0xf]
      %v475 = vld [vmem:[%s4] sm:$0x1]
      %v476 = vpack.c.bf16 %v452, %v451
      %v477 = vpack.c.bf16 %v454, %v453
      %v478 = vpack.c.bf16 %v456, %v455
      %v479 = vpack.c.bf16 %v458, %v457
      %v481 = vlaneseq
      %v482 = vshrl.u32 %v481, 7
      %v483 = vsub.s32 0, %v482
      %v484 = vrot.slane %v475, %v483
      %v502 = vunpack.c.l.b16 %v459
      %v503 = vunpack.c.l.b16 %v460
      %v504 = vunpack.c.l.b16 %v461
      %v505 = vunpack.c.l.b16 %v462
      %v506 = vunpack.c.l.b16 %v463
      %v507 = vunpack.c.l.b16 %v464
      %v508 = vunpack.c.l.b16 %v465
      %v509 = vunpack.c.l.b16 %v466
      %v510 = vunpack.c.l.b16 %v467
      %v511 = vunpack.c.l.b16 %v468
      %v512 = vunpack.c.l.b16 %v469
      %v513 = vunpack.c.l.b16 %v470
      %v514 = vunpack.c.l.b16 %v471
      %v515 = vunpack.c.l.b16 %v472
      %v516 = vunpack.c.l.b16 %v473
      %v517 = vunpack.c.l.b16 %v474
      %v518 = vpack.c.b16 %v503, %v502
      %v519 = vpack.c.b16 %v505, %v504
      %v520 = vpack.c.b16 %v507, %v506
      %v521 = vpack.c.b16 %v509, %v508
      %v522 = vpack.c.b16 %v511, %v510
      %v523 = vpack.c.b16 %v513, %v512
      %v524 = vpack.c.b16 %v515, %v514
      %v525 = vpack.c.b16 %v517, %v516
      %534 = vmatprep.subr.bf16.mxu0 0
      %535 = vmatpush1.bf16.msra.mxu0 %v525
      %536 = vmatprep.subr.bf16.mxu0 0
      %537 = vmatpush1.bf16.msra.mxu0 %v524
      %538 = vmatprep.subr.bf16.mxu0 0
      %539 = vmatpush1.bf16.msra.mxu0 %v523
      %540 = vmatprep.subr.bf16.mxu0 0
      %541 = vmatpush1.bf16.msra.mxu0 %v522
      %542 = vmatprep.subr.bf16.mxu0 0
      %543 = vmatpush1.bf16.msra.mxu0 %v521
      %544 = vmatprep.subr.bf16.mxu0 0
      %545 = vmatpush1.bf16.msra.mxu0 %v520
      %546 = vmatprep.subr.bf16.mxu0 0
      %547 = vmatpush1.bf16.msra.mxu0 %v519
      %548 = vmatprep.subr.bf16.mxu0 0
      %549 = vmatpush1.bf16.msra.mxu0 %v518
      %550 = vmatprep.subr.bf16.mxu0 0
      %551 = vmatpush2.bf16.msra.mxu0 0
      %552 = vmatprep.subr.bf16.mxu0 0
      %553 = vmatpush2.bf16.msra.mxu0 0
      %554 = vmatprep.subr.bf16.mxu0 0
      %555 = vmatpush2.bf16.msra.mxu0 0
      %556 = vmatprep.subr.bf16.mxu0 0
      %557 = vmatpush2.bf16.msra.mxu0 0
      %558 = vmatprep.subr.bf16.mxu0 0
      %559 = vmatpush2.bf16.msra.mxu0 0
      %560 = vmatprep.subr.bf16.mxu0 0
      %561 = vmatpush2.bf16.msra.mxu0 0
      %562 = vmatprep.subr.bf16.mxu0 0
      %563 = vmatpush2.bf16.msra.mxu0 0
      %564 = vmatprep.subr.bf16.mxu0 0
      %565 = vmatpush2.bf16.msra.mxu0 0
      %566 = vmatprep.mubr.bf16.mxu0 0
      %567 = vmatmul.mubr.bf16.gmra.mxu0 %v476
      %v568 = vpop.f32.mrf.mxu0
      %v569 = vadd.f32 %v484, %v568
      %v570 = vpop.f32.mrf.mxu0
      %v571 = vpop.f32.mrf.mxu0
      %v572 = vadd.f32 %v484, %v571
      %v573 = vpop.f32.mrf.mxu0
      %574 = vmatprep.mubr.bf16.mxu0 0
      %575 = vmatmul.mubr.bf16.gmra.mxu0 %v477
      %v576 = vpop.f32.mrf.mxu0
      %v577 = vadd.f32 %v484, %v576
      %v578 = vpop.f32.mrf.mxu0
      %v579 = vpop.f32.mrf.mxu0
      %v580 = vadd.f32 %v484, %v579
      %v581 = vpop.f32.mrf.mxu0
      %582 = vmatprep.mubr.bf16.mxu0 0
      %583 = vmatmul.mubr.bf16.gmra.mxu0 %v478
      %v584 = vpop.f32.mrf.mxu0
      %v585 = vadd.f32 %v484, %v584
      %v586 = vpop.f32.mrf.mxu0
      %v587 = vpop.f32.mrf.mxu0
      %v588 = vadd.f32 %v484, %v587
      %v589 = vpop.f32.mrf.mxu0
      %590 = vmatprep.mubr.bf16.mxu0 0
      %591 = vmatmul.mubr.bf16.gmra.mxu0 %v479
      %v592 = vpop.f32.mrf.mxu0
      %v593 = vadd.f32 %v484, %v592
      %v594 = vpop.f32.mrf.mxu0
      %v595 = vpop.f32.mrf.mxu0
      %v596 = vadd.f32 %v484, %v595
      %v597 = vpop.f32.mrf.mxu0
      %598 = vdwg.mxu0
      %v599 = vmax.f32 %v569, 0.0
      %v600 = vmax.f32 %v572, 0.0
      %v601 = vmax.f32 %v577, 0.0
      %v602 = vmax.f32 %v580, 0.0
      %v603 = vmax.f32 %v585, 0.0
      %v604 = vmax.f32 %v588, 0.0
      %v605 = vmax.f32 %v593, 0.0
      %v606 = vmax.f32 %v596, 0.0
      %v607 = vld [vmem:[%s5] sm:$0xf]
      %v608 = vld [vmem:[%s5 + $0x4] sm:$0xf]
      %v609 = vld [vmem:[%s5 + $0x8] sm:$0xf]
      %v610 = vld [vmem:[%s5 + $0xc] sm:$0xf]
      %v611 = vld [vmem:[%s5 + $0x10] sm:$0xf]
      %v612 = vld [vmem:[%s5 + $0x14] sm:$0xf]
      %v613 = vld [vmem:[%s5 + $0x18] sm:$0xf]
      %v614 = vld [vmem:[%s5 + $0x1c] sm:$0xf]
      %v615 = vld [vmem:[%s5 + $0x20] sm:$0xf]
      %v616 = vld [vmem:[%s5 + $0x24] sm:$0xf]
      %v617 = vld [vmem:[%s5 + $0x28] sm:$0xf]
      %v618 = vld [vmem:[%s5 + $0x2c] sm:$0xf]
      %v619 = vld [vmem:[%s5 + $0x30] sm:$0xf]
      %v620 = vld [vmem:[%s5 + $0x34] sm:$0xf]
      %v621 = vld [vmem:[%s5 + $0x38] sm:$0xf]
      %v622 = vld [vmem:[%s5 + $0x3c] sm:$0xf]
      %v623 = vld [vmem:[%s6] sm:$0x1]
      %v624 = vpack.c.bf16 %v600, %v599
      %v625 = vpack.c.bf16 %v602, %v601
      %v626 = vpack.c.bf16 %v604, %v603
      %v627 = vpack.c.bf16 %v606, %v605
      %v629 = vlaneseq
      %v630 = vshrl.u32 %v629, 7
      %v631 = vsub.s32 0, %v630
      %v632 = vrot.slane %v623, %v631
      %v650 = vunpack.c.l.b16 %v607
      %v651 = vunpack.c.l.b16 %v608
      %v652 = vunpack.c.l.b16 %v609
      %v653 = vunpack.c.l.b16 %v610
      %v654 = vunpack.c.l.b16 %v611
      %v655 = vunpack.c.l.b16 %v612
      %v656 = vunpack.c.l.b16 %v613
      %v657 = vunpack.c.l.b16 %v614
      %v658 = vunpack.c.l.b16 %v615
      %v659 = vunpack.c.l.b16 %v616
      %v660 = vunpack.c.l.b16 %v617
      %v661 = vunpack.c.l.b16 %v618
      %v662 = vunpack.c.l.b16 %v619
      %v663 = vunpack.c.l.b16 %v620
      %v664 = vunpack.c.l.b16 %v621
      %v665 = vunpack.c.l.b16 %v622
      %v666 = vpack.c.b16 %v651, %v650
      %v667 = vpack.c.b16 %v653, %v652
      %v668 = vpack.c.b16 %v655, %v654
      %v669 = vpack.c.b16 %v657, %v656
      %v670 = vpack.c.b16 %v659, %v658
      %v671 = vpack.c.b16 %v661, %v660
      %v672 = vpack.c.b16 %v663, %v662
      %v673 = vpack.c.b16 %v665, %v664
      %682 = vmatprep.subr.bf16.mxu0 0
      %683 = vmatpush1.bf16.msra.mxu0 %v673
      %684 = vmatprep.subr.bf16.mxu0 0
      %685 = vmatpush1.bf16.msra.mxu0 %v672
      %686 = vmatprep.subr.bf16.mxu0 0
      %687 = vmatpush1.bf16.msra.mxu0 %v671
      %688 = vmatprep.subr.bf16.mxu0 0
      %689 = vmatpush1.bf16.msra.mxu0 %v670
      %690 = vmatprep.subr.bf16.mxu0 0
      %691 = vmatpush1.bf16.msra.mxu0 %v669
      %692 = vmatprep.subr.bf16.mxu0 0
      %693 = vmatpush1.bf16.msra.mxu0 %v668
      %694 = vmatprep.subr.bf16.mxu0 0
      %695 = vmatpush1.bf16.msra.mxu0 %v667
      %696 = vmatprep.subr.bf16.mxu0 0
      %697 = vmatpush1.bf16.msra.mxu0 %v666
      %698 = vmatprep.subr.bf16.mxu0 0
      %699 = vmatpush2.bf16.msra.mxu0 0
      %700 = vmatprep.subr.bf16.mxu0 0
      %701 = vmatpush2.bf16.msra.mxu0 0
      %702 = vmatprep.subr.bf16.mxu0 0
      %703 = vmatpush2.bf16.msra.mxu0 0
      %704 = vmatprep.subr.bf16.mxu0 0
      %705 = vmatpush2.bf16.msra.mxu0 0
      %706 = vmatprep.subr.bf16.mxu0 0
      %707 = vmatpush2.bf16.msra.mxu0 0
      %708 = vmatprep.subr.bf16.mxu0 0
      %709 = vmatpush2.bf16.msra.mxu0 0
      %710 = vmatprep.subr.bf16.mxu0 0
      %711 = vmatpush2.bf16.msra.mxu0 0
      %712 = vmatprep.subr.bf16.mxu0 0
      %713 = vmatpush2.bf16.msra.mxu0 0
      %714 = vmatprep.mubr.bf16.mxu0 0
      %715 = vmatmul.mubr.bf16.gmra.mxu0 %v624
      %v716 = vpop.f32.mrf.mxu0
      %v717 = vadd.f32 %v632, %v716
      %v718 = vpop.f32.mrf.mxu0
      %v719 = vpop.f32.mrf.mxu0
      %v720 = vadd.f32 %v632, %v719
      %v721 = vpop.f32.mrf.mxu0
      %722 = vmatprep.mubr.bf16.mxu0 0
      %723 = vmatmul.mubr.bf16.gmra.mxu0 %v625
      %v724 = vpop.f32.mrf.mxu0
      %v725 = vadd.f32 %v632, %v724
      %v726 = vpop.f32.mrf.mxu0
      %v727 = vpop.f32.mrf.mxu0
      %v728 = vadd.f32 %v632, %v727
      %v729 = vpop.f32.mrf.mxu0
      %730 = vmatprep.mubr.bf16.mxu0 0
      %731 = vmatmul.mubr.bf16.gmra.mxu0 %v626
      %v732 = vpop.f32.mrf.mxu0
      %v733 = vadd.f32 %v632, %v732
      %v734 = vpop.f32.mrf.mxu0
      %v735 = vpop.f32.mrf.mxu0
      %v736 = vadd.f32 %v632, %v735
      %v737 = vpop.f32.mrf.mxu0
      %738 = vmatprep.mubr.bf16.mxu0 0
      %739 = vmatmul.mubr.bf16.gmra.mxu0 %v627
      %v740 = vpop.f32.mrf.mxu0
      %v741 = vadd.f32 %v632, %v740
      %v742 = vpop.f32.mrf.mxu0
      %v743 = vpop.f32.mrf.mxu0
      %v744 = vadd.f32 %v632, %v743
      %v745 = vpop.f32.mrf.mxu0
      %746 = vdwg.mxu0
      %747 = vst [vmem:[%s280] sm:$0xff] %v717
      %748 = vst [vmem:[%s280 + $0x8] sm:$0xff] %v720
      %749 = vst [vmem:[%s280 + $0x10] sm:$0xff] %v725
      %750 = vst [vmem:[%s280 + $0x18] sm:$0xff] %v728
      %751 = vst [vmem:[%s280 + $0x20] sm:$0xff] %v733
      %752 = vst [vmem:[%s280 + $0x28] sm:$0xff] %v736
      %753 = vst [vmem:[%s280 + $0x30] sm:$0xff] %v741
      %754 = vst [vmem:[%s280 + $0x38] sm:$0xff] %v744
      %s755 = smul.u32 8, %s18
      %p756 = scmp.lt.s32.totalorder %s755, 15
      %s757 = scalar_select %p756, %s755, 15
      %s758 = smul.addr %s757, 8
      %s759 = scalar_lea.vmem %s7, %s758
      // Predicated region
      $region49: #{encode_process_decode.19} parent=47 // pred_check
        %p760 = pneg %p188
      $region50: #{encode_process_decode.19} parent=47 // pred_check_branch
        %762 = sbr.rel (%p760) target = $region52
      $region51: #{encode_process_decode.19} parent=47 // pred_region
        %s763 = smul.u32 8, %s18
      $region52: #{encode_process_decode.19} parent=47 // pred_fallthru
        _
    $region48: #{encode_process_decode.19} parent=5 // pred_fallthru
      _
    %p764 = scmp.le.s32.totalorder 2, %s13
    // Predicated region
    $region53: #{encode_process_decode.19} parent=5 // pred_check
      %p765 = pneg %p764
    $region54: #{encode_process_decode.19} parent=5 // pred_check_branch
      %767 = sbr.rel (%p765) target = $region56
    $region55: #{encode_process_decode.19} parent=5 // pred_region
      %s768 = ssub.s32 %s13, 2
      // Predicated region
      $region57: #{encode_process_decode.19} parent=55 // pred_check
        %p769 = pneg %p194
      $region58: #{encode_process_decode.19} parent=55 // pred_check_branch
        %771 = sbr.rel (%p769) target = $region60
      $region59: #{encode_process_decode.19} parent=55 // pred_region
        %s772 = smul.u32 8, %s19
        %p773 = scmp.lt.s32.totalorder %s772, 15
        %s774 = scalar_select %p773, %s772, 15
        %s775 = smul.addr %s774, 8
        %s776 = scalar_lea.vmem %s7, %s775
      $region60: #{encode_process_decode.19} parent=55 // pred_fallthru
        _
    $region56: #{encode_process_decode.19} parent=5 // pred_fallthru
      _
  $region6: #{encode_process_decode.19} parent=0 // loop_footer
    %s17 = sadd.s32 1, %s13
  $region7: #{encode_process_decode.19} parent=0 // loop_footer_branch
    %12 = sbr.rel target = $region3
  $region8: #{encode_process_decode.19} parent=0 // loop_exit
    _

// kernel: encode_process_decode.18
$region0: #{encode_process_decode.18}
  #allocation0 [shape = 'u32[]', space=smem, size = 0x4, offset = 0x4, fixed_abs, tag = 'smem constant byte address 0x4 - core index']
  #allocation1 [shape = 'u32[144,128]{1,0:T(1,128)}', space=vmem, size = 0x12000, scoped, tag = 'internal scratch']
  %s0 = inlined_call_operand.vmem [shape: bf16[64,128], index: 0, kind: input, shape index: {}]
  %s1 = inlined_call_operand.vmem [shape: bf16[128,128], index: 1, kind: input, shape index: {}]
  %s2 = inlined_call_operand.vmem [shape: f32[1,128], index: 2, kind: input, shape index: {}]
  %s3 = inlined_call_operand.vmem [shape: bf16[128,128], index: 3, kind: input, shape index: {}]
  %s4 = inlined_call_operand.vmem [shape: f32[1,128], index: 4, kind: input, shape index: {}]
  %s5 = inlined_call_operand.vmem [shape: bf16[128,128], index: 5, kind: input, shape index: {}]
  %s6 = inlined_call_operand.vmem [shape: f32[1,128], index: 6, kind: input, shape index: {}]
  %s7 = inlined_call_operand.vmem [shape: f32[64,128], index: 7, kind: output, shape index: {}]
  %s8 = sld [smem:[#allocation0]]
  $region61: #{encode_process_decode.18} parent=0
    _
  %s10 = ssub.s32 1, %s8
  %s11 = scalar_select 0, %s10, %s8
  loop: start=0, step=1, limit=4
  $region2: #{encode_process_decode.18} parent=0 // loop_pre_header
    _
  $region3: #{encode_process_decode.18} parent=0 // loop_header
    %s13 = sphi 0, %s17
    %p14 = scmp.ge.s32.totalorder %s13, 4
    %s23 = sphi 0, %s25
    %s26 = sphi 0, %s23
    %s27 = sphi 0, %s26
    %s43 = sphi 0, %s27
    %s47 = sphi 0, %s47
    %s49 = sphi 0, %s47
    %s50 = sphi 0, %s49
    %s64 = sphi 0, %s50
    %s68 = sphi 0, %s68
    %s70 = sphi 0, %s68
    %s71 = sphi 0, %s70
    %s85 = sphi 0, %s71
    %s89 = sphi 0, %s89
    %s91 = sphi 0, %s89
    %s92 = sphi 0, %s91
    %s106 = sphi 0, %s92
    %s110 = sphi 0, %s110
    %s112 = sphi 0, %s110
    %s113 = sphi 0, %s112
    %s127 = sphi 0, %s113
    %s131 = sphi 0, %s131
    %s133 = sphi 0, %s131
    %s134 = sphi 0, %s133
    %s148 = sphi 0, %s134
    %s152 = sphi 0, %s152
    %s154 = sphi 0, %s152
    %s155 = sphi 0, %s154
    %s169 = sphi 0, %s155
    %s175 = sphi 0, %s177
    %s178 = sphi 0, %s175
    %s179 = sphi 0, %s178
    %s195 = sphi 0, %s179
  $region4: #{encode_process_decode.18} parent=0 // loop_header_branch
    %16 = sbr.rel (%p14) target = $region8
  $region5: #{encode_process_decode.18} parent=0 // loop_body
    %s18 = ssub.s32 %s13, 1
    %s19 = ssub.s32 %s13, 2
    %s20 = sadd.s32 %s13, 1
    %s21 = ssub.s32 %s13, %s20
    %p22 = scmp.eq.s32.totalorder %s21, 0
    %s24 = sadd.s32 %s23, 1
    %s25 = scalar_select %p22, %s23, %s24
    %p28 = pneg %p22
    %p29 = scmp.eq.s32.totalorder %s13, 1
    %p30 = por %p28, %p29
    %p31 = scmp.ne.s32.totalorder %s23, %s26
    %p32 = scmp.eq.s32.totalorder %s13, 0
    %p33 = por %p31, %p32
    %p34 = scmp.ne.s32.totalorder %s23, %s26
    %p35 = scmp.eq.s32.totalorder %s18, 1
    %p36 = por %p34, %p35
    %p37 = scmp.ne.s32.totalorder %s26, %s27
    %p38 = scmp.eq.s32.totalorder %s18, 0
    %p39 = por %p37, %p38
    %p40 = scmp.ne.s32.totalorder %s26, %s27
    %p41 = scmp.eq.s32.totalorder %s19, 1
    %p42 = por %p40, %p41
    %p44 = scmp.ne.s32.totalorder %s27, %s43
    %p45 = scmp.eq.s32.totalorder %s19, 0
    %p46 = por %p44, %p45
    %s48 = sadd.s32 %s47, 1
    %p51 = scmp.eq.s32.totalorder %s13, 1
    %p52 = scmp.ne.s32.totalorder %s47, %s49
    %p53 = scmp.eq.s32.totalorder %s13, 0
    %p54 = por %p52, %p53
    %p55 = scmp.ne.s32.totalorder %s47, %s49
    %p56 = scmp.eq.s32.totalorder %s18, 1
    %p57 = por %p55, %p56
    %p58 = scmp.ne.s32.totalorder %s49, %s50
    %p59 = scmp.eq.s32.totalorder %s18, 0
    %p60 = por %p58, %p59
    %p61 = scmp.ne.s32.totalorder %s49, %s50
    %p62 = scmp.eq.s32.totalorder %s19, 1
    %p63 = por %p61, %p62
    %p65 = scmp.ne.s32.totalorder %s50, %s64
    %p66 = scmp.eq.s32.totalorder %s19, 0
    %p67 = por %p65, %p66
    %s69 = sadd.s32 %s68, 1
    %p72 = scmp.eq.s32.totalorder %s13, 1
    %p73 = scmp.ne.s32.totalorder %s68, %s70
    %p74 = scmp.eq.s32.totalorder %s13, 0
    %p75 = por %p73, %p74
    %p76 = scmp.ne.s32.totalorder %s68, %s70
    %p77 = scmp.eq.s32.totalorder %s18, 1
    %p78 = por %p76, %p77
    %p79 = scmp.ne.s32.totalorder %s70, %s71
    %p80 = scmp.eq.s32.totalorder %s18, 0
    %p81 = por %p79, %p80
    %p82 = scmp.ne.s32.totalorder %s70, %s71
    %p83 = scmp.eq.s32.totalorder %s19, 1
    %p84 = por %p82, %p83
    %p86 = scmp.ne.s32.totalorder %s71, %s85
    %p87 = scmp.eq.s32.totalorder %s19, 0
    %p88 = por %p86, %p87
    %s90 = sadd.s32 %s89, 1
    %p93 = scmp.eq.s32.totalorder %s13, 1
    %p94 = scmp.ne.s32.totalorder %s89, %s91
    %p95 = scmp.eq.s32.totalorder %s13, 0
    %p96 = por %p94, %p95
    %p97 = scmp.ne.s32.totalorder %s89, %s91
    %p98 = scmp.eq.s32.totalorder %s18, 1
    %p99 = por %p97, %p98
    %p100 = scmp.ne.s32.totalorder %s91, %s92
    %p101 = scmp.eq.s32.totalorder %s18, 0
    %p102 = por %p100, %p101
    %p103 = scmp.ne.s32.totalorder %s91, %s92
    %p104 = scmp.eq.s32.totalorder %s19, 1
    %p105 = por %p103, %p104
    %p107 = scmp.ne.s32.totalorder %s92, %s106
    %p108 = scmp.eq.s32.totalorder %s19, 0
    %p109 = por %p107, %p108
    %s111 = sadd.s32 %s110, 1
    %p114 = scmp.eq.s32.totalorder %s13, 1
    %p115 = scmp.ne.s32.totalorder %s110, %s112
    %p116 = scmp.eq.s32.totalorder %s13, 0
    %p117 = por %p115, %p116
    %p118 = scmp.ne.s32.totalorder %s110, %s112
    %p119 = scmp.eq.s32.totalorder %s18, 1
    %p120 = por %p118, %p119
    %p121 = scmp.ne.s32.totalorder %s112, %s113
    %p122 = scmp.eq.s32.totalorder %s18, 0
    %p123 = por %p121, %p122
    %p124 = scmp.ne.s32.totalorder %s112, %s113
    %p125 = scmp.eq.s32.totalorder %s19, 1
    %p126 = por %p124, %p125
    %p128 = scmp.ne.s32.totalorder %s113, %s127
    %p129 = scmp.eq.s32.totalorder %s19, 0
    %p130 = por %p128, %p129
    %s132 = sadd.s32 %s131, 1
    %p135 = scmp.eq.s32.totalorder %s13, 1
    %p136 = scmp.ne.s32.totalorder %s131, %s133
    %p137 = scmp.eq.s32.totalorder %s13, 0
    %p138 = por %p136, %p137
    %p139 = scmp.ne.s32.totalorder %s131, %s133
    %p140 = scmp.eq.s32.totalorder %s18, 1
    %p141 = por %p139, %p140
    %p142 = scmp.ne.s32.totalorder %s133, %s134
    %p143 = scmp.eq.s32.totalorder %s18, 0
    %p144 = por %p142, %p143
    %p145 = scmp.ne.s32.totalorder %s133, %s134
    %p146 = scmp.eq.s32.totalorder %s19, 1
    %p147 = por %p145, %p146
    %p149 = scmp.ne.s32.totalorder %s134, %s148
    %p150 = scmp.eq.s32.totalorder %s19, 0
    %p151 = por %p149, %p150
    %s153 = sadd.s32 %s152, 1
    %p156 = scmp.eq.s32.totalorder %s13, 1
    %p157 = scmp.ne.s32.totalorder %s152, %s154
    %p158 = scmp.eq.s32.totalorder %s13, 0
    %p159 = por %p157, %p158
    %p160 = scmp.ne.s32.totalorder %s152, %s154
    %p161 = scmp.eq.s32.totalorder %s18, 1
    %p162 = por %p160, %p161
    %p163 = scmp.ne.s32.totalorder %s154, %s155
    %p164 = scmp.eq.s32.totalorder %s18, 0
    %p165 = por %p163, %p164
    %p166 = scmp.ne.s32.totalorder %s154, %s155
    %p167 = scmp.eq.s32.totalorder %s19, 1
    %p168 = por %p166, %p167
    %p170 = scmp.ne.s32.totalorder %s155, %s169
    %p171 = scmp.eq.s32.totalorder %s19, 0
    %p172 = por %p170, %p171
    %s173 = ssub.s32 %s13, %s20
    %p174 = scmp.eq.s32.totalorder %s173, 0
    %s176 = sadd.s32 %s175, 1
    %s177 = scalar_select %p174, %s175, %s176
    %p180 = pneg %p174
    %p181 = scmp.eq.s32.totalorder %s13, 1
    %p182 = por %p180, %p181
    %p183 = scmp.ne.s32.totalorder %s175, %s178
    %p184 = scmp.eq.s32.totalorder %s13, 0
    %p185 = por %p183, %p184
    %p186 = scmp.ne.s32.totalorder %s175, %s178
    %p187 = scmp.eq.s32.totalorder %s18, 1
    %p188 = por %p186, %p187
    %p189 = scmp.ne.s32.totalorder %s178, %s179
    %p190 = scmp.eq.s32.totalorder %s18, 0
    %p191 = por %p189, %p190
    %p192 = scmp.ne.s32.totalorder %s178, %s179
    %p193 = scmp.eq.s32.totalorder %s19, 1
    %p194 = por %p192, %p193
    %p196 = scmp.ne.s32.totalorder %s179, %s195
    %p197 = scmp.eq.s32.totalorder %s19, 0
    %p198 = por %p196, %p197
    %p199 = scmp.le.s32.totalorder 1, %s13
    %p200 = scmp.lt.s32.totalorder %s13, 3
    %p201 = pnand %p199, %p200
    %p202 = pneg %p201
    // Predicated region
    $region9: #{encode_process_decode.18} parent=5 // pred_check
      _
    $region10: #{encode_process_decode.18} parent=5 // pred_check_branch
      %204 = sbr.rel (%p201) target = $region12
    $region11: #{encode_process_decode.18} parent=5 // pred_region
      %s205 = ssub.s32 %s13, 1
      // Predicated region
      $region13: #{encode_process_decode.18} parent=11 // pred_check
        %p206 = pneg %p60
      $region14: #{encode_process_decode.18} parent=11 // pred_check_branch
        %208 = sbr.rel (%p206) target = $region16
      $region15: #{encode_process_decode.18} parent=11 // pred_region
        _
      $region16: #{encode_process_decode.18} parent=11 // pred_fallthru
        _
      // Predicated region
      $region17: #{encode_process_decode.18} parent=11 // pred_check
        %p209 = pneg %p81
      $region18: #{encode_process_decode.18} parent=11 // pred_check_branch
        %211 = sbr.rel (%p209) target = $region20
      $region19: #{encode_process_decode.18} parent=11 // pred_region
        _
      $region20: #{encode_process_decode.18} parent=11 // pred_fallthru
        _
      // Predicated region
      $region21: #{encode_process_decode.18} parent=11 // pred_check
        %p212 = pneg %p102
      $region22: #{encode_process_decode.18} parent=11 // pred_check_branch
        %214 = sbr.rel (%p212) target = $region24
      $region23: #{encode_process_decode.18} parent=11 // pred_region
        _
      $region24: #{encode_process_decode.18} parent=11 // pred_fallthru
        _
      // Predicated region
      $region25: #{encode_process_decode.18} parent=11 // pred_check
        %p215 = pneg %p123
      $region26: #{encode_process_decode.18} parent=11 // pred_check_branch
        %217 = sbr.rel (%p215) target = $region28
      $region27: #{encode_process_decode.18} parent=11 // pred_region
        _
      $region28: #{encode_process_decode.18} parent=11 // pred_fallthru
        _
      // Predicated region
      $region29: #{encode_process_decode.18} parent=11 // pred_check
        %p218 = pneg %p144
      $region30: #{encode_process_decode.18} parent=11 // pred_check_branch
        %220 = sbr.rel (%p218) target = $region32
      $region31: #{encode_process_decode.18} parent=11 // pred_region
        _
      $region32: #{encode_process_decode.18} parent=11 // pred_fallthru
        _
      // Predicated region
      $region33: #{encode_process_decode.18} parent=11 // pred_check
        %p221 = pneg %p165
      $region34: #{encode_process_decode.18} parent=11 // pred_check_branch
        %223 = sbr.rel (%p221) target = $region36
      $region35: #{encode_process_decode.18} parent=11 // pred_region
        _
      $region36: #{encode_process_decode.18} parent=11 // pred_fallthru
        _
    $region12: #{encode_process_decode.18} parent=5 // pred_fallthru
      _
    %p224 = scmp.lt.s32.totalorder %s13, 2
    // Predicated region
    $region37: #{encode_process_decode.18} parent=5 // pred_check
      %p225 = pneg %p224
    $region38: #{encode_process_decode.18} parent=5 // pred_check_branch
      %227 = sbr.rel (%p225) target = $region40
    $region39: #{encode_process_decode.18} parent=5 // pred_region
      // Predicated region
      $region41: #{encode_process_decode.18} parent=39 // pred_check
        %p228 = pneg %p33
      $region42: #{encode_process_decode.18} parent=39 // pred_check_branch
        %230 = sbr.rel (%p228) target = $region44
      $region43: #{encode_process_decode.18} parent=39 // pred_region
        %s231 = smul.u32 4, %s13
        %p232 = scmp.lt.s32.totalorder %s231, 7
        %s233 = scalar_select %p232, %s231, 7
        %s234 = smul.addr %s233, 4
        %s235 = scalar_lea.vmem %s0, %s234
        %s236 = smul.u32 4, %s13
      $region44: #{encode_process_decode.18} parent=39 // pred_fallthru
        _
    $region40: #{encode_process_decode.18} parent=5 // pred_fallthru
      _
    %p237 = scmp.le.s32.totalorder 1, %s13
    %p238 = scmp.lt.s32.totalorder %s13, 3
    %p239 = pnand %p237, %p238
    %p240 = pneg %p239
    // Predicated region
    $region45: #{encode_process_decode.18} parent=5 // pred_check
      _
    $region46: #{encode_process_decode.18} parent=5 // pred_check_branch
      %242 = sbr.rel (%p239) target = $region48
    $region47: #{encode_process_decode.18} parent=5 // pred_region
      %s243 = ssub.s32 %s13, 1
      %s244 = smul.u32 4, %s18
      %p245 = scmp.lt.s32.totalorder %s244, 7
      %s246 = scalar_select %p245, %s244, 7
      %s247 = smul.addr %s246, 4
      %s248 = scalar_lea.vmem %s0, %s247
      %p249 = pneg %p39
      %p250 = pneg %p36
      %p251 = pneg %p60
      %p252 = pneg %p57
      %p253 = pneg %p81
      %p254 = pneg %p78
      %p255 = pneg %p102
      %p256 = pneg %p99
      %p257 = pneg %p123
      %p258 = pneg %p120
      %p259 = pneg %p144
      %p260 = pneg %p141
      %p261 = pneg %p165
      %p262 = pneg %p162
      %p263 = pneg %p191
      %p264 = pneg %p188
      %s265 = smul.u32 4, %s18
      %p266 = scmp.lt.s32.totalorder %s265, 7
      %s267 = scalar_select %p266, %s265, 7
      %s268 = smul.addr %s267, 8
      %s269 = scalar_lea.vmem %s7, %s268
      %s270 = smul.u32 4, %s18
      %p271 = scmp.lt.s32.totalorder %s270, 7
      %s272 = scalar_select %p271, %s270, 7
      %s273 = smul.addr %s272, 4
      %s274 = scalar_lea.vmem %s0, %s273
      %s275 = smul.u32 4, %s18
      %s276 = smul.u32 4, %s18
      %p277 = scmp.lt.s32.totalorder %s276, 7
      %s278 = scalar_select %p277, %s276, 7
      %s279 = smul.addr %s278, 8
      %s280 = scalar_lea.vmem %s7, %s279
      %s281 = smul.u32 4, %s18
      %v283 = vld [vmem:[%s274] sm:$0xf]
      %v284 = vld [vmem:[%s274 + $0x4] sm:$0xf]
      %v285 = vld [vmem:[%s274 + $0x8] sm:$0xf]
      %v286 = vld [vmem:[%s274 + $0xc] sm:$0xf]
      %v287 = vld [vmem:[%s1] sm:$0xf]
      %v288 = vld [vmem:[%s1 + $0x4] sm:$0xf]
      %v289 = vld [vmem:[%s1 + $0x8] sm:$0xf]
      %v290 = vld [vmem:[%s1 + $0xc] sm:$0xf]
      %v291 = vld [vmem:[%s1 + $0x10] sm:$0xf]
      %v292 = vld [vmem:[%s1 + $0x14] sm:$0xf]
      %v293 = vld [vmem:[%s1 + $0x18] sm:$0xf]
      %v294 = vld [vmem:[%s1 + $0x1c] sm:$0xf]
      %v295 = vld [vmem:[%s1 + $0x20] sm:$0xf]
      %v296 = vld [vmem:[%s1 + $0x24] sm:$0xf]
      %v297 = vld [vmem:[%s1 + $0x28] sm:$0xf]
      %v298 = vld [vmem:[%s1 + $0x2c] sm:$0xf]
      %v299 = vld [vmem:[%s1 + $0x30] sm:$0xf]
      %v300 = vld [vmem:[%s1 + $0x34] sm:$0xf]
      %v301 = vld [vmem:[%s1 + $0x38] sm:$0xf]
      %v302 = vld [vmem:[%s1 + $0x3c] sm:$0xf]
      %v303 = vld [vmem:[%s2] sm:$0x1]
      %v305 = vlaneseq
      %v306 = vshrl.u32 %v305, 7
      %v307 = vsub.s32 0, %v306
      %v308 = vrot.slane %v303, %v307
      %v314 = vunpack.c.l.b16 %v283
      %v315 = vunpack.c.l.b16 %v284
      %v316 = vunpack.c.l.b16 %v285
      %v317 = vunpack.c.l.b16 %v286
      %v318 = vpack.c.b16 %v315, %v314
      %v319 = vpack.c.b16 %v317, %v316
      %v338 = vunpack.c.l.b16 %v287
      %v339 = vunpack.c.l.b16 %v288
      %v340 = vunpack.c.l.b16 %v289
      %v341 = vunpack.c.l.b16 %v290
      %v342 = vunpack.c.l.b16 %v291
      %v343 = vunpack.c.l.b16 %v292
      %v344 = vunpack.c.l.b16 %v293
      %v345 = vunpack.c.l.b16 %v294
      %v346 = vunpack.c.l.b16 %v295
      %v347 = vunpack.c.l.b16 %v296
      %v348 = vunpack.c.l.b16 %v297
      %v349 = vunpack.c.l.b16 %v298
      %v350 = vunpack.c.l.b16 %v299
      %v351 = vunpack.c.l.b16 %v300
      %v352 = vunpack.c.l.b16 %v301
      %v353 = vunpack.c.l.b16 %v302
      %v354 = vpack.c.b16 %v339, %v338
      %v355 = vpack.c.b16 %v341, %v340
      %v356 = vpack.c.b16 %v343, %v342
      %v357 = vpack.c.b16 %v345, %v344
      %v358 = vpack.c.b16 %v347, %v346
      %v359 = vpack.c.b16 %v349, %v348
      %v360 = vpack.c.b16 %v351, %v350
      %v361 = vpack.c.b16 %v353, %v352
      %370 = vmatprep.subr.bf16.mxu0 0
      %371 = vmatpush1.bf16.msra.mxu0 %v361
      %372 = vmatprep.subr.bf16.mxu0 0
      %373 = vmatpush1.bf16.msra.mxu0 %v360
      %374 = vmatprep.subr.bf16.mxu0 0
      %375 = vmatpush1.bf16.msra.mxu0 %v359
      %376 = vmatprep.subr.bf16.mxu0 0
      %377 = vmatpush1.bf16.msra.mxu0 %v358
      %378 = vmatprep.subr.bf16.mxu0 0
      %379 = vmatpush1.bf16.msra.mxu0 %v357
      %380 = vmatprep.subr.bf16.mxu0 0
      %381 = vmatpush1.bf16.msra.mxu0 %v356
      %382 = vmatprep.subr.bf16.mxu0 0
      %383 = vmatpush1.bf16.msra.mxu0 %v355
      %384 = vmatprep.subr.bf16.mxu0 0
      %385 = vmatpush1.bf16.msra.mxu0 %v354
      %386 = vmatprep.subr.bf16.mxu0 0
      %387 = vmatpush2.bf16.msra.mxu0 0
      %388 = vmatprep.subr.bf16.mxu0 0
      %389 = vmatpush2.bf16.msra.mxu0 0
      %390 = vmatprep.subr.bf16.mxu0 0
      %391 = vmatpush2.bf16.msra.mxu0 0
      %392 = vmatprep.subr.bf16.mxu0 0
      %393 = vmatpush2.bf16.msra.mxu0 0
      %394 = vmatprep.subr.bf16.mxu0 0
      %395 = vmatpush2.bf16.msra.mxu0 0
      %396 = vmatprep.subr.bf16.mxu0 0
      %397 = vmatpush2.bf16.msra.mxu0 0
      %398 = vmatprep.subr.bf16.mxu0 0
      %399 = vmatpush2.bf16.msra.mxu0 0
      %400 = vmatprep.subr.bf16.mxu0 0
      %401 = vmatpush2.bf16.msra.mxu0 0
      %402 = vmatprep.mubr.bf16.mxu0 0
      %403 = vmatmul.mubr.bf16.gmra.mxu0 %v318
      %v404 = vpop.f32.mrf.mxu0
      %v405 = vadd.f32 %v308, %v404
      %v406 = vpop.f32.mrf.mxu0
      %v407 = vpop.f32.mrf.mxu0
      %v408 = vadd.f32 %v308, %v407
      %v409 = vpop.f32.mrf.mxu0
      %410 = vmatprep.mubr.bf16.mxu0 0
      %411 = vmatmul.mubr.bf16.gmra.mxu0 %v319
      %v412 = vpop.f32.mrf.mxu0
      %v413 = vadd.f32 %v308, %v412
      %v414 = vpop.f32.mrf.mxu0
      %v415 = vpop.f32.mrf.mxu0
      %v416 = vadd.f32 %v308, %v415
      %v417 = vpop.f32.mrf.mxu0
      %418 = vdwg.mxu0
      %v419 = vmax.f32 %v405, 0.0
      %v420 = vmax.f32 %v408, 0.0
      %v421 = vmax.f32 %v413, 0.0
      %v422 = vmax.f32 %v416, 0.0
      %v423 = vld [vmem:[%s3] sm:$0xf]
      %v424 = vld [vmem:[%s3 + $0x4] sm:$0xf]
      %v425 = vld [vmem:[%s3 + $0x8] sm:$0xf]
      %v426 = vld [vmem:[%s3 + $0xc] sm:$0xf]
      %v427 = vld [vmem:[%s3 + $0x10] sm:$0xf]
      %v428 = vld [vmem:[%s3 + $0x14] sm:$0xf]
      %v429 = vld [vmem:[%s3 + $0x18] sm:$0xf]
      %v430 = vld [vmem:[%s3 + $0x1c] sm:$0xf]
      %v431 = vld [vmem:[%s3 + $0x20] sm:$0xf]
      %v432 = vld [vmem:[%s3 + $0x24] sm:$0xf]
      %v433 = vld [vmem:[%s3 + $0x28] sm:$0xf]
      %v434 = vld [vmem:[%s3 + $0x2c] sm:$0xf]
      %v435 = vld [vmem:[%s3 + $0x30] sm:$0xf]
      %v436 = vld [vmem:[%s3 + $0x34] sm:$0xf]
      %v437 = vld [vmem:[%s3 + $0x38] sm:$0xf]
      %v438 = vld [vmem:[%s3 + $0x3c] sm:$0xf]
      %v439 = vld [vmem:[%s4] sm:$0x1]
      %v440 = vpack.c.bf16 %v420, %v419
      %v441 = vpack.c.bf16 %v422, %v421
      %v443 = vlaneseq
      %v444 = vshrl.u32 %v443, 7
      %v445 = vsub.s32 0, %v444
      %v446 = vrot.slane %v439, %v445
      %v464 = vunpack.c.l.b16 %v423
      %v465 = vunpack.c.l.b16 %v424
      %v466 = vunpack.c.l.b16 %v425
      %v467 = vunpack.c.l.b16 %v426
      %v468 = vunpack.c.l.b16 %v427
      %v469 = vunpack.c.l.b16 %v428
      %v470 = vunpack.c.l.b16 %v429
      %v471 = vunpack.c.l.b16 %v430
      %v472 = vunpack.c.l.b16 %v431
      %v473 = vunpack.c.l.b16 %v432
      %v474 = vunpack.c.l.b16 %v433
      %v475 = vunpack.c.l.b16 %v434
      %v476 = vunpack.c.l.b16 %v435
      %v477 = vunpack.c.l.b16 %v436
      %v478 = vunpack.c.l.b16 %v437
      %v479 = vunpack.c.l.b16 %v438
      %v480 = vpack.c.b16 %v465, %v464
      %v481 = vpack.c.b16 %v467, %v466
      %v482 = vpack.c.b16 %v469, %v468
      %v483 = vpack.c.b16 %v471, %v470
      %v484 = vpack.c.b16 %v473, %v472
      %v485 = vpack.c.b16 %v475, %v474
      %v486 = vpack.c.b16 %v477, %v476
      %v487 = vpack.c.b16 %v479, %v478
      %496 = vmatprep.subr.bf16.mxu0 0
      %497 = vmatpush1.bf16.msra.mxu0 %v487
      %498 = vmatprep.subr.bf16.mxu0 0
      %499 = vmatpush1.bf16.msra.mxu0 %v486
      %500 = vmatprep.subr.bf16.mxu0 0
      %501 = vmatpush1.bf16.msra.mxu0 %v485
      %502 = vmatprep.subr.bf16.mxu0 0
      %503 = vmatpush1.bf16.msra.mxu0 %v484
      %504 = vmatprep.subr.bf16.mxu0 0
      %505 = vmatpush1.bf16.msra.mxu0 %v483
      %506 = vmatprep.subr.bf16.mxu0 0
      %507 = vmatpush1.bf16.msra.mxu0 %v482
      %508 = vmatprep.subr.bf16.mxu0 0
      %509 = vmatpush1.bf16.msra.mxu0 %v481
      %510 = vmatprep.subr.bf16.mxu0 0
      %511 = vmatpush1.bf16.msra.mxu0 %v480
      %512 = vmatprep.subr.bf16.mxu0 0
      %513 = vmatpush2.bf16.msra.mxu0 0
      %514 = vmatprep.subr.bf16.mxu0 0
      %515 = vmatpush2.bf16.msra.mxu0 0
      %516 = vmatprep.subr.bf16.mxu0 0
      %517 = vmatpush2.bf16.msra.mxu0 0
      %518 = vmatprep.subr.bf16.mxu0 0
      %519 = vmatpush2.bf16.msra.mxu0 0
      %520 = vmatprep.subr.bf16.mxu0 0
      %521 = vmatpush2.bf16.msra.mxu0 0
      %522 = vmatprep.subr.bf16.mxu0 0
      %523 = vmatpush2.bf16.msra.mxu0 0
      %524 = vmatprep.subr.bf16.mxu0 0
      %525 = vmatpush2.bf16.msra.mxu0 0
      %526 = vmatprep.subr.bf16.mxu0 0
      %527 = vmatpush2.bf16.msra.mxu0 0
      %528 = vmatprep.mubr.bf16.mxu0 0
      %529 = vmatmul.mubr.bf16.gmra.mxu0 %v440
      %v530 = vpop.f32.mrf.mxu0
      %v531 = vadd.f32 %v446, %v530
      %v532 = vpop.f32.mrf.mxu0
      %v533 = vpop.f32.mrf.mxu0
      %v534 = vadd.f32 %v446, %v533
      %v535 = vpop.f32.mrf.mxu0
      %536 = vmatprep.mubr.bf16.mxu0 0
      %537 = vmatmul.mubr.bf16.gmra.mxu0 %v441
      %v538 = vpop.f32.mrf.mxu0
      %v539 = vadd.f32 %v446, %v538
      %v540 = vpop.f32.mrf.mxu0
      %v541 = vpop.f32.mrf.mxu0
      %v542 = vadd.f32 %v446, %v541
      %v543 = vpop.f32.mrf.mxu0
      %544 = vdwg.mxu0
      %v545 = vmax.f32 %v531, 0.0
      %v546 = vmax.f32 %v534, 0.0
      %v547 = vmax.f32 %v539, 0.0
      %v548 = vmax.f32 %v542, 0.0
      %v549 = vld [vmem:[%s5] sm:$0xf]
      %v550 = vld [vmem:[%s5 + $0x4] sm:$0xf]
      %v551 = vld [vmem:[%s5 + $0x8] sm:$0xf]
      %v552 = vld [vmem:[%s5 + $0xc] sm:$0xf]
      %v553 = vld [vmem:[%s5 + $0x10] sm:$0xf]
      %v554 = vld [vmem:[%s5 + $0x14] sm:$0xf]
      %v555 = vld [vmem:[%s5 + $0x18] sm:$0xf]
      %v556 = vld [vmem:[%s5 + $0x1c] sm:$0xf]
      %v557 = vld [vmem:[%s5 + $0x20] sm:$0xf]
      %v558 = vld [vmem:[%s5 + $0x24] sm:$0xf]
      %v559 = vld [vmem:[%s5 + $0x28] sm:$0xf]
      %v560 = vld [vmem:[%s5 + $0x2c] sm:$0xf]
      %v561 = vld [vmem:[%s5 + $0x30] sm:$0xf]
      %v562 = vld [vmem:[%s5 + $0x34] sm:$0xf]
      %v563 = vld [vmem:[%s5 + $0x38] sm:$0xf]
      %v564 = vld [vmem:[%s5 + $0x3c] sm:$0xf]
      %v565 = vld [vmem:[%s6] sm:$0x1]
      %v566 = vpack.c.bf16 %v546, %v545
      %v567 = vpack.c.bf16 %v548, %v547
      %v569 = vlaneseq
      %v570 = vshrl.u32 %v569, 7
      %v571 = vsub.s32 0, %v570
      %v572 = vrot.slane %v565, %v571
      %v590 = vunpack.c.l.b16 %v549
      %v591 = vunpack.c.l.b16 %v550
      %v592 = vunpack.c.l.b16 %v551
      %v593 = vunpack.c.l.b16 %v552
      %v594 = vunpack.c.l.b16 %v553
      %v595 = vunpack.c.l.b16 %v554
      %v596 = vunpack.c.l.b16 %v555
      %v597 = vunpack.c.l.b16 %v556
      %v598 = vunpack.c.l.b16 %v557
      %v599 = vunpack.c.l.b16 %v558
      %v600 = vunpack.c.l.b16 %v559
      %v601 = vunpack.c.l.b16 %v560
      %v602 = vunpack.c.l.b16 %v561
      %v603 = vunpack.c.l.b16 %v562
      %v604 = vunpack.c.l.b16 %v563
      %v605 = vunpack.c.l.b16 %v564
      %v606 = vpack.c.b16 %v591, %v590
      %v607 = vpack.c.b16 %v593, %v592
      %v608 = vpack.c.b16 %v595, %v594
      %v609 = vpack.c.b16 %v597, %v596
      %v610 = vpack.c.b16 %v599, %v598
      %v611 = vpack.c.b16 %v601, %v600
      %v612 = vpack.c.b16 %v603, %v602
      %v613 = vpack.c.b16 %v605, %v604
      %622 = vmatprep.subr.bf16.mxu0 0
      %623 = vmatpush1.bf16.msra.mxu0 %v613
      %624 = vmatprep.subr.bf16.mxu0 0
      %625 = vmatpush1.bf16.msra.mxu0 %v612
      %626 = vmatprep.subr.bf16.mxu0 0
      %627 = vmatpush1.bf16.msra.mxu0 %v611
      %628 = vmatprep.subr.bf16.mxu0 0
      %629 = vmatpush1.bf16.msra.mxu0 %v610
      %630 = vmatprep.subr.bf16.mxu0 0
      %631 = vmatpush1.bf16.msra.mxu0 %v609
      %632 = vmatprep.subr.bf16.mxu0 0
      %633 = vmatpush1.bf16.msra.mxu0 %v608
      %634 = vmatprep.subr.bf16.mxu0 0
      %635 = vmatpush1.bf16.msra.mxu0 %v607
      %636 = vmatprep.subr.bf16.mxu0 0
      %637 = vmatpush1.bf16.msra.mxu0 %v606
      %638 = vmatprep.subr.bf16.mxu0 0
      %639 = vmatpush2.bf16.msra.mxu0 0
      %640 = vmatprep.subr.bf16.mxu0 0
      %641 = vmatpush2.bf16.msra.mxu0 0
      %642 = vmatprep.subr.bf16.mxu0 0
      %643 = vmatpush2.bf16.msra.mxu0 0
      %644 = vmatprep.subr.bf16.mxu0 0
      %645 = vmatpush2.bf16.msra.mxu0 0
      %646 = vmatprep.subr.bf16.mxu0 0
      %647 = vmatpush2.bf16.msra.mxu0 0
      %648 = vmatprep.subr.bf16.mxu0 0
      %649 = vmatpush2.bf16.msra.mxu0 0
      %650 = vmatprep.subr.bf16.mxu0 0
      %651 = vmatpush2.bf16.msra.mxu0 0
      %652 = vmatprep.subr.bf16.mxu0 0
      %653 = vmatpush2.bf16.msra.mxu0 0
      %654 = vmatprep.mubr.bf16.mxu0 0
      %655 = vmatmul.mubr.bf16.gmra.mxu0 %v566
      %v656 = vpop.f32.mrf.mxu0
      %v657 = vadd.f32 %v572, %v656
      %v658 = vpop.f32.mrf.mxu0
      %v659 = vpop.f32.mrf.mxu0
      %v660 = vadd.f32 %v572, %v659
      %v661 = vpop.f32.mrf.mxu0
      %662 = vmatprep.mubr.bf16.mxu0 0
      %663 = vmatmul.mubr.bf16.gmra.mxu0 %v567
      %v664 = vpop.f32.mrf.mxu0
      %v665 = vadd.f32 %v572, %v664
      %v666 = vpop.f32.mrf.mxu0
      %v667 = vpop.f32.mrf.mxu0
      %v668 = vadd.f32 %v572, %v667
      %v669 = vpop.f32.mrf.mxu0
      %670 = vdwg.mxu0
      %671 = vst [vmem:[%s280] sm:$0xff] %v657
      %672 = vst [vmem:[%s280 + $0x8] sm:$0xff] %v660
      %673 = vst [vmem:[%s280 + $0x10] sm:$0xff] %v665
      %674 = vst [vmem:[%s280 + $0x18] sm:$0xff] %v668
      %s675 = smul.u32 4, %s18
      %p676 = scmp.lt.s32.totalorder %s675, 7
      %s677 = scalar_select %p676, %s675, 7
      %s678 = smul.addr %s677, 8
      %s679 = scalar_lea.vmem %s7, %s678
      // Predicated region
      $region49: #{encode_process_decode.18} parent=47 // pred_check
        %p680 = pneg %p188
      $region50: #{encode_process_decode.18} parent=47 // pred_check_branch
        %682 = sbr.rel (%p680) target = $region52
      $region51: #{encode_process_decode.18} parent=47 // pred_region
        %s683 = smul.u32 4, %s18
      $region52: #{encode_process_decode.18} parent=47 // pred_fallthru
        _
    $region48: #{encode_process_decode.18} parent=5 // pred_fallthru
      _
    %p684 = scmp.le.s32.totalorder 2, %s13
    // Predicated region
    $region53: #{encode_process_decode.18} parent=5 // pred_check
      %p685 = pneg %p684
    $region54: #{encode_process_decode.18} parent=5 // pred_check_branch
      %687 = sbr.rel (%p685) target = $region56
    $region55: #{encode_process_decode.18} parent=5 // pred_region
      %s688 = ssub.s32 %s13, 2
      // Predicated region
      $region57: #{encode_process_decode.18} parent=55 // pred_check
        %p689 = pneg %p194
      $region58: #{encode_process_decode.18} parent=55 // pred_check_branch
        %691 = sbr.rel (%p689) target = $region60
      $region59: #{encode_process_decode.18} parent=55 // pred_region
        %s692 = smul.u32 4, %s19
        %p693 = scmp.lt.s32.totalorder %s692, 7
        %s694 = scalar_select %p693, %s692, 7
        %s695 = smul.addr %s694, 8
        %s696 = scalar_lea.vmem %s7, %s695
      $region60: #{encode_process_decode.18} parent=55 // pred_fallthru
        _
    $region56: #{encode_process_decode.18} parent=5 // pred_fallthru
      _
  $region6: #{encode_process_decode.18} parent=0 // loop_footer
    %s17 = sadd.s32 1, %s13
  $region7: #{encode_process_decode.18} parent=0 // loop_footer_branch
    %12 = sbr.rel target = $region3
  $region8: #{encode_process_decode.18} parent=0 // loop_exit
    _

</llo_original>
